<compile_context>
chip_gen: v5e
topology: v5e:2x2
jax: 0.10.0
libtpu: 0.0.40
codegen_flags: <defaults>
</compile_context>

<pallas_src>
import jax
import jax.numpy as jnp
from jax.experimental import pallas as pl
from jax.experimental.pallas import tpu as pltpu


_VMEM_LIMIT = 48 * 1024 * 1024   # > default scoped limit (16/32 MiB), < v7x physical 64 MiB
_SQRT1_2 = 0.7071067811865476


# ----------------------------------------------------------------------------
# helpers
# ----------------------------------------------------------------------------
def _round_up(x, m):
    return (x + m - 1) // m * m


def _pick_tile(dim, targets):
    """Largest target tile that divides `dim`; else the full dim (always legal)."""
    for t in targets:
        if t <= dim and dim % t == 0:
            return t
    return dim


def _choose_row_tile(M, targets=(256, 128, 64, 32, 16, 8)):
    """Row tile + padded row count.  Pads M up to a multiple of 8 (pad rows are
    computed but sliced off by the caller) so non-divisible M (e.g. batch*77)
    never produces a giant single tile."""
    Mp = _round_up(M, 8)
    for t in targets:
        if t <= Mp and Mp % t == 0:
            return t, Mp
    return 8, Mp


def _choose_seq_tile(L, targets=(128, 64, 32, 16, 8)):
    Lp = _round_up(L, 8)
    for t in targets:
        if t <= Lp and Lp % t == 0:
            return t, Lp
    return 8, Lp


def _erf_approx(z):
    # Abramowitz & Stegun 7.1.26 (max abs err ~1.5e-7): VPU/EUP-only ops, so it
    # lowers inside Mosaic without relying on an erf primitive.
    az = jnp.abs(z)
    t = 1.0 / (1.0 + 0.3275911 * az)
    poly = ((((1.061405429 * t - 1.453152027) * t + 1.421413741) * t
             - 0.284496736) * t + 0.254829592) * t
    r = 1.0 - poly * jnp.exp(-az * az)
    return jnp.where(z >= 0, r, -r)


def _gelu_exact(x):
    # exact-erf GELU (matches nn.GELU() up to ~1e-7)
    return 0.5 * x * (1.0 + _erf_approx(x * _SQRT1_2))


# ----------------------------------------------------------------------------
# Fused linear kernel:  y = act(LN(x) @ Wt + b) + residual
#   (LN / bias / activation / residual are all optional, compiled-in statically)
# ----------------------------------------------------------------------------
def _make_linear_kernel(fuse_ln, has_bias, activation, has_res):
    def kernel(*refs):
        it = iter(refs)
        x_ref = next(it)
        if fuse_ln:
            g_ref = next(it)
            bln_ref = next(it)
        wt_ref = next(it)
        bias_ref = next(it) if has_bias else None
        res_ref = next(it) if has_res else None
        o_ref = next(it)
        acc_ref = next(it)

        @pl.when(pl.program_id(2) == 0)
        def _init():
            acc_ref[...] = jnp.zeros_like(acc_ref)

        if fuse_ln:
            # LN rides the VPU/EUP/XLU slots while the MXU is busy; valid because
            # the wrapper only requests fusion when tk == K (full channel row).
            xf = x_ref[...].astype(jnp.float32)
            mu = jnp.mean(xf, axis=-1, keepdims=True)
            xc = xf - mu
            var = jnp.mean(xc * xc, axis=-1, keepdims=True)
            xf = (xc * jax.lax.rsqrt(var + 1e-5) * g_ref[...].astype(jnp.float32)
                  + bln_ref[...].astype(jnp.float32))
            x = xf.astype(x_ref.dtype)
        else:
            x = x_ref[...]

        acc_ref[...] += jnp.dot(x, wt_ref[...], preferred_element_type=jnp.float32)

        @pl.when(pl.program_id(2) == pl.num_programs(2) - 1)
        def _fin():
            y = acc_ref[...]
            if has_bias:
                y = y + bias_ref[...].astype(jnp.float32)
            if activation == "gelu":
                y = _gelu_exact(y)
            if has_res:
                y = y + res_ref[...].astype(jnp.float32)
            o_ref[...] = y.astype(o_ref.dtype)

    return kernel


def pallas_linear(x2d, wt, bias=None, *, ln=None, activation=None, residual=None,
                  out_dtype=None):
    """x2d: (M, K); wt: (K, Nout) pre-transposed; bias: (Nout,) or None.
    Optional fused LayerNorm on x (ln=(gamma, beta)), fused activation ("gelu"),
    and fused residual add (residual: (M, Nout))."""
    M, K = x2d.shape
    K2, Nout = wt.shape
    assert K == K2
    out_dtype = out_dtype or x2d.dtype

    tk = _pick_tile(K, (512, 256, 128))
    fuse_ln = ln is not None
    if fuse_ln and tk != K:
        # LN needs the full channel row in one tile; fall back to a standalone pass.
        x2d = pallas_layernorm(x2d, ln[0], ln[1])
        fuse_ln = False
    tn = _pick_tile(Nout, (512, 256, 128))
    tm, Mp = _choose_row_tile(M)

    pad = Mp - M
    x_in = x2d if pad == 0 else jnp.pad(x2d, ((0, pad), (0, 0)))
    res_in = residual
    if residual is not None and pad:
        res_in = jnp.pad(residual, ((0, pad), (0, 0)))

    has_bias = bias is not None
    has_res = residual is not None

    inputs = [x_in]
    in_specs = [pl.BlockSpec((tm, tk), lambda i, j, k: (i, k))]
    if fuse_ln:
        inputs += [ln[0].reshape(1, K), ln[1].reshape(1, K)]
        in_specs += [pl.BlockSpec((1, K), lambda i, j, k: (0, 0)),
                     pl.BlockSpec((1, K), lambda i, j, k: (0, 0))]
    inputs.append(wt)
    in_specs.append(pl.BlockSpec((tk, tn), lambda i, j, k: (k, j)))
    if has_bias:
        inputs.append(bias.reshape(1, Nout))
        in_specs.append(pl.BlockSpec((1, tn), lambda i, j, k: (0, j)))
    if has_res:
        inputs.append(res_in)
        in_specs.append(pl.BlockSpec((tm, tn), lambda i, j, k: (i, j)))

    grid = (Mp // tm, Nout // tn, K // tk)
    out = pl.pallas_call(
        _make_linear_kernel(fuse_ln, has_bias, activation, has_res),
        out_shape=jax.ShapeDtypeStruct((Mp, Nout), out_dtype),
        grid=grid,
        in_specs=in_specs,
        out_specs=pl.BlockSpec((tm, tn), lambda i, j, k: (i, j)),
        scratch_shapes=[pltpu.VMEM((tm, tn), jnp.float32)],
        compiler_params=pltpu.CompilerParams(
            dimension_semantics=("parallel", "parallel", "arbitrary"),
            vmem_limit_bytes=_VMEM_LIMIT),
    )(*inputs)
    return out if pad == 0 else out[:M]


# ----------------------------------------------------------------------------
# Standalone LayerNorm kernel (fallback only, when tk != K for the fused path)
# ----------------------------------------------------------------------------
def _ln_kernel(x_ref, g_ref, b_ref, o_ref):
    x = x_ref[...].astype(jnp.float32)
    mu = jnp.mean(x, axis=-1, keepdims=True)
    xc = x - mu
    var = jnp.mean(xc * xc, axis=-1, keepdims=True)
    inv = jax.lax.rsqrt(var + 1e-5)
    o_ref[...] = (xc * inv * g_ref[...] + b_ref[...]).astype(o_ref.dtype)


def pallas_layernorm(x2d, gamma, beta):
    M, C = x2d.shape
    tm, Mp = _choose_row_tile(M, (512, 256, 128, 64, 32, 16, 8))
    pad = Mp - M
    x_in = x2d if pad == 0 else jnp.pad(x2d, ((0, pad), (0, 0)))
    out = pl.pallas_call(
        _ln_kernel,
        out_shape=jax.ShapeDtypeStruct((Mp, C), x2d.dtype),
        grid=(Mp // tm,),
        in_specs=[
            pl.BlockSpec((tm, C), lambda i: (i, 0)),
            pl.BlockSpec((1, C), lambda i: (0, 0)),
            pl.BlockSpec((1, C), lambda i: (0, 0)),
        ],
        out_specs=pl.BlockSpec((tm, C), lambda i: (i, 0)),
        compiler_params=pltpu.CompilerParams(
            dimension_semantics=("parallel",), vmem_limit_bytes=_VMEM_LIMIT),
    )(x_in, gamma.reshape(1, C), beta.reshape(1, C))
    return out if pad == 0 else out[:M]


# ----------------------------------------------------------------------------
# Attention kernel: grid=(batch, q-tile); head-major batched matmul in-kernel
# ----------------------------------------------------------------------------
def _make_attn_kernel(num_heads, head_dim, scale, causal, tq):
    C = num_heads * head_dim

    def kernel(q_ref, kv_ref, o_ref):
        q = q_ref[0].astype(jnp.float32) * scale          # (tq, C), scale folded into q
        kv = kv_ref[0].astype(jnp.float32)                # (Lk, 2C) packed K|V
        Lq = q.shape[0]
        Lk = kv.shape[0]
        # One head-major (H, L, D) relayout per slab, then a single batched
        # dot_general over all heads (no per-head narrow lane slices / concat).
        qh = jnp.transpose(q.reshape(Lq, num_heads, head_dim), (1, 0, 2))
        kh = jnp.transpose(kv[:, 0:C].reshape(Lk, num_heads, head_dim), (1, 0, 2))
        vh = jnp.transpose(kv[:, C:2 * C].reshape(Lk, num_heads, head_dim), (1, 0, 2))
        s = jnp.einsum("hqd,hkd->hqk", qh, kh, preferred_element_type=jnp.float32)
        if causal:
            q_start = pl.program_id(1) * tq
            row = jax.lax.broadcasted_iota(jnp.int32, (1, Lq, Lk), 1) + q_start
            col = jax.lax.broadcasted_iota(jnp.int32, (1, Lq, Lk), 2)
            s = jnp.where(col <= row, s, jnp.float32(-1e30))
        s = s - jnp.max(s, axis=-1, keepdims=True)
        p = jnp.exp(s)
        p = p * pl.reciprocal(jnp.sum(p, axis=-1, keepdims=True), approx=True)
        o = jnp.einsum("hqk,hkd->hqd", p, vh, preferred_element_type=jnp.float32)
        # single lane-dense (tq, C) slab store
        o_ref[0] = jnp.transpose(o, (1, 0, 2)).reshape(Lq, C).astype(o_ref.dtype)

    return kernel


def pallas_attention(q, kv, num_heads, scale, causal):
    """q: (N, Lq, C); kv: (N, Lk, 2C) packed K|V -> (N, Lq, C)."""
    N, Lq, C = q.shape
    _, Lk, C2 = kv.shape
    assert C2 == 2 * C
    D = C // num_heads
    tq, Lqp = _choose_seq_tile(Lq)
    pad = Lqp - Lq
    q_in = q if pad == 0 else jnp.pad(q, ((0, 0), (0, pad), (0, 0)))
    # TODO(synk): flash-style KV-axis tiling (online softmax) for very long Lk.
    out = pl.pallas_call(
        _make_attn_kernel(num_heads, D, scale, causal, tq),
        out_shape=jax.ShapeDtypeStruct((N, Lqp, C), q.dtype),
        grid=(N, Lqp // tq),
        in_specs=[
            pl.BlockSpec((1, tq, C), lambda b, qi: (b, qi, 0)),
            pl.BlockSpec((1, Lk, C2), lambda b, qi: (b, 0, 0)),
        ],
        out_specs=pl.BlockSpec((1, tq, C), lambda b, qi: (b, qi, 0)),
        compiler_params=pltpu.CompilerParams(
            dimension_semantics=("parallel", "parallel"),
            vmem_limit_bytes=_VMEM_LIMIT),
    )(q_in, kv)
    return out if pad == 0 else out[:, :Lq]


# ----------------------------------------------------------------------------
# MultimodalTransformer forward — LN / GELU / residual are fused into the
# linear kernels; attention is a separate per-(batch, q-tile) kernel.
# ----------------------------------------------------------------------------
def multimodal_transformer_forward(image_embs, text_embs, params, num_heads):
    N, Lt, C = text_embs.shape
    Li = image_embs.shape[1]
    D = C // num_heads
    scale = D ** -0.5
    M = N * Lt

    x2 = text_embs.reshape(M, C)
    img2 = image_embs.reshape(N * Li, C)

    for lyr in params["layers"]:
        # ---------- self-attention residual block (causal) ----------
        sp = lyr["self"]
        ln1 = (sp["ln1_g"], sp["ln1_b"])
        q = pallas_linear(x2, sp["w_q_t"], sp["b_q"], ln=ln1)
        kv = pallas_linear(x2, sp["w_kv_t"], sp["b_kv"], ln=ln1)
        a = pallas_attention(q.reshape(N, Lt, C), kv.reshape(N, Lt, 2 * C),
                             num_heads, scale, causal=True)
        x2 = pallas_linear(a.reshape(M, C), sp["w_out_t"], sp["b_out"], residual=x2)

        # MLP: LN + c_fc + GELU fused; residual fused into c_proj epilogue
        m = pallas_linear(x2, sp["w_fc_t"], sp["b_fc"],
                          ln=(sp["ln2_g"], sp["ln2_b"]), activation="gelu")
        x2 = pallas_linear(m, sp["w_proj_t"], sp["b_proj"], residual=x2)

        # ---------- cross-attention residual block (text <- image) ----------
        cp = lyr["cross"]
        q = pallas_linear(x2, cp["w_q_t"], cp["b_q"], ln=(cp["ln1_g"], cp["ln1_b"]))
        kv = pallas_linear(img2, cp["w_kv_t"], cp["b_kv"],
                           ln=(cp["lnkv_g"], cp["lnkv_b"]))
        a = pallas_attention(q.reshape(N, Lt, C), kv.reshape(N, Li, 2 * C),
                             num_heads, scale, causal=False)
        x2 = pallas_linear(a.reshape(M, C), cp["w_out_t"], cp["b_out"], residual=x2)

        m = pallas_linear(x2, cp["w_fc_t"], cp["b_fc"],
                          ln=(cp["ln2_g"], cp["ln2_b"]), activation="gelu")
        x2 = pallas_linear(m, cp["w_proj_t"], cp["b_proj"], residual=x2)

    # ---------- final LayerNorm fused into text_projection (no bias) ----------
    out = pallas_linear(x2, params["text_projection"], bias=None,
                        ln=(params["lnf_g"], params["lnf_b"]))
    out_dim = params["text_projection"].shape[1]
    return out.reshape(N, Lt, out_dim)


# ----------------------------------------------------------------------------
# Pure-JAX reference (same params / same math, exact softmax & GELU)
# ----------------------------------------------------------------------------
def reference_forward(image_embs, text_embs, params, num_heads):
    N, Lt, C = text_embs.shape
    H = num_heads
    D = C // H

    def ln(x, g, b):
        mu = jnp.mean(x, -1, keepdims=True)
        xc = x - mu
        var = jnp.mean(xc * xc, -1, keepdims=True)
        return xc * jax.lax.rsqrt(var + 1e-5) * g + b

    def sdpa(q, k, v, causal):
        Lq, Lk = q.shape[1], k.shape[1]
        qh = q.reshape(N, Lq, H, D).transpose(0, 2, 1, 3)
        kh = k.reshape(N, Lk, H, D).transpose(0, 2, 1, 3)
        vh = v.reshape(N, Lk, H, D).transpose(0, 2, 1, 3)
        s = jnp.einsum("nhqd,nhkd->nhqk", qh, kh) * (D ** -0.5)
        if causal:
            mask = jnp.tril(jnp.ones((Lq, Lk), bool))
            s = jnp.where(mask, s, -jnp.inf)
        p = jax.nn.softmax(s, axis=-1)
        o = jnp.einsum("nhqk,nhkd->nhqd", p, vh)
        return o.transpose(0, 2, 1, 3).reshape(N, Lq, C)

    x = text_embs
    for lyr in params["layers"]:
        sp = lyr["self"]
        h = ln(x, sp["ln1_g"], sp["ln1_b"])
        q = h @ sp["w_q_t"] + sp["b_q"]
        kv = h @ sp["w_kv_t"] + sp["b_kv"]
        k, v = jnp.split(kv, 2, axis=-1)
        a = sdpa(q, k, v, causal=True)
        x = x + (a @ sp["w_out_t"] + sp["b_out"])
        h = ln(x, sp["ln2_g"], sp["ln2_b"])
        m = jax.nn.gelu(h @ sp["w_fc_t"] + sp["b_fc"], approximate=False)
        x = x + (m @ sp["w_proj_t"] + sp["b_proj"])

        cp = lyr["cross"]
        qn = ln(x, cp["ln1_g"], cp["ln1_b"])
        kvn = ln(image_embs, cp["lnkv_g"], cp["lnkv_b"])
        q = qn @ cp["w_q_t"] + cp["b_q"]
        kv = kvn @ cp["w_kv_t"] + cp["b_kv"]
        k, v = jnp.split(kv, 2, axis=-1)
        a = sdpa(q, k, v, causal=False)
        x = x + (a @ cp["w_out_t"] + cp["b_out"])
        h = ln(x, cp["ln2_g"], cp["ln2_b"])
        m = jax.nn.gelu(h @ cp["w_fc_t"] + cp["b_fc"], approximate=False)
        x = x + (m @ cp["w_proj_t"] + cp["b_proj"])

    out = ln(x, params["lnf_g"], params["lnf_b"])
    return out @ params["text_projection"]


# ----------------------------------------------------------------------------
# Deterministic synthetic parameters (weights pre-transposed (K, Nout); the
# self-attention in_proj is split into separate Q and KV weights)
# ----------------------------------------------------------------------------
def _ln_init(key, dim):
    k1, k2 = jax.random.split(key)
    return (1.0 + 0.02 * jax.random.normal(k1, (dim,), jnp.float32),
            0.02 * jax.random.normal(k2, (dim,), jnp.float32))


def _lin_init(key, din, dout, std):
    k1, k2 = jax.random.split(key)
    return (std * jax.random.normal(k1, (din, dout), jnp.float32),
            0.01 * jax.random.normal(k2, (dout,), jnp.float32))


def init_params(key, *, width, layers, heads, mlp_ratio, output_dim):
    C = width
    MLPW = int(C * mlp_ratio)
    attn_std = C ** -0.5
    proj_std = attn_std * (2 * layers) ** -0.5
    fc_std = (2 * C) ** -0.5
    params = {"layers": []}

    def block(key, is_cross):
        ks = jax.random.split(key, 8)
        ln1 = _ln_init(ks[0], C)
        w_q_t, b_q = _lin_init(ks[1], C, C, attn_std)
        w_kv_t, b_kv = _lin_init(ks[2], C, 2 * C, attn_std)
        w_out_t, b_out = _lin_init(ks[3], C, C, proj_std)
        ln2 = _ln_init(ks[4], C)
        w_fc_t, b_fc = _lin_init(ks[5], C, MLPW, fc_std)
        w_proj_t, b_proj = _lin_init(ks[6], MLPW, C, proj_std)
        p = dict(ln1_g=ln1[0], ln1_b=ln1[1],
                 w_q_t=w_q_t, b_q=b_q, w_kv_t=w_kv_t, b_kv=b_kv,
                 w_out_t=w_out_t, b_out=b_out,
                 ln2_g=ln2[0], ln2_b=ln2[1],
                 w_fc_t=w_fc_t, b_fc=b_fc, w_proj_t=w_proj_t, b_proj=b_proj)
        if is_cross:
            p["lnkv_g"], p["lnkv_b"] = _ln_init(ks[7], C)
        return p

    for _ in range(layers):
        key, k_self, k_cross = jax.random.split(key, 3)
        params["layers"].append({"self": block(k_self, False),
                                 "cross": block(k_cross, True)})

    key, k1, k2 = jax.random.split(key, 3)
    params["lnf_g"], params["lnf_b"] = _ln_init(k1, C)
    params["text_projection"] = attn_std * jax.random.normal(
        k2, (C, output_dim), jnp.float32)
    return params


if __name__ == "__main__":
    # Small shapes: batch=2, text seq=8, image seq=16, width=32, heads=4, 2 layers
    N, Lt, Li = 2, 8, 16
    width, heads, layers, mlp_ratio, output_dim = 32, 4, 2, 4.0, 16

    key = jax.random.PRNGKey(0)
    k_img, k_txt, k_par = jax.random.split(key, 3)
    image_embs = jax.random.normal(k_img, (N, Li, width), dtype=jnp.float32)
    text_embs = jax.random.normal(k_txt, (N, Lt, width), dtype=jnp.float32)
    params = init_params(k_par, width=width, layers=layers, heads=heads,
                         mlp_ratio=mlp_ratio, output_dim=output_dim)

    fwd = jax.jit(lambda im, tx, p: multimodal_transformer_forward(im, tx, p, heads))
    out = jax.block_until_ready(fwd(image_embs, text_embs, params))

    ref = reference_forward(image_embs, text_embs, params, heads)
    assert out.shape == (N, Lt, output_dim)
    max_diff = float(jnp.max(jnp.abs(out - ref)))
    assert jnp.allclose(out, ref, atol=1e-2, rtol=1e-2), \
        f"mismatch vs reference, max|diff|={max_diff}"

    print("KERNEL_OK")
</pallas_src>

<mosaic_0001>
module attributes {stable_mosaic.version = 11 : i64} {
  func.func @kernel(%arg0: i32, %arg1: i32, %arg2: i32, %arg3: memref<16x32xf32, #tpu.memory_space<vmem>>, %arg4: memref<1x32xf32, #tpu.memory_space<vmem>>, %arg5: memref<1x32xf32, #tpu.memory_space<vmem>>, %arg6: memref<32x32xf32, #tpu.memory_space<vmem>>, %arg7: memref<1x32xf32, #tpu.memory_space<vmem>>, %arg8: memref<16x32xf32, #tpu.memory_space<vmem>>, %arg9: memref<16x32xf32, #tpu.memory_space<vmem>>) attributes {dimension_semantics = [#tpu.dimension_semantics<parallel>, #tpu.dimension_semantics<parallel>, #tpu.dimension_semantics<arbitrary>], iteration_bounds = array<i64: 1, 1, 1>, scalar_prefetch = 0 : i64, scratch_operands = 1 : i64, tpu.core_type = #tpu.core_type<tc>, window_params = [{transform_indices = @transform_0, window_bounds = array<i64: 16, 32>}, {pipeline_mode = #tpu.pipeline_mode<synchronous>, transform_indices = @transform_1, window_bounds = array<i64: 1, 32>}, {pipeline_mode = #tpu.pipeline_mode<synchronous>, transform_indices = @transform_2, window_bounds = array<i64: 1, 32>}, {transform_indices = @transform_3, window_bounds = array<i64: 32, 32>}, {transform_indices = @transform_4, window_bounds = array<i64: 1, 32>}, {transform_indices = @transform_5, window_bounds = array<i64: 16, 32>}]} {
    %c0_i32 = arith.constant 0 : i32
    %0 = arith.cmpi eq, %arg2, %c0_i32 : i32
    %1 = arith.extui %0 : i1 to i32
    %c0_i32_0 = arith.constant 0 : i32
    %2 = arith.cmpi ne, %1, %c0_i32_0 : i32
    scf.if %2 {
      %cst_19 = arith.constant 0.000000e+00 : f32
      %34 = vector.broadcast %cst_19 : f32 to vector<16x32xf32>
      %c0_20 = arith.constant 0 : index
      %c0_21 = arith.constant 0 : index
      %35 = vector.load %arg9[%c0_20, %c0_21] : memref<16x32xf32, #tpu.memory_space<vmem>>, vector<16x32xf32>
      tpu.vector_store %arg9[%c0_20, %c0_21], %34 {strides = array<i32>} : memref<16x32xf32, #tpu.memory_space<vmem>>, vector<16x32xf32>,
    } else {
    }
    %c0 = arith.constant 0 : index
    %c0_1 = arith.constant 0 : index
    %3 = vector.load %arg3[%c0, %c0_1] : memref<16x32xf32, #tpu.memory_space<vmem>>, vector<16x32xf32>
    %cst = arith.constant dense<0.000000e+00> : vector<16xf32>
    %4 = vector.multi_reduction <add>, %3, %cst [1] : vector<16x32xf32> to vector<16xf32>
    %5 = vector.shape_cast %4 : vector<16xf32> to vector<16x1xf32>
    %cst_2 = arith.constant 3.200000e+01 : f32
    %6 = vector.broadcast %cst_2 : f32 to vector<16x1xf32>
    %7 = arith.divf %5, %6 : vector<16x1xf32>
    %8 = vector.broadcast %7 : vector<16x1xf32> to vector<16x32xf32>
    %9 = arith.subf %3, %8 : vector<16x32xf32>
    %10 = arith.mulf %9, %9 : vector<16x32xf32>
    %cst_3 = arith.constant dense<0.000000e+00> : vector<16xf32>
    %11 = vector.multi_reduction <add>, %10, %cst_3 [1] : vector<16x32xf32> to vector<16xf32>
    %12 = vector.shape_cast %11 : vector<16xf32> to vector<16x1xf32>
    %cst_4 = arith.constant 3.200000e+01 : f32
    %13 = vector.broadcast %cst_4 : f32 to vector<16x1xf32>
    %14 = arith.divf %12, %13 : vector<16x1xf32>
    %cst_5 = arith.constant 9.99999974E-6 : f32
    %15 = vector.broadcast %cst_5 : f32 to vector<16x1xf32>
    %16 = arith.addf %14, %15 : vector<16x1xf32>
    %17 = math.rsqrt %16 : vector<16x1xf32>
    %18 = vector.broadcast %17 : vector<16x1xf32> to vector<16x32xf32>
    %19 = arith.mulf %9, %18 : vector<16x32xf32>
    %c0_6 = arith.constant 0 : index
    %c0_7 = arith.constant 0 : index
    %20 = vector.load %arg4[%c0_6, %c0_7] : memref<1x32xf32, #tpu.memory_space<vmem>>, vector<1x32xf32>
    %21 = vector.broadcast %20 : vector<1x32xf32> to vector<16x32xf32>
    %22 = arith.mulf %19, %21 : vector<16x32xf32>
    %c0_8 = arith.constant 0 : index
    %c0_9 = arith.constant 0 : index
    %23 = vector.load %arg5[%c0_8, %c0_9] : memref<1x32xf32, #tpu.memory_space<vmem>>, vector<1x32xf32>
    %24 = vector.broadcast %23 : vector<1x32xf32> to vector<16x32xf32>
    %25 = arith.addf %22, %24 : vector<16x32xf32>
    %c0_10 = arith.constant 0 : index
    %c0_11 = arith.constant 0 : index
    %26 = vector.load %arg9[%c0_10, %c0_11] : memref<16x32xf32, #tpu.memory_space<vmem>>, vector<16x32xf32>
    %c0_12 = arith.constant 0 : index
    %c0_13 = arith.constant 0 : index
    %27 = vector.load %arg6[%c0_12, %c0_13] : memref<32x32xf32, #tpu.memory_space<vmem>>, vector<32x32xf32>
    %cst_14 = arith.constant dense<0.000000e+00> : vector<16x32xf32>
    %28 = tpu.matmul %25, %27, %cst_14 {dimension_numbers = #tpu.dot_dimension_numbers<[1], [0], [0], [1], [0, 0, 1, 1], [], []>} : vector<16x32xf32>, vector<32x32xf32>, vector<16x32xf32> -> vector<16x32xf32>
    %29 = arith.addf %26, %28 : vector<16x32xf32>
    %c0_15 = arith.constant 0 : index
    %c0_16 = arith.constant 0 : index
    %30 = vector.load %arg9[%c0_15, %c0_16] : memref<16x32xf32, #tpu.memory_space<vmem>>, vector<16x32xf32>
    tpu.vector_store %arg9[%c0_15, %c0_16], %29 {strides = array<i32>} : memref<16x32xf32, #tpu.memory_space<vmem>>, vector<16x32xf32>,
    %c0_i32_17 = arith.constant 0 : i32
    %31 = arith.cmpi eq, %arg2, %c0_i32_17 : i32
    %32 = arith.extui %31 : i1 to i32
    %c0_i32_18 = arith.constant 0 : i32
    %33 = arith.cmpi ne, %32, %c0_i32_18 : i32
    scf.if %33 {
      %c0_19 = arith.constant 0 : index
      %c0_20 = arith.constant 0 : index
      %34 = vector.load %arg9[%c0_19, %c0_20] : memref<16x32xf32, #tpu.memory_space<vmem>>, vector<16x32xf32>
      %c0_21 = arith.constant 0 : index
      %c0_22 = arith.constant 0 : index
      %35 = vector.load %arg7[%c0_21, %c0_22] : memref<1x32xf32, #tpu.memory_space<vmem>>, vector<1x32xf32>
      %36 = vector.broadcast %35 : vector<1x32xf32> to vector<16x32xf32>
      %37 = arith.addf %34, %36 : vector<16x32xf32>
      %c0_23 = arith.constant 0 : index
      %c0_24 = arith.constant 0 : index
      %38 = vector.load %arg8[%c0_23, %c0_24] : memref<16x32xf32, #tpu.memory_space<vmem>>, vector<16x32xf32>
      tpu.vector_store %arg8[%c0_23, %c0_24], %37 {strides = array<i32>} : memref<16x32xf32, #tpu.memory_space<vmem>>, vector<16x32xf32>,
    } else {
    }
    return
  }
  func.func @transform_0(%arg0: i32, %arg1: i32, %arg2: i32) -> (i32, i32) {
    %c0_i32 = arith.constant 0 : i32
    return %arg0, %arg2 : i32, i32
  }
  func.func @transform_1(%arg0: i32, %arg1: i32, %arg2: i32) -> (i32, i32) {
    %c0_i32 = arith.constant 0 : i32
    %c0_i32_0 = arith.constant 0 : i32
    %c0_i32_1 = arith.constant 0 : i32
    return %c0_i32, %c0_i32_0 : i32, i32
  }
  func.func @transform_2(%arg0: i32, %arg1: i32, %arg2: i32) -> (i32, i32) {
    %c0_i32 = arith.constant 0 : i32
    %c0_i32_0 = arith.constant 0 : i32
    %c0_i32_1 = arith.constant 0 : i32
    return %c0_i32, %c0_i32_0 : i32, i32
  }
  func.func @transform_3(%arg0: i32, %arg1: i32, %arg2: i32) -> (i32, i32) {
    %c0_i32 = arith.constant 0 : i32
    return %arg2, %arg1 : i32, i32
  }
  func.func @transform_4(%arg0: i32, %arg1: i32, %arg2: i32) -> (i32, i32) {
    %c0_i32 = arith.constant 0 : i32
    %c0_i32_0 = arith.constant 0 : i32
    return %c0_i32, %arg1 : i32, i32
  }
  func.func @transform_5(%arg0: i32, %arg1: i32, %arg2: i32) -> (i32, i32) {
    %c0_i32 = arith.constant 0 : i32
    return %arg0, %arg1 : i32, i32
  }
}

module attributes {stable_mosaic.version = 11 : i64} {
  func.func @kernel(%arg0: i32, %arg1: i32, %arg2: i32, %arg3: memref<16x32xf32, #tpu.memory_space<vmem>>, %arg4: memref<1x32xf32, #tpu.memory_space<vmem>>, %arg5: memref<1x32xf32, #tpu.memory_space<vmem>>, %arg6: memref<32x64xf32, #tpu.memory_space<vmem>>, %arg7: memref<1x64xf32, #tpu.memory_space<vmem>>, %arg8: memref<16x64xf32, #tpu.memory_space<vmem>>, %arg9: memref<16x64xf32, #tpu.memory_space<vmem>>) attributes {dimension_semantics = [#tpu.dimension_semantics<parallel>, #tpu.dimension_semantics<parallel>, #tpu.dimension_semantics<arbitrary>], iteration_bounds = array<i64: 1, 1, 1>, scalar_prefetch = 0 : i64, scratch_operands = 1 : i64, tpu.core_type = #tpu.core_type<tc>, window_params = [{transform_indices = @transform_0, window_bounds = array<i64: 16, 32>}, {pipeline_mode = #tpu.pipeline_mode<synchronous>, transform_indices = @transform_1, window_bounds = array<i64: 1, 32>}, {pipeline_mode = #tpu.pipeline_mode<synchronous>, transform_indices = @transform_2, window_bounds = array<i64: 1, 32>}, {transform_indices = @transform_3, window_bounds = array<i64: 32, 64>}, {transform_indices = @transform_4, window_bounds = array<i64: 1, 64>}, {transform_indices = @transform_5, window_bounds = array<i64: 16, 64>}]} {
    %c0_i32 = arith.constant 0 : i32
    %0 = arith.cmpi eq, %arg2, %c0_i32 : i32
    %1 = arith.extui %0 : i1 to i32
    %c0_i32_0 = arith.constant 0 : i32
    %2 = arith.cmpi ne, %1, %c0_i32_0 : i32
    scf.if %2 {
      %cst_19 = arith.constant 0.000000e+00 : f32
      %34 = vector.broadcast %cst_19 : f32 to vector<16x64xf32>
      %c0_20 = arith.constant 0 : index
      %c0_21 = arith.constant 0 : index
      %35 = vector.load %arg9[%c0_20, %c0_21] : memref<16x64xf32, #tpu.memory_space<vmem>>, vector<16x64xf32>
      tpu.vector_store %arg9[%c0_20, %c0_21], %34 {strides = array<i32>} : memref<16x64xf32, #tpu.memory_space<vmem>>, vector<16x64xf32>,
    } else {
    }
    %c0 = arith.constant 0 : index
    %c0_1 = arith.constant 0 : index
    %3 = vector.load %arg3[%c0, %c0_1] : memref<16x32xf32, #tpu.memory_space<vmem>>, vector<16x32xf32>
    %cst = arith.constant dense<0.000000e+00> : vector<16xf32>
    %4 = vector.multi_reduction <add>, %3, %cst [1] : vector<16x32xf32> to vector<16xf32>
    %5 = vector.shape_cast %4 : vector<16xf32> to vector<16x1xf32>
    %cst_2 = arith.constant 3.200000e+01 : f32
    %6 = vector.broadcast %cst_2 : f32 to vector<16x1xf32>
    %7 = arith.divf %5, %6 : vector<16x1xf32>
    %8 = vector.broadcast %7 : vector<16x1xf32> to vector<16x32xf32>
    %9 = arith.subf %3, %8 : vector<16x32xf32>
    %10 = arith.mulf %9, %9 : vector<16x32xf32>
    %cst_3 = arith.constant dense<0.000000e+00> : vector<16xf32>
    %11 = vector.multi_reduction <add>, %10, %cst_3 [1] : vector<16x32xf32> to vector<16xf32>
    %12 = vector.shape_cast %11 : vector<16xf32> to vector<16x1xf32>
    %cst_4 = arith.constant 3.200000e+01 : f32
    %13 = vector.broadcast %cst_4 : f32 to vector<16x1xf32>
    %14 = arith.divf %12, %13 : vector<16x1xf32>
    %cst_5 = arith.constant 9.99999974E-6 : f32
    %15 = vector.broadcast %cst_5 : f32 to vector<16x1xf32>
    %16 = arith.addf %14, %15 : vector<16x1xf32>
    %17 = math.rsqrt %16 : vector<16x1xf32>
    %18 = vector.broadcast %17 : vector<16x1xf32> to vector<16x32xf32>
    %19 = arith.mulf %9, %18 : vector<16x32xf32>
    %c0_6 = arith.constant 0 : index
    %c0_7 = arith.constant 0 : index
    %20 = vector.load %arg4[%c0_6, %c0_7] : memref<1x32xf32, #tpu.memory_space<vmem>>, vector<1x32xf32>
    %21 = vector.broadcast %20 : vector<1x32xf32> to vector<16x32xf32>
    %22 = arith.mulf %19, %21 : vector<16x32xf32>
    %c0_8 = arith.constant 0 : index
    %c0_9 = arith.constant 0 : index
    %23 = vector.load %arg5[%c0_8, %c0_9] : memref<1x32xf32, #tpu.memory_space<vmem>>, vector<1x32xf32>
    %24 = vector.broadcast %23 : vector<1x32xf32> to vector<16x32xf32>
    %25 = arith.addf %22, %24 : vector<16x32xf32>
    %c0_10 = arith.constant 0 : index
    %c0_11 = arith.constant 0 : index
    %26 = vector.load %arg9[%c0_10, %c0_11] : memref<16x64xf32, #tpu.memory_space<vmem>>, vector<16x64xf32>
    %c0_12 = arith.constant 0 : index
    %c0_13 = arith.constant 0 : index
    %27 = vector.load %arg6[%c0_12, %c0_13] : memref<32x64xf32, #tpu.memory_space<vmem>>, vector<32x64xf32>
    %cst_14 = arith.constant dense<0.000000e+00> : vector<16x64xf32>
    %28 = tpu.matmul %25, %27, %cst_14 {dimension_numbers = #tpu.dot_dimension_numbers<[1], [0], [0], [1], [0, 0, 1, 1], [], []>} : vector<16x32xf32>, vector<32x64xf32>, vector<16x64xf32> -> vector<16x64xf32>
    %29 = arith.addf %26, %28 : vector<16x64xf32>
    %c0_15 = arith.constant 0 : index
    %c0_16 = arith.constant 0 : index
    %30 = vector.load %arg9[%c0_15, %c0_16] : memref<16x64xf32, #tpu.memory_space<vmem>>, vector<16x64xf32>
    tpu.vector_store %arg9[%c0_15, %c0_16], %29 {strides = array<i32>} : memref<16x64xf32, #tpu.memory_space<vmem>>, vector<16x64xf32>,
    %c0_i32_17 = arith.constant 0 : i32
    %31 = arith.cmpi eq, %arg2, %c0_i32_17 : i32
    %32 = arith.extui %31 : i1 to i32
    %c0_i32_18 = arith.constant 0 : i32
    %33 = arith.cmpi ne, %32, %c0_i32_18 : i32
    scf.if %33 {
      %c0_19 = arith.constant 0 : index
      %c0_20 = arith.constant 0 : index
      %34 = vector.load %arg9[%c0_19, %c0_20] : memref<16x64xf32, #tpu.memory_space<vmem>>, vector<16x64xf32>
      %c0_21 = arith.constant 0 : index
      %c0_22 = arith.constant 0 : index
      %35 = vector.load %arg7[%c0_21, %c0_22] : memref<1x64xf32, #tpu.memory_space<vmem>>, vector<1x64xf32>
      %36 = vector.broadcast %35 : vector<1x64xf32> to vector<16x64xf32>
      %37 = arith.addf %34, %36 : vector<16x64xf32>
      %c0_23 = arith.constant 0 : index
      %c0_24 = arith.constant 0 : index
      %38 = vector.load %arg8[%c0_23, %c0_24] : memref<16x64xf32, #tpu.memory_space<vmem>>, vector<16x64xf32>
      tpu.vector_store %arg8[%c0_23, %c0_24], %37 {strides = array<i32>} : memref<16x64xf32, #tpu.memory_space<vmem>>, vector<16x64xf32>,
    } else {
    }
    return
  }
  func.func @transform_0(%arg0: i32, %arg1: i32, %arg2: i32) -> (i32, i32) {
    %c0_i32 = arith.constant 0 : i32
    return %arg0, %arg2 : i32, i32
  }
  func.func @transform_1(%arg0: i32, %arg1: i32, %arg2: i32) -> (i32, i32) {
    %c0_i32 = arith.constant 0 : i32
    %c0_i32_0 = arith.constant 0 : i32
    %c0_i32_1 = arith.constant 0 : i32
    return %c0_i32, %c0_i32_0 : i32, i32
  }
  func.func @transform_2(%arg0: i32, %arg1: i32, %arg2: i32) -> (i32, i32) {
    %c0_i32 = arith.constant 0 : i32
    %c0_i32_0 = arith.constant 0 : i32
    %c0_i32_1 = arith.constant 0 : i32
    return %c0_i32, %c0_i32_0 : i32, i32
  }
  func.func @transform_3(%arg0: i32, %arg1: i32, %arg2: i32) -> (i32, i32) {
    %c0_i32 = arith.constant 0 : i32
    return %arg2, %arg1 : i32, i32
  }
  func.func @transform_4(%arg0: i32, %arg1: i32, %arg2: i32) -> (i32, i32) {
    %c0_i32 = arith.constant 0 : i32
    %c0_i32_0 = arith.constant 0 : i32
    return %c0_i32, %arg1 : i32, i32
  }
  func.func @transform_5(%arg0: i32, %arg1: i32, %arg2: i32) -> (i32, i32) {
    %c0_i32 = arith.constant 0 : i32
    return %arg0, %arg1 : i32, i32
  }
}

module attributes {stable_mosaic.version = 11 : i64} {
  func.func @kernel(%arg0: i32, %arg1: i32, %arg2: i32, %arg3: memref<16x32xf32, #tpu.memory_space<vmem>>, %arg4: memref<32x32xf32, #tpu.memory_space<vmem>>, %arg5: memref<1x32xf32, #tpu.memory_space<vmem>>, %arg6: memref<16x32xf32, #tpu.memory_space<vmem>>, %arg7: memref<16x32xf32, #tpu.memory_space<vmem>>, %arg8: memref<16x32xf32, #tpu.memory_space<vmem>>) attributes {dimension_semantics = [#tpu.dimension_semantics<parallel>, #tpu.dimension_semantics<parallel>, #tpu.dimension_semantics<arbitrary>], iteration_bounds = array<i64: 1, 1, 1>, scalar_prefetch = 0 : i64, scratch_operands = 1 : i64, tpu.core_type = #tpu.core_type<tc>, window_params = [{transform_indices = @transform_0, window_bounds = array<i64: 16, 32>}, {transform_indices = @transform_1, window_bounds = array<i64: 32, 32>}, {transform_indices = @transform_2, window_bounds = array<i64: 1, 32>}, {transform_indices = @transform_3, window_bounds = array<i64: 16, 32>}, {transform_indices = @transform_4, window_bounds = array<i64: 16, 32>}]} {
    %c0_i32 = arith.constant 0 : i32
    %0 = arith.cmpi eq, %arg2, %c0_i32 : i32
    %1 = arith.extui %0 : i1 to i32
    %c0_i32_0 = arith.constant 0 : i32
    %2 = arith.cmpi ne, %1, %c0_i32_0 : i32
    scf.if %2 {
      %cst_10 = arith.constant 0.000000e+00 : f32
      %12 = vector.broadcast %cst_10 : f32 to vector<16x32xf32>
      %c0_11 = arith.constant 0 : index
      %c0_12 = arith.constant 0 : index
      %13 = vector.load %arg8[%c0_11, %c0_12] : memref<16x32xf32, #tpu.memory_space<vmem>>, vector<16x32xf32>
      tpu.vector_store %arg8[%c0_11, %c0_12], %12 {strides = array<i32>} : memref<16x32xf32, #tpu.memory_space<vmem>>, vector<16x32xf32>,
    } else {
    }
    %c0 = arith.constant 0 : index
    %c0_1 = arith.constant 0 : index
    %3 = vector.load %arg3[%c0, %c0_1] : memref<16x32xf32, #tpu.memory_space<vmem>>, vector<16x32xf32>
    %c0_2 = arith.constant 0 : index
    %c0_3 = arith.constant 0 : index
    %4 = vector.load %arg8[%c0_2, %c0_3] : memref<16x32xf32, #tpu.memory_space<vmem>>, vector<16x32xf32>
    %c0_4 = arith.constant 0 : index
    %c0_5 = arith.constant 0 : index
    %5 = vector.load %arg4[%c0_4, %c0_5] : memref<32x32xf32, #tpu.memory_space<vmem>>, vector<32x32xf32>
    %cst = arith.constant dense<0.000000e+00> : vector<16x32xf32>
    %6 = tpu.matmul %3, %5, %cst {dimension_numbers = #tpu.dot_dimension_numbers<[1], [0], [0], [1], [0, 0, 1, 1], [], []>} : vector<16x32xf32>, vector<32x32xf32>, vector<16x32xf32> -> vector<16x32xf32>
    %7 = arith.addf %4, %6 : vector<16x32xf32>
    %c0_6 = arith.constant 0 : index
    %c0_7 = arith.constant 0 : index
    %8 = vector.load %arg8[%c0_6, %c0_7] : memref<16x32xf32, #tpu.memory_space<vmem>>, vector<16x32xf32>
    tpu.vector_store %arg8[%c0_6, %c0_7], %7 {strides = array<i32>} : memref<16x32xf32, #tpu.memory_space<vmem>>, vector<16x32xf32>,
    %c0_i32_8 = arith.constant 0 : i32
    %9 = arith.cmpi eq, %arg2, %c0_i32_8 : i32
    %10 = arith.extui %9 : i1 to i32
    %c0_i32_9 = arith.constant 0 : i32
    %11 = arith.cmpi ne, %10, %c0_i32_9 : i32
    scf.if %11 {
      %c0_10 = arith.constant 0 : index
      %c0_11 = arith.constant 0 : index
      %12 = vector.load %arg8[%c0_10, %c0_11] : memref<16x32xf32, #tpu.memory_space<vmem>>, vector<16x32xf32>
      %c0_12 = arith.constant 0 : index
      %c0_13 = arith.constant 0 : index
      %13 = vector.load %arg5[%c0_12, %c0_13] : memref<1x32xf32, #tpu.memory_space<vmem>>, vector<1x32xf32>
      %14 = vector.broadcast %13 : vector<1x32xf32> to vector<16x32xf32>
      %15 = arith.addf %12, %14 : vector<16x32xf32>
      %c0_14 = arith.constant 0 : index
      %c0_15 = arith.constant 0 : index
      %16 = vector.load %arg6[%c0_14, %c0_15] : memref<16x32xf32, #tpu.memory_space<vmem>>, vector<16x32xf32>
      %17 = arith.addf %15, %16 : vector<16x32xf32>
      %c0_16 = arith.constant 0 : index
      %c0_17 = arith.constant 0 : index
      %18 = vector.load %arg7[%c0_16, %c0_17] : memref<16x32xf32, #tpu.memory_space<vmem>>, vector<16x32xf32>
      tpu.vector_store %arg7[%c0_16, %c0_17], %17 {strides = array<i32>} : memref<16x32xf32, #tpu.memory_space<vmem>>, vector<16x32xf32>,
    } else {
    }
    return
  }
  func.func @transform_0(%arg0: i32, %arg1: i32, %arg2: i32) -> (i32, i32) {
    %c0_i32 = arith.constant 0 : i32
    return %arg0, %arg2 : i32, i32
  }
  func.func @transform_1(%arg0: i32, %arg1: i32, %arg2: i32) -> (i32, i32) {
    %c0_i32 = arith.constant 0 : i32
    return %arg2, %arg1 : i32, i32
  }
  func.func @transform_2(%arg0: i32, %arg1: i32, %arg2: i32) -> (i32, i32) {
    %c0_i32 = arith.constant 0 : i32
    %c0_i32_0 = arith.constant 0 : i32
    return %c0_i32, %arg1 : i32, i32
  }
  func.func @transform_3(%arg0: i32, %arg1: i32, %arg2: i32) -> (i32, i32) {
    %c0_i32 = arith.constant 0 : i32
    return %arg0, %arg1 : i32, i32
  }
  func.func @transform_4(%arg0: i32, %arg1: i32, %arg2: i32) -> (i32, i32) {
    %c0_i32 = arith.constant 0 : i32
    return %arg0, %arg1 : i32, i32
  }
}

module attributes {stable_mosaic.version = 11 : i64} {
  func.func @kernel(%arg0: i32, %arg1: i32, %arg2: memref<1x8x32xf32, #tpu.memory_space<vmem>>, %arg3: memref<1x8x64xf32, #tpu.memory_space<vmem>>, %arg4: memref<1x8x32xf32, #tpu.memory_space<vmem>>) attributes {dimension_semantics = [#tpu.dimension_semantics<parallel>, #tpu.dimension_semantics<parallel>], iteration_bounds = array<i64: 2, 1>, scalar_prefetch = 0 : i64, scratch_operands = 0 : i64, tpu.core_type = #tpu.core_type<tc>, window_params = [{transform_indices = @transform_0, window_bounds = array<i64: 1, 8, 32>}, {transform_indices = @transform_1, window_bounds = array<i64: 1, 8, 64>}, {transform_indices = @transform_2, window_bounds = array<i64: 1, 8, 32>}]} {
    %c0 = arith.constant 0 : index
    %c0_0 = arith.constant 0 : index
    %c0_1 = arith.constant 0 : index
    %0 = vector.load %arg2[%c0, %c0_0, %c0_1] : memref<1x8x32xf32, #tpu.memory_space<vmem>>, vector<1x8x32xf32>
    %1 = vector.shape_cast %0 : vector<1x8x32xf32> to vector<8x32xf32>
    %cst = arith.constant 0.353553385 : f32
    %2 = vector.broadcast %cst : f32 to vector<8x32xf32>
    %3 = arith.mulf %1, %2 : vector<8x32xf32>
    %c0_2 = arith.constant 0 : index
    %c0_3 = arith.constant 0 : index
    %c0_4 = arith.constant 0 : index
    %4 = vector.load %arg3[%c0_2, %c0_3, %c0_4] : memref<1x8x64xf32, #tpu.memory_space<vmem>>, vector<1x8x64xf32>
    %5 = vector.shape_cast %4 : vector<1x8x64xf32> to vector<8x64xf32>
    %6 = vector.shape_cast %3 : vector<8x32xf32> to vector<8x4x8xf32>
    %7 = tpu.transpose %6, [1, 0, 2] : vector<8x4x8xf32> -> vector<4x8x8xf32>
    %8 = vector.extract_strided_slice %5 {offsets = [0, 0], sizes = [8, 32], strides = [1, 1]} : vector<8x64xf32> to vector<8x32xf32>
    %9 = vector.shape_cast %8 : vector<8x32xf32> to vector<8x4x8xf32>
    %10 = tpu.transpose %9, [1, 0, 2] : vector<8x4x8xf32> -> vector<4x8x8xf32>
    %11 = vector.extract_strided_slice %5 {offsets = [0, 32], sizes = [8, 32], strides = [1, 1]} : vector<8x64xf32> to vector<8x32xf32>
    %12 = vector.shape_cast %11 : vector<8x32xf32> to vector<8x4x8xf32>
    %13 = tpu.transpose %12, [1, 0, 2] : vector<8x4x8xf32> -> vector<4x8x8xf32>
    "tpu.trace_start"() <{level = 10 : i32, message = "hqd,hkd->hqk"}> : () -> ()
    %cst_5 = arith.constant dense<0.000000e+00> : vector<4x8x8xf32>
    %14 = tpu.matmul %7, %10, %cst_5 {dimension_numbers = #tpu.dot_dimension_numbers<[2], [2], [1], [1], [0, 0, 0, 1, 1, 1], [0], [0]>} : vector<4x8x8xf32>, vector<4x8x8xf32>, vector<4x8x8xf32> -> vector<4x8x8xf32>
    "tpu.trace_stop"() : () -> ()
    %c8_i32 = arith.constant 8 : i32
    %15 = arith.muli %arg1, %c8_i32 : i32
    %16 = tpu.iota {dimensions = array<i32: 1>} : vector<1x8x8xi32>
    %17 = vector.broadcast %15 : i32 to vector<1x8x8xi32>
    %18 = arith.addi %16, %17 : vector<1x8x8xi32>
    %19 = tpu.iota {dimensions = array<i32: 2>} : vector<1x8x8xi32>
    %20 = arith.cmpi sle, %19, %18 : vector<1x8x8xi32>
    %cst_6 = arith.constant -1.000000e+30 : f32
    %21 = vector.shape_cast %20 : vector<1x8x8xi1> to vector<1x8x8xi1>
    %22 = vector.broadcast %21 : vector<1x8x8xi1> to vector<4x8x8xi1>
    %23 = vector.broadcast %cst_6 : f32 to vector<4x8x8xf32>
    %24 = arith.select %22, %14, %23 : vector<4x8x8xi1>, vector<4x8x8xf32>
    %cst_7 = arith.constant dense<0xFF800000> : vector<4x8xf32>
    %25 = vector.multi_reduction <maximumf>, %24, %cst_7 [2] : vector<4x8x8xf32> to vector<4x8xf32>
    %26 = vector.shape_cast %25 : vector<4x8xf32> to vector<4x8x1xf32>
    %27 = vector.broadcast %26 : vector<4x8x1xf32> to vector<4x8x8xf32>
    %28 = arith.subf %24, %27 : vector<4x8x8xf32>
    %29 = math.exp %28 : vector<4x8x8xf32>
    %cst_8 = arith.constant dense<0.000000e+00> : vector<4x8xf32>
    %30 = vector.multi_reduction <add>, %29, %cst_8 [2] : vector<4x8x8xf32> to vector<4x8xf32>
    %31 = vector.shape_cast %30 : vector<4x8xf32> to vector<4x8x1xf32>
    %32 = tpu.reciprocal %31 {approx = true} : vector<4x8x1xf32> -> vector<4x8x1xf32>
    %33 = vector.broadcast %32 : vector<4x8x1xf32> to vector<4x8x8xf32>
    %34 = arith.mulf %29, %33 : vector<4x8x8xf32>
    "tpu.trace_start"() <{level = 10 : i32, message = "hqk,hkd->hqd"}> : () -> ()
    %cst_9 = arith.constant dense<0.000000e+00> : vector<4x8x8xf32>
    %35 = tpu.matmul %34, %13, %cst_9 {dimension_numbers = #tpu.dot_dimension_numbers<[2], [1], [1], [2], [0, 0, 0, 1, 1, 2], [0], [0]>} : vector<4x8x8xf32>, vector<4x8x8xf32>, vector<4x8x8xf32> -> vector<4x8x8xf32>
    "tpu.trace_stop"() : () -> ()
    %36 = tpu.transpose %35, [1, 0, 2] : vector<4x8x8xf32> -> vector<8x4x8xf32>
    %37 = vector.shape_cast %36 : vector<8x4x8xf32> to vector<8x32xf32>
    %c0_10 = arith.constant 0 : index
    %c0_11 = arith.constant 0 : index
    %c0_12 = arith.constant 0 : index
    %38 = vector.load %arg4[%c0_10, %c0_11, %c0_12] : memref<1x8x32xf32, #tpu.memory_space<vmem>>, vector<1x8x32xf32>
    %39 = vector.shape_cast %38 : vector<1x8x32xf32> to vector<8x32xf32>
    %40 = vector.shape_cast %37 : vector<8x32xf32> to vector<1x8x32xf32>
    tpu.vector_store %arg4[%c0_10, %c0_11, %c0_12], %40 {strides = array<i32>} : memref<1x8x32xf32, #tpu.memory_space<vmem>>, vector<1x8x32xf32>,
    return
  }
  func.func @transform_0(%arg0: i32, %arg1: i32) -> (i32, i32, i32) {
    %c0_i32 = arith.constant 0 : i32
    %c0_i32_0 = arith.constant 0 : i32
    return %arg0, %arg1, %c0_i32 : i32, i32, i32
  }
  func.func @transform_1(%arg0: i32, %arg1: i32) -> (i32, i32, i32) {
    %c0_i32 = arith.constant 0 : i32
    %c0_i32_0 = arith.constant 0 : i32
    %c0_i32_1 = arith.constant 0 : i32
    return %arg0, %c0_i32, %c0_i32_0 : i32, i32, i32
  }
  func.func @transform_2(%arg0: i32, %arg1: i32) -> (i32, i32, i32) {
    %c0_i32 = arith.constant 0 : i32
    %c0_i32_0 = arith.constant 0 : i32
    return %arg0, %arg1, %c0_i32 : i32, i32, i32
  }
}

module attributes {stable_mosaic.version = 11 : i64} {
  func.func @kernel(%arg0: i32, %arg1: i32, %arg2: i32, %arg3: memref<16x32xf32, #tpu.memory_space<vmem>>, %arg4: memref<1x32xf32, #tpu.memory_space<vmem>>, %arg5: memref<1x32xf32, #tpu.memory_space<vmem>>, %arg6: memref<32x128xf32, #tpu.memory_space<vmem>>, %arg7: memref<1x128xf32, #tpu.memory_space<vmem>>, %arg8: memref<16x128xf32, #tpu.memory_space<vmem>>, %arg9: memref<16x128xf32, #tpu.memory_space<vmem>>) attributes {dimension_semantics = [#tpu.dimension_semantics<parallel>, #tpu.dimension_semantics<parallel>, #tpu.dimension_semantics<arbitrary>], iteration_bounds = array<i64: 1, 1, 1>, scalar_prefetch = 0 : i64, scratch_operands = 1 : i64, tpu.core_type = #tpu.core_type<tc>, window_params = [{transform_indices = @transform_0, window_bounds = array<i64: 16, 32>}, {pipeline_mode = #tpu.pipeline_mode<synchronous>, transform_indices = @transform_1, window_bounds = array<i64: 1, 32>}, {pipeline_mode = #tpu.pipeline_mode<synchronous>, transform_indices = @transform_2, window_bounds = array<i64: 1, 32>}, {transform_indices = @transform_3, window_bounds = array<i64: 32, 128>}, {transform_indices = @transform_4, window_bounds = array<i64: 1, 128>}, {transform_indices = @transform_5, window_bounds = array<i64: 16, 128>}]} {
    %c0_i32 = arith.constant 0 : i32
    %0 = arith.cmpi eq, %arg2, %c0_i32 : i32
    %1 = arith.extui %0 : i1 to i32
    %c0_i32_0 = arith.constant 0 : i32
    %2 = arith.cmpi ne, %1, %c0_i32_0 : i32
    scf.if %2 {
      %cst_19 = arith.constant 0.000000e+00 : f32
      %34 = vector.broadcast %cst_19 : f32 to vector<16x128xf32>
      %c0_20 = arith.constant 0 : index
      %c0_21 = arith.constant 0 : index
      %35 = vector.load %arg9[%c0_20, %c0_21] : memref<16x128xf32, #tpu.memory_space<vmem>>, vector<16x128xf32>
      tpu.vector_store %arg9[%c0_20, %c0_21], %34 {strides = array<i32>} : memref<16x128xf32, #tpu.memory_space<vmem>>, vector<16x128xf32>,
    } else {
    }
    %c0 = arith.constant 0 : index
    %c0_1 = arith.constant 0 : index
    %3 = vector.load %arg3[%c0, %c0_1] : memref<16x32xf32, #tpu.memory_space<vmem>>, vector<16x32xf32>
    %cst = arith.constant dense<0.000000e+00> : vector<16xf32>
    %4 = vector.multi_reduction <add>, %3, %cst [1] : vector<16x32xf32> to vector<16xf32>
    %5 = vector.shape_cast %4 : vector<16xf32> to vector<16x1xf32>
    %cst_2 = arith.constant 3.200000e+01 : f32
    %6 = vector.broadcast %cst_2 : f32 to vector<16x1xf32>
    %7 = arith.divf %5, %6 : vector<16x1xf32>
    %8 = vector.broadcast %7 : vector<16x1xf32> to vector<16x32xf32>
    %9 = arith.subf %3, %8 : vector<16x32xf32>
    %10 = arith.mulf %9, %9 : vector<16x32xf32>
    %cst_3 = arith.constant dense<0.000000e+00> : vector<16xf32>
    %11 = vector.multi_reduction <add>, %10, %cst_3 [1] : vector<16x32xf32> to vector<16xf32>
    %12 = vector.shape_cast %11 : vector<16xf32> to vector<16x1xf32>
    %cst_4 = arith.constant 3.200000e+01 : f32
    %13 = vector.broadcast %cst_4 : f32 to vector<16x1xf32>
    %14 = arith.divf %12, %13 : vector<16x1xf32>
    %cst_5 = arith.constant 9.99999974E-6 : f32
    %15 = vector.broadcast %cst_5 : f32 to vector<16x1xf32>
    %16 = arith.addf %14, %15 : vector<16x1xf32>
    %17 = math.rsqrt %16 : vector<16x1xf32>
    %18 = vector.broadcast %17 : vector<16x1xf32> to vector<16x32xf32>
    %19 = arith.mulf %9, %18 : vector<16x32xf32>
    %c0_6 = arith.constant 0 : index
    %c0_7 = arith.constant 0 : index
    %20 = vector.load %arg4[%c0_6, %c0_7] : memref<1x32xf32, #tpu.memory_space<vmem>>, vector<1x32xf32>
    %21 = vector.broadcast %20 : vector<1x32xf32> to vector<16x32xf32>
    %22 = arith.mulf %19, %21 : vector<16x32xf32>
    %c0_8 = arith.constant 0 : index
    %c0_9 = arith.constant 0 : index
    %23 = vector.load %arg5[%c0_8, %c0_9] : memref<1x32xf32, #tpu.memory_space<vmem>>, vector<1x32xf32>
    %24 = vector.broadcast %23 : vector<1x32xf32> to vector<16x32xf32>
    %25 = arith.addf %22, %24 : vector<16x32xf32>
    %c0_10 = arith.constant 0 : index
    %c0_11 = arith.constant 0 : index
    %26 = vector.load %arg9[%c0_10, %c0_11] : memref<16x128xf32, #tpu.memory_space<vmem>>, vector<16x128xf32>
    %c0_12 = arith.constant 0 : index
    %c0_13 = arith.constant 0 : index
    %27 = vector.load %arg6[%c0_12, %c0_13] : memref<32x128xf32, #tpu.memory_space<vmem>>, vector<32x128xf32>
    %cst_14 = arith.constant dense<0.000000e+00> : vector<16x128xf32>
    %28 = tpu.matmul %25, %27, %cst_14 {dimension_numbers = #tpu.dot_dimension_numbers<[1], [0], [0], [1], [0, 0, 1, 1], [], []>} : vector<16x32xf32>, vector<32x128xf32>, vector<16x128xf32> -> vector<16x128xf32>
    %29 = arith.addf %26, %28 : vector<16x128xf32>
    %c0_15 = arith.constant 0 : index
    %c0_16 = arith.constant 0 : index
    %30 = vector.load %arg9[%c0_15, %c0_16] : memref<16x128xf32, #tpu.memory_space<vmem>>, vector<16x128xf32>
    tpu.vector_store %arg9[%c0_15, %c0_16], %29 {strides = array<i32>} : memref<16x128xf32, #tpu.memory_space<vmem>>, vector<16x128xf32>,
    %c0_i32_17 = arith.constant 0 : i32
    %31 = arith.cmpi eq, %arg2, %c0_i32_17 : i32
    %32 = arith.extui %31 : i1 to i32
    %c0_i32_18 = arith.constant 0 : i32
    %33 = arith.cmpi ne, %32, %c0_i32_18 : i32
    scf.if %33 {
      %c0_19 = arith.constant 0 : index
      %c0_20 = arith.constant 0 : index
      %34 = vector.load %arg9[%c0_19, %c0_20] : memref<16x128xf32, #tpu.memory_space<vmem>>, vector<16x128xf32>
      %c0_21 = arith.constant 0 : index
      %c0_22 = arith.constant 0 : index
      %35 = vector.load %arg7[%c0_21, %c0_22] : memref<1x128xf32, #tpu.memory_space<vmem>>, vector<1x128xf32>
      %36 = vector.broadcast %35 : vector<1x128xf32> to vector<16x128xf32>
      %37 = arith.addf %34, %36 : vector<16x128xf32>
      %cst_23 = arith.constant 5.000000e-01 : f32
      %38 = vector.broadcast %cst_23 : f32 to vector<16x128xf32>
      %39 = arith.mulf %38, %37 : vector<16x128xf32>
      %cst_24 = arith.constant 0.707106769 : f32
      %40 = vector.broadcast %cst_24 : f32 to vector<16x128xf32>
      %41 = arith.mulf %37, %40 : vector<16x128xf32>
      %42 = math.absf %41 : vector<16x128xf32>
      %cst_25 = arith.constant 0.327591091 : f32
      %43 = vector.broadcast %cst_25 : f32 to vector<16x128xf32>
      %44 = arith.mulf %43, %42 : vector<16x128xf32>
      %cst_26 = arith.constant 1.000000e+00 : f32
      %45 = vector.broadcast %cst_26 : f32 to vector<16x128xf32>
      %46 = arith.addf %45, %44 : vector<16x128xf32>
      %cst_27 = arith.constant 1.000000e+00 : f32
      %47 = vector.broadcast %cst_27 : f32 to vector<16x128xf32>
      %48 = arith.divf %47, %46 : vector<16x128xf32>
      %cst_28 = arith.constant 1.06140542 : f32
      %49 = vector.broadcast %cst_28 : f32 to vector<16x128xf32>
      %50 = arith.mulf %49, %48 : vector<16x128xf32>
      %cst_29 = arith.constant 1.45315206 : f32
      %51 = vector.broadcast %cst_29 : f32 to vector<16x128xf32>
      %52 = arith.subf %50, %51 : vector<16x128xf32>
      %53 = arith.mulf %52, %48 : vector<16x128xf32>
      %cst_30 = arith.constant 1.42141378 : f32
      %54 = vector.broadcast %cst_30 : f32 to vector<16x128xf32>
      %55 = arith.addf %53, %54 : vector<16x128xf32>
      %56 = arith.mulf %55, %48 : vector<16x128xf32>
      %cst_31 = arith.constant 0.284496725 : f32
      %57 = vector.broadcast %cst_31 : f32 to vector<16x128xf32>
      %58 = arith.subf %56, %57 : vector<16x128xf32>
      %59 = arith.mulf %58, %48 : vector<16x128xf32>
      %cst_32 = arith.constant 0.254829586 : f32
      %60 = vector.broadcast %cst_32 : f32 to vector<16x128xf32>
      %61 = arith.addf %59, %60 : vector<16x128xf32>
      %62 = arith.mulf %61, %48 : vector<16x128xf32>
      %cst_33 = arith.constant 0.000000e+00 : f32
      %63 = vector.broadcast %cst_33 : f32 to vector<16x128xf32>
      %64 = arith.subf %63, %42 : vector<16x128xf32>
      %65 = arith.mulf %64, %42 : vector<16x128xf32>
      %66 = math.exp %65 : vector<16x128xf32>
      %67 = arith.mulf %62, %66 : vector<16x128xf32>
      %cst_34 = arith.constant 1.000000e+00 : f32
      %68 = vector.broadcast %cst_34 : f32 to vector<16x128xf32>
      %69 = arith.subf %68, %67 : vector<16x128xf32>
      %cst_35 = arith.constant 0.000000e+00 : f32
      %70 = vector.broadcast %cst_35 : f32 to vector<16x128xf32>
      %71 = arith.cmpf oge, %41, %70 : vector<16x128xf32>
      %cst_36 = arith.constant 0.000000e+00 : f32
      %72 = vector.broadcast %cst_36 : f32 to vector<16x128xf32>
      %73 = arith.subf %72, %69 : vector<16x128xf32>
      %74 = arith.select %71, %69, %73 : vector<16x128xi1>, vector<16x128xf32>
      %cst_37 = arith.constant 1.000000e+00 : f32
      %75 = vector.broadcast %cst_37 : f32 to vector<16x128xf32>
      %76 = arith.addf %75, %74 : vector<16x128xf32>
      %77 = arith.mulf %39, %76 : vector<16x128xf32>
      %c0_38 = arith.constant 0 : index
      %c0_39 = arith.constant 0 : index
      %78 = vector.load %arg8[%c0_38, %c0_39] : memref<16x128xf32, #tpu.memory_space<vmem>>, vector<16x128xf32>
      tpu.vector_store %arg8[%c0_38, %c0_39], %77 {strides = array<i32>} : memref<16x128xf32, #tpu.memory_space<vmem>>, vector<16x128xf32>,
    } else {
    }
    return
  }
  func.func @transform_0(%arg0: i32, %arg1: i32, %arg2: i32) -> (i32, i32) {
    %c0_i32 = arith.constant 0 : i32
    return %arg0, %arg2 : i32, i32
  }
  func.func @transform_1(%arg0: i32, %arg1: i32, %arg2: i32) -> (i32, i32) {
    %c0_i32 = arith.constant 0 : i32
    %c0_i32_0 = arith.constant 0 : i32
    %c0_i32_1 = arith.constant 0 : i32
    return %c0_i32, %c0_i32_0 : i32, i32
  }
  func.func @transform_2(%arg0: i32, %arg1: i32, %arg2: i32) -> (i32, i32) {
    %c0_i32 = arith.constant 0 : i32
    %c0_i32_0 = arith.constant 0 : i32
    %c0_i32_1 = arith.constant 0 : i32
    return %c0_i32, %c0_i32_0 : i32, i32
  }
  func.func @transform_3(%arg0: i32, %arg1: i32, %arg2: i32) -> (i32, i32) {
    %c0_i32 = arith.constant 0 : i32
    return %arg2, %arg1 : i32, i32
  }
  func.func @transform_4(%arg0: i32, %arg1: i32, %arg2: i32) -> (i32, i32) {
    %c0_i32 = arith.constant 0 : i32
    %c0_i32_0 = arith.constant 0 : i32
    return %c0_i32, %arg1 : i32, i32
  }
  func.func @transform_5(%arg0: i32, %arg1: i32, %arg2: i32) -> (i32, i32) {
    %c0_i32 = arith.constant 0 : i32
    return %arg0, %arg1 : i32, i32
  }
}

module attributes {stable_mosaic.version = 11 : i64} {
  func.func @kernel(%arg0: i32, %arg1: i32, %arg2: i32, %arg3: memref<16x128xf32, #tpu.memory_space<vmem>>, %arg4: memref<128x32xf32, #tpu.memory_space<vmem>>, %arg5: memref<1x32xf32, #tpu.memory_space<vmem>>, %arg6: memref<16x32xf32, #tpu.memory_space<vmem>>, %arg7: memref<16x32xf32, #tpu.memory_space<vmem>>, %arg8: memref<16x32xf32, #tpu.memory_space<vmem>>) attributes {dimension_semantics = [#tpu.dimension_semantics<parallel>, #tpu.dimension_semantics<parallel>, #tpu.dimension_semantics<arbitrary>], iteration_bounds = array<i64: 1, 1, 1>, scalar_prefetch = 0 : i64, scratch_operands = 1 : i64, tpu.core_type = #tpu.core_type<tc>, window_params = [{transform_indices = @transform_0, window_bounds = array<i64: 16, 128>}, {transform_indices = @transform_1, window_bounds = array<i64: 128, 32>}, {transform_indices = @transform_2, window_bounds = array<i64: 1, 32>}, {transform_indices = @transform_3, window_bounds = array<i64: 16, 32>}, {transform_indices = @transform_4, window_bounds = array<i64: 16, 32>}]} {
    %c0_i32 = arith.constant 0 : i32
    %0 = arith.cmpi eq, %arg2, %c0_i32 : i32
    %1 = arith.extui %0 : i1 to i32
    %c0_i32_0 = arith.constant 0 : i32
    %2 = arith.cmpi ne, %1, %c0_i32_0 : i32
    scf.if %2 {
      %cst_10 = arith.constant 0.000000e+00 : f32
      %12 = vector.broadcast %cst_10 : f32 to vector<16x32xf32>
      %c0_11 = arith.constant 0 : index
      %c0_12 = arith.constant 0 : index
      %13 = vector.load %arg8[%c0_11, %c0_12] : memref<16x32xf32, #tpu.memory_space<vmem>>, vector<16x32xf32>
      tpu.vector_store %arg8[%c0_11, %c0_12], %12 {strides = array<i32>} : memref<16x32xf32, #tpu.memory_space<vmem>>, vector<16x32xf32>,
    } else {
    }
    %c0 = arith.constant 0 : index
    %c0_1 = arith.constant 0 : index
    %3 = vector.load %arg3[%c0, %c0_1] : memref<16x128xf32, #tpu.memory_space<vmem>>, vector<16x128xf32>
    %c0_2 = arith.constant 0 : index
    %c0_3 = arith.constant 0 : index
    %4 = vector.load %arg8[%c0_2, %c0_3] : memref<16x32xf32, #tpu.memory_space<vmem>>, vector<16x32xf32>
    %c0_4 = arith.constant 0 : index
    %c0_5 = arith.constant 0 : index
    %5 = vector.load %arg4[%c0_4, %c0_5] : memref<128x32xf32, #tpu.memory_space<vmem>>, vector<128x32xf32>
    %cst = arith.constant dense<0.000000e+00> : vector<16x32xf32>
    %6 = tpu.matmul %3, %5, %cst {dimension_numbers = #tpu.dot_dimension_numbers<[1], [0], [0], [1], [0, 0, 1, 1], [], []>} : vector<16x128xf32>, vector<128x32xf32>, vector<16x32xf32> -> vector<16x32xf32>
    %7 = arith.addf %4, %6 : vector<16x32xf32>
    %c0_6 = arith.constant 0 : index
    %c0_7 = arith.constant 0 : index
    %8 = vector.load %arg8[%c0_6, %c0_7] : memref<16x32xf32, #tpu.memory_space<vmem>>, vector<16x32xf32>
    tpu.vector_store %arg8[%c0_6, %c0_7], %7 {strides = array<i32>} : memref<16x32xf32, #tpu.memory_space<vmem>>, vector<16x32xf32>,
    %c0_i32_8 = arith.constant 0 : i32
    %9 = arith.cmpi eq, %arg2, %c0_i32_8 : i32
    %10 = arith.extui %9 : i1 to i32
    %c0_i32_9 = arith.constant 0 : i32
    %11 = arith.cmpi ne, %10, %c0_i32_9 : i32
    scf.if %11 {
      %c0_10 = arith.constant 0 : index
      %c0_11 = arith.constant 0 : index
      %12 = vector.load %arg8[%c0_10, %c0_11] : memref<16x32xf32, #tpu.memory_space<vmem>>, vector<16x32xf32>
      %c0_12 = arith.constant 0 : index
      %c0_13 = arith.constant 0 : index
      %13 = vector.load %arg5[%c0_12, %c0_13] : memref<1x32xf32, #tpu.memory_space<vmem>>, vector<1x32xf32>
      %14 = vector.broadcast %13 : vector<1x32xf32> to vector<16x32xf32>
      %15 = arith.addf %12, %14 : vector<16x32xf32>
      %c0_14 = arith.constant 0 : index
      %c0_15 = arith.constant 0 : index
      %16 = vector.load %arg6[%c0_14, %c0_15] : memref<16x32xf32, #tpu.memory_space<vmem>>, vector<16x32xf32>
      %17 = arith.addf %15, %16 : vector<16x32xf32>
      %c0_16 = arith.constant 0 : index
      %c0_17 = arith.constant 0 : index
      %18 = vector.load %arg7[%c0_16, %c0_17] : memref<16x32xf32, #tpu.memory_space<vmem>>, vector<16x32xf32>
      tpu.vector_store %arg7[%c0_16, %c0_17], %17 {strides = array<i32>} : memref<16x32xf32, #tpu.memory_space<vmem>>, vector<16x32xf32>,
    } else {
    }
    return
  }
  func.func @transform_0(%arg0: i32, %arg1: i32, %arg2: i32) -> (i32, i32) {
    %c0_i32 = arith.constant 0 : i32
    return %arg0, %arg2 : i32, i32
  }
  func.func @transform_1(%arg0: i32, %arg1: i32, %arg2: i32) -> (i32, i32) {
    %c0_i32 = arith.constant 0 : i32
    return %arg2, %arg1 : i32, i32
  }
  func.func @transform_2(%arg0: i32, %arg1: i32, %arg2: i32) -> (i32, i32) {
    %c0_i32 = arith.constant 0 : i32
    %c0_i32_0 = arith.constant 0 : i32
    return %c0_i32, %arg1 : i32, i32
  }
  func.func @transform_3(%arg0: i32, %arg1: i32, %arg2: i32) -> (i32, i32) {
    %c0_i32 = arith.constant 0 : i32
    return %arg0, %arg1 : i32, i32
  }
  func.func @transform_4(%arg0: i32, %arg1: i32, %arg2: i32) -> (i32, i32) {
    %c0_i32 = arith.constant 0 : i32
    return %arg0, %arg1 : i32, i32
  }
}

module attributes {stable_mosaic.version = 11 : i64} {
  func.func @kernel(%arg0: i32, %arg1: i32, %arg2: i32, %arg3: memref<16x32xf32, #tpu.memory_space<vmem>>, %arg4: memref<1x32xf32, #tpu.memory_space<vmem>>, %arg5: memref<1x32xf32, #tpu.memory_space<vmem>>, %arg6: memref<32x32xf32, #tpu.memory_space<vmem>>, %arg7: memref<1x32xf32, #tpu.memory_space<vmem>>, %arg8: memref<16x32xf32, #tpu.memory_space<vmem>>, %arg9: memref<16x32xf32, #tpu.memory_space<vmem>>) attributes {dimension_semantics = [#tpu.dimension_semantics<parallel>, #tpu.dimension_semantics<parallel>, #tpu.dimension_semantics<arbitrary>], iteration_bounds = array<i64: 1, 1, 1>, scalar_prefetch = 0 : i64, scratch_operands = 1 : i64, tpu.core_type = #tpu.core_type<tc>, window_params = [{transform_indices = @transform_0, window_bounds = array<i64: 16, 32>}, {pipeline_mode = #tpu.pipeline_mode<synchronous>, transform_indices = @transform_1, window_bounds = array<i64: 1, 32>}, {pipeline_mode = #tpu.pipeline_mode<synchronous>, transform_indices = @transform_2, window_bounds = array<i64: 1, 32>}, {transform_indices = @transform_3, window_bounds = array<i64: 32, 32>}, {transform_indices = @transform_4, window_bounds = array<i64: 1, 32>}, {transform_indices = @transform_5, window_bounds = array<i64: 16, 32>}]} {
    %c0_i32 = arith.constant 0 : i32
    %0 = arith.cmpi eq, %arg2, %c0_i32 : i32
    %1 = arith.extui %0 : i1 to i32
    %c0_i32_0 = arith.constant 0 : i32
    %2 = arith.cmpi ne, %1, %c0_i32_0 : i32
    scf.if %2 {
      %cst_19 = arith.constant 0.000000e+00 : f32
      %34 = vector.broadcast %cst_19 : f32 to vector<16x32xf32>
      %c0_20 = arith.constant 0 : index
      %c0_21 = arith.constant 0 : index
      %35 = vector.load %arg9[%c0_20, %c0_21] : memref<16x32xf32, #tpu.memory_space<vmem>>, vector<16x32xf32>
      tpu.vector_store %arg9[%c0_20, %c0_21], %34 {strides = array<i32>} : memref<16x32xf32, #tpu.memory_space<vmem>>, vector<16x32xf32>,
    } else {
    }
    %c0 = arith.constant 0 : index
    %c0_1 = arith.constant 0 : index
    %3 = vector.load %arg3[%c0, %c0_1] : memref<16x32xf32, #tpu.memory_space<vmem>>, vector<16x32xf32>
    %cst = arith.constant dense<0.000000e+00> : vector<16xf32>
    %4 = vector.multi_reduction <add>, %3, %cst [1] : vector<16x32xf32> to vector<16xf32>
    %5 = vector.shape_cast %4 : vector<16xf32> to vector<16x1xf32>
    %cst_2 = arith.constant 3.200000e+01 : f32
    %6 = vector.broadcast %cst_2 : f32 to vector<16x1xf32>
    %7 = arith.divf %5, %6 : vector<16x1xf32>
    %8 = vector.broadcast %7 : vector<16x1xf32> to vector<16x32xf32>
    %9 = arith.subf %3, %8 : vector<16x32xf32>
    %10 = arith.mulf %9, %9 : vector<16x32xf32>
    %cst_3 = arith.constant dense<0.000000e+00> : vector<16xf32>
    %11 = vector.multi_reduction <add>, %10, %cst_3 [1] : vector<16x32xf32> to vector<16xf32>
    %12 = vector.shape_cast %11 : vector<16xf32> to vector<16x1xf32>
    %cst_4 = arith.constant 3.200000e+01 : f32
    %13 = vector.broadcast %cst_4 : f32 to vector<16x1xf32>
    %14 = arith.divf %12, %13 : vector<16x1xf32>
    %cst_5 = arith.constant 9.99999974E-6 : f32
    %15 = vector.broadcast %cst_5 : f32 to vector<16x1xf32>
    %16 = arith.addf %14, %15 : vector<16x1xf32>
    %17 = math.rsqrt %16 : vector<16x1xf32>
    %18 = vector.broadcast %17 : vector<16x1xf32> to vector<16x32xf32>
    %19 = arith.mulf %9, %18 : vector<16x32xf32>
    %c0_6 = arith.constant 0 : index
    %c0_7 = arith.constant 0 : index
    %20 = vector.load %arg4[%c0_6, %c0_7] : memref<1x32xf32, #tpu.memory_space<vmem>>, vector<1x32xf32>
    %21 = vector.broadcast %20 : vector<1x32xf32> to vector<16x32xf32>
    %22 = arith.mulf %19, %21 : vector<16x32xf32>
    %c0_8 = arith.constant 0 : index
    %c0_9 = arith.constant 0 : index
    %23 = vector.load %arg5[%c0_8, %c0_9] : memref<1x32xf32, #tpu.memory_space<vmem>>, vector<1x32xf32>
    %24 = vector.broadcast %23 : vector<1x32xf32> to vector<16x32xf32>
    %25 = arith.addf %22, %24 : vector<16x32xf32>
    %c0_10 = arith.constant 0 : index
    %c0_11 = arith.constant 0 : index
    %26 = vector.load %arg9[%c0_10, %c0_11] : memref<16x32xf32, #tpu.memory_space<vmem>>, vector<16x32xf32>
    %c0_12 = arith.constant 0 : index
    %c0_13 = arith.constant 0 : index
    %27 = vector.load %arg6[%c0_12, %c0_13] : memref<32x32xf32, #tpu.memory_space<vmem>>, vector<32x32xf32>
    %cst_14 = arith.constant dense<0.000000e+00> : vector<16x32xf32>
    %28 = tpu.matmul %25, %27, %cst_14 {dimension_numbers = #tpu.dot_dimension_numbers<[1], [0], [0], [1], [0, 0, 1, 1], [], []>} : vector<16x32xf32>, vector<32x32xf32>, vector<16x32xf32> -> vector<16x32xf32>
    %29 = arith.addf %26, %28 : vector<16x32xf32>
    %c0_15 = arith.constant 0 : index
    %c0_16 = arith.constant 0 : index
    %30 = vector.load %arg9[%c0_15, %c0_16] : memref<16x32xf32, #tpu.memory_space<vmem>>, vector<16x32xf32>
    tpu.vector_store %arg9[%c0_15, %c0_16], %29 {strides = array<i32>} : memref<16x32xf32, #tpu.memory_space<vmem>>, vector<16x32xf32>,
    %c0_i32_17 = arith.constant 0 : i32
    %31 = arith.cmpi eq, %arg2, %c0_i32_17 : i32
    %32 = arith.extui %31 : i1 to i32
    %c0_i32_18 = arith.constant 0 : i32
    %33 = arith.cmpi ne, %32, %c0_i32_18 : i32
    scf.if %33 {
      %c0_19 = arith.constant 0 : index
      %c0_20 = arith.constant 0 : index
      %34 = vector.load %arg9[%c0_19, %c0_20] : memref<16x32xf32, #tpu.memory_space<vmem>>, vector<16x32xf32>
      %c0_21 = arith.constant 0 : index
      %c0_22 = arith.constant 0 : index
      %35 = vector.load %arg7[%c0_21, %c0_22] : memref<1x32xf32, #tpu.memory_space<vmem>>, vector<1x32xf32>
      %36 = vector.broadcast %35 : vector<1x32xf32> to vector<16x32xf32>
      %37 = arith.addf %34, %36 : vector<16x32xf32>
      %c0_23 = arith.constant 0 : index
      %c0_24 = arith.constant 0 : index
      %38 = vector.load %arg8[%c0_23, %c0_24] : memref<16x32xf32, #tpu.memory_space<vmem>>, vector<16x32xf32>
      tpu.vector_store %arg8[%c0_23, %c0_24], %37 {strides = array<i32>} : memref<16x32xf32, #tpu.memory_space<vmem>>, vector<16x32xf32>,
    } else {
    }
    return
  }
  func.func @transform_0(%arg0: i32, %arg1: i32, %arg2: i32) -> (i32, i32) {
    %c0_i32 = arith.constant 0 : i32
    return %arg0, %arg2 : i32, i32
  }
  func.func @transform_1(%arg0: i32, %arg1: i32, %arg2: i32) -> (i32, i32) {
    %c0_i32 = arith.constant 0 : i32
    %c0_i32_0 = arith.constant 0 : i32
    %c0_i32_1 = arith.constant 0 : i32
    return %c0_i32, %c0_i32_0 : i32, i32
  }
  func.func @transform_2(%arg0: i32, %arg1: i32, %arg2: i32) -> (i32, i32) {
    %c0_i32 = arith.constant 0 : i32
    %c0_i32_0 = arith.constant 0 : i32
    %c0_i32_1 = arith.constant 0 : i32
    return %c0_i32, %c0_i32_0 : i32, i32
  }
  func.func @transform_3(%arg0: i32, %arg1: i32, %arg2: i32) -> (i32, i32) {
    %c0_i32 = arith.constant 0 : i32
    return %arg2, %arg1 : i32, i32
  }
  func.func @transform_4(%arg0: i32, %arg1: i32, %arg2: i32) -> (i32, i32) {
    %c0_i32 = arith.constant 0 : i32
    %c0_i32_0 = arith.constant 0 : i32
    return %c0_i32, %arg1 : i32, i32
  }
  func.func @transform_5(%arg0: i32, %arg1: i32, %arg2: i32) -> (i32, i32) {
    %c0_i32 = arith.constant 0 : i32
    return %arg0, %arg1 : i32, i32
  }
}

module attributes {stable_mosaic.version = 11 : i64} {
  func.func @kernel(%arg0: i32, %arg1: i32, %arg2: i32, %arg3: memref<32x32xf32, #tpu.memory_space<vmem>>, %arg4: memref<1x32xf32, #tpu.memory_space<vmem>>, %arg5: memref<1x32xf32, #tpu.memory_space<vmem>>, %arg6: memref<32x64xf32, #tpu.memory_space<vmem>>, %arg7: memref<1x64xf32, #tpu.memory_space<vmem>>, %arg8: memref<32x64xf32, #tpu.memory_space<vmem>>, %arg9: memref<32x64xf32, #tpu.memory_space<vmem>>) attributes {dimension_semantics = [#tpu.dimension_semantics<parallel>, #tpu.dimension_semantics<parallel>, #tpu.dimension_semantics<arbitrary>], iteration_bounds = array<i64: 1, 1, 1>, scalar_prefetch = 0 : i64, scratch_operands = 1 : i64, tpu.core_type = #tpu.core_type<tc>, window_params = [{transform_indices = @transform_0, window_bounds = array<i64: 32, 32>}, {pipeline_mode = #tpu.pipeline_mode<synchronous>, transform_indices = @transform_1, window_bounds = array<i64: 1, 32>}, {pipeline_mode = #tpu.pipeline_mode<synchronous>, transform_indices = @transform_2, window_bounds = array<i64: 1, 32>}, {transform_indices = @transform_3, window_bounds = array<i64: 32, 64>}, {transform_indices = @transform_4, window_bounds = array<i64: 1, 64>}, {transform_indices = @transform_5, window_bounds = array<i64: 32, 64>}]} {
    %c0_i32 = arith.constant 0 : i32
    %0 = arith.cmpi eq, %arg2, %c0_i32 : i32
    %1 = arith.extui %0 : i1 to i32
    %c0_i32_0 = arith.constant 0 : i32
    %2 = arith.cmpi ne, %1, %c0_i32_0 : i32
    scf.if %2 {
      %cst_19 = arith.constant 0.000000e+00 : f32
      %34 = vector.broadcast %cst_19 : f32 to vector<32x64xf32>
      %c0_20 = arith.constant 0 : index
      %c0_21 = arith.constant 0 : index
      %35 = vector.load %arg9[%c0_20, %c0_21] : memref<32x64xf32, #tpu.memory_space<vmem>>, vector<32x64xf32>
      tpu.vector_store %arg9[%c0_20, %c0_21], %34 {strides = array<i32>} : memref<32x64xf32, #tpu.memory_space<vmem>>, vector<32x64xf32>,
    } else {
    }
    %c0 = arith.constant 0 : index
    %c0_1 = arith.constant 0 : index
    %3 = vector.load %arg3[%c0, %c0_1] : memref<32x32xf32, #tpu.memory_space<vmem>>, vector<32x32xf32>
    %cst = arith.constant dense<0.000000e+00> : vector<32xf32>
    %4 = vector.multi_reduction <add>, %3, %cst [1] : vector<32x32xf32> to vector<32xf32>
    %5 = vector.shape_cast %4 : vector<32xf32> to vector<32x1xf32>
    %cst_2 = arith.constant 3.200000e+01 : f32
    %6 = vector.broadcast %cst_2 : f32 to vector<32x1xf32>
    %7 = arith.divf %5, %6 : vector<32x1xf32>
    %8 = vector.broadcast %7 : vector<32x1xf32> to vector<32x32xf32>
    %9 = arith.subf %3, %8 : vector<32x32xf32>
    %10 = arith.mulf %9, %9 : vector<32x32xf32>
    %cst_3 = arith.constant dense<0.000000e+00> : vector<32xf32>
    %11 = vector.multi_reduction <add>, %10, %cst_3 [1] : vector<32x32xf32> to vector<32xf32>
    %12 = vector.shape_cast %11 : vector<32xf32> to vector<32x1xf32>
    %cst_4 = arith.constant 3.200000e+01 : f32
    %13 = vector.broadcast %cst_4 : f32 to vector<32x1xf32>
    %14 = arith.divf %12, %13 : vector<32x1xf32>
    %cst_5 = arith.constant 9.99999974E-6 : f32
    %15 = vector.broadcast %cst_5 : f32 to vector<32x1xf32>
    %16 = arith.addf %14, %15 : vector<32x1xf32>
    %17 = math.rsqrt %16 : vector<32x1xf32>
    %18 = vector.broadcast %17 : vector<32x1xf32> to vector<32x32xf32>
    %19 = arith.mulf %9, %18 : vector<32x32xf32>
    %c0_6 = arith.constant 0 : index
    %c0_7 = arith.constant 0 : index
    %20 = vector.load %arg4[%c0_6, %c0_7] : memref<1x32xf32, #tpu.memory_space<vmem>>, vector<1x32xf32>
    %21 = vector.broadcast %20 : vector<1x32xf32> to vector<32x32xf32>
    %22 = arith.mulf %19, %21 : vector<32x32xf32>
    %c0_8 = arith.constant 0 : index
    %c0_9 = arith.constant 0 : index
    %23 = vector.load %arg5[%c0_8, %c0_9] : memref<1x32xf32, #tpu.memory_space<vmem>>, vector<1x32xf32>
    %24 = vector.broadcast %23 : vector<1x32xf32> to vector<32x32xf32>
    %25 = arith.addf %22, %24 : vector<32x32xf32>
    %c0_10 = arith.constant 0 : index
    %c0_11 = arith.constant 0 : index
    %26 = vector.load %arg9[%c0_10, %c0_11] : memref<32x64xf32, #tpu.memory_space<vmem>>, vector<32x64xf32>
    %c0_12 = arith.constant 0 : index
    %c0_13 = arith.constant 0 : index
    %27 = vector.load %arg6[%c0_12, %c0_13] : memref<32x64xf32, #tpu.memory_space<vmem>>, vector<32x64xf32>
    %cst_14 = arith.constant dense<0.000000e+00> : vector<32x64xf32>
    %28 = tpu.matmul %25, %27, %cst_14 {dimension_numbers = #tpu.dot_dimension_numbers<[1], [0], [0], [1], [0, 0, 1, 1], [], []>} : vector<32x32xf32>, vector<32x64xf32>, vector<32x64xf32> -> vector<32x64xf32>
    %29 = arith.addf %26, %28 : vector<32x64xf32>
    %c0_15 = arith.constant 0 : index
    %c0_16 = arith.constant 0 : index
    %30 = vector.load %arg9[%c0_15, %c0_16] : memref<32x64xf32, #tpu.memory_space<vmem>>, vector<32x64xf32>
    tpu.vector_store %arg9[%c0_15, %c0_16], %29 {strides = array<i32>} : memref<32x64xf32, #tpu.memory_space<vmem>>, vector<32x64xf32>,
    %c0_i32_17 = arith.constant 0 : i32
    %31 = arith.cmpi eq, %arg2, %c0_i32_17 : i32
    %32 = arith.extui %31 : i1 to i32
    %c0_i32_18 = arith.constant 0 : i32
    %33 = arith.cmpi ne, %32, %c0_i32_18 : i32
    scf.if %33 {
      %c0_19 = arith.constant 0 : index
      %c0_20 = arith.constant 0 : index
      %34 = vector.load %arg9[%c0_19, %c0_20] : memref<32x64xf32, #tpu.memory_space<vmem>>, vector<32x64xf32>
      %c0_21 = arith.constant 0 : index
      %c0_22 = arith.constant 0 : index
      %35 = vector.load %arg7[%c0_21, %c0_22] : memref<1x64xf32, #tpu.memory_space<vmem>>, vector<1x64xf32>
      %36 = vector.broadcast %35 : vector<1x64xf32> to vector<32x64xf32>
      %37 = arith.addf %34, %36 : vector<32x64xf32>
      %c0_23 = arith.constant 0 : index
      %c0_24 = arith.constant 0 : index
      %38 = vector.load %arg8[%c0_23, %c0_24] : memref<32x64xf32, #tpu.memory_space<vmem>>, vector<32x64xf32>
      tpu.vector_store %arg8[%c0_23, %c0_24], %37 {strides = array<i32>} : memref<32x64xf32, #tpu.memory_space<vmem>>, vector<32x64xf32>,
    } else {
    }
    return
  }
  func.func @transform_0(%arg0: i32, %arg1: i32, %arg2: i32) -> (i32, i32) {
    %c0_i32 = arith.constant 0 : i32
    return %arg0, %arg2 : i32, i32
  }
  func.func @transform_1(%arg0: i32, %arg1: i32, %arg2: i32) -> (i32, i32) {
    %c0_i32 = arith.constant 0 : i32
    %c0_i32_0 = arith.constant 0 : i32
    %c0_i32_1 = arith.constant 0 : i32
    return %c0_i32, %c0_i32_0 : i32, i32
  }
  func.func @transform_2(%arg0: i32, %arg1: i32, %arg2: i32) -> (i32, i32) {
    %c0_i32 = arith.constant 0 : i32
    %c0_i32_0 = arith.constant 0 : i32
    %c0_i32_1 = arith.constant 0 : i32
    return %c0_i32, %c0_i32_0 : i32, i32
  }
  func.func @transform_3(%arg0: i32, %arg1: i32, %arg2: i32) -> (i32, i32) {
    %c0_i32 = arith.constant 0 : i32
    return %arg2, %arg1 : i32, i32
  }
  func.func @transform_4(%arg0: i32, %arg1: i32, %arg2: i32) -> (i32, i32) {
    %c0_i32 = arith.constant 0 : i32
    %c0_i32_0 = arith.constant 0 : i32
    return %c0_i32, %arg1 : i32, i32
  }
  func.func @transform_5(%arg0: i32, %arg1: i32, %arg2: i32) -> (i32, i32) {
    %c0_i32 = arith.constant 0 : i32
    return %arg0, %arg1 : i32, i32
  }
}

module attributes {stable_mosaic.version = 11 : i64} {
  func.func @kernel(%arg0: i32, %arg1: i32, %arg2: i32, %arg3: memref<16x32xf32, #tpu.memory_space<vmem>>, %arg4: memref<32x32xf32, #tpu.memory_space<vmem>>, %arg5: memref<1x32xf32, #tpu.memory_space<vmem>>, %arg6: memref<16x32xf32, #tpu.memory_space<vmem>>, %arg7: memref<16x32xf32, #tpu.memory_space<vmem>>, %arg8: memref<16x32xf32, #tpu.memory_space<vmem>>) attributes {dimension_semantics = [#tpu.dimension_semantics<parallel>, #tpu.dimension_semantics<parallel>, #tpu.dimension_semantics<arbitrary>], iteration_bounds = array<i64: 1, 1, 1>, scalar_prefetch = 0 : i64, scratch_operands = 1 : i64, tpu.core_type = #tpu.core_type<tc>, window_params = [{transform_indices = @transform_0, window_bounds = array<i64: 16, 32>}, {transform_indices = @transform_1, window_bounds = array<i64: 32, 32>}, {transform_indices = @transform_2, window_bounds = array<i64: 1, 32>}, {transform_indices = @transform_3, window_bounds = array<i64: 16, 32>}, {transform_indices = @transform_4, window_bounds = array<i64: 16, 32>}]} {
    %c0_i32 = arith.constant 0 : i32
    %0 = arith.cmpi eq, %arg2, %c0_i32 : i32
    %1 = arith.extui %0 : i1 to i32
    %c0_i32_0 = arith.constant 0 : i32
    %2 = arith.cmpi ne, %1, %c0_i32_0 : i32
    scf.if %2 {
      %cst_10 = arith.constant 0.000000e+00 : f32
      %12 = vector.broadcast %cst_10 : f32 to vector<16x32xf32>
      %c0_11 = arith.constant 0 : index
      %c0_12 = arith.constant 0 : index
      %13 = vector.load %arg8[%c0_11, %c0_12] : memref<16x32xf32, #tpu.memory_space<vmem>>, vector<16x32xf32>
      tpu.vector_store %arg8[%c0_11, %c0_12], %12 {strides = array<i32>} : memref<16x32xf32, #tpu.memory_space<vmem>>, vector<16x32xf32>,
    } else {
    }
    %c0 = arith.constant 0 : index
    %c0_1 = arith.constant 0 : index
    %3 = vector.load %arg3[%c0, %c0_1] : memref<16x32xf32, #tpu.memory_space<vmem>>, vector<16x32xf32>
    %c0_2 = arith.constant 0 : index
    %c0_3 = arith.constant 0 : index
    %4 = vector.load %arg8[%c0_2, %c0_3] : memref<16x32xf32, #tpu.memory_space<vmem>>, vector<16x32xf32>
    %c0_4 = arith.constant 0 : index
    %c0_5 = arith.constant 0 : index
    %5 = vector.load %arg4[%c0_4, %c0_5] : memref<32x32xf32, #tpu.memory_space<vmem>>, vector<32x32xf32>
    %cst = arith.constant dense<0.000000e+00> : vector<16x32xf32>
    %6 = tpu.matmul %3, %5, %cst {dimension_numbers = #tpu.dot_dimension_numbers<[1], [0], [0], [1], [0, 0, 1, 1], [], []>} : vector<16x32xf32>, vector<32x32xf32>, vector<16x32xf32> -> vector<16x32xf32>
    %7 = arith.addf %4, %6 : vector<16x32xf32>
    %c0_6 = arith.constant 0 : index
    %c0_7 = arith.constant 0 : index
    %8 = vector.load %arg8[%c0_6, %c0_7] : memref<16x32xf32, #tpu.memory_space<vmem>>, vector<16x32xf32>
    tpu.vector_store %arg8[%c0_6, %c0_7], %7 {strides = array<i32>} : memref<16x32xf32, #tpu.memory_space<vmem>>, vector<16x32xf32>,
    %c0_i32_8 = arith.constant 0 : i32
    %9 = arith.cmpi eq, %arg2, %c0_i32_8 : i32
    %10 = arith.extui %9 : i1 to i32
    %c0_i32_9 = arith.constant 0 : i32
    %11 = arith.cmpi ne, %10, %c0_i32_9 : i32
    scf.if %11 {
      %c0_10 = arith.constant 0 : index
      %c0_11 = arith.constant 0 : index
      %12 = vector.load %arg8[%c0_10, %c0_11] : memref<16x32xf32, #tpu.memory_space<vmem>>, vector<16x32xf32>
      %c0_12 = arith.constant 0 : index
      %c0_13 = arith.constant 0 : index
      %13 = vector.load %arg5[%c0_12, %c0_13] : memref<1x32xf32, #tpu.memory_space<vmem>>, vector<1x32xf32>
      %14 = vector.broadcast %13 : vector<1x32xf32> to vector<16x32xf32>
      %15 = arith.addf %12, %14 : vector<16x32xf32>
      %c0_14 = arith.constant 0 : index
      %c0_15 = arith.constant 0 : index
      %16 = vector.load %arg6[%c0_14, %c0_15] : memref<16x32xf32, #tpu.memory_space<vmem>>, vector<16x32xf32>
      %17 = arith.addf %15, %16 : vector<16x32xf32>
      %c0_16 = arith.constant 0 : index
      %c0_17 = arith.constant 0 : index
      %18 = vector.load %arg7[%c0_16, %c0_17] : memref<16x32xf32, #tpu.memory_space<vmem>>, vector<16x32xf32>
      tpu.vector_store %arg7[%c0_16, %c0_17], %17 {strides = array<i32>} : memref<16x32xf32, #tpu.memory_space<vmem>>, vector<16x32xf32>,
    } else {
    }
    return
  }
  func.func @transform_0(%arg0: i32, %arg1: i32, %arg2: i32) -> (i32, i32) {
    %c0_i32 = arith.constant 0 : i32
    return %arg0, %arg2 : i32, i32
  }
  func.func @transform_1(%arg0: i32, %arg1: i32, %arg2: i32) -> (i32, i32) {
    %c0_i32 = arith.constant 0 : i32
    return %arg2, %arg1 : i32, i32
  }
  func.func @transform_2(%arg0: i32, %arg1: i32, %arg2: i32) -> (i32, i32) {
    %c0_i32 = arith.constant 0 : i32
    %c0_i32_0 = arith.constant 0 : i32
    return %c0_i32, %arg1 : i32, i32
  }
  func.func @transform_3(%arg0: i32, %arg1: i32, %arg2: i32) -> (i32, i32) {
    %c0_i32 = arith.constant 0 : i32
    return %arg0, %arg1 : i32, i32
  }
  func.func @transform_4(%arg0: i32, %arg1: i32, %arg2: i32) -> (i32, i32) {
    %c0_i32 = arith.constant 0 : i32
    return %arg0, %arg1 : i32, i32
  }
}

module attributes {stable_mosaic.version = 11 : i64} {
  func.func @kernel(%arg0: i32, %arg1: i32, %arg2: memref<1x8x32xf32, #tpu.memory_space<vmem>>, %arg3: memref<1x16x64xf32, #tpu.memory_space<vmem>>, %arg4: memref<1x8x32xf32, #tpu.memory_space<vmem>>) attributes {dimension_semantics = [#tpu.dimension_semantics<parallel>, #tpu.dimension_semantics<parallel>], iteration_bounds = array<i64: 2, 1>, scalar_prefetch = 0 : i64, scratch_operands = 0 : i64, tpu.core_type = #tpu.core_type<tc>, window_params = [{transform_indices = @transform_0, window_bounds = array<i64: 1, 8, 32>}, {transform_indices = @transform_1, window_bounds = array<i64: 1, 16, 64>}, {transform_indices = @transform_2, window_bounds = array<i64: 1, 8, 32>}]} {
    %c0 = arith.constant 0 : index
    %c0_0 = arith.constant 0 : index
    %c0_1 = arith.constant 0 : index
    %0 = vector.load %arg2[%c0, %c0_0, %c0_1] : memref<1x8x32xf32, #tpu.memory_space<vmem>>, vector<1x8x32xf32>
    %1 = vector.shape_cast %0 : vector<1x8x32xf32> to vector<8x32xf32>
    %cst = arith.constant 0.353553385 : f32
    %2 = vector.broadcast %cst : f32 to vector<8x32xf32>
    %3 = arith.mulf %1, %2 : vector<8x32xf32>
    %c0_2 = arith.constant 0 : index
    %c0_3 = arith.constant 0 : index
    %c0_4 = arith.constant 0 : index
    %4 = vector.load %arg3[%c0_2, %c0_3, %c0_4] : memref<1x16x64xf32, #tpu.memory_space<vmem>>, vector<1x16x64xf32>
    %5 = vector.shape_cast %4 : vector<1x16x64xf32> to vector<16x64xf32>
    %6 = vector.shape_cast %3 : vector<8x32xf32> to vector<8x4x8xf32>
    %7 = tpu.transpose %6, [1, 0, 2] : vector<8x4x8xf32> -> vector<4x8x8xf32>
    %8 = vector.extract_strided_slice %5 {offsets = [0, 0], sizes = [16, 32], strides = [1, 1]} : vector<16x64xf32> to vector<16x32xf32>
    %9 = vector.shape_cast %8 : vector<16x32xf32> to vector<16x4x8xf32>
    %10 = tpu.transpose %9, [1, 0, 2] : vector<16x4x8xf32> -> vector<4x16x8xf32>
    %11 = vector.extract_strided_slice %5 {offsets = [0, 32], sizes = [16, 32], strides = [1, 1]} : vector<16x64xf32> to vector<16x32xf32>
    %12 = vector.shape_cast %11 : vector<16x32xf32> to vector<16x4x8xf32>
    %13 = tpu.transpose %12, [1, 0, 2] : vector<16x4x8xf32> -> vector<4x16x8xf32>
    "tpu.trace_start"() <{level = 10 : i32, message = "hqd,hkd->hqk"}> : () -> ()
    %cst_5 = arith.constant dense<0.000000e+00> : vector<4x8x16xf32>
    %14 = tpu.matmul %7, %10, %cst_5 {dimension_numbers = #tpu.dot_dimension_numbers<[2], [2], [1], [1], [0, 0, 0, 1, 1, 1], [0], [0]>} : vector<4x8x8xf32>, vector<4x16x8xf32>, vector<4x8x16xf32> -> vector<4x8x16xf32>
    "tpu.trace_stop"() : () -> ()
    %cst_6 = arith.constant dense<0xFF800000> : vector<4x8xf32>
    %15 = vector.multi_reduction <maximumf>, %14, %cst_6 [2] : vector<4x8x16xf32> to vector<4x8xf32>
    %16 = vector.shape_cast %15 : vector<4x8xf32> to vector<4x8x1xf32>
    %17 = vector.broadcast %16 : vector<4x8x1xf32> to vector<4x8x16xf32>
    %18 = arith.subf %14, %17 : vector<4x8x16xf32>
    %19 = math.exp %18 : vector<4x8x16xf32>
    %cst_7 = arith.constant dense<0.000000e+00> : vector<4x8xf32>
    %20 = vector.multi_reduction <add>, %19, %cst_7 [2] : vector<4x8x16xf32> to vector<4x8xf32>
    %21 = vector.shape_cast %20 : vector<4x8xf32> to vector<4x8x1xf32>
    %22 = tpu.reciprocal %21 {approx = true} : vector<4x8x1xf32> -> vector<4x8x1xf32>
    %23 = vector.broadcast %22 : vector<4x8x1xf32> to vector<4x8x16xf32>
    %24 = arith.mulf %19, %23 : vector<4x8x16xf32>
    "tpu.trace_start"() <{level = 10 : i32, message = "hqk,hkd->hqd"}> : () -> ()
    %cst_8 = arith.constant dense<0.000000e+00> : vector<4x8x8xf32>
    %25 = tpu.matmul %24, %13, %cst_8 {dimension_numbers = #tpu.dot_dimension_numbers<[2], [1], [1], [2], [0, 0, 0, 1, 1, 2], [0], [0]>} : vector<4x8x16xf32>, vector<4x16x8xf32>, vector<4x8x8xf32> -> vector<4x8x8xf32>
    "tpu.trace_stop"() : () -> ()
    %26 = tpu.transpose %25, [1, 0, 2] : vector<4x8x8xf32> -> vector<8x4x8xf32>
    %27 = vector.shape_cast %26 : vector<8x4x8xf32> to vector<8x32xf32>
    %c0_9 = arith.constant 0 : index
    %c0_10 = arith.constant 0 : index
    %c0_11 = arith.constant 0 : index
    %28 = vector.load %arg4[%c0_9, %c0_10, %c0_11] : memref<1x8x32xf32, #tpu.memory_space<vmem>>, vector<1x8x32xf32>
    %29 = vector.shape_cast %28 : vector<1x8x32xf32> to vector<8x32xf32>
    %30 = vector.shape_cast %27 : vector<8x32xf32> to vector<1x8x32xf32>
    tpu.vector_store %arg4[%c0_9, %c0_10, %c0_11], %30 {strides = array<i32>} : memref<1x8x32xf32, #tpu.memory_space<vmem>>, vector<1x8x32xf32>,
    return
  }
  func.func @transform_0(%arg0: i32, %arg1: i32) -> (i32, i32, i32) {
    %c0_i32 = arith.constant 0 : i32
    %c0_i32_0 = arith.constant 0 : i32
    return %arg0, %arg1, %c0_i32 : i32, i32, i32
  }
  func.func @transform_1(%arg0: i32, %arg1: i32) -> (i32, i32, i32) {
    %c0_i32 = arith.constant 0 : i32
    %c0_i32_0 = arith.constant 0 : i32
    %c0_i32_1 = arith.constant 0 : i32
    return %arg0, %c0_i32, %c0_i32_0 : i32, i32, i32
  }
  func.func @transform_2(%arg0: i32, %arg1: i32) -> (i32, i32, i32) {
    %c0_i32 = arith.constant 0 : i32
    %c0_i32_0 = arith.constant 0 : i32
    return %arg0, %arg1, %c0_i32 : i32, i32, i32
  }
}

module attributes {stable_mosaic.version = 11 : i64} {
  func.func @kernel(%arg0: i32, %arg1: i32, %arg2: i32, %arg3: memref<16x32xf32, #tpu.memory_space<vmem>>, %arg4: memref<1x32xf32, #tpu.memory_space<vmem>>, %arg5: memref<1x32xf32, #tpu.memory_space<vmem>>, %arg6: memref<32x128xf32, #tpu.memory_space<vmem>>, %arg7: memref<1x128xf32, #tpu.memory_space<vmem>>, %arg8: memref<16x128xf32, #tpu.memory_space<vmem>>, %arg9: memref<16x128xf32, #tpu.memory_space<vmem>>) attributes {dimension_semantics = [#tpu.dimension_semantics<parallel>, #tpu.dimension_semantics<parallel>, #tpu.dimension_semantics<arbitrary>], iteration_bounds = array<i64: 1, 1, 1>, scalar_prefetch = 0 : i64, scratch_operands = 1 : i64, tpu.core_type = #tpu.core_type<tc>, window_params = [{transform_indices = @transform_0, window_bounds = array<i64: 16, 32>}, {pipeline_mode = #tpu.pipeline_mode<synchronous>, transform_indices = @transform_1, window_bounds = array<i64: 1, 32>}, {pipeline_mode = #tpu.pipeline_mode<synchronous>, transform_indices = @transform_2, window_bounds = array<i64: 1, 32>}, {transform_indices = @transform_3, window_bounds = array<i64: 32, 128>}, {transform_indices = @transform_4, window_bounds = array<i64: 1, 128>}, {transform_indices = @transform_5, window_bounds = array<i64: 16, 128>}]} {
    %c0_i32 = arith.constant 0 : i32
    %0 = arith.cmpi eq, %arg2, %c0_i32 : i32
    %1 = arith.extui %0 : i1 to i32
    %c0_i32_0 = arith.constant 0 : i32
    %2 = arith.cmpi ne, %1, %c0_i32_0 : i32
    scf.if %2 {
      %cst_19 = arith.constant 0.000000e+00 : f32
      %34 = vector.broadcast %cst_19 : f32 to vector<16x128xf32>
      %c0_20 = arith.constant 0 : index
      %c0_21 = arith.constant 0 : index
      %35 = vector.load %arg9[%c0_20, %c0_21] : memref<16x128xf32, #tpu.memory_space<vmem>>, vector<16x128xf32>
      tpu.vector_store %arg9[%c0_20, %c0_21], %34 {strides = array<i32>} : memref<16x128xf32, #tpu.memory_space<vmem>>, vector<16x128xf32>,
    } else {
    }
    %c0 = arith.constant 0 : index
    %c0_1 = arith.constant 0 : index
    %3 = vector.load %arg3[%c0, %c0_1] : memref<16x32xf32, #tpu.memory_space<vmem>>, vector<16x32xf32>
    %cst = arith.constant dense<0.000000e+00> : vector<16xf32>
    %4 = vector.multi_reduction <add>, %3, %cst [1] : vector<16x32xf32> to vector<16xf32>
    %5 = vector.shape_cast %4 : vector<16xf32> to vector<16x1xf32>
    %cst_2 = arith.constant 3.200000e+01 : f32
    %6 = vector.broadcast %cst_2 : f32 to vector<16x1xf32>
    %7 = arith.divf %5, %6 : vector<16x1xf32>
    %8 = vector.broadcast %7 : vector<16x1xf32> to vector<16x32xf32>
    %9 = arith.subf %3, %8 : vector<16x32xf32>
    %10 = arith.mulf %9, %9 : vector<16x32xf32>
    %cst_3 = arith.constant dense<0.000000e+00> : vector<16xf32>
    %11 = vector.multi_reduction <add>, %10, %cst_3 [1] : vector<16x32xf32> to vector<16xf32>
    %12 = vector.shape_cast %11 : vector<16xf32> to vector<16x1xf32>
    %cst_4 = arith.constant 3.200000e+01 : f32
    %13 = vector.broadcast %cst_4 : f32 to vector<16x1xf32>
    %14 = arith.divf %12, %13 : vector<16x1xf32>
    %cst_5 = arith.constant 9.99999974E-6 : f32
    %15 = vector.broadcast %cst_5 : f32 to vector<16x1xf32>
    %16 = arith.addf %14, %15 : vector<16x1xf32>
    %17 = math.rsqrt %16 : vector<16x1xf32>
    %18 = vector.broadcast %17 : vector<16x1xf32> to vector<16x32xf32>
    %19 = arith.mulf %9, %18 : vector<16x32xf32>
    %c0_6 = arith.constant 0 : index
    %c0_7 = arith.constant 0 : index
    %20 = vector.load %arg4[%c0_6, %c0_7] : memref<1x32xf32, #tpu.memory_space<vmem>>, vector<1x32xf32>
    %21 = vector.broadcast %20 : vector<1x32xf32> to vector<16x32xf32>
    %22 = arith.mulf %19, %21 : vector<16x32xf32>
    %c0_8 = arith.constant 0 : index
    %c0_9 = arith.constant 0 : index
    %23 = vector.load %arg5[%c0_8, %c0_9] : memref<1x32xf32, #tpu.memory_space<vmem>>, vector<1x32xf32>
    %24 = vector.broadcast %23 : vector<1x32xf32> to vector<16x32xf32>
    %25 = arith.addf %22, %24 : vector<16x32xf32>
    %c0_10 = arith.constant 0 : index
    %c0_11 = arith.constant 0 : index
    %26 = vector.load %arg9[%c0_10, %c0_11] : memref<16x128xf32, #tpu.memory_space<vmem>>, vector<16x128xf32>
    %c0_12 = arith.constant 0 : index
    %c0_13 = arith.constant 0 : index
    %27 = vector.load %arg6[%c0_12, %c0_13] : memref<32x128xf32, #tpu.memory_space<vmem>>, vector<32x128xf32>
    %cst_14 = arith.constant dense<0.000000e+00> : vector<16x128xf32>
    %28 = tpu.matmul %25, %27, %cst_14 {dimension_numbers = #tpu.dot_dimension_numbers<[1], [0], [0], [1], [0, 0, 1, 1], [], []>} : vector<16x32xf32>, vector<32x128xf32>, vector<16x128xf32> -> vector<16x128xf32>
    %29 = arith.addf %26, %28 : vector<16x128xf32>
    %c0_15 = arith.constant 0 : index
    %c0_16 = arith.constant 0 : index
    %30 = vector.load %arg9[%c0_15, %c0_16] : memref<16x128xf32, #tpu.memory_space<vmem>>, vector<16x128xf32>
    tpu.vector_store %arg9[%c0_15, %c0_16], %29 {strides = array<i32>} : memref<16x128xf32, #tpu.memory_space<vmem>>, vector<16x128xf32>,
    %c0_i32_17 = arith.constant 0 : i32
    %31 = arith.cmpi eq, %arg2, %c0_i32_17 : i32
    %32 = arith.extui %31 : i1 to i32
    %c0_i32_18 = arith.constant 0 : i32
    %33 = arith.cmpi ne, %32, %c0_i32_18 : i32
    scf.if %33 {
      %c0_19 = arith.constant 0 : index
      %c0_20 = arith.constant 0 : index
      %34 = vector.load %arg9[%c0_19, %c0_20] : memref<16x128xf32, #tpu.memory_space<vmem>>, vector<16x128xf32>
      %c0_21 = arith.constant 0 : index
      %c0_22 = arith.constant 0 : index
      %35 = vector.load %arg7[%c0_21, %c0_22] : memref<1x128xf32, #tpu.memory_space<vmem>>, vector<1x128xf32>
      %36 = vector.broadcast %35 : vector<1x128xf32> to vector<16x128xf32>
      %37 = arith.addf %34, %36 : vector<16x128xf32>
      %cst_23 = arith.constant 5.000000e-01 : f32
      %38 = vector.broadcast %cst_23 : f32 to vector<16x128xf32>
      %39 = arith.mulf %38, %37 : vector<16x128xf32>
      %cst_24 = arith.constant 0.707106769 : f32
      %40 = vector.broadcast %cst_24 : f32 to vector<16x128xf32>
      %41 = arith.mulf %37, %40 : vector<16x128xf32>
      %42 = math.absf %41 : vector<16x128xf32>
      %cst_25 = arith.constant 0.327591091 : f32
      %43 = vector.broadcast %cst_25 : f32 to vector<16x128xf32>
      %44 = arith.mulf %43, %42 : vector<16x128xf32>
      %cst_26 = arith.constant 1.000000e+00 : f32
      %45 = vector.broadcast %cst_26 : f32 to vector<16x128xf32>
      %46 = arith.addf %45, %44 : vector<16x128xf32>
      %cst_27 = arith.constant 1.000000e+00 : f32
      %47 = vector.broadcast %cst_27 : f32 to vector<16x128xf32>
      %48 = arith.divf %47, %46 : vector<16x128xf32>
      %cst_28 = arith.constant 1.06140542 : f32
      %49 = vector.broadcast %cst_28 : f32 to vector<16x128xf32>
      %50 = arith.mulf %49, %48 : vector<16x128xf32>
      %cst_29 = arith.constant 1.45315206 : f32
      %51 = vector.broadcast %cst_29 : f32 to vector<16x128xf32>
      %52 = arith.subf %50, %51 : vector<16x128xf32>
      %53 = arith.mulf %52, %48 : vector<16x128xf32>
      %cst_30 = arith.constant 1.42141378 : f32
      %54 = vector.broadcast %cst_30 : f32 to vector<16x128xf32>
      %55 = arith.addf %53, %54 : vector<16x128xf32>
      %56 = arith.mulf %55, %48 : vector<16x128xf32>
      %cst_31 = arith.constant 0.284496725 : f32
      %57 = vector.broadcast %cst_31 : f32 to vector<16x128xf32>
      %58 = arith.subf %56, %57 : vector<16x128xf32>
      %59 = arith.mulf %58, %48 : vector<16x128xf32>
      %cst_32 = arith.constant 0.254829586 : f32
      %60 = vector.broadcast %cst_32 : f32 to vector<16x128xf32>
      %61 = arith.addf %59, %60 : vector<16x128xf32>
      %62 = arith.mulf %61, %48 : vector<16x128xf32>
      %cst_33 = arith.constant 0.000000e+00 : f32
      %63 = vector.broadcast %cst_33 : f32 to vector<16x128xf32>
      %64 = arith.subf %63, %42 : vector<16x128xf32>
      %65 = arith.mulf %64, %42 : vector<16x128xf32>
      %66 = math.exp %65 : vector<16x128xf32>
      %67 = arith.mulf %62, %66 : vector<16x128xf32>
      %cst_34 = arith.constant 1.000000e+00 : f32
      %68 = vector.broadcast %cst_34 : f32 to vector<16x128xf32>
      %69 = arith.subf %68, %67 : vector<16x128xf32>
      %cst_35 = arith.constant 0.000000e+00 : f32
      %70 = vector.broadcast %cst_35 : f32 to vector<16x128xf32>
      %71 = arith.cmpf oge, %41, %70 : vector<16x128xf32>
      %cst_36 = arith.constant 0.000000e+00 : f32
      %72 = vector.broadcast %cst_36 : f32 to vector<16x128xf32>
      %73 = arith.subf %72, %69 : vector<16x128xf32>
      %74 = arith.select %71, %69, %73 : vector<16x128xi1>, vector<16x128xf32>
      %cst_37 = arith.constant 1.000000e+00 : f32
      %75 = vector.broadcast %cst_37 : f32 to vector<16x128xf32>
      %76 = arith.addf %75, %74 : vector<16x128xf32>
      %77 = arith.mulf %39, %76 : vector<16x128xf32>
      %c0_38 = arith.constant 0 : index
      %c0_39 = arith.constant 0 : index
      %78 = vector.load %arg8[%c0_38, %c0_39] : memref<16x128xf32, #tpu.memory_space<vmem>>, vector<16x128xf32>
      tpu.vector_store %arg8[%c0_38, %c0_39], %77 {strides = array<i32>} : memref<16x128xf32, #tpu.memory_space<vmem>>, vector<16x128xf32>,
    } else {
    }
    return
  }
  func.func @transform_0(%arg0: i32, %arg1: i32, %arg2: i32) -> (i32, i32) {
    %c0_i32 = arith.constant 0 : i32
    return %arg0, %arg2 : i32, i32
  }
  func.func @transform_1(%arg0: i32, %arg1: i32, %arg2: i32) -> (i32, i32) {
    %c0_i32 = arith.constant 0 : i32
    %c0_i32_0 = arith.constant 0 : i32
    %c0_i32_1 = arith.constant 0 : i32
    return %c0_i32, %c0_i32_0 : i32, i32
  }
  func.func @transform_2(%arg0: i32, %arg1: i32, %arg2: i32) -> (i32, i32) {
    %c0_i32 = arith.constant 0 : i32
    %c0_i32_0 = arith.constant 0 : i32
    %c0_i32_1 = arith.constant 0 : i32
    return %c0_i32, %c0_i32_0 : i32, i32
  }
  func.func @transform_3(%arg0: i32, %arg1: i32, %arg2: i32) -> (i32, i32) {
    %c0_i32 = arith.constant 0 : i32
    return %arg2, %arg1 : i32, i32
  }
  func.func @transform_4(%arg0: i32, %arg1: i32, %arg2: i32) -> (i32, i32) {
    %c0_i32 = arith.constant 0 : i32
    %c0_i32_0 = arith.constant 0 : i32
    return %c0_i32, %arg1 : i32, i32
  }
  func.func @transform_5(%arg0: i32, %arg1: i32, %arg2: i32) -> (i32, i32) {
    %c0_i32 = arith.constant 0 : i32
    return %arg0, %arg1 : i32, i32
  }
}

module attributes {stable_mosaic.version = 11 : i64} {
  func.func @kernel(%arg0: i32, %arg1: i32, %arg2: i32, %arg3: memref<16x128xf32, #tpu.memory_space<vmem>>, %arg4: memref<128x32xf32, #tpu.memory_space<vmem>>, %arg5: memref<1x32xf32, #tpu.memory_space<vmem>>, %arg6: memref<16x32xf32, #tpu.memory_space<vmem>>, %arg7: memref<16x32xf32, #tpu.memory_space<vmem>>, %arg8: memref<16x32xf32, #tpu.memory_space<vmem>>) attributes {dimension_semantics = [#tpu.dimension_semantics<parallel>, #tpu.dimension_semantics<parallel>, #tpu.dimension_semantics<arbitrary>], iteration_bounds = array<i64: 1, 1, 1>, scalar_prefetch = 0 : i64, scratch_operands = 1 : i64, tpu.core_type = #tpu.core_type<tc>, window_params = [{transform_indices = @transform_0, window_bounds = array<i64: 16, 128>}, {transform_indices = @transform_1, window_bounds = array<i64: 128, 32>}, {transform_indices = @transform_2, window_bounds = array<i64: 1, 32>}, {transform_indices = @transform_3, window_bounds = array<i64: 16, 32>}, {transform_indices = @transform_4, window_bounds = array<i64: 16, 32>}]} {
    %c0_i32 = arith.constant 0 : i32
    %0 = arith.cmpi eq, %arg2, %c0_i32 : i32
    %1 = arith.extui %0 : i1 to i32
    %c0_i32_0 = arith.constant 0 : i32
    %2 = arith.cmpi ne, %1, %c0_i32_0 : i32
    scf.if %2 {
      %cst_10 = arith.constant 0.000000e+00 : f32
      %12 = vector.broadcast %cst_10 : f32 to vector<16x32xf32>
      %c0_11 = arith.constant 0 : index
      %c0_12 = arith.constant 0 : index
      %13 = vector.load %arg8[%c0_11, %c0_12] : memref<16x32xf32, #tpu.memory_space<vmem>>, vector<16x32xf32>
      tpu.vector_store %arg8[%c0_11, %c0_12], %12 {strides = array<i32>} : memref<16x32xf32, #tpu.memory_space<vmem>>, vector<16x32xf32>,
    } else {
    }
    %c0 = arith.constant 0 : index
    %c0_1 = arith.constant 0 : index
    %3 = vector.load %arg3[%c0, %c0_1] : memref<16x128xf32, #tpu.memory_space<vmem>>, vector<16x128xf32>
    %c0_2 = arith.constant 0 : index
    %c0_3 = arith.constant 0 : index
    %4 = vector.load %arg8[%c0_2, %c0_3] : memref<16x32xf32, #tpu.memory_space<vmem>>, vector<16x32xf32>
    %c0_4 = arith.constant 0 : index
    %c0_5 = arith.constant 0 : index
    %5 = vector.load %arg4[%c0_4, %c0_5] : memref<128x32xf32, #tpu.memory_space<vmem>>, vector<128x32xf32>
    %cst = arith.constant dense<0.000000e+00> : vector<16x32xf32>
    %6 = tpu.matmul %3, %5, %cst {dimension_numbers = #tpu.dot_dimension_numbers<[1], [0], [0], [1], [0, 0, 1, 1], [], []>} : vector<16x128xf32>, vector<128x32xf32>, vector<16x32xf32> -> vector<16x32xf32>
    %7 = arith.addf %4, %6 : vector<16x32xf32>
    %c0_6 = arith.constant 0 : index
    %c0_7 = arith.constant 0 : index
    %8 = vector.load %arg8[%c0_6, %c0_7] : memref<16x32xf32, #tpu.memory_space<vmem>>, vector<16x32xf32>
    tpu.vector_store %arg8[%c0_6, %c0_7], %7 {strides = array<i32>} : memref<16x32xf32, #tpu.memory_space<vmem>>, vector<16x32xf32>,
    %c0_i32_8 = arith.constant 0 : i32
    %9 = arith.cmpi eq, %arg2, %c0_i32_8 : i32
    %10 = arith.extui %9 : i1 to i32
    %c0_i32_9 = arith.constant 0 : i32
    %11 = arith.cmpi ne, %10, %c0_i32_9 : i32
    scf.if %11 {
      %c0_10 = arith.constant 0 : index
      %c0_11 = arith.constant 0 : index
      %12 = vector.load %arg8[%c0_10, %c0_11] : memref<16x32xf32, #tpu.memory_space<vmem>>, vector<16x32xf32>
      %c0_12 = arith.constant 0 : index
      %c0_13 = arith.constant 0 : index
      %13 = vector.load %arg5[%c0_12, %c0_13] : memref<1x32xf32, #tpu.memory_space<vmem>>, vector<1x32xf32>
      %14 = vector.broadcast %13 : vector<1x32xf32> to vector<16x32xf32>
      %15 = arith.addf %12, %14 : vector<16x32xf32>
      %c0_14 = arith.constant 0 : index
      %c0_15 = arith.constant 0 : index
      %16 = vector.load %arg6[%c0_14, %c0_15] : memref<16x32xf32, #tpu.memory_space<vmem>>, vector<16x32xf32>
      %17 = arith.addf %15, %16 : vector<16x32xf32>
      %c0_16 = arith.constant 0 : index
      %c0_17 = arith.constant 0 : index
      %18 = vector.load %arg7[%c0_16, %c0_17] : memref<16x32xf32, #tpu.memory_space<vmem>>, vector<16x32xf32>
      tpu.vector_store %arg7[%c0_16, %c0_17], %17 {strides = array<i32>} : memref<16x32xf32, #tpu.memory_space<vmem>>, vector<16x32xf32>,
    } else {
    }
    return
  }
  func.func @transform_0(%arg0: i32, %arg1: i32, %arg2: i32) -> (i32, i32) {
    %c0_i32 = arith.constant 0 : i32
    return %arg0, %arg2 : i32, i32
  }
  func.func @transform_1(%arg0: i32, %arg1: i32, %arg2: i32) -> (i32, i32) {
    %c0_i32 = arith.constant 0 : i32
    return %arg2, %arg1 : i32, i32
  }
  func.func @transform_2(%arg0: i32, %arg1: i32, %arg2: i32) -> (i32, i32) {
    %c0_i32 = arith.constant 0 : i32
    %c0_i32_0 = arith.constant 0 : i32
    return %c0_i32, %arg1 : i32, i32
  }
  func.func @transform_3(%arg0: i32, %arg1: i32, %arg2: i32) -> (i32, i32) {
    %c0_i32 = arith.constant 0 : i32
    return %arg0, %arg1 : i32, i32
  }
  func.func @transform_4(%arg0: i32, %arg1: i32, %arg2: i32) -> (i32, i32) {
    %c0_i32 = arith.constant 0 : i32
    return %arg0, %arg1 : i32, i32
  }
}

module attributes {stable_mosaic.version = 11 : i64} {
  func.func @kernel(%arg0: i32, %arg1: i32, %arg2: i32, %arg3: memref<16x32xf32, #tpu.memory_space<vmem>>, %arg4: memref<1x32xf32, #tpu.memory_space<vmem>>, %arg5: memref<1x32xf32, #tpu.memory_space<vmem>>, %arg6: memref<32x32xf32, #tpu.memory_space<vmem>>, %arg7: memref<1x32xf32, #tpu.memory_space<vmem>>, %arg8: memref<16x32xf32, #tpu.memory_space<vmem>>, %arg9: memref<16x32xf32, #tpu.memory_space<vmem>>) attributes {dimension_semantics = [#tpu.dimension_semantics<parallel>, #tpu.dimension_semantics<parallel>, #tpu.dimension_semantics<arbitrary>], iteration_bounds = array<i64: 1, 1, 1>, scalar_prefetch = 0 : i64, scratch_operands = 1 : i64, tpu.core_type = #tpu.core_type<tc>, window_params = [{transform_indices = @transform_0, window_bounds = array<i64: 16, 32>}, {pipeline_mode = #tpu.pipeline_mode<synchronous>, transform_indices = @transform_1, window_bounds = array<i64: 1, 32>}, {pipeline_mode = #tpu.pipeline_mode<synchronous>, transform_indices = @transform_2, window_bounds = array<i64: 1, 32>}, {transform_indices = @transform_3, window_bounds = array<i64: 32, 32>}, {transform_indices = @transform_4, window_bounds = array<i64: 1, 32>}, {transform_indices = @transform_5, window_bounds = array<i64: 16, 32>}]} {
    %c0_i32 = arith.constant 0 : i32
    %0 = arith.cmpi eq, %arg2, %c0_i32 : i32
    %1 = arith.extui %0 : i1 to i32
    %c0_i32_0 = arith.constant 0 : i32
    %2 = arith.cmpi ne, %1, %c0_i32_0 : i32
    scf.if %2 {
      %cst_19 = arith.constant 0.000000e+00 : f32
      %34 = vector.broadcast %cst_19 : f32 to vector<16x32xf32>
      %c0_20 = arith.constant 0 : index
      %c0_21 = arith.constant 0 : index
      %35 = vector.load %arg9[%c0_20, %c0_21] : memref<16x32xf32, #tpu.memory_space<vmem>>, vector<16x32xf32>
      tpu.vector_store %arg9[%c0_20, %c0_21], %34 {strides = array<i32>} : memref<16x32xf32, #tpu.memory_space<vmem>>, vector<16x32xf32>,
    } else {
    }
    %c0 = arith.constant 0 : index
    %c0_1 = arith.constant 0 : index
    %3 = vector.load %arg3[%c0, %c0_1] : memref<16x32xf32, #tpu.memory_space<vmem>>, vector<16x32xf32>
    %cst = arith.constant dense<0.000000e+00> : vector<16xf32>
    %4 = vector.multi_reduction <add>, %3, %cst [1] : vector<16x32xf32> to vector<16xf32>
    %5 = vector.shape_cast %4 : vector<16xf32> to vector<16x1xf32>
    %cst_2 = arith.constant 3.200000e+01 : f32
    %6 = vector.broadcast %cst_2 : f32 to vector<16x1xf32>
    %7 = arith.divf %5, %6 : vector<16x1xf32>
    %8 = vector.broadcast %7 : vector<16x1xf32> to vector<16x32xf32>
    %9 = arith.subf %3, %8 : vector<16x32xf32>
    %10 = arith.mulf %9, %9 : vector<16x32xf32>
    %cst_3 = arith.constant dense<0.000000e+00> : vector<16xf32>
    %11 = vector.multi_reduction <add>, %10, %cst_3 [1] : vector<16x32xf32> to vector<16xf32>
    %12 = vector.shape_cast %11 : vector<16xf32> to vector<16x1xf32>
    %cst_4 = arith.constant 3.200000e+01 : f32
    %13 = vector.broadcast %cst_4 : f32 to vector<16x1xf32>
    %14 = arith.divf %12, %13 : vector<16x1xf32>
    %cst_5 = arith.constant 9.99999974E-6 : f32
    %15 = vector.broadcast %cst_5 : f32 to vector<16x1xf32>
    %16 = arith.addf %14, %15 : vector<16x1xf32>
    %17 = math.rsqrt %16 : vector<16x1xf32>
    %18 = vector.broadcast %17 : vector<16x1xf32> to vector<16x32xf32>
    %19 = arith.mulf %9, %18 : vector<16x32xf32>
    %c0_6 = arith.constant 0 : index
    %c0_7 = arith.constant 0 : index
    %20 = vector.load %arg4[%c0_6, %c0_7] : memref<1x32xf32, #tpu.memory_space<vmem>>, vector<1x32xf32>
    %21 = vector.broadcast %20 : vector<1x32xf32> to vector<16x32xf32>
    %22 = arith.mulf %19, %21 : vector<16x32xf32>
    %c0_8 = arith.constant 0 : index
    %c0_9 = arith.constant 0 : index
    %23 = vector.load %arg5[%c0_8, %c0_9] : memref<1x32xf32, #tpu.memory_space<vmem>>, vector<1x32xf32>
    %24 = vector.broadcast %23 : vector<1x32xf32> to vector<16x32xf32>
    %25 = arith.addf %22, %24 : vector<16x32xf32>
    %c0_10 = arith.constant 0 : index
    %c0_11 = arith.constant 0 : index
    %26 = vector.load %arg9[%c0_10, %c0_11] : memref<16x32xf32, #tpu.memory_space<vmem>>, vector<16x32xf32>
    %c0_12 = arith.constant 0 : index
    %c0_13 = arith.constant 0 : index
    %27 = vector.load %arg6[%c0_12, %c0_13] : memref<32x32xf32, #tpu.memory_space<vmem>>, vector<32x32xf32>
    %cst_14 = arith.constant dense<0.000000e+00> : vector<16x32xf32>
    %28 = tpu.matmul %25, %27, %cst_14 {dimension_numbers = #tpu.dot_dimension_numbers<[1], [0], [0], [1], [0, 0, 1, 1], [], []>} : vector<16x32xf32>, vector<32x32xf32>, vector<16x32xf32> -> vector<16x32xf32>
    %29 = arith.addf %26, %28 : vector<16x32xf32>
    %c0_15 = arith.constant 0 : index
    %c0_16 = arith.constant 0 : index
    %30 = vector.load %arg9[%c0_15, %c0_16] : memref<16x32xf32, #tpu.memory_space<vmem>>, vector<16x32xf32>
    tpu.vector_store %arg9[%c0_15, %c0_16], %29 {strides = array<i32>} : memref<16x32xf32, #tpu.memory_space<vmem>>, vector<16x32xf32>,
    %c0_i32_17 = arith.constant 0 : i32
    %31 = arith.cmpi eq, %arg2, %c0_i32_17 : i32
    %32 = arith.extui %31 : i1 to i32
    %c0_i32_18 = arith.constant 0 : i32
    %33 = arith.cmpi ne, %32, %c0_i32_18 : i32
    scf.if %33 {
      %c0_19 = arith.constant 0 : index
      %c0_20 = arith.constant 0 : index
      %34 = vector.load %arg9[%c0_19, %c0_20] : memref<16x32xf32, #tpu.memory_space<vmem>>, vector<16x32xf32>
      %c0_21 = arith.constant 0 : index
      %c0_22 = arith.constant 0 : index
      %35 = vector.load %arg7[%c0_21, %c0_22] : memref<1x32xf32, #tpu.memory_space<vmem>>, vector<1x32xf32>
      %36 = vector.broadcast %35 : vector<1x32xf32> to vector<16x32xf32>
      %37 = arith.addf %34, %36 : vector<16x32xf32>
      %c0_23 = arith.constant 0 : index
      %c0_24 = arith.constant 0 : index
      %38 = vector.load %arg8[%c0_23, %c0_24] : memref<16x32xf32, #tpu.memory_space<vmem>>, vector<16x32xf32>
      tpu.vector_store %arg8[%c0_23, %c0_24], %37 {strides = array<i32>} : memref<16x32xf32, #tpu.memory_space<vmem>>, vector<16x32xf32>,
    } else {
    }
    return
  }
  func.func @transform_0(%arg0: i32, %arg1: i32, %arg2: i32) -> (i32, i32) {
    %c0_i32 = arith.constant 0 : i32
    return %arg0, %arg2 : i32, i32
  }
  func.func @transform_1(%arg0: i32, %arg1: i32, %arg2: i32) -> (i32, i32) {
    %c0_i32 = arith.constant 0 : i32
    %c0_i32_0 = arith.constant 0 : i32
    %c0_i32_1 = arith.constant 0 : i32
    return %c0_i32, %c0_i32_0 : i32, i32
  }
  func.func @transform_2(%arg0: i32, %arg1: i32, %arg2: i32) -> (i32, i32) {
    %c0_i32 = arith.constant 0 : i32
    %c0_i32_0 = arith.constant 0 : i32
    %c0_i32_1 = arith.constant 0 : i32
    return %c0_i32, %c0_i32_0 : i32, i32
  }
  func.func @transform_3(%arg0: i32, %arg1: i32, %arg2: i32) -> (i32, i32) {
    %c0_i32 = arith.constant 0 : i32
    return %arg2, %arg1 : i32, i32
  }
  func.func @transform_4(%arg0: i32, %arg1: i32, %arg2: i32) -> (i32, i32) {
    %c0_i32 = arith.constant 0 : i32
    %c0_i32_0 = arith.constant 0 : i32
    return %c0_i32, %arg1 : i32, i32
  }
  func.func @transform_5(%arg0: i32, %arg1: i32, %arg2: i32) -> (i32, i32) {
    %c0_i32 = arith.constant 0 : i32
    return %arg0, %arg1 : i32, i32
  }
}

module attributes {stable_mosaic.version = 11 : i64} {
  func.func @kernel(%arg0: i32, %arg1: i32, %arg2: i32, %arg3: memref<16x32xf32, #tpu.memory_space<vmem>>, %arg4: memref<1x32xf32, #tpu.memory_space<vmem>>, %arg5: memref<1x32xf32, #tpu.memory_space<vmem>>, %arg6: memref<32x64xf32, #tpu.memory_space<vmem>>, %arg7: memref<1x64xf32, #tpu.memory_space<vmem>>, %arg8: memref<16x64xf32, #tpu.memory_space<vmem>>, %arg9: memref<16x64xf32, #tpu.memory_space<vmem>>) attributes {dimension_semantics = [#tpu.dimension_semantics<parallel>, #tpu.dimension_semantics<parallel>, #tpu.dimension_semantics<arbitrary>], iteration_bounds = array<i64: 1, 1, 1>, scalar_prefetch = 0 : i64, scratch_operands = 1 : i64, tpu.core_type = #tpu.core_type<tc>, window_params = [{transform_indices = @transform_0, window_bounds = array<i64: 16, 32>}, {pipeline_mode = #tpu.pipeline_mode<synchronous>, transform_indices = @transform_1, window_bounds = array<i64: 1, 32>}, {pipeline_mode = #tpu.pipeline_mode<synchronous>, transform_indices = @transform_2, window_bounds = array<i64: 1, 32>}, {transform_indices = @transform_3, window_bounds = array<i64: 32, 64>}, {transform_indices = @transform_4, window_bounds = array<i64: 1, 64>}, {transform_indices = @transform_5, window_bounds = array<i64: 16, 64>}]} {
    %c0_i32 = arith.constant 0 : i32
    %0 = arith.cmpi eq, %arg2, %c0_i32 : i32
    %1 = arith.extui %0 : i1 to i32
    %c0_i32_0 = arith.constant 0 : i32
    %2 = arith.cmpi ne, %1, %c0_i32_0 : i32
    scf.if %2 {
      %cst_19 = arith.constant 0.000000e+00 : f32
      %34 = vector.broadcast %cst_19 : f32 to vector<16x64xf32>
      %c0_20 = arith.constant 0 : index
      %c0_21 = arith.constant 0 : index
      %35 = vector.load %arg9[%c0_20, %c0_21] : memref<16x64xf32, #tpu.memory_space<vmem>>, vector<16x64xf32>
      tpu.vector_store %arg9[%c0_20, %c0_21], %34 {strides = array<i32>} : memref<16x64xf32, #tpu.memory_space<vmem>>, vector<16x64xf32>,
    } else {
    }
    %c0 = arith.constant 0 : index
    %c0_1 = arith.constant 0 : index
    %3 = vector.load %arg3[%c0, %c0_1] : memref<16x32xf32, #tpu.memory_space<vmem>>, vector<16x32xf32>
    %cst = arith.constant dense<0.000000e+00> : vector<16xf32>
    %4 = vector.multi_reduction <add>, %3, %cst [1] : vector<16x32xf32> to vector<16xf32>
    %5 = vector.shape_cast %4 : vector<16xf32> to vector<16x1xf32>
    %cst_2 = arith.constant 3.200000e+01 : f32
    %6 = vector.broadcast %cst_2 : f32 to vector<16x1xf32>
    %7 = arith.divf %5, %6 : vector<16x1xf32>
    %8 = vector.broadcast %7 : vector<16x1xf32> to vector<16x32xf32>
    %9 = arith.subf %3, %8 : vector<16x32xf32>
    %10 = arith.mulf %9, %9 : vector<16x32xf32>
    %cst_3 = arith.constant dense<0.000000e+00> : vector<16xf32>
    %11 = vector.multi_reduction <add>, %10, %cst_3 [1] : vector<16x32xf32> to vector<16xf32>
    %12 = vector.shape_cast %11 : vector<16xf32> to vector<16x1xf32>
    %cst_4 = arith.constant 3.200000e+01 : f32
    %13 = vector.broadcast %cst_4 : f32 to vector<16x1xf32>
    %14 = arith.divf %12, %13 : vector<16x1xf32>
    %cst_5 = arith.constant 9.99999974E-6 : f32
    %15 = vector.broadcast %cst_5 : f32 to vector<16x1xf32>
    %16 = arith.addf %14, %15 : vector<16x1xf32>
    %17 = math.rsqrt %16 : vector<16x1xf32>
    %18 = vector.broadcast %17 : vector<16x1xf32> to vector<16x32xf32>
    %19 = arith.mulf %9, %18 : vector<16x32xf32>
    %c0_6 = arith.constant 0 : index
    %c0_7 = arith.constant 0 : index
    %20 = vector.load %arg4[%c0_6, %c0_7] : memref<1x32xf32, #tpu.memory_space<vmem>>, vector<1x32xf32>
    %21 = vector.broadcast %20 : vector<1x32xf32> to vector<16x32xf32>
    %22 = arith.mulf %19, %21 : vector<16x32xf32>
    %c0_8 = arith.constant 0 : index
    %c0_9 = arith.constant 0 : index
    %23 = vector.load %arg5[%c0_8, %c0_9] : memref<1x32xf32, #tpu.memory_space<vmem>>, vector<1x32xf32>
    %24 = vector.broadcast %23 : vector<1x32xf32> to vector<16x32xf32>
    %25 = arith.addf %22, %24 : vector<16x32xf32>
    %c0_10 = arith.constant 0 : index
    %c0_11 = arith.constant 0 : index
    %26 = vector.load %arg9[%c0_10, %c0_11] : memref<16x64xf32, #tpu.memory_space<vmem>>, vector<16x64xf32>
    %c0_12 = arith.constant 0 : index
    %c0_13 = arith.constant 0 : index
    %27 = vector.load %arg6[%c0_12, %c0_13] : memref<32x64xf32, #tpu.memory_space<vmem>>, vector<32x64xf32>
    %cst_14 = arith.constant dense<0.000000e+00> : vector<16x64xf32>
    %28 = tpu.matmul %25, %27, %cst_14 {dimension_numbers = #tpu.dot_dimension_numbers<[1], [0], [0], [1], [0, 0, 1, 1], [], []>} : vector<16x32xf32>, vector<32x64xf32>, vector<16x64xf32> -> vector<16x64xf32>
    %29 = arith.addf %26, %28 : vector<16x64xf32>
    %c0_15 = arith.constant 0 : index
    %c0_16 = arith.constant 0 : index
    %30 = vector.load %arg9[%c0_15, %c0_16] : memref<16x64xf32, #tpu.memory_space<vmem>>, vector<16x64xf32>
    tpu.vector_store %arg9[%c0_15, %c0_16], %29 {strides = array<i32>} : memref<16x64xf32, #tpu.memory_space<vmem>>, vector<16x64xf32>,
    %c0_i32_17 = arith.constant 0 : i32
    %31 = arith.cmpi eq, %arg2, %c0_i32_17 : i32
    %32 = arith.extui %31 : i1 to i32
    %c0_i32_18 = arith.constant 0 : i32
    %33 = arith.cmpi ne, %32, %c0_i32_18 : i32
    scf.if %33 {
      %c0_19 = arith.constant 0 : index
      %c0_20 = arith.constant 0 : index
      %34 = vector.load %arg9[%c0_19, %c0_20] : memref<16x64xf32, #tpu.memory_space<vmem>>, vector<16x64xf32>
      %c0_21 = arith.constant 0 : index
      %c0_22 = arith.constant 0 : index
      %35 = vector.load %arg7[%c0_21, %c0_22] : memref<1x64xf32, #tpu.memory_space<vmem>>, vector<1x64xf32>
      %36 = vector.broadcast %35 : vector<1x64xf32> to vector<16x64xf32>
      %37 = arith.addf %34, %36 : vector<16x64xf32>
      %c0_23 = arith.constant 0 : index
      %c0_24 = arith.constant 0 : index
      %38 = vector.load %arg8[%c0_23, %c0_24] : memref<16x64xf32, #tpu.memory_space<vmem>>, vector<16x64xf32>
      tpu.vector_store %arg8[%c0_23, %c0_24], %37 {strides = array<i32>} : memref<16x64xf32, #tpu.memory_space<vmem>>, vector<16x64xf32>,
    } else {
    }
    return
  }
  func.func @transform_0(%arg0: i32, %arg1: i32, %arg2: i32) -> (i32, i32) {
    %c0_i32 = arith.constant 0 : i32
    return %arg0, %arg2 : i32, i32
  }
  func.func @transform_1(%arg0: i32, %arg1: i32, %arg2: i32) -> (i32, i32) {
    %c0_i32 = arith.constant 0 : i32
    %c0_i32_0 = arith.constant 0 : i32
    %c0_i32_1 = arith.constant 0 : i32
    return %c0_i32, %c0_i32_0 : i32, i32
  }
  func.func @transform_2(%arg0: i32, %arg1: i32, %arg2: i32) -> (i32, i32) {
    %c0_i32 = arith.constant 0 : i32
    %c0_i32_0 = arith.constant 0 : i32
    %c0_i32_1 = arith.constant 0 : i32
    return %c0_i32, %c0_i32_0 : i32, i32
  }
  func.func @transform_3(%arg0: i32, %arg1: i32, %arg2: i32) -> (i32, i32) {
    %c0_i32 = arith.constant 0 : i32
    return %arg2, %arg1 : i32, i32
  }
  func.func @transform_4(%arg0: i32, %arg1: i32, %arg2: i32) -> (i32, i32) {
    %c0_i32 = arith.constant 0 : i32
    %c0_i32_0 = arith.constant 0 : i32
    return %c0_i32, %arg1 : i32, i32
  }
  func.func @transform_5(%arg0: i32, %arg1: i32, %arg2: i32) -> (i32, i32) {
    %c0_i32 = arith.constant 0 : i32
    return %arg0, %arg1 : i32, i32
  }
}

module attributes {stable_mosaic.version = 11 : i64} {
  func.func @kernel(%arg0: i32, %arg1: i32, %arg2: i32, %arg3: memref<16x32xf32, #tpu.memory_space<vmem>>, %arg4: memref<32x32xf32, #tpu.memory_space<vmem>>, %arg5: memref<1x32xf32, #tpu.memory_space<vmem>>, %arg6: memref<16x32xf32, #tpu.memory_space<vmem>>, %arg7: memref<16x32xf32, #tpu.memory_space<vmem>>, %arg8: memref<16x32xf32, #tpu.memory_space<vmem>>) attributes {dimension_semantics = [#tpu.dimension_semantics<parallel>, #tpu.dimension_semantics<parallel>, #tpu.dimension_semantics<arbitrary>], iteration_bounds = array<i64: 1, 1, 1>, scalar_prefetch = 0 : i64, scratch_operands = 1 : i64, tpu.core_type = #tpu.core_type<tc>, window_params = [{transform_indices = @transform_0, window_bounds = array<i64: 16, 32>}, {transform_indices = @transform_1, window_bounds = array<i64: 32, 32>}, {transform_indices = @transform_2, window_bounds = array<i64: 1, 32>}, {transform_indices = @transform_3, window_bounds = array<i64: 16, 32>}, {transform_indices = @transform_4, window_bounds = array<i64: 16, 32>}]} {
    %c0_i32 = arith.constant 0 : i32
    %0 = arith.cmpi eq, %arg2, %c0_i32 : i32
    %1 = arith.extui %0 : i1 to i32
    %c0_i32_0 = arith.constant 0 : i32
    %2 = arith.cmpi ne, %1, %c0_i32_0 : i32
    scf.if %2 {
      %cst_10 = arith.constant 0.000000e+00 : f32
      %12 = vector.broadcast %cst_10 : f32 to vector<16x32xf32>
      %c0_11 = arith.constant 0 : index
      %c0_12 = arith.constant 0 : index
      %13 = vector.load %arg8[%c0_11, %c0_12] : memref<16x32xf32, #tpu.memory_space<vmem>>, vector<16x32xf32>
      tpu.vector_store %arg8[%c0_11, %c0_12], %12 {strides = array<i32>} : memref<16x32xf32, #tpu.memory_space<vmem>>, vector<16x32xf32>,
    } else {
    }
    %c0 = arith.constant 0 : index
    %c0_1 = arith.constant 0 : index
    %3 = vector.load %arg3[%c0, %c0_1] : memref<16x32xf32, #tpu.memory_space<vmem>>, vector<16x32xf32>
    %c0_2 = arith.constant 0 : index
    %c0_3 = arith.constant 0 : index
    %4 = vector.load %arg8[%c0_2, %c0_3] : memref<16x32xf32, #tpu.memory_space<vmem>>, vector<16x32xf32>
    %c0_4 = arith.constant 0 : index
    %c0_5 = arith.constant 0 : index
    %5 = vector.load %arg4[%c0_4, %c0_5] : memref<32x32xf32, #tpu.memory_space<vmem>>, vector<32x32xf32>
    %cst = arith.constant dense<0.000000e+00> : vector<16x32xf32>
    %6 = tpu.matmul %3, %5, %cst {dimension_numbers = #tpu.dot_dimension_numbers<[1], [0], [0], [1], [0, 0, 1, 1], [], []>} : vector<16x32xf32>, vector<32x32xf32>, vector<16x32xf32> -> vector<16x32xf32>
    %7 = arith.addf %4, %6 : vector<16x32xf32>
    %c0_6 = arith.constant 0 : index
    %c0_7 = arith.constant 0 : index
    %8 = vector.load %arg8[%c0_6, %c0_7] : memref<16x32xf32, #tpu.memory_space<vmem>>, vector<16x32xf32>
    tpu.vector_store %arg8[%c0_6, %c0_7], %7 {strides = array<i32>} : memref<16x32xf32, #tpu.memory_space<vmem>>, vector<16x32xf32>,
    %c0_i32_8 = arith.constant 0 : i32
    %9 = arith.cmpi eq, %arg2, %c0_i32_8 : i32
    %10 = arith.extui %9 : i1 to i32
    %c0_i32_9 = arith.constant 0 : i32
    %11 = arith.cmpi ne, %10, %c0_i32_9 : i32
    scf.if %11 {
      %c0_10 = arith.constant 0 : index
      %c0_11 = arith.constant 0 : index
      %12 = vector.load %arg8[%c0_10, %c0_11] : memref<16x32xf32, #tpu.memory_space<vmem>>, vector<16x32xf32>
      %c0_12 = arith.constant 0 : index
      %c0_13 = arith.constant 0 : index
      %13 = vector.load %arg5[%c0_12, %c0_13] : memref<1x32xf32, #tpu.memory_space<vmem>>, vector<1x32xf32>
      %14 = vector.broadcast %13 : vector<1x32xf32> to vector<16x32xf32>
      %15 = arith.addf %12, %14 : vector<16x32xf32>
      %c0_14 = arith.constant 0 : index
      %c0_15 = arith.constant 0 : index
      %16 = vector.load %arg6[%c0_14, %c0_15] : memref<16x32xf32, #tpu.memory_space<vmem>>, vector<16x32xf32>
      %17 = arith.addf %15, %16 : vector<16x32xf32>
      %c0_16 = arith.constant 0 : index
      %c0_17 = arith.constant 0 : index
      %18 = vector.load %arg7[%c0_16, %c0_17] : memref<16x32xf32, #tpu.memory_space<vmem>>, vector<16x32xf32>
      tpu.vector_store %arg7[%c0_16, %c0_17], %17 {strides = array<i32>} : memref<16x32xf32, #tpu.memory_space<vmem>>, vector<16x32xf32>,
    } else {
    }
    return
  }
  func.func @transform_0(%arg0: i32, %arg1: i32, %arg2: i32) -> (i32, i32) {
    %c0_i32 = arith.constant 0 : i32
    return %arg0, %arg2 : i32, i32
  }
  func.func @transform_1(%arg0: i32, %arg1: i32, %arg2: i32) -> (i32, i32) {
    %c0_i32 = arith.constant 0 : i32
    return %arg2, %arg1 : i32, i32
  }
  func.func @transform_2(%arg0: i32, %arg1: i32, %arg2: i32) -> (i32, i32) {
    %c0_i32 = arith.constant 0 : i32
    %c0_i32_0 = arith.constant 0 : i32
    return %c0_i32, %arg1 : i32, i32
  }
  func.func @transform_3(%arg0: i32, %arg1: i32, %arg2: i32) -> (i32, i32) {
    %c0_i32 = arith.constant 0 : i32
    return %arg0, %arg1 : i32, i32
  }
  func.func @transform_4(%arg0: i32, %arg1: i32, %arg2: i32) -> (i32, i32) {
    %c0_i32 = arith.constant 0 : i32
    return %arg0, %arg1 : i32, i32
  }
}

module attributes {stable_mosaic.version = 11 : i64} {
  func.func @kernel(%arg0: i32, %arg1: i32, %arg2: i32, %arg3: memref<32x32xf32, #tpu.memory_space<vmem>>, %arg4: memref<1x32xf32, #tpu.memory_space<vmem>>, %arg5: memref<1x32xf32, #tpu.memory_space<vmem>>, %arg6: memref<32x64xf32, #tpu.memory_space<vmem>>, %arg7: memref<1x64xf32, #tpu.memory_space<vmem>>, %arg8: memref<32x64xf32, #tpu.memory_space<vmem>>, %arg9: memref<32x64xf32, #tpu.memory_space<vmem>>) attributes {dimension_semantics = [#tpu.dimension_semantics<parallel>, #tpu.dimension_semantics<parallel>, #tpu.dimension_semantics<arbitrary>], iteration_bounds = array<i64: 1, 1, 1>, scalar_prefetch = 0 : i64, scratch_operands = 1 : i64, tpu.core_type = #tpu.core_type<tc>, window_params = [{transform_indices = @transform_0, window_bounds = array<i64: 32, 32>}, {pipeline_mode = #tpu.pipeline_mode<synchronous>, transform_indices = @transform_1, window_bounds = array<i64: 1, 32>}, {pipeline_mode = #tpu.pipeline_mode<synchronous>, transform_indices = @transform_2, window_bounds = array<i64: 1, 32>}, {transform_indices = @transform_3, window_bounds = array<i64: 32, 64>}, {transform_indices = @transform_4, window_bounds = array<i64: 1, 64>}, {transform_indices = @transform_5, window_bounds = array<i64: 32, 64>}]} {
    %c0_i32 = arith.constant 0 : i32
    %0 = arith.cmpi eq, %arg2, %c0_i32 : i32
    %1 = arith.extui %0 : i1 to i32
    %c0_i32_0 = arith.constant 0 : i32
    %2 = arith.cmpi ne, %1, %c0_i32_0 : i32
    scf.if %2 {
      %cst_19 = arith.constant 0.000000e+00 : f32
      %34 = vector.broadcast %cst_19 : f32 to vector<32x64xf32>
      %c0_20 = arith.constant 0 : index
      %c0_21 = arith.constant 0 : index
      %35 = vector.load %arg9[%c0_20, %c0_21] : memref<32x64xf32, #tpu.memory_space<vmem>>, vector<32x64xf32>
      tpu.vector_store %arg9[%c0_20, %c0_21], %34 {strides = array<i32>} : memref<32x64xf32, #tpu.memory_space<vmem>>, vector<32x64xf32>,
    } else {
    }
    %c0 = arith.constant 0 : index
    %c0_1 = arith.constant 0 : index
    %3 = vector.load %arg3[%c0, %c0_1] : memref<32x32xf32, #tpu.memory_space<vmem>>, vector<32x32xf32>
    %cst = arith.constant dense<0.000000e+00> : vector<32xf32>
    %4 = vector.multi_reduction <add>, %3, %cst [1] : vector<32x32xf32> to vector<32xf32>
    %5 = vector.shape_cast %4 : vector<32xf32> to vector<32x1xf32>
    %cst_2 = arith.constant 3.200000e+01 : f32
    %6 = vector.broadcast %cst_2 : f32 to vector<32x1xf32>
    %7 = arith.divf %5, %6 : vector<32x1xf32>
    %8 = vector.broadcast %7 : vector<32x1xf32> to vector<32x32xf32>
    %9 = arith.subf %3, %8 : vector<32x32xf32>
    %10 = arith.mulf %9, %9 : vector<32x32xf32>
    %cst_3 = arith.constant dense<0.000000e+00> : vector<32xf32>
    %11 = vector.multi_reduction <add>, %10, %cst_3 [1] : vector<32x32xf32> to vector<32xf32>
    %12 = vector.shape_cast %11 : vector<32xf32> to vector<32x1xf32>
    %cst_4 = arith.constant 3.200000e+01 : f32
    %13 = vector.broadcast %cst_4 : f32 to vector<32x1xf32>
    %14 = arith.divf %12, %13 : vector<32x1xf32>
    %cst_5 = arith.constant 9.99999974E-6 : f32
    %15 = vector.broadcast %cst_5 : f32 to vector<32x1xf32>
    %16 = arith.addf %14, %15 : vector<32x1xf32>
    %17 = math.rsqrt %16 : vector<32x1xf32>
    %18 = vector.broadcast %17 : vector<32x1xf32> to vector<32x32xf32>
    %19 = arith.mulf %9, %18 : vector<32x32xf32>
    %c0_6 = arith.constant 0 : index
    %c0_7 = arith.constant 0 : index
    %20 = vector.load %arg4[%c0_6, %c0_7] : memref<1x32xf32, #tpu.memory_space<vmem>>, vector<1x32xf32>
    %21 = vector.broadcast %20 : vector<1x32xf32> to vector<32x32xf32>
    %22 = arith.mulf %19, %21 : vector<32x32xf32>
    %c0_8 = arith.constant 0 : index
    %c0_9 = arith.constant 0 : index
    %23 = vector.load %arg5[%c0_8, %c0_9] : memref<1x32xf32, #tpu.memory_space<vmem>>, vector<1x32xf32>
    %24 = vector.broadcast %23 : vector<1x32xf32> to vector<32x32xf32>
    %25 = arith.addf %22, %24 : vector<32x32xf32>
    %c0_10 = arith.constant 0 : index
    %c0_11 = arith.constant 0 : index
    %26 = vector.load %arg9[%c0_10, %c0_11] : memref<32x64xf32, #tpu.memory_space<vmem>>, vector<32x64xf32>
    %c0_12 = arith.constant 0 : index
    %c0_13 = arith.constant 0 : index
    %27 = vector.load %arg6[%c0_12, %c0_13] : memref<32x64xf32, #tpu.memory_space<vmem>>, vector<32x64xf32>
    %cst_14 = arith.constant dense<0.000000e+00> : vector<32x64xf32>
    %28 = tpu.matmul %25, %27, %cst_14 {dimension_numbers = #tpu.dot_dimension_numbers<[1], [0], [0], [1], [0, 0, 1, 1], [], []>} : vector<32x32xf32>, vector<32x64xf32>, vector<32x64xf32> -> vector<32x64xf32>
    %29 = arith.addf %26, %28 : vector<32x64xf32>
    %c0_15 = arith.constant 0 : index
    %c0_16 = arith.constant 0 : index
    %30 = vector.load %arg9[%c0_15, %c0_16] : memref<32x64xf32, #tpu.memory_space<vmem>>, vector<32x64xf32>
    tpu.vector_store %arg9[%c0_15, %c0_16], %29 {strides = array<i32>} : memref<32x64xf32, #tpu.memory_space<vmem>>, vector<32x64xf32>,
    %c0_i32_17 = arith.constant 0 : i32
    %31 = arith.cmpi eq, %arg2, %c0_i32_17 : i32
    %32 = arith.extui %31 : i1 to i32
    %c0_i32_18 = arith.constant 0 : i32
    %33 = arith.cmpi ne, %32, %c0_i32_18 : i32
    scf.if %33 {
      %c0_19 = arith.constant 0 : index
      %c0_20 = arith.constant 0 : index
      %34 = vector.load %arg9[%c0_19, %c0_20] : memref<32x64xf32, #tpu.memory_space<vmem>>, vector<32x64xf32>
      %c0_21 = arith.constant 0 : index
      %c0_22 = arith.constant 0 : index
      %35 = vector.load %arg7[%c0_21, %c0_22] : memref<1x64xf32, #tpu.memory_space<vmem>>, vector<1x64xf32>
      %36 = vector.broadcast %35 : vector<1x64xf32> to vector<32x64xf32>
      %37 = arith.addf %34, %36 : vector<32x64xf32>
      %c0_23 = arith.constant 0 : index
      %c0_24 = arith.constant 0 : index
      %38 = vector.load %arg8[%c0_23, %c0_24] : memref<32x64xf32, #tpu.memory_space<vmem>>, vector<32x64xf32>
      tpu.vector_store %arg8[%c0_23, %c0_24], %37 {strides = array<i32>} : memref<32x64xf32, #tpu.memory_space<vmem>>, vector<32x64xf32>,
    } else {
    }
    return
  }
  func.func @transform_0(%arg0: i32, %arg1: i32, %arg2: i32) -> (i32, i32) {
    %c0_i32 = arith.constant 0 : i32
    return %arg0, %arg2 : i32, i32
  }
  func.func @transform_1(%arg0: i32, %arg1: i32, %arg2: i32) -> (i32, i32) {
    %c0_i32 = arith.constant 0 : i32
    %c0_i32_0 = arith.constant 0 : i32
    %c0_i32_1 = arith.constant 0 : i32
    return %c0_i32, %c0_i32_0 : i32, i32
  }
  func.func @transform_2(%arg0: i32, %arg1: i32, %arg2: i32) -> (i32, i32) {
    %c0_i32 = arith.constant 0 : i32
    %c0_i32_0 = arith.constant 0 : i32
    %c0_i32_1 = arith.constant 0 : i32
    return %c0_i32, %c0_i32_0 : i32, i32
  }
  func.func @transform_3(%arg0: i32, %arg1: i32, %arg2: i32) -> (i32, i32) {
    %c0_i32 = arith.constant 0 : i32
    return %arg2, %arg1 : i32, i32
  }
  func.func @transform_4(%arg0: i32, %arg1: i32, %arg2: i32) -> (i32, i32) {
    %c0_i32 = arith.constant 0 : i32
    %c0_i32_0 = arith.constant 0 : i32
    return %c0_i32, %arg1 : i32, i32
  }
  func.func @transform_5(%arg0: i32, %arg1: i32, %arg2: i32) -> (i32, i32) {
    %c0_i32 = arith.constant 0 : i32
    return %arg0, %arg1 : i32, i32
  }
}

module attributes {stable_mosaic.version = 11 : i64} {
  func.func @kernel(%arg0: i32, %arg1: i32, %arg2: i32, %arg3: memref<16x32xf32, #tpu.memory_space<vmem>>, %arg4: memref<1x32xf32, #tpu.memory_space<vmem>>, %arg5: memref<1x32xf32, #tpu.memory_space<vmem>>, %arg6: memref<32x128xf32, #tpu.memory_space<vmem>>, %arg7: memref<1x128xf32, #tpu.memory_space<vmem>>, %arg8: memref<16x128xf32, #tpu.memory_space<vmem>>, %arg9: memref<16x128xf32, #tpu.memory_space<vmem>>) attributes {dimension_semantics = [#tpu.dimension_semantics<parallel>, #tpu.dimension_semantics<parallel>, #tpu.dimension_semantics<arbitrary>], iteration_bounds = array<i64: 1, 1, 1>, scalar_prefetch = 0 : i64, scratch_operands = 1 : i64, tpu.core_type = #tpu.core_type<tc>, window_params = [{transform_indices = @transform_0, window_bounds = array<i64: 16, 32>}, {pipeline_mode = #tpu.pipeline_mode<synchronous>, transform_indices = @transform_1, window_bounds = array<i64: 1, 32>}, {pipeline_mode = #tpu.pipeline_mode<synchronous>, transform_indices = @transform_2, window_bounds = array<i64: 1, 32>}, {transform_indices = @transform_3, window_bounds = array<i64: 32, 128>}, {transform_indices = @transform_4, window_bounds = array<i64: 1, 128>}, {transform_indices = @transform_5, window_bounds = array<i64: 16, 128>}]} {
    %c0_i32 = arith.constant 0 : i32
    %0 = arith.cmpi eq, %arg2, %c0_i32 : i32
    %1 = arith.extui %0 : i1 to i32
    %c0_i32_0 = arith.constant 0 : i32
    %2 = arith.cmpi ne, %1, %c0_i32_0 : i32
    scf.if %2 {
      %cst_19 = arith.constant 0.000000e+00 : f32
      %34 = vector.broadcast %cst_19 : f32 to vector<16x128xf32>
      %c0_20 = arith.constant 0 : index
      %c0_21 = arith.constant 0 : index
      %35 = vector.load %arg9[%c0_20, %c0_21] : memref<16x128xf32, #tpu.memory_space<vmem>>, vector<16x128xf32>
      tpu.vector_store %arg9[%c0_20, %c0_21], %34 {strides = array<i32>} : memref<16x128xf32, #tpu.memory_space<vmem>>, vector<16x128xf32>,
    } else {
    }
    %c0 = arith.constant 0 : index
    %c0_1 = arith.constant 0 : index
    %3 = vector.load %arg3[%c0, %c0_1] : memref<16x32xf32, #tpu.memory_space<vmem>>, vector<16x32xf32>
    %cst = arith.constant dense<0.000000e+00> : vector<16xf32>
    %4 = vector.multi_reduction <add>, %3, %cst [1] : vector<16x32xf32> to vector<16xf32>
    %5 = vector.shape_cast %4 : vector<16xf32> to vector<16x1xf32>
    %cst_2 = arith.constant 3.200000e+01 : f32
    %6 = vector.broadcast %cst_2 : f32 to vector<16x1xf32>
    %7 = arith.divf %5, %6 : vector<16x1xf32>
    %8 = vector.broadcast %7 : vector<16x1xf32> to vector<16x32xf32>
    %9 = arith.subf %3, %8 : vector<16x32xf32>
    %10 = arith.mulf %9, %9 : vector<16x32xf32>
    %cst_3 = arith.constant dense<0.000000e+00> : vector<16xf32>
    %11 = vector.multi_reduction <add>, %10, %cst_3 [1] : vector<16x32xf32> to vector<16xf32>
    %12 = vector.shape_cast %11 : vector<16xf32> to vector<16x1xf32>
    %cst_4 = arith.constant 3.200000e+01 : f32
    %13 = vector.broadcast %cst_4 : f32 to vector<16x1xf32>
    %14 = arith.divf %12, %13 : vector<16x1xf32>
    %cst_5 = arith.constant 9.99999974E-6 : f32
    %15 = vector.broadcast %cst_5 : f32 to vector<16x1xf32>
    %16 = arith.addf %14, %15 : vector<16x1xf32>
    %17 = math.rsqrt %16 : vector<16x1xf32>
    %18 = vector.broadcast %17 : vector<16x1xf32> to vector<16x32xf32>
    %19 = arith.mulf %9, %18 : vector<16x32xf32>
    %c0_6 = arith.constant 0 : index
    %c0_7 = arith.constant 0 : index
    %20 = vector.load %arg4[%c0_6, %c0_7] : memref<1x32xf32, #tpu.memory_space<vmem>>, vector<1x32xf32>
    %21 = vector.broadcast %20 : vector<1x32xf32> to vector<16x32xf32>
    %22 = arith.mulf %19, %21 : vector<16x32xf32>
    %c0_8 = arith.constant 0 : index
    %c0_9 = arith.constant 0 : index
    %23 = vector.load %arg5[%c0_8, %c0_9] : memref<1x32xf32, #tpu.memory_space<vmem>>, vector<1x32xf32>
    %24 = vector.broadcast %23 : vector<1x32xf32> to vector<16x32xf32>
    %25 = arith.addf %22, %24 : vector<16x32xf32>
    %c0_10 = arith.constant 0 : index
    %c0_11 = arith.constant 0 : index
    %26 = vector.load %arg9[%c0_10, %c0_11] : memref<16x128xf32, #tpu.memory_space<vmem>>, vector<16x128xf32>
    %c0_12 = arith.constant 0 : index
    %c0_13 = arith.constant 0 : index
    %27 = vector.load %arg6[%c0_12, %c0_13] : memref<32x128xf32, #tpu.memory_space<vmem>>, vector<32x128xf32>
    %cst_14 = arith.constant dense<0.000000e+00> : vector<16x128xf32>
    %28 = tpu.matmul %25, %27, %cst_14 {dimension_numbers = #tpu.dot_dimension_numbers<[1], [0], [0], [1], [0, 0, 1, 1], [], []>} : vector<16x32xf32>, vector<32x128xf32>, vector<16x128xf32> -> vector<16x128xf32>
    %29 = arith.addf %26, %28 : vector<16x128xf32>
    %c0_15 = arith.constant 0 : index
    %c0_16 = arith.constant 0 : index
    %30 = vector.load %arg9[%c0_15, %c0_16] : memref<16x128xf32, #tpu.memory_space<vmem>>, vector<16x128xf32>
    tpu.vector_store %arg9[%c0_15, %c0_16], %29 {strides = array<i32>} : memref<16x128xf32, #tpu.memory_space<vmem>>, vector<16x128xf32>,
    %c0_i32_17 = arith.constant 0 : i32
    %31 = arith.cmpi eq, %arg2, %c0_i32_17 : i32
    %32 = arith.extui %31 : i1 to i32
    %c0_i32_18 = arith.constant 0 : i32
    %33 = arith.cmpi ne, %32, %c0_i32_18 : i32
    scf.if %33 {
      %c0_19 = arith.constant 0 : index
      %c0_20 = arith.constant 0 : index
      %34 = vector.load %arg9[%c0_19, %c0_20] : memref<16x128xf32, #tpu.memory_space<vmem>>, vector<16x128xf32>
      %c0_21 = arith.constant 0 : index
      %c0_22 = arith.constant 0 : index
      %35 = vector.load %arg7[%c0_21, %c0_22] : memref<1x128xf32, #tpu.memory_space<vmem>>, vector<1x128xf32>
      %36 = vector.broadcast %35 : vector<1x128xf32> to vector<16x128xf32>
      %37 = arith.addf %34, %36 : vector<16x128xf32>
      %cst_23 = arith.constant 5.000000e-01 : f32
      %38 = vector.broadcast %cst_23 : f32 to vector<16x128xf32>
      %39 = arith.mulf %38, %37 : vector<16x128xf32>
      %cst_24 = arith.constant 0.707106769 : f32
      %40 = vector.broadcast %cst_24 : f32 to vector<16x128xf32>
      %41 = arith.mulf %37, %40 : vector<16x128xf32>
      %42 = math.absf %41 : vector<16x128xf32>
      %cst_25 = arith.constant 0.327591091 : f32
      %43 = vector.broadcast %cst_25 : f32 to vector<16x128xf32>
      %44 = arith.mulf %43, %42 : vector<16x128xf32>
      %cst_26 = arith.constant 1.000000e+00 : f32
      %45 = vector.broadcast %cst_26 : f32 to vector<16x128xf32>
      %46 = arith.addf %45, %44 : vector<16x128xf32>
      %cst_27 = arith.constant 1.000000e+00 : f32
      %47 = vector.broadcast %cst_27 : f32 to vector<16x128xf32>
      %48 = arith.divf %47, %46 : vector<16x128xf32>
      %cst_28 = arith.constant 1.06140542 : f32
      %49 = vector.broadcast %cst_28 : f32 to vector<16x128xf32>
      %50 = arith.mulf %49, %48 : vector<16x128xf32>
      %cst_29 = arith.constant 1.45315206 : f32
      %51 = vector.broadcast %cst_29 : f32 to vector<16x128xf32>
      %52 = arith.subf %50, %51 : vector<16x128xf32>
      %53 = arith.mulf %52, %48 : vector<16x128xf32>
      %cst_30 = arith.constant 1.42141378 : f32
      %54 = vector.broadcast %cst_30 : f32 to vector<16x128xf32>
      %55 = arith.addf %53, %54 : vector<16x128xf32>
      %56 = arith.mulf %55, %48 : vector<16x128xf32>
      %cst_31 = arith.constant 0.284496725 : f32
      %57 = vector.broadcast %cst_31 : f32 to vector<16x128xf32>
      %58 = arith.subf %56, %57 : vector<16x128xf32>
      %59 = arith.mulf %58, %48 : vector<16x128xf32>
      %cst_32 = arith.constant 0.254829586 : f32
      %60 = vector.broadcast %cst_32 : f32 to vector<16x128xf32>
      %61 = arith.addf %59, %60 : vector<16x128xf32>
      %62 = arith.mulf %61, %48 : vector<16x128xf32>
      %cst_33 = arith.constant 0.000000e+00 : f32
      %63 = vector.broadcast %cst_33 : f32 to vector<16x128xf32>
      %64 = arith.subf %63, %42 : vector<16x128xf32>
      %65 = arith.mulf %64, %42 : vector<16x128xf32>
      %66 = math.exp %65 : vector<16x128xf32>
      %67 = arith.mulf %62, %66 : vector<16x128xf32>
      %cst_34 = arith.constant 1.000000e+00 : f32
      %68 = vector.broadcast %cst_34 : f32 to vector<16x128xf32>
      %69 = arith.subf %68, %67 : vector<16x128xf32>
      %cst_35 = arith.constant 0.000000e+00 : f32
      %70 = vector.broadcast %cst_35 : f32 to vector<16x128xf32>
      %71 = arith.cmpf oge, %41, %70 : vector<16x128xf32>
      %cst_36 = arith.constant 0.000000e+00 : f32
      %72 = vector.broadcast %cst_36 : f32 to vector<16x128xf32>
      %73 = arith.subf %72, %69 : vector<16x128xf32>
      %74 = arith.select %71, %69, %73 : vector<16x128xi1>, vector<16x128xf32>
      %cst_37 = arith.constant 1.000000e+00 : f32
      %75 = vector.broadcast %cst_37 : f32 to vector<16x128xf32>
      %76 = arith.addf %75, %74 : vector<16x128xf32>
      %77 = arith.mulf %39, %76 : vector<16x128xf32>
      %c0_38 = arith.constant 0 : index
      %c0_39 = arith.constant 0 : index
      %78 = vector.load %arg8[%c0_38, %c0_39] : memref<16x128xf32, #tpu.memory_space<vmem>>, vector<16x128xf32>
      tpu.vector_store %arg8[%c0_38, %c0_39], %77 {strides = array<i32>} : memref<16x128xf32, #tpu.memory_space<vmem>>, vector<16x128xf32>,
    } else {
    }
    return
  }
  func.func @transform_0(%arg0: i32, %arg1: i32, %arg2: i32) -> (i32, i32) {
    %c0_i32 = arith.constant 0 : i32
    return %arg0, %arg2 : i32, i32
  }
  func.func @transform_1(%arg0: i32, %arg1: i32, %arg2: i32) -> (i32, i32) {
    %c0_i32 = arith.constant 0 : i32
    %c0_i32_0 = arith.constant 0 : i32
    %c0_i32_1 = arith.constant 0 : i32
    return %c0_i32, %c0_i32_0 : i32, i32
  }
  func.func @transform_2(%arg0: i32, %arg1: i32, %arg2: i32) -> (i32, i32) {
    %c0_i32 = arith.constant 0 : i32
    %c0_i32_0 = arith.constant 0 : i32
    %c0_i32_1 = arith.constant 0 : i32
    return %c0_i32, %c0_i32_0 : i32, i32
  }
  func.func @transform_3(%arg0: i32, %arg1: i32, %arg2: i32) -> (i32, i32) {
    %c0_i32 = arith.constant 0 : i32
    return %arg2, %arg1 : i32, i32
  }
  func.func @transform_4(%arg0: i32, %arg1: i32, %arg2: i32) -> (i32, i32) {
    %c0_i32 = arith.constant 0 : i32
    %c0_i32_0 = arith.constant 0 : i32
    return %c0_i32, %arg1 : i32, i32
  }
  func.func @transform_5(%arg0: i32, %arg1: i32, %arg2: i32) -> (i32, i32) {
    %c0_i32 = arith.constant 0 : i32
    return %arg0, %arg1 : i32, i32
  }
}

module attributes {stable_mosaic.version = 11 : i64} {
  func.func @kernel(%arg0: i32, %arg1: i32, %arg2: i32, %arg3: memref<16x32xf32, #tpu.memory_space<vmem>>, %arg4: memref<1x32xf32, #tpu.memory_space<vmem>>, %arg5: memref<1x32xf32, #tpu.memory_space<vmem>>, %arg6: memref<32x16xf32, #tpu.memory_space<vmem>>, %arg7: memref<16x16xf32, #tpu.memory_space<vmem>>, %arg8: memref<16x16xf32, #tpu.memory_space<vmem>>) attributes {dimension_semantics = [#tpu.dimension_semantics<parallel>, #tpu.dimension_semantics<parallel>, #tpu.dimension_semantics<arbitrary>], iteration_bounds = array<i64: 1, 1, 1>, scalar_prefetch = 0 : i64, scratch_operands = 1 : i64, tpu.core_type = #tpu.core_type<tc>, window_params = [{transform_indices = @transform_0, window_bounds = array<i64: 16, 32>}, {pipeline_mode = #tpu.pipeline_mode<synchronous>, transform_indices = @transform_1, window_bounds = array<i64: 1, 32>}, {pipeline_mode = #tpu.pipeline_mode<synchronous>, transform_indices = @transform_2, window_bounds = array<i64: 1, 32>}, {transform_indices = @transform_3, window_bounds = array<i64: 32, 16>}, {transform_indices = @transform_4, window_bounds = array<i64: 16, 16>}]} {
    %c0_i32 = arith.constant 0 : i32
    %0 = arith.cmpi eq, %arg2, %c0_i32 : i32
    %1 = arith.extui %0 : i1 to i32
    %c0_i32_0 = arith.constant 0 : i32
    %2 = arith.cmpi ne, %1, %c0_i32_0 : i32
    scf.if %2 {
      %cst_19 = arith.constant 0.000000e+00 : f32
      %34 = vector.broadcast %cst_19 : f32 to vector<16x16xf32>
      %c0_20 = arith.constant 0 : index
      %c0_21 = arith.constant 0 : index
      %35 = vector.load %arg8[%c0_20, %c0_21] : memref<16x16xf32, #tpu.memory_space<vmem>>, vector<16x16xf32>
      tpu.vector_store %arg8[%c0_20, %c0_21], %34 {strides = array<i32>} : memref<16x16xf32, #tpu.memory_space<vmem>>, vector<16x16xf32>,
    } else {
    }
    %c0 = arith.constant 0 : index
    %c0_1 = arith.constant 0 : index
    %3 = vector.load %arg3[%c0, %c0_1] : memref<16x32xf32, #tpu.memory_space<vmem>>, vector<16x32xf32>
    %cst = arith.constant dense<0.000000e+00> : vector<16xf32>
    %4 = vector.multi_reduction <add>, %3, %cst [1] : vector<16x32xf32> to vector<16xf32>
    %5 = vector.shape_cast %4 : vector<16xf32> to vector<16x1xf32>
    %cst_2 = arith.constant 3.200000e+01 : f32
    %6 = vector.broadcast %cst_2 : f32 to vector<16x1xf32>
    %7 = arith.divf %5, %6 : vector<16x1xf32>
    %8 = vector.broadcast %7 : vector<16x1xf32> to vector<16x32xf32>
    %9 = arith.subf %3, %8 : vector<16x32xf32>
    %10 = arith.mulf %9, %9 : vector<16x32xf32>
    %cst_3 = arith.constant dense<0.000000e+00> : vector<16xf32>
    %11 = vector.multi_reduction <add>, %10, %cst_3 [1] : vector<16x32xf32> to vector<16xf32>
    %12 = vector.shape_cast %11 : vector<16xf32> to vector<16x1xf32>
    %cst_4 = arith.constant 3.200000e+01 : f32
    %13 = vector.broadcast %cst_4 : f32 to vector<16x1xf32>
    %14 = arith.divf %12, %13 : vector<16x1xf32>
    %cst_5 = arith.constant 9.99999974E-6 : f32
    %15 = vector.broadcast %cst_5 : f32 to vector<16x1xf32>
    %16 = arith.addf %14, %15 : vector<16x1xf32>
    %17 = math.rsqrt %16 : vector<16x1xf32>
    %18 = vector.broadcast %17 : vector<16x1xf32> to vector<16x32xf32>
    %19 = arith.mulf %9, %18 : vector<16x32xf32>
    %c0_6 = arith.constant 0 : index
    %c0_7 = arith.constant 0 : index
    %20 = vector.load %arg4[%c0_6, %c0_7] : memref<1x32xf32, #tpu.memory_space<vmem>>, vector<1x32xf32>
    %21 = vector.broadcast %20 : vector<1x32xf32> to vector<16x32xf32>
    %22 = arith.mulf %19, %21 : vector<16x32xf32>
    %c0_8 = arith.constant 0 : index
    %c0_9 = arith.constant 0 : index
    %23 = vector.load %arg5[%c0_8, %c0_9] : memref<1x32xf32, #tpu.memory_space<vmem>>, vector<1x32xf32>
    %24 = vector.broadcast %23 : vector<1x32xf32> to vector<16x32xf32>
    %25 = arith.addf %22, %24 : vector<16x32xf32>
    %c0_10 = arith.constant 0 : index
    %c0_11 = arith.constant 0 : index
    %26 = vector.load %arg8[%c0_10, %c0_11] : memref<16x16xf32, #tpu.memory_space<vmem>>, vector<16x16xf32>
    %c0_12 = arith.constant 0 : index
    %c0_13 = arith.constant 0 : index
    %27 = vector.load %arg6[%c0_12, %c0_13] : memref<32x16xf32, #tpu.memory_space<vmem>>, vector<32x16xf32>
    %cst_14 = arith.constant dense<0.000000e+00> : vector<16x16xf32>
    %28 = tpu.matmul %25, %27, %cst_14 {dimension_numbers = #tpu.dot_dimension_numbers<[1], [0], [0], [1], [0, 0, 1, 1], [], []>} : vector<16x32xf32>, vector<32x16xf32>, vector<16x16xf32> -> vector<16x16xf32>
    %29 = arith.addf %26, %28 : vector<16x16xf32>
    %c0_15 = arith.constant 0 : index
    %c0_16 = arith.constant 0 : index
    %30 = vector.load %arg8[%c0_15, %c0_16] : memref<16x16xf32, #tpu.memory_space<vmem>>, vector<16x16xf32>
    tpu.vector_store %arg8[%c0_15, %c0_16], %29 {strides = array<i32>} : memref<16x16xf32, #tpu.memory_space<vmem>>, vector<16x16xf32>,
    %c0_i32_17 = arith.constant 0 : i32
    %31 = arith.cmpi eq, %arg2, %c0_i32_17 : i32
    %32 = arith.extui %31 : i1 to i32
    %c0_i32_18 = arith.constant 0 : i32
    %33 = arith.cmpi ne, %32, %c0_i32_18 : i32
    scf.if %33 {
      %c0_19 = arith.constant 0 : index
      %c0_20 = arith.constant 0 : index
      %34 = vector.load %arg8[%c0_19, %c0_20] : memref<16x16xf32, #tpu.memory_space<vmem>>, vector<16x16xf32>
      %c0_21 = arith.constant 0 : index
      %c0_22 = arith.constant 0 : index
      %35 = vector.load %arg7[%c0_21, %c0_22] : memref<16x16xf32, #tpu.memory_space<vmem>>, vector<16x16xf32>
      tpu.vector_store %arg7[%c0_21, %c0_22], %34 {strides = array<i32>} : memref<16x16xf32, #tpu.memory_space<vmem>>, vector<16x16xf32>,
    } else {
    }
    return
  }
  func.func @transform_0(%arg0: i32, %arg1: i32, %arg2: i32) -> (i32, i32) {
    %c0_i32 = arith.constant 0 : i32
    return %arg0, %arg2 : i32, i32
  }
  func.func @transform_1(%arg0: i32, %arg1: i32, %arg2: i32) -> (i32, i32) {
    %c0_i32 = arith.constant 0 : i32
    %c0_i32_0 = arith.constant 0 : i32
    %c0_i32_1 = arith.constant 0 : i32
    return %c0_i32, %c0_i32_0 : i32, i32
  }
  func.func @transform_2(%arg0: i32, %arg1: i32, %arg2: i32) -> (i32, i32) {
    %c0_i32 = arith.constant 0 : i32
    %c0_i32_0 = arith.constant 0 : i32
    %c0_i32_1 = arith.constant 0 : i32
    return %c0_i32, %c0_i32_0 : i32, i32
  }
  func.func @transform_3(%arg0: i32, %arg1: i32, %arg2: i32) -> (i32, i32) {
    %c0_i32 = arith.constant 0 : i32
    return %arg2, %arg1 : i32, i32
  }
  func.func @transform_4(%arg0: i32, %arg1: i32, %arg2: i32) -> (i32, i32) {
    %c0_i32 = arith.constant 0 : i32
    return %arg0, %arg1 : i32, i32
  }
}

</mosaic_0001>

<llo_original>
// kernel: _lambda_.25
$region0: #{_lambda_.25}
  #allocation0 [shape = 'u32[]', space=smem, size = 0x4, offset = 0x4, fixed_abs, tag = 'smem constant byte address 0x4 - core index']
  #allocation1 [shape = 'u32[72,128]{1,0:T(1,128)}', space=vmem, size = 0x9000, scoped, tag = 'internal scratch']
  #allocation2 [shape = 'f32[16,32]{1,0:T(8,128)}', space=vmem, size = 0x2000, scoped, tag = 'scratch operand']
  %s0 = inlined_call_operand.hbm [shape: f32[16,32], index: 0, kind: input, shape index: {}]
  %s1 = inlined_call_operand.vmem [shape: f32[1,32], index: 1, kind: input, shape index: {}]
  %s2 = inlined_call_operand.vmem [shape: f32[1,32], index: 2, kind: input, shape index: {}]
  %s3 = inlined_call_operand.vmem [shape: f32[32,32], index: 3, kind: input, shape index: {}]
  %s4 = inlined_call_operand.vmem [shape: f32[1,32], index: 4, kind: input, shape index: {}]
  %s5 = inlined_call_operand.vmem [shape: f32[16,32], index: 5, kind: output, shape index: {}]
  %s6 = sld [smem:[#allocation0]]
  $region42: #{_lambda_.25} parent=0
    _
  %s8 = ssub.s32 1, %s6
  %s9 = scalar_select 0, %s8, %s6
  $region1: #{_lambda_.25} parent=0
    #allocation3 [shape = 'u8[8192]{0}', space=vmem, size = 0x2000, scoped, tag = 'input window, operand 0, single buffered']
    #allocation4 [shape = 's32[1]{0}', space=sflag, size = 0x4, scoped, tag = 'scoped memory for _lambda_.25']
    %10 = vsyncpa [#allocation4], 0
    // Predicated region
    $region2: #{_lambda_.25} parent=1 // pred_check
      _
    $region3: #{_lambda_.25} parent=1 // pred_check_branch
      %12 = sbr.rel (0) target = $region5
    $region4: #{_lambda_.25} parent=1 // pred_region
      %14 = vsyncadd [#allocation4], 0
      %s15 = sshll.u32 %s0, 4
      %s16 = int_to_ptr.hbm [resolvable:$true] %s15
      %s17 = sshll.u32 [#allocation3], 4
      %s18 = int_to_ptr.vmem [resolvable:$true] %s17
      %23 = dma.hbm_to_vmem [thread:$0]  %s16, 256, %s18, [#allocation4], 128, 128, 8
    $region5: #{_lambda_.25} parent=1 // pred_fallthru
      _
    // Predicated region
    $region6: #{_lambda_.25} parent=1 // pred_check
      _
    $region7: #{_lambda_.25} parent=1 // pred_check_branch
      %25 = sbr.rel (0) target = $region9
    $region8: #{_lambda_.25} parent=1 // pred_region
      _
    $region9: #{_lambda_.25} parent=1 // pred_fallthru
      _
    // Predicated region
    $region10: #{_lambda_.25} parent=1 // pred_check
      _
    $region11: #{_lambda_.25} parent=1 // pred_check_branch
      %27 = sbr.rel (0) target = $region13
    $region12: #{_lambda_.25} parent=1 // pred_region
      _
    $region13: #{_lambda_.25} parent=1 // pred_fallthru
      _
    // Predicated region
    $region14: #{_lambda_.25} parent=1 // pred_check
      _
    $region15: #{_lambda_.25} parent=1 // pred_check_branch
      %29 = sbr.rel (0) target = $region17
    $region16: #{_lambda_.25} parent=1 // pred_region
      _
    $region17: #{_lambda_.25} parent=1 // pred_fallthru
      _
    // Predicated region
    $region18: #{_lambda_.25} parent=1 // pred_check
      _
    $region19: #{_lambda_.25} parent=1 // pred_check_branch
      %31 = sbr.rel (0) target = $region21
    $region20: #{_lambda_.25} parent=1 // pred_region
      _
    $region21: #{_lambda_.25} parent=1 // pred_fallthru
      _
    // Predicated region
    $region22: #{_lambda_.25} parent=1 // pred_check
      _
    $region23: #{_lambda_.25} parent=1 // pred_check_branch
      %33 = sbr.rel (0) target = $region25
    $region24: #{_lambda_.25} parent=1 // pred_region
      %35 = dma.done [#allocation4], 256
    $region25: #{_lambda_.25} parent=1 // pred_fallthru
      _
    %p36 = scmp.eq.s32.totalorder 0, 0
    // Predicated region
    $region26: #{_lambda_.25} parent=1 // pred_check
      %p37 = pneg %p36
    $region27: #{_lambda_.25} parent=1 // pred_check_branch
      %39 = sbr.rel (%p37) target = $region29
    $region28: #{_lambda_.25} parent=1 // pred_region
      %vm40 = vcmask 261120
      %41 = vst.msk [vmem:[#allocation2] sm:$0xff] %vm40, 0.0
      %42 = vst.msk [vmem:[#allocation2 + $0x8] sm:$0xff] %vm40, 0.0
    $region29: #{_lambda_.25} parent=1 // pred_fallthru
      _
    %v43 = vld [vmem:[#allocation3] sm:$0xff]
    %v44 = vld [vmem:[#allocation3 + $0x8] sm:$0xff]
    %vm45 = vcmask 261120
    %v46 = vsel %vm45, %v43, 0.0
    %47 = vadd.xlane.f32.xlu0 %v46
    %v48 = vpop.xlane.xlu0 %47
    %v49 = vsel %vm45, %v44, 0.0
    %50 = vadd.xlane.f32.xlu0 %v49
    %v51 = vpop.xlane.xlu0 %50
    %v52 = vrcp.pop 32.0
    %v53 = vmul.f32 32.0, %v52
    %v54 = vsub.f32 1.0, %v53
    %v55 = vmul.f32 %v52, %v54
    %v56 = vadd.f32 %v52, %v55
    %vm57 = vweird.f32 %v52
    %v58 = vsel %vm57, %v52, %v56
    %v59 = vmul.f32 %v48, %v58
    %v60 = vmul.f32 %v51, %v58
    %v61 = vsub.f32 %v43, %v59
    %v62 = vsub.f32 %v44, %v60
    %v63 = vmul.f32 %v61, %v61
    %v64 = vmul.f32 %v62, %v62
    %v65 = vsel %vm45, %v63, 0.0
    %66 = vadd.xlane.f32.xlu0 %v65
    %v67 = vpop.xlane.xlu0 %66
    %v68 = vsel %vm45, %v64, 0.0
    %69 = vadd.xlane.f32.xlu0 %v68
    %v70 = vpop.xlane.xlu0 %69
    %v71 = vmul.f32 %v67, %v58
    %v72 = vmul.f32 %v70, %v58
    %v73 = vadd.f32 %v71, 1e-05
    %v74 = vadd.f32 %v72, 1e-05
    %v75 = vrsqrt.pop %v73
    %v76 = vmul.f32 %v75, %v73
    %v77 = vmul.f32 %v76, %v75
    %v78 = vmul.f32 0.5, %v77
    %v79 = vsub.f32 1.5, %v78
    %v80 = vmul.f32 %v75, %v79
    %vm81 = vweird.f32 %v73
    %vm82 = vweird.f32 %v75
    %vm83 = vmor %vm81, %vm82
    %v84 = vsel %vm83, %v75, %v80
    %v85 = vrsqrt.pop %v74
    %v86 = vmul.f32 %v85, %v74
    %v87 = vmul.f32 %v86, %v85
    %v88 = vmul.f32 0.5, %v87
    %v89 = vsub.f32 1.5, %v88
    %v90 = vmul.f32 %v85, %v89
    %vm91 = vweird.f32 %v74
    %vm92 = vweird.f32 %v85
    %vm93 = vmor %vm91, %vm92
    %v94 = vsel %vm93, %v85, %v90
    %v95 = vmul.f32 %v61, %v84
    %v96 = vmul.f32 %v62, %v94
    %v97 = vld [vmem:[%s1] sm:$0x1]
    %v99 = vperm.slane %v97, 0
    %v101 = vmul.f32 %v95, %v99
    %v102 = vmul.f32 %v96, %v99
    %v103 = vld [vmem:[%s2] sm:$0x1]
    %v105 = vperm.slane %v103, 0
    %v107 = vadd.f32 %v101, %v105
    %v108 = vadd.f32 %v102, %v105
    %v109 = vld [vmem:[#allocation2] sm:$0xff]
    %v110 = vld [vmem:[#allocation2 + $0x8] sm:$0xff]
    %v111 = vld [vmem:[%s3] sm:$0xff]
    %v112 = vld [vmem:[%s3 + $0x8] sm:$0xff]
    %v113 = vld [vmem:[%s3 + $0x10] sm:$0xff]
    %v114 = vld [vmem:[%s3 + $0x18] sm:$0xff]
    %v116 = vsel %vm45, %v107, 0
    %v119 = vsel %vm45, %v108, 0
    %121 = vmatpush.msra.mxu0 0.0
    %122 = vmatpush.msra.mxu0 0.0
    %123 = vmatpush.msra.mxu0 0.0
    %124 = vmatpush.msra.mxu0 0.0
    %125 = vmatpush.msra.mxu0 0.0
    %126 = vmatpush.msra.mxu0 0.0
    %127 = vmatpush.msra.mxu0 0.0
    %128 = vmatpush.msra.mxu0 0.0
    %129 = vmatpush.msra.mxu0 0.0
    %130 = vmatpush.msra.mxu0 0.0
    %131 = vmatpush.msra.mxu0 0.0
    %132 = vmatpush.msra.mxu0 0.0
    %133 = vmatpush.msra.mxu0 %v114
    %134 = vmatpush.msra.mxu0 %v113
    %135 = vmatpush.msra.mxu0 %v112
    %136 = vmatpush.msra.mxu0 %v111
    %137 = vmatmul.f32.gmra.mxu0 %v116
    %v138 = vpop.f32.mrf.mxu0
    %v139 = vadd.f32 0.0, %v138
    %140 = vmatmul.f32.gmra.mxu0 %v119
    %v141 = vpop.f32.mrf.mxu0
    %v142 = vadd.f32 0.0, %v141
    %143 = vdwg.mxu0
    %v144 = vadd.f32 %v109, %v139
    %v145 = vadd.f32 %v110, %v142
    %146 = vst.msk [vmem:[#allocation2] sm:$0xff] %vm45, %v144
    %147 = vst.msk [vmem:[#allocation2 + $0x8] sm:$0xff] %vm45, %v145
    // Predicated region
    $region30: #{_lambda_.25} parent=1 // pred_check
      %p148 = pneg %p36
    $region31: #{_lambda_.25} parent=1 // pred_check_branch
      %150 = sbr.rel (%p148) target = $region33
    $region32: #{_lambda_.25} parent=1 // pred_region
      %v151 = vld [vmem:[#allocation2] sm:$0xff]
      %v152 = vld [vmem:[#allocation2 + $0x8] sm:$0xff]
      %v153 = vld [vmem:[%s4] sm:$0x1]
      %v155 = vperm.slane %v153, 0
      %v157 = vadd.f32 %v151, %v155
      %v158 = vadd.f32 %v152, %v155
      %159 = vst.msk [vmem:[%s5] sm:$0xff] %vm45, %v157
      %160 = vst.msk [vmem:[%s5 + $0x8] sm:$0xff] %vm45, %v158
    $region33: #{_lambda_.25} parent=1 // pred_fallthru
      _
    // Predicated region
    $region34: #{_lambda_.25} parent=1 // pred_check
      _
    $region35: #{_lambda_.25} parent=1 // pred_check_branch
      %162 = sbr.rel (0) target = $region37
    $region36: #{_lambda_.25} parent=1 // pred_region
      _
    $region37: #{_lambda_.25} parent=1 // pred_fallthru
      _
    // Predicated region
    $region38: #{_lambda_.25} parent=1 // pred_check
      _
    $region39: #{_lambda_.25} parent=1 // pred_check_branch
      %164 = sbr.rel (0) target = $region41
    $region40: #{_lambda_.25} parent=1 // pred_region
      _
    $region41: #{_lambda_.25} parent=1 // pred_fallthru
      _
    %165 = vsyncpa [#allocation4], 1

// kernel: _lambda_.26
$region0: #{_lambda_.26}
  #allocation0 [shape = 'u32[]', space=smem, size = 0x4, offset = 0x4, fixed_abs, tag = 'smem constant byte address 0x4 - core index']
  #allocation1 [shape = 'u32[72,128]{1,0:T(1,128)}', space=vmem, size = 0x9000, scoped, tag = 'internal scratch']
  #allocation2 [shape = 'f32[16,64]{1,0:T(8,128)}', space=vmem, size = 0x2000, scoped, tag = 'scratch operand']
  %s0 = inlined_call_operand.hbm [shape: f32[16,32], index: 0, kind: input, shape index: {}]
  %s1 = inlined_call_operand.vmem [shape: f32[1,32], index: 1, kind: input, shape index: {}]
  %s2 = inlined_call_operand.vmem [shape: f32[1,32], index: 2, kind: input, shape index: {}]
  %s3 = inlined_call_operand.hbm [shape: f32[32,64], index: 3, kind: input, shape index: {}]
  %s4 = inlined_call_operand.vmem [shape: f32[1,64], index: 4, kind: input, shape index: {}]
  %s5 = inlined_call_operand.vmem [shape: f32[16,64], index: 5, kind: output, shape index: {}]
  %s6 = sld [smem:[#allocation0]]
  $region46: #{_lambda_.26} parent=0
    _
  %s8 = ssub.s32 1, %s6
  %s9 = scalar_select 0, %s8, %s6
  $region1: #{_lambda_.26} parent=0
    #allocation3 [shape = 'u8[8192]{0}', space=vmem, size = 0x2000, scoped, tag = 'input window, operand 0, single buffered']
    #allocation4 [shape = 's32[1]{0}', space=sflag, size = 0x4, scoped, tag = 'scoped memory for _lambda_.26']
    #allocation5 [shape = 'u8[16384]{0}', space=vmem, size = 0x4000, scoped, tag = 'input window, operand 3, single buffered']
    #allocation6 [shape = 's32[1]{0}', space=sflag, size = 0x4, scoped, tag = 'scoped memory for _lambda_.26']
    %10 = vsyncpa [#allocation4], 0
    %11 = vsyncpa [#allocation6], 0
    // Predicated region
    $region2: #{_lambda_.26} parent=1 // pred_check
      _
    $region3: #{_lambda_.26} parent=1 // pred_check_branch
      %13 = sbr.rel (0) target = $region5
    $region4: #{_lambda_.26} parent=1 // pred_region
      %15 = vsyncadd [#allocation4], 0
      %s16 = sshll.u32 %s0, 4
      %s17 = int_to_ptr.hbm [resolvable:$true] %s16
      %s18 = sshll.u32 [#allocation3], 4
      %s19 = int_to_ptr.vmem [resolvable:$true] %s18
      %24 = dma.hbm_to_vmem [thread:$0]  %s17, 256, %s19, [#allocation4], 128, 128, 8
    $region5: #{_lambda_.26} parent=1 // pred_fallthru
      _
    // Predicated region
    $region6: #{_lambda_.26} parent=1 // pred_check
      _
    $region7: #{_lambda_.26} parent=1 // pred_check_branch
      %26 = sbr.rel (0) target = $region9
    $region8: #{_lambda_.26} parent=1 // pred_region
      _
    $region9: #{_lambda_.26} parent=1 // pred_fallthru
      _
    // Predicated region
    $region10: #{_lambda_.26} parent=1 // pred_check
      _
    $region11: #{_lambda_.26} parent=1 // pred_check_branch
      %28 = sbr.rel (0) target = $region13
    $region12: #{_lambda_.26} parent=1 // pred_region
      _
    $region13: #{_lambda_.26} parent=1 // pred_fallthru
      _
    // Predicated region
    $region14: #{_lambda_.26} parent=1 // pred_check
      _
    $region15: #{_lambda_.26} parent=1 // pred_check_branch
      %30 = sbr.rel (0) target = $region17
    $region16: #{_lambda_.26} parent=1 // pred_region
      %32 = vsyncadd [#allocation6], 0
      %s33 = sshll.u32 %s3, 4
      %s34 = int_to_ptr.hbm [resolvable:$true] %s33
      %s35 = sshll.u32 [#allocation5], 4
      %s36 = int_to_ptr.vmem [resolvable:$true] %s35
      %41 = dma.hbm_to_vmem [thread:$0]  %s34, 512, %s36, [#allocation6], 128, 128, 8
    $region17: #{_lambda_.26} parent=1 // pred_fallthru
      _
    // Predicated region
    $region18: #{_lambda_.26} parent=1 // pred_check
      _
    $region19: #{_lambda_.26} parent=1 // pred_check_branch
      %43 = sbr.rel (0) target = $region21
    $region20: #{_lambda_.26} parent=1 // pred_region
      _
    $region21: #{_lambda_.26} parent=1 // pred_fallthru
      _
    // Predicated region
    $region22: #{_lambda_.26} parent=1 // pred_check
      _
    $region23: #{_lambda_.26} parent=1 // pred_check_branch
      %45 = sbr.rel (0) target = $region25
    $region24: #{_lambda_.26} parent=1 // pred_region
      %47 = dma.done [#allocation4], 256
    $region25: #{_lambda_.26} parent=1 // pred_fallthru
      _
    // Predicated region
    $region26: #{_lambda_.26} parent=1 // pred_check
      _
    $region27: #{_lambda_.26} parent=1 // pred_check_branch
      %49 = sbr.rel (0) target = $region29
    $region28: #{_lambda_.26} parent=1 // pred_region
      %51 = dma.done [#allocation6], 512
    $region29: #{_lambda_.26} parent=1 // pred_fallthru
      _
    %p52 = scmp.eq.s32.totalorder 0, 0
    // Predicated region
    $region30: #{_lambda_.26} parent=1 // pred_check
      %p53 = pneg %p52
    $region31: #{_lambda_.26} parent=1 // pred_check_branch
      %55 = sbr.rel (%p53) target = $region33
    $region32: #{_lambda_.26} parent=1 // pred_region
      %vm56 = vcmask 523264
      %57 = vst.msk [vmem:[#allocation2] sm:$0xff] %vm56, 0.0
      %58 = vst.msk [vmem:[#allocation2 + $0x8] sm:$0xff] %vm56, 0.0
    $region33: #{_lambda_.26} parent=1 // pred_fallthru
      _
    %v59 = vld [vmem:[#allocation3] sm:$0xff]
    %v60 = vld [vmem:[#allocation3 + $0x8] sm:$0xff]
    %vm61 = vcmask 261120
    %v62 = vsel %vm61, %v59, 0.0
    %63 = vadd.xlane.f32.xlu0 %v62
    %v64 = vpop.xlane.xlu0 %63
    %v65 = vsel %vm61, %v60, 0.0
    %66 = vadd.xlane.f32.xlu0 %v65
    %v67 = vpop.xlane.xlu0 %66
    %v68 = vrcp.pop 32.0
    %v69 = vmul.f32 32.0, %v68
    %v70 = vsub.f32 1.0, %v69
    %v71 = vmul.f32 %v68, %v70
    %v72 = vadd.f32 %v68, %v71
    %vm73 = vweird.f32 %v68
    %v74 = vsel %vm73, %v68, %v72
    %v75 = vmul.f32 %v64, %v74
    %v76 = vmul.f32 %v67, %v74
    %v77 = vsub.f32 %v59, %v75
    %v78 = vsub.f32 %v60, %v76
    %v79 = vmul.f32 %v77, %v77
    %v80 = vmul.f32 %v78, %v78
    %v81 = vsel %vm61, %v79, 0.0
    %82 = vadd.xlane.f32.xlu0 %v81
    %v83 = vpop.xlane.xlu0 %82
    %v84 = vsel %vm61, %v80, 0.0
    %85 = vadd.xlane.f32.xlu0 %v84
    %v86 = vpop.xlane.xlu0 %85
    %v87 = vmul.f32 %v83, %v74
    %v88 = vmul.f32 %v86, %v74
    %v89 = vadd.f32 %v87, 1e-05
    %v90 = vadd.f32 %v88, 1e-05
    %v91 = vrsqrt.pop %v89
    %v92 = vmul.f32 %v91, %v89
    %v93 = vmul.f32 %v92, %v91
    %v94 = vmul.f32 0.5, %v93
    %v95 = vsub.f32 1.5, %v94
    %v96 = vmul.f32 %v91, %v95
    %vm97 = vweird.f32 %v89
    %vm98 = vweird.f32 %v91
    %vm99 = vmor %vm97, %vm98
    %v100 = vsel %vm99, %v91, %v96
    %v101 = vrsqrt.pop %v90
    %v102 = vmul.f32 %v101, %v90
    %v103 = vmul.f32 %v102, %v101
    %v104 = vmul.f32 0.5, %v103
    %v105 = vsub.f32 1.5, %v104
    %v106 = vmul.f32 %v101, %v105
    %vm107 = vweird.f32 %v90
    %vm108 = vweird.f32 %v101
    %vm109 = vmor %vm107, %vm108
    %v110 = vsel %vm109, %v101, %v106
    %v111 = vmul.f32 %v77, %v100
    %v112 = vmul.f32 %v78, %v110
    %v113 = vld [vmem:[%s1] sm:$0x1]
    %v115 = vperm.slane %v113, 0
    %v117 = vmul.f32 %v111, %v115
    %v118 = vmul.f32 %v112, %v115
    %v119 = vld [vmem:[%s2] sm:$0x1]
    %v121 = vperm.slane %v119, 0
    %v123 = vadd.f32 %v117, %v121
    %v124 = vadd.f32 %v118, %v121
    %v125 = vld [vmem:[#allocation2] sm:$0xff]
    %v126 = vld [vmem:[#allocation2 + $0x8] sm:$0xff]
    %v127 = vld [vmem:[#allocation5] sm:$0xff]
    %v128 = vld [vmem:[#allocation5 + $0x8] sm:$0xff]
    %v129 = vld [vmem:[#allocation5 + $0x10] sm:$0xff]
    %v130 = vld [vmem:[#allocation5 + $0x18] sm:$0xff]
    %v132 = vsel %vm61, %v123, 0
    %v135 = vsel %vm61, %v124, 0
    %137 = vmatpush.msra.mxu0 0.0
    %138 = vmatpush.msra.mxu0 0.0
    %139 = vmatpush.msra.mxu0 0.0
    %140 = vmatpush.msra.mxu0 0.0
    %141 = vmatpush.msra.mxu0 0.0
    %142 = vmatpush.msra.mxu0 0.0
    %143 = vmatpush.msra.mxu0 0.0
    %144 = vmatpush.msra.mxu0 0.0
    %145 = vmatpush.msra.mxu0 0.0
    %146 = vmatpush.msra.mxu0 0.0
    %147 = vmatpush.msra.mxu0 0.0
    %148 = vmatpush.msra.mxu0 0.0
    %149 = vmatpush.msra.mxu0 %v130
    %150 = vmatpush.msra.mxu0 %v129
    %151 = vmatpush.msra.mxu0 %v128
    %152 = vmatpush.msra.mxu0 %v127
    %153 = vmatmul.f32.gmra.mxu0 %v132
    %v154 = vpop.f32.mrf.mxu0
    %v155 = vadd.f32 0.0, %v154
    %156 = vmatmul.f32.gmra.mxu0 %v135
    %v157 = vpop.f32.mrf.mxu0
    %v158 = vadd.f32 0.0, %v157
    %159 = vdwg.mxu0
    %v160 = vadd.f32 %v125, %v155
    %v161 = vadd.f32 %v126, %v158
    %vm162 = vcmask 523264
    %163 = vst.msk [vmem:[#allocation2] sm:$0xff] %vm162, %v160
    %164 = vst.msk [vmem:[#allocation2 + $0x8] sm:$0xff] %vm162, %v161
    // Predicated region
    $region34: #{_lambda_.26} parent=1 // pred_check
      %p165 = pneg %p52
    $region35: #{_lambda_.26} parent=1 // pred_check_branch
      %167 = sbr.rel (%p165) target = $region37
    $region36: #{_lambda_.26} parent=1 // pred_region
      %v168 = vld [vmem:[#allocation2] sm:$0xff]
      %v169 = vld [vmem:[#allocation2 + $0x8] sm:$0xff]
      %v170 = vld [vmem:[%s4] sm:$0x1]
      %v172 = vperm.slane %v170, 0
      %v174 = vadd.f32 %v168, %v172
      %v175 = vadd.f32 %v169, %v172
      %176 = vst.msk [vmem:[%s5] sm:$0xff] %vm162, %v174
      %177 = vst.msk [vmem:[%s5 + $0x8] sm:$0xff] %vm162, %v175
    $region37: #{_lambda_.26} parent=1 // pred_fallthru
      _
    // Predicated region
    $region38: #{_lambda_.26} parent=1 // pred_check
      _
    $region39: #{_lambda_.26} parent=1 // pred_check_branch
      %179 = sbr.rel (0) target = $region41
    $region40: #{_lambda_.26} parent=1 // pred_region
      _
    $region41: #{_lambda_.26} parent=1 // pred_fallthru
      _
    // Predicated region
    $region42: #{_lambda_.26} parent=1 // pred_check
      _
    $region43: #{_lambda_.26} parent=1 // pred_check_branch
      %181 = sbr.rel (0) target = $region45
    $region44: #{_lambda_.26} parent=1 // pred_region
      _
    $region45: #{_lambda_.26} parent=1 // pred_fallthru
      _
    %182 = vsyncpa [#allocation4], 1
    %183 = vsyncpa [#allocation6], 1

// kernel: _lambda_.28
$region0: #{_lambda_.28}
  #allocation0 [shape = 'u32[]', space=smem, size = 0x4, offset = 0x4, fixed_abs, tag = 'smem constant byte address 0x4 - core index']
  #allocation1 [shape = 'u32[72,128]{1,0:T(1,128)}', space=vmem, size = 0x9000, scoped, tag = 'internal scratch']
  #allocation2 [shape = 'f32[16,32]{1,0:T(8,128)}', space=vmem, size = 0x2000, scoped, tag = 'scratch operand']
  %s0 = inlined_call_operand.vmem [shape: f32[16,32], index: 0, kind: input, shape index: {}]
  %s1 = inlined_call_operand.hbm [shape: f32[32,32], index: 1, kind: input, shape index: {}]
  %s2 = inlined_call_operand.vmem [shape: f32[1,32], index: 2, kind: input, shape index: {}]
  %s3 = inlined_call_operand.hbm [shape: f32[16,32], index: 3, kind: input, shape index: {}]
  %s4 = inlined_call_operand.vmem [shape: f32[16,32], index: 4, kind: output, shape index: {}]
  %s5 = sld [smem:[#allocation0]]
  $region42: #{_lambda_.28} parent=0
    _
  %s7 = ssub.s32 1, %s5
  %s8 = scalar_select 0, %s7, %s5
  $region1: #{_lambda_.28} parent=0
    #allocation3 [shape = 'u8[16384]{0}', space=vmem, size = 0x4000, scoped, tag = 'input window, operand 1, single buffered']
    #allocation4 [shape = 's32[1]{0}', space=sflag, size = 0x4, scoped, tag = 'scoped memory for _lambda_.28']
    #allocation5 [shape = 'u8[8192]{0}', space=vmem, size = 0x2000, scoped, tag = 'input window, operand 3, single buffered']
    #allocation6 [shape = 's32[1]{0}', space=sflag, size = 0x4, scoped, tag = 'scoped memory for _lambda_.28']
    %9 = vsyncpa [#allocation4], 0
    %10 = vsyncpa [#allocation6], 0
    // Predicated region
    $region2: #{_lambda_.28} parent=1 // pred_check
      _
    $region3: #{_lambda_.28} parent=1 // pred_check_branch
      %12 = sbr.rel (0) target = $region5
    $region4: #{_lambda_.28} parent=1 // pred_region
      _
    $region5: #{_lambda_.28} parent=1 // pred_fallthru
      _
    // Predicated region
    $region6: #{_lambda_.28} parent=1 // pred_check
      _
    $region7: #{_lambda_.28} parent=1 // pred_check_branch
      %14 = sbr.rel (0) target = $region9
    $region8: #{_lambda_.28} parent=1 // pred_region
      %16 = vsyncadd [#allocation4], 0
      %s17 = sshll.u32 %s1, 4
      %s18 = int_to_ptr.hbm [resolvable:$true] %s17
      %s19 = sshll.u32 [#allocation3], 4
      %s20 = int_to_ptr.vmem [resolvable:$true] %s19
      %25 = dma.hbm_to_vmem [thread:$0]  %s18, 512, %s20, [#allocation4], 128, 128, 8
    $region9: #{_lambda_.28} parent=1 // pred_fallthru
      _
    // Predicated region
    $region10: #{_lambda_.28} parent=1 // pred_check
      _
    $region11: #{_lambda_.28} parent=1 // pred_check_branch
      %27 = sbr.rel (0) target = $region13
    $region12: #{_lambda_.28} parent=1 // pred_region
      _
    $region13: #{_lambda_.28} parent=1 // pred_fallthru
      _
    // Predicated region
    $region14: #{_lambda_.28} parent=1 // pred_check
      _
    $region15: #{_lambda_.28} parent=1 // pred_check_branch
      %29 = sbr.rel (0) target = $region17
    $region16: #{_lambda_.28} parent=1 // pred_region
      %31 = vsyncadd [#allocation6], 0
      %s32 = sshll.u32 %s3, 4
      %s33 = int_to_ptr.hbm [resolvable:$true] %s32
      %s34 = sshll.u32 [#allocation5], 4
      %s35 = int_to_ptr.vmem [resolvable:$true] %s34
      %40 = dma.hbm_to_vmem [thread:$0]  %s33, 256, %s35, [#allocation6], 128, 128, 8
    $region17: #{_lambda_.28} parent=1 // pred_fallthru
      _
    // Predicated region
    $region18: #{_lambda_.28} parent=1 // pred_check
      _
    $region19: #{_lambda_.28} parent=1 // pred_check_branch
      %42 = sbr.rel (0) target = $region21
    $region20: #{_lambda_.28} parent=1 // pred_region
      %44 = dma.done [#allocation4], 512
    $region21: #{_lambda_.28} parent=1 // pred_fallthru
      _
    // Predicated region
    $region22: #{_lambda_.28} parent=1 // pred_check
      _
    $region23: #{_lambda_.28} parent=1 // pred_check_branch
      %46 = sbr.rel (0) target = $region25
    $region24: #{_lambda_.28} parent=1 // pred_region
      %48 = dma.done [#allocation6], 256
    $region25: #{_lambda_.28} parent=1 // pred_fallthru
      _
    %p49 = scmp.eq.s32.totalorder 0, 0
    // Predicated region
    $region26: #{_lambda_.28} parent=1 // pred_check
      %p50 = pneg %p49
    $region27: #{_lambda_.28} parent=1 // pred_check_branch
      %52 = sbr.rel (%p50) target = $region29
    $region28: #{_lambda_.28} parent=1 // pred_region
      %vm53 = vcmask 261120
      %54 = vst.msk [vmem:[#allocation2] sm:$0xff] %vm53, 0.0
      %55 = vst.msk [vmem:[#allocation2 + $0x8] sm:$0xff] %vm53, 0.0
    $region29: #{_lambda_.28} parent=1 // pred_fallthru
      _
    %v56 = vld [vmem:[%s0] sm:$0xff]
    %v57 = vld [vmem:[%s0 + $0x8] sm:$0xff]
    %v58 = vld [vmem:[#allocation2] sm:$0xff]
    %v59 = vld [vmem:[#allocation2 + $0x8] sm:$0xff]
    %v60 = vld [vmem:[#allocation3] sm:$0xff]
    %v61 = vld [vmem:[#allocation3 + $0x8] sm:$0xff]
    %v62 = vld [vmem:[#allocation3 + $0x10] sm:$0xff]
    %v63 = vld [vmem:[#allocation3 + $0x18] sm:$0xff]
    %vm64 = vcmask 261120
    %v66 = vsel %vm64, %v56, 0
    %v69 = vsel %vm64, %v57, 0
    %71 = vmatpush.msra.mxu0 0.0
    %72 = vmatpush.msra.mxu0 0.0
    %73 = vmatpush.msra.mxu0 0.0
    %74 = vmatpush.msra.mxu0 0.0
    %75 = vmatpush.msra.mxu0 0.0
    %76 = vmatpush.msra.mxu0 0.0
    %77 = vmatpush.msra.mxu0 0.0
    %78 = vmatpush.msra.mxu0 0.0
    %79 = vmatpush.msra.mxu0 0.0
    %80 = vmatpush.msra.mxu0 0.0
    %81 = vmatpush.msra.mxu0 0.0
    %82 = vmatpush.msra.mxu0 0.0
    %83 = vmatpush.msra.mxu0 %v63
    %84 = vmatpush.msra.mxu0 %v62
    %85 = vmatpush.msra.mxu0 %v61
    %86 = vmatpush.msra.mxu0 %v60
    %87 = vmatmul.f32.gmra.mxu0 %v66
    %v88 = vpop.f32.mrf.mxu0
    %v89 = vadd.f32 0.0, %v88
    %90 = vmatmul.f32.gmra.mxu0 %v69
    %v91 = vpop.f32.mrf.mxu0
    %v92 = vadd.f32 0.0, %v91
    %93 = vdwg.mxu0
    %v94 = vadd.f32 %v58, %v89
    %v95 = vadd.f32 %v59, %v92
    %96 = vst.msk [vmem:[#allocation2] sm:$0xff] %vm64, %v94
    %97 = vst.msk [vmem:[#allocation2 + $0x8] sm:$0xff] %vm64, %v95
    // Predicated region
    $region30: #{_lambda_.28} parent=1 // pred_check
      %p98 = pneg %p49
    $region31: #{_lambda_.28} parent=1 // pred_check_branch
      %100 = sbr.rel (%p98) target = $region33
    $region32: #{_lambda_.28} parent=1 // pred_region
      %v101 = vld [vmem:[#allocation2] sm:$0xff]
      %v102 = vld [vmem:[#allocation2 + $0x8] sm:$0xff]
      %v103 = vld [vmem:[%s2] sm:$0x1]
      %v105 = vperm.slane %v103, 0
      %v107 = vadd.f32 %v101, %v105
      %v108 = vadd.f32 %v102, %v105
      %v109 = vld [vmem:[#allocation5] sm:$0xff]
      %v110 = vld [vmem:[#allocation5 + $0x8] sm:$0xff]
      %v111 = vadd.f32 %v107, %v109
      %v112 = vadd.f32 %v108, %v110
      %113 = vst.msk [vmem:[%s4] sm:$0xff] %vm64, %v111
      %114 = vst.msk [vmem:[%s4 + $0x8] sm:$0xff] %vm64, %v112
    $region33: #{_lambda_.28} parent=1 // pred_fallthru
      _
    // Predicated region
    $region34: #{_lambda_.28} parent=1 // pred_check
      _
    $region35: #{_lambda_.28} parent=1 // pred_check_branch
      %116 = sbr.rel (0) target = $region37
    $region36: #{_lambda_.28} parent=1 // pred_region
      _
    $region37: #{_lambda_.28} parent=1 // pred_fallthru
      _
    // Predicated region
    $region38: #{_lambda_.28} parent=1 // pred_check
      _
    $region39: #{_lambda_.28} parent=1 // pred_check_branch
      %118 = sbr.rel (0) target = $region41
    $region40: #{_lambda_.28} parent=1 // pred_region
      _
    $region41: #{_lambda_.28} parent=1 // pred_fallthru
      _
    %119 = vsyncpa [#allocation4], 1
    %120 = vsyncpa [#allocation6], 1

// kernel: _lambda_.27
$region0: #{_lambda_.27}
  #allocation0 [shape = 'u32[]', space=smem, size = 0x4, offset = 0x4, fixed_abs, tag = 'smem constant byte address 0x4 - core index']
  #allocation1 [shape = 'u32[72,128]{1,0:T(1,128)}', space=vmem, size = 0x9000, scoped, tag = 'internal scratch']
  %s0 = inlined_call_operand.vmem [shape: f32[2,8,32], index: 0, kind: input, shape index: {}]
  %s1 = inlined_call_operand.vmem [shape: f32[2,8,64], index: 1, kind: input, shape index: {}]
  %s2 = inlined_call_operand.vmem [shape: f32[2,8,32], index: 2, kind: output, shape index: {}]
  %s3 = sld [smem:[#allocation0]]
  $region41: #{_lambda_.27} parent=0
    _
  %s5 = ssub.s32 1, %s3
  %s6 = scalar_select 0, %s5, %s3
  loop: start=0, step=1, limit=4
  $region2: #{_lambda_.27} parent=0 // loop_pre_header
    _
  $region3: #{_lambda_.27} parent=0 // loop_header
    %s8 = sphi 0, %s12
    %p9 = scmp.ge.s32.totalorder %s8, 4
    %s15 = sphi 0, %s27
    %s16 = sphi 0, %s23
    %s17 = sphi 0, %s15
    %s18 = sphi 0, %s16
    %s19 = sphi 0, %s17
    %s20 = sphi 0, %s18
    %s32 = sphi 0, %s34
    %s35 = sphi 0, %s32
    %s36 = sphi 0, %s35
    %s52 = sphi 0, %s36
    %s58 = sphi 0, %s60
    %s61 = sphi 0, %s58
    %s62 = sphi 0, %s61
    %s78 = sphi 0, %s62
    %s86 = sphi 0, %s88
    %s89 = sphi 0, %s86
    %s90 = sphi 0, %s89
    %s106 = sphi 0, %s90
  $region4: #{_lambda_.27} parent=0 // loop_header_branch
    %11 = sbr.rel (%p9) target = $region8
  $region5: #{_lambda_.27} parent=0 // loop_body
    %s13 = ssub.s32 %s8, 1
    %s14 = ssub.s32 %s8, 2
    %s21 = sadd.s32 1, %s16
    %p22 = scmp.ge.s32.totalorder %s21, 1
    %s23 = scalar_select %p22, 0, %s21
    %s24 = sadd.s32 1, %s15
    %s25 = scalar_select %p22, %s24, %s15
    %p26 = scmp.ge.s32.totalorder %s25, 2
    %s27 = scalar_select %p26, 0, %s25
    %s28 = ssub.s32 %s15, %s27
    %s29 = ssub.s32 %s16, %s23
    %s30 = sor.u32 %s28, %s29
    %p31 = scmp.eq.s32.totalorder %s30, 0
    %s33 = sadd.s32 %s32, 1
    %s34 = scalar_select %p31, %s32, %s33
    %p37 = pneg %p31
    %p38 = scmp.eq.s32.totalorder %s8, 1
    %p39 = por %p37, %p38
    %p40 = scmp.ne.s32.totalorder %s32, %s35
    %p41 = scmp.eq.s32.totalorder %s8, 0
    %p42 = por %p40, %p41
    %p43 = scmp.ne.s32.totalorder %s32, %s35
    %p44 = scmp.eq.s32.totalorder %s13, 1
    %p45 = por %p43, %p44
    %p46 = scmp.ne.s32.totalorder %s35, %s36
    %p47 = scmp.eq.s32.totalorder %s13, 0
    %p48 = por %p46, %p47
    %p49 = scmp.ne.s32.totalorder %s35, %s36
    %p50 = scmp.eq.s32.totalorder %s14, 1
    %p51 = por %p49, %p50
    %p53 = scmp.ne.s32.totalorder %s36, %s52
    %p54 = scmp.eq.s32.totalorder %s14, 0
    %p55 = por %p53, %p54
    %s56 = ssub.s32 %s15, %s27
    %p57 = scmp.eq.s32.totalorder %s56, 0
    %s59 = sadd.s32 %s58, 1
    %s60 = scalar_select %p57, %s58, %s59
    %p63 = pneg %p57
    %p64 = scmp.eq.s32.totalorder %s8, 1
    %p65 = por %p63, %p64
    %p66 = scmp.ne.s32.totalorder %s58, %s61
    %p67 = scmp.eq.s32.totalorder %s8, 0
    %p68 = por %p66, %p67
    %p69 = scmp.ne.s32.totalorder %s58, %s61
    %p70 = scmp.eq.s32.totalorder %s13, 1
    %p71 = por %p69, %p70
    %p72 = scmp.ne.s32.totalorder %s61, %s62
    %p73 = scmp.eq.s32.totalorder %s13, 0
    %p74 = por %p72, %p73
    %p75 = scmp.ne.s32.totalorder %s61, %s62
    %p76 = scmp.eq.s32.totalorder %s14, 1
    %p77 = por %p75, %p76
    %p79 = scmp.ne.s32.totalorder %s62, %s78
    %p80 = scmp.eq.s32.totalorder %s14, 0
    %p81 = por %p79, %p80
    %s82 = ssub.s32 %s15, %s27
    %s83 = ssub.s32 %s16, %s23
    %s84 = sor.u32 %s82, %s83
    %p85 = scmp.eq.s32.totalorder %s84, 0
    %s87 = sadd.s32 %s86, 1
    %s88 = scalar_select %p85, %s86, %s87
    %p91 = pneg %p85
    %p92 = scmp.eq.s32.totalorder %s8, 1
    %p93 = por %p91, %p92
    %p94 = scmp.ne.s32.totalorder %s86, %s89
    %p95 = scmp.eq.s32.totalorder %s8, 0
    %p96 = por %p94, %p95
    %p97 = scmp.ne.s32.totalorder %s86, %s89
    %p98 = scmp.eq.s32.totalorder %s13, 1
    %p99 = por %p97, %p98
    %p100 = scmp.ne.s32.totalorder %s89, %s90
    %p101 = scmp.eq.s32.totalorder %s13, 0
    %p102 = por %p100, %p101
    %p103 = scmp.ne.s32.totalorder %s89, %s90
    %p104 = scmp.eq.s32.totalorder %s14, 1
    %p105 = por %p103, %p104
    %p107 = scmp.ne.s32.totalorder %s90, %s106
    %p108 = scmp.eq.s32.totalorder %s14, 0
    %p109 = por %p107, %p108
    %p110 = scmp.le.s32.totalorder 1, %s8
    %p111 = scmp.lt.s32.totalorder %s8, 3
    %p112 = pnand %p110, %p111
    %p113 = pneg %p112
    // Predicated region
    $region9: #{_lambda_.27} parent=5 // pred_check
      _
    $region10: #{_lambda_.27} parent=5 // pred_check_branch
      %115 = sbr.rel (%p112) target = $region12
    $region11: #{_lambda_.27} parent=5 // pred_region
      %s116 = ssub.s32 %s8, 1
    $region12: #{_lambda_.27} parent=5 // pred_fallthru
      _
    %p117 = scmp.lt.s32.totalorder %s8, 2
    // Predicated region
    $region13: #{_lambda_.27} parent=5 // pred_check
      %p118 = pneg %p117
    $region14: #{_lambda_.27} parent=5 // pred_check_branch
      %120 = sbr.rel (%p118) target = $region16
    $region15: #{_lambda_.27} parent=5 // pred_region
      // Predicated region
      $region17: #{_lambda_.27} parent=15 // pred_check
        %p121 = pneg %p42
      $region18: #{_lambda_.27} parent=15 // pred_check_branch
        %123 = sbr.rel (%p121) target = $region20
      $region19: #{_lambda_.27} parent=15 // pred_region
        %p124 = scmp.lt.s32.totalorder %s15, 1
        %s125 = scalar_select %p124, %s15, 1
        %p126 = scmp.lt.s32.totalorder %s16, 0
        %s127 = scalar_select %p126, %s16, 0
        %s128 = sadd.s32 %s127, %s125
        %s129 = smul.addr %s128, 8
        %s130 = scalar_lea.vmem %s0, %s129
      $region20: #{_lambda_.27} parent=15 // pred_fallthru
        _
      // Predicated region
      $region21: #{_lambda_.27} parent=15 // pred_check
        %p131 = pneg %p68
      $region22: #{_lambda_.27} parent=15 // pred_check_branch
        %133 = sbr.rel (%p131) target = $region24
      $region23: #{_lambda_.27} parent=15 // pred_region
        %p134 = scmp.lt.s32.totalorder %s15, 1
        %s135 = scalar_select %p134, %s15, 1
        %s136 = smul.addr %s135, 8
        %s137 = scalar_lea.vmem %s1, %s136
      $region24: #{_lambda_.27} parent=15 // pred_fallthru
        _
    $region16: #{_lambda_.27} parent=5 // pred_fallthru
      _
    %p138 = scmp.le.s32.totalorder 1, %s8
    %p139 = scmp.lt.s32.totalorder %s8, 3
    %p140 = pnand %p138, %p139
    %p141 = pneg %p140
    // Predicated region
    $region25: #{_lambda_.27} parent=5 // pred_check
      _
    $region26: #{_lambda_.27} parent=5 // pred_check_branch
      %143 = sbr.rel (%p140) target = $region28
    $region27: #{_lambda_.27} parent=5 // pred_region
      %s144 = ssub.s32 %s8, 1
      %p145 = scmp.lt.s32.totalorder %s17, 1
      %s146 = scalar_select %p145, %s17, 1
      %p147 = scmp.lt.s32.totalorder %s18, 0
      %s148 = scalar_select %p147, %s18, 0
      %s149 = sadd.s32 %s148, %s146
      %s150 = smul.addr %s149, 8
      %s151 = scalar_lea.vmem %s0, %s150
      %p152 = pneg %p48
      %p153 = pneg %p45
      %p154 = scmp.lt.s32.totalorder %s17, 1
      %s155 = scalar_select %p154, %s17, 1
      %s156 = smul.addr %s155, 8
      %s157 = scalar_lea.vmem %s1, %s156
      %p158 = pneg %p74
      %p159 = pneg %p71
      %p160 = pneg %p102
      %p161 = pneg %p99
      %p162 = scmp.lt.s32.totalorder %s17, 1
      %s163 = scalar_select %p162, %s17, 1
      %p164 = scmp.lt.s32.totalorder %s18, 0
      %s165 = scalar_select %p164, %s18, 0
      %s166 = sadd.s32 %s165, %s163
      %s167 = smul.addr %s166, 8
      %s168 = scalar_lea.vmem %s2, %s167
      %p169 = scmp.lt.s32.totalorder %s17, 1
      %s170 = scalar_select %p169, %s17, 1
      %p171 = scmp.lt.s32.totalorder %s18, 0
      %s172 = scalar_select %p171, %s18, 0
      %s173 = sadd.s32 %s172, %s170
      %s174 = smul.addr %s173, 8
      %s175 = scalar_lea.vmem %s0, %s174
      %p176 = scmp.lt.s32.totalorder %s17, 1
      %s177 = scalar_select %p176, %s17, 1
      %s178 = smul.addr %s177, 8
      %s179 = scalar_lea.vmem %s1, %s178
      %p180 = scmp.lt.s32.totalorder %s17, 1
      %s181 = scalar_select %p180, %s17, 1
      %p182 = scmp.lt.s32.totalorder %s18, 0
      %s183 = scalar_select %p182, %s18, 0
      %s184 = sadd.s32 %s183, %s181
      %s185 = smul.addr %s184, 8
      %s186 = scalar_lea.vmem %s2, %s185
      %v187 = vld [vmem:[%s175] sm:$0xff]
      %v188 = vmul.f32 %v187, 0.35355338
      %v189 = vld [vmem:[%s179] sm:$0xff]
      %191 = vrot.lane.b32.xlu0 %v188, 120
      %v192 = vpop.permute.xlu0 %191
      %194 = vrot.lane.b32.xlu0 %v188, 112
      %v195 = vpop.permute.xlu0 %194
      %197 = vrot.lane.b32.xlu0 %v188, 104
      %v198 = vpop.permute.xlu0 %197
      %v200 = vrot.slane %v195, 4
      %vm201 = vcmask 1047556
      %v202 = vsel %vm201, %v200, %v188
      %v203 = vrot.slane %v188, 4
      %v204 = vsel %vm201, %v195, %v203
      %v206 = vunpack.c.l.s4 1983009808
      %v207 = vunpack.c.0.s8 %v206
      %v208 = vperm.slane %v202, %v207
      %v210 = vunpack.c.l.s4 1983009808
      %v211 = vunpack.c.0.s8 %v210
      %v212 = vperm.slane %v204, %v211
      %v213 = vrot.slane %v198, 4
      %v214 = vsel %vm201, %v213, %v192
      %v215 = vrot.slane %v192, 4
      %v216 = vsel %vm201, %v198, %v215
      %v218 = vunpack.c.l.s4 1983009808
      %v219 = vunpack.c.0.s8 %v218
      %v220 = vperm.slane %v214, %v219
      %v222 = vunpack.c.l.s4 1983009808
      %v223 = vunpack.c.0.s8 %v222
      %v224 = vperm.slane %v216, %v223
      %v225 = vrot.slane %v220, 4
      %v226 = vsel %vm201, %v225, %v208
      %v227 = vrot.slane %v208, 4
      %v228 = vsel %vm201, %v220, %v227
      %v230 = vunpack.c.l.s4 1934713408
      %v231 = vunpack.c.0.s8 %v230
      %v232 = vperm.slane %v226, %v231
      %v234 = vunpack.c.l.s4 1934713408
      %v235 = vunpack.c.0.s8 %v234
      %v236 = vperm.slane %v228, %v235
      %v237 = vrot.slane %v224, 4
      %v238 = vsel %vm201, %v237, %v212
      %v239 = vrot.slane %v212, 4
      %v240 = vsel %vm201, %v224, %v239
      %v242 = vunpack.c.l.s4 1934713408
      %v243 = vunpack.c.0.s8 %v242
      %v244 = vperm.slane %v238, %v243
      %v246 = vunpack.c.l.s4 1934713408
      %v247 = vunpack.c.0.s8 %v246
      %v248 = vperm.slane %v240, %v247
      %v249 = vrot.slane %v232, 4
      %v250 = vsel %vm201, 0.0, %v249
      %v251 = vrot.slane %v236, 4
      %v252 = vsel %vm201, 0.0, %v251
      %v253 = vrot.slane %v244, 4
      %v254 = vsel %vm201, 0.0, %v253
      %v255 = vrot.slane %v248, 4
      %v256 = vsel %vm201, 0.0, %v255
      %v257 = vsel %vm201, %v251, %v232
      %v259 = vunpack.c.l.s4 1983009808
      %v260 = vunpack.c.0.s8 %v259
      %v261 = vperm.slane %v257, %v260
      %v262 = vrot.slane %v252, 4
      %v263 = vsel %vm201, %v262, %v250
      %v265 = vunpack.c.l.s4 1983009808
      %v266 = vunpack.c.0.s8 %v265
      %v267 = vperm.slane %v263, %v266
      %v268 = vsel %vm201, %v255, %v244
      %v270 = vunpack.c.l.s4 1983009808
      %v271 = vunpack.c.0.s8 %v270
      %v272 = vperm.slane %v268, %v271
      %v273 = vrot.slane %v256, 4
      %v274 = vsel %vm201, %v273, %v254
      %v276 = vunpack.c.l.s4 1983009808
      %v277 = vunpack.c.0.s8 %v276
      %v278 = vperm.slane %v274, %v277
      %v279 = vrot.slane %v267, 4
      %v280 = vsel %vm201, %v279, %v261
      %v281 = vrot.slane %v261, 4
      %v282 = vsel %vm201, %v267, %v281
      %v284 = vunpack.c.l.s4 1934713408
      %v285 = vunpack.c.0.s8 %v284
      %v286 = vperm.slane %v280, %v285
      %v288 = vunpack.c.l.s4 1934713408
      %v289 = vunpack.c.0.s8 %v288
      %v290 = vperm.slane %v282, %v289
      %v291 = vrot.slane %v278, 4
      %v292 = vsel %vm201, %v291, %v272
      %v293 = vrot.slane %v272, 4
      %v294 = vsel %vm201, %v278, %v293
      %v296 = vunpack.c.l.s4 1934713408
      %v297 = vunpack.c.0.s8 %v296
      %v298 = vperm.slane %v292, %v297
      %v300 = vunpack.c.l.s4 1934713408
      %v301 = vunpack.c.0.s8 %v300
      %v302 = vperm.slane %v294, %v301
      %v303 = vrot.slane %v298, 4
      %v304 = vsel %vm201, %v303, %v286
      %v305 = vrot.slane %v286, 4
      %v306 = vsel %vm201, %v298, %v305
      %v307 = vrot.slane %v302, 4
      %v308 = vsel %vm201, %v307, %v290
      %v309 = vrot.slane %v290, 4
      %v310 = vsel %vm201, %v302, %v309
      %312 = vrot.lane.b32.xlu0 %v189, 120
      %v313 = vpop.permute.xlu0 %312
      %315 = vrot.lane.b32.xlu0 %v189, 112
      %v316 = vpop.permute.xlu0 %315
      %318 = vrot.lane.b32.xlu0 %v189, 104
      %v319 = vpop.permute.xlu0 %318
      %v321 = vrot.slane %v316, 4
      %v322 = vsel %vm201, %v321, %v189
      %v323 = vrot.slane %v189, 4
      %v324 = vsel %vm201, %v316, %v323
      %v326 = vunpack.c.l.s4 1983009808
      %v327 = vunpack.c.0.s8 %v326
      %v328 = vperm.slane %v322, %v327
      %v330 = vunpack.c.l.s4 1983009808
      %v331 = vunpack.c.0.s8 %v330
      %v332 = vperm.slane %v324, %v331
      %v333 = vrot.slane %v319, 4
      %v334 = vsel %vm201, %v333, %v313
      %v335 = vrot.slane %v313, 4
      %v336 = vsel %vm201, %v319, %v335
      %v338 = vunpack.c.l.s4 1983009808
      %v339 = vunpack.c.0.s8 %v338
      %v340 = vperm.slane %v334, %v339
      %v342 = vunpack.c.l.s4 1983009808
      %v343 = vunpack.c.0.s8 %v342
      %v344 = vperm.slane %v336, %v343
      %v345 = vrot.slane %v340, 4
      %v346 = vsel %vm201, %v345, %v328
      %v347 = vrot.slane %v328, 4
      %v348 = vsel %vm201, %v340, %v347
      %v350 = vunpack.c.l.s4 1934713408
      %v351 = vunpack.c.0.s8 %v350
      %v352 = vperm.slane %v346, %v351
      %v354 = vunpack.c.l.s4 1934713408
      %v355 = vunpack.c.0.s8 %v354
      %v356 = vperm.slane %v348, %v355
      %v357 = vrot.slane %v344, 4
      %v358 = vsel %vm201, %v357, %v332
      %v359 = vrot.slane %v332, 4
      %v360 = vsel %vm201, %v344, %v359
      %v362 = vunpack.c.l.s4 1934713408
      %v363 = vunpack.c.0.s8 %v362
      %v364 = vperm.slane %v358, %v363
      %v366 = vunpack.c.l.s4 1934713408
      %v367 = vunpack.c.0.s8 %v366
      %v368 = vperm.slane %v360, %v367
      %v369 = vrot.slane %v352, 4
      %v370 = vsel %vm201, 0.0, %v369
      %v371 = vrot.slane %v356, 4
      %v372 = vsel %vm201, 0.0, %v371
      %v373 = vrot.slane %v364, 4
      %v374 = vsel %vm201, 0.0, %v373
      %v375 = vrot.slane %v368, 4
      %v376 = vsel %vm201, 0.0, %v375
      %v377 = vsel %vm201, %v371, %v352
      %v379 = vunpack.c.l.s4 1983009808
      %v380 = vunpack.c.0.s8 %v379
      %v381 = vperm.slane %v377, %v380
      %v382 = vrot.slane %v372, 4
      %v383 = vsel %vm201, %v382, %v370
      %v385 = vunpack.c.l.s4 1983009808
      %v386 = vunpack.c.0.s8 %v385
      %v387 = vperm.slane %v383, %v386
      %v388 = vsel %vm201, %v375, %v364
      %v390 = vunpack.c.l.s4 1983009808
      %v391 = vunpack.c.0.s8 %v390
      %v392 = vperm.slane %v388, %v391
      %v393 = vrot.slane %v376, 4
      %v394 = vsel %vm201, %v393, %v374
      %v396 = vunpack.c.l.s4 1983009808
      %v397 = vunpack.c.0.s8 %v396
      %v398 = vperm.slane %v394, %v397
      %v399 = vrot.slane %v387, 4
      %v400 = vsel %vm201, %v399, %v381
      %v401 = vrot.slane %v381, 4
      %v402 = vsel %vm201, %v387, %v401
      %v404 = vunpack.c.l.s4 1934713408
      %v405 = vunpack.c.0.s8 %v404
      %v406 = vperm.slane %v400, %v405
      %v408 = vunpack.c.l.s4 1934713408
      %v409 = vunpack.c.0.s8 %v408
      %v410 = vperm.slane %v402, %v409
      %v411 = vrot.slane %v398, 4
      %v412 = vsel %vm201, %v411, %v392
      %v413 = vrot.slane %v392, 4
      %v414 = vsel %vm201, %v398, %v413
      %v416 = vunpack.c.l.s4 1934713408
      %v417 = vunpack.c.0.s8 %v416
      %v418 = vperm.slane %v412, %v417
      %v420 = vunpack.c.l.s4 1934713408
      %v421 = vunpack.c.0.s8 %v420
      %v422 = vperm.slane %v414, %v421
      %v423 = vrot.slane %v418, 4
      %v424 = vsel %vm201, %v423, %v406
      %v425 = vrot.slane %v406, 4
      %v426 = vsel %vm201, %v418, %v425
      %v427 = vrot.slane %v422, 4
      %v428 = vsel %vm201, %v427, %v410
      %v429 = vrot.slane %v410, 4
      %v430 = vsel %vm201, %v422, %v429
      %431 = vrot.lane.b32.xlu0 %v189, 96
      %v432 = vpop.permute.xlu0 %431
      %433 = vrot.lane.b32.xlu0 %v313, 96
      %v434 = vpop.permute.xlu0 %433
      %435 = vrot.lane.b32.xlu0 %v316, 96
      %v436 = vpop.permute.xlu0 %435
      %437 = vrot.lane.b32.xlu0 %v319, 96
      %v438 = vpop.permute.xlu0 %437
      %v443 = vrot.slane %v436, 4
      %v444 = vsel %vm201, %v443, %v432
      %v445 = vrot.slane %v432, 4
      %v446 = vsel %vm201, %v436, %v445
      %v448 = vunpack.c.l.s4 1983009808
      %v449 = vunpack.c.0.s8 %v448
      %v450 = vperm.slane %v444, %v449
      %v452 = vunpack.c.l.s4 1983009808
      %v453 = vunpack.c.0.s8 %v452
      %v454 = vperm.slane %v446, %v453
      %v455 = vrot.slane %v438, 4
      %v456 = vsel %vm201, %v455, %v434
      %v457 = vrot.slane %v434, 4
      %v458 = vsel %vm201, %v438, %v457
      %v460 = vunpack.c.l.s4 1983009808
      %v461 = vunpack.c.0.s8 %v460
      %v462 = vperm.slane %v456, %v461
      %v464 = vunpack.c.l.s4 1983009808
      %v465 = vunpack.c.0.s8 %v464
      %v466 = vperm.slane %v458, %v465
      %v467 = vrot.slane %v462, 4
      %v468 = vsel %vm201, %v467, %v450
      %v469 = vrot.slane %v450, 4
      %v470 = vsel %vm201, %v462, %v469
      %v472 = vunpack.c.l.s4 1934713408
      %v473 = vunpack.c.0.s8 %v472
      %v474 = vperm.slane %v468, %v473
      %v476 = vunpack.c.l.s4 1934713408
      %v477 = vunpack.c.0.s8 %v476
      %v478 = vperm.slane %v470, %v477
      %v479 = vrot.slane %v466, 4
      %v480 = vsel %vm201, %v479, %v454
      %v481 = vrot.slane %v454, 4
      %v482 = vsel %vm201, %v466, %v481
      %v484 = vunpack.c.l.s4 1934713408
      %v485 = vunpack.c.0.s8 %v484
      %v486 = vperm.slane %v480, %v485
      %v488 = vunpack.c.l.s4 1934713408
      %v489 = vunpack.c.0.s8 %v488
      %v490 = vperm.slane %v482, %v489
      %v491 = vrot.slane %v474, 4
      %v492 = vsel %vm201, 0.0, %v491
      %v493 = vrot.slane %v478, 4
      %v494 = vsel %vm201, 0.0, %v493
      %v495 = vrot.slane %v486, 4
      %v496 = vsel %vm201, 0.0, %v495
      %v497 = vrot.slane %v490, 4
      %v498 = vsel %vm201, 0.0, %v497
      %v499 = vsel %vm201, %v493, %v474
      %v501 = vunpack.c.l.s4 1983009808
      %v502 = vunpack.c.0.s8 %v501
      %v503 = vperm.slane %v499, %v502
      %v504 = vrot.slane %v494, 4
      %v505 = vsel %vm201, %v504, %v492
      %v507 = vunpack.c.l.s4 1983009808
      %v508 = vunpack.c.0.s8 %v507
      %v509 = vperm.slane %v505, %v508
      %v510 = vsel %vm201, %v497, %v486
      %v512 = vunpack.c.l.s4 1983009808
      %v513 = vunpack.c.0.s8 %v512
      %v514 = vperm.slane %v510, %v513
      %v515 = vrot.slane %v498, 4
      %v516 = vsel %vm201, %v515, %v496
      %v518 = vunpack.c.l.s4 1983009808
      %v519 = vunpack.c.0.s8 %v518
      %v520 = vperm.slane %v516, %v519
      %v521 = vrot.slane %v509, 4
      %v522 = vsel %vm201, %v521, %v503
      %v523 = vrot.slane %v503, 4
      %v524 = vsel %vm201, %v509, %v523
      %v526 = vunpack.c.l.s4 1934713408
      %v527 = vunpack.c.0.s8 %v526
      %v528 = vperm.slane %v522, %v527
      %v530 = vunpack.c.l.s4 1934713408
      %v531 = vunpack.c.0.s8 %v530
      %v532 = vperm.slane %v524, %v531
      %v533 = vrot.slane %v520, 4
      %v534 = vsel %vm201, %v533, %v514
      %v535 = vrot.slane %v514, 4
      %v536 = vsel %vm201, %v520, %v535
      %v538 = vunpack.c.l.s4 1934713408
      %v539 = vunpack.c.0.s8 %v538
      %v540 = vperm.slane %v534, %v539
      %v542 = vunpack.c.l.s4 1934713408
      %v543 = vunpack.c.0.s8 %v542
      %v544 = vperm.slane %v536, %v543
      %v545 = vrot.slane %v540, 4
      %v546 = vsel %vm201, %v545, %v528
      %v547 = vrot.slane %v528, 4
      %v548 = vsel %vm201, %v540, %v547
      %v549 = vrot.slane %v544, 4
      %v550 = vsel %vm201, %v549, %v532
      %v551 = vrot.slane %v532, 4
      %v552 = vsel %vm201, %v544, %v551
      %vm553 = vcmask 64512
      %v555 = vsel %vm553, %v304, 0
      %v558 = vsel %vm553, %v424, 0
      %560 = vmatpush.xpose.msra.mxu0 0.0
      %561 = vmatpush.xpose.msra.mxu0 0.0
      %562 = vmatpush.xpose.msra.mxu0 0.0
      %563 = vmatpush.xpose.msra.mxu0 0.0
      %564 = vmatpush.xpose.msra.mxu0 0.0
      %565 = vmatpush.xpose.msra.mxu0 0.0
      %566 = vmatpush.xpose.msra.mxu0 0.0
      %567 = vmatpush.xpose.msra.mxu0 0.0
      %568 = vmatpush.xpose.msra.mxu0 0.0
      %569 = vmatpush.xpose.msra.mxu0 0.0
      %570 = vmatpush.xpose.msra.mxu0 0.0
      %571 = vmatpush.xpose.msra.mxu0 0.0
      %572 = vmatpush.xpose.msra.mxu0 0.0
      %573 = vmatpush.xpose.msra.mxu0 0.0
      %574 = vmatpush.xpose.msra.mxu0 0.0
      %575 = vmatpush.xpose.msra.mxu0 %v558
      %576 = vmatmul.f32.gmra.mxu0 %v555
      %v577 = vpop.f32.mrf.mxu0
      %v578 = vadd.f32 0.0, %v577
      %579 = vdwg.mxu0
      %v581 = vsel %vm553, %v306, 0
      %v584 = vsel %vm553, %v426, 0
      %586 = vmatpush.xpose.msra.mxu0 0.0
      %587 = vmatpush.xpose.msra.mxu0 0.0
      %588 = vmatpush.xpose.msra.mxu0 0.0
      %589 = vmatpush.xpose.msra.mxu0 0.0
      %590 = vmatpush.xpose.msra.mxu0 0.0
      %591 = vmatpush.xpose.msra.mxu0 0.0
      %592 = vmatpush.xpose.msra.mxu0 0.0
      %593 = vmatpush.xpose.msra.mxu0 0.0
      %594 = vmatpush.xpose.msra.mxu0 0.0
      %595 = vmatpush.xpose.msra.mxu0 0.0
      %596 = vmatpush.xpose.msra.mxu0 0.0
      %597 = vmatpush.xpose.msra.mxu0 0.0
      %598 = vmatpush.xpose.msra.mxu0 0.0
      %599 = vmatpush.xpose.msra.mxu0 0.0
      %600 = vmatpush.xpose.msra.mxu0 0.0
      %601 = vmatpush.xpose.msra.mxu0 %v584
      %602 = vmatmul.f32.gmra.mxu0 %v581
      %v603 = vpop.f32.mrf.mxu0
      %v604 = vadd.f32 0.0, %v603
      %605 = vdwg.mxu0
      %v607 = vsel %vm553, %v308, 0
      %v610 = vsel %vm553, %v428, 0
      %612 = vmatpush.xpose.msra.mxu0 0.0
      %613 = vmatpush.xpose.msra.mxu0 0.0
      %614 = vmatpush.xpose.msra.mxu0 0.0
      %615 = vmatpush.xpose.msra.mxu0 0.0
      %616 = vmatpush.xpose.msra.mxu0 0.0
      %617 = vmatpush.xpose.msra.mxu0 0.0
      %618 = vmatpush.xpose.msra.mxu0 0.0
      %619 = vmatpush.xpose.msra.mxu0 0.0
      %620 = vmatpush.xpose.msra.mxu0 0.0
      %621 = vmatpush.xpose.msra.mxu0 0.0
      %622 = vmatpush.xpose.msra.mxu0 0.0
      %623 = vmatpush.xpose.msra.mxu0 0.0
      %624 = vmatpush.xpose.msra.mxu0 0.0
      %625 = vmatpush.xpose.msra.mxu0 0.0
      %626 = vmatpush.xpose.msra.mxu0 0.0
      %627 = vmatpush.xpose.msra.mxu0 %v610
      %628 = vmatmul.f32.gmra.mxu0 %v607
      %v629 = vpop.f32.mrf.mxu0
      %v630 = vadd.f32 0.0, %v629
      %631 = vdwg.mxu0
      %v633 = vsel %vm553, %v310, 0
      %v636 = vsel %vm553, %v430, 0
      %638 = vmatpush.xpose.msra.mxu0 0.0
      %639 = vmatpush.xpose.msra.mxu0 0.0
      %640 = vmatpush.xpose.msra.mxu0 0.0
      %641 = vmatpush.xpose.msra.mxu0 0.0
      %642 = vmatpush.xpose.msra.mxu0 0.0
      %643 = vmatpush.xpose.msra.mxu0 0.0
      %644 = vmatpush.xpose.msra.mxu0 0.0
      %645 = vmatpush.xpose.msra.mxu0 0.0
      %646 = vmatpush.xpose.msra.mxu0 0.0
      %647 = vmatpush.xpose.msra.mxu0 0.0
      %648 = vmatpush.xpose.msra.mxu0 0.0
      %649 = vmatpush.xpose.msra.mxu0 0.0
      %650 = vmatpush.xpose.msra.mxu0 0.0
      %651 = vmatpush.xpose.msra.mxu0 0.0
      %652 = vmatpush.xpose.msra.mxu0 0.0
      %653 = vmatpush.xpose.msra.mxu0 %v636
      %654 = vmatmul.f32.gmra.mxu0 %v633
      %v655 = vpop.f32.mrf.mxu0
      %v656 = vadd.f32 0.0, %v655
      %657 = vdwg.mxu0
      %s658 = smul.u32 %s18, 8
      %v659 = vlaneseq
      %v660 = vshrl.u32 %v659, 7
      %v661 = vstv %s658
      %v662 = vadd.s32 %v660, %v661
      %v663 = vlaneseq
      %v664 = vand.u32 %v663, 127
      %vm665 = vcmp.le.s32.totalorder %v664, %v662
      %v666 = vsel %vm665, 1, 0
      %vm667 = vcmp.eq.s32.totalorder %v666, 1
      %v668 = vsel %vm667, %v578, -1e+30
      %v669 = vsel %vm667, %v604, -1e+30
      %v670 = vsel %vm667, %v630, -1e+30
      %v671 = vsel %vm667, %v656, -1e+30
      %v672 = vsel %vm553, %v668, -inf
      %673 = vmax.xlane.f32.xlu0 %v672
      %v674 = vpop.xlane.xlu0 %673
      %v675 = vsel %vm553, %v669, -inf
      %676 = vmax.xlane.f32.xlu0 %v675
      %v677 = vpop.xlane.xlu0 %676
      %v678 = vsel %vm553, %v670, -inf
      %679 = vmax.xlane.f32.xlu0 %v678
      %v680 = vpop.xlane.xlu0 %679
      %v681 = vsel %vm553, %v671, -inf
      %682 = vmax.xlane.f32.xlu0 %v681
      %v683 = vpop.xlane.xlu0 %682
      %v684 = vsub.f32 %v668, %v674
      %v685 = vsub.f32 %v669, %v677
      %v686 = vsub.f32 %v670, %v680
      %v687 = vsub.f32 %v671, %v683
      %v688 = vmul.f32 %v684, 1.442695
      %v689 = vpow.pop %v688
      %v690 = vmul.f32 %v685, 1.442695
      %v691 = vpow.pop %v690
      %v692 = vmul.f32 %v686, 1.442695
      %v693 = vpow.pop %v692
      %v694 = vmul.f32 %v687, 1.442695
      %v695 = vpow.pop %v694
      %v696 = vsel %vm553, %v689, 0.0
      %697 = vadd.xlane.f32.xlu0 %v696
      %v698 = vpop.xlane.xlu0 %697
      %v699 = vsel %vm553, %v691, 0.0
      %700 = vadd.xlane.f32.xlu0 %v699
      %v701 = vpop.xlane.xlu0 %700
      %v702 = vsel %vm553, %v693, 0.0
      %703 = vadd.xlane.f32.xlu0 %v702
      %v704 = vpop.xlane.xlu0 %703
      %v705 = vsel %vm553, %v695, 0.0
      %706 = vadd.xlane.f32.xlu0 %v705
      %v707 = vpop.xlane.xlu0 %706
      %v708 = vrcp.pop %v698
      %v709 = vrcp.pop %v701
      %v710 = vrcp.pop %v704
      %v711 = vrcp.pop %v707
      %v712 = vmul.f32 %v689, %v708
      %v713 = vmul.f32 %v691, %v709
      %v714 = vmul.f32 %v693, %v710
      %v715 = vmul.f32 %v695, %v711
      %v717 = vsel %vm553, %v712, 0
      %719 = vmatpush.msra.mxu0 0.0
      %720 = vmatpush.msra.mxu0 0.0
      %721 = vmatpush.msra.mxu0 0.0
      %722 = vmatpush.msra.mxu0 0.0
      %723 = vmatpush.msra.mxu0 0.0
      %724 = vmatpush.msra.mxu0 0.0
      %725 = vmatpush.msra.mxu0 0.0
      %726 = vmatpush.msra.mxu0 0.0
      %727 = vmatpush.msra.mxu0 0.0
      %728 = vmatpush.msra.mxu0 0.0
      %729 = vmatpush.msra.mxu0 0.0
      %730 = vmatpush.msra.mxu0 0.0
      %731 = vmatpush.msra.mxu0 0.0
      %732 = vmatpush.msra.mxu0 0.0
      %733 = vmatpush.msra.mxu0 0.0
      %734 = vmatpush.msra.mxu0 %v546
      %735 = vmatmul.f32.gmra.mxu0 %v717
      %v736 = vpop.f32.mrf.mxu0
      %v737 = vadd.f32 0.0, %v736
      %738 = vdwg.mxu0
      %v740 = vsel %vm553, %v713, 0
      %742 = vmatpush.msra.mxu0 0.0
      %743 = vmatpush.msra.mxu0 0.0
      %744 = vmatpush.msra.mxu0 0.0
      %745 = vmatpush.msra.mxu0 0.0
      %746 = vmatpush.msra.mxu0 0.0
      %747 = vmatpush.msra.mxu0 0.0
      %748 = vmatpush.msra.mxu0 0.0
      %749 = vmatpush.msra.mxu0 0.0
      %750 = vmatpush.msra.mxu0 0.0
      %751 = vmatpush.msra.mxu0 0.0
      %752 = vmatpush.msra.mxu0 0.0
      %753 = vmatpush.msra.mxu0 0.0
      %754 = vmatpush.msra.mxu0 0.0
      %755 = vmatpush.msra.mxu0 0.0
      %756 = vmatpush.msra.mxu0 0.0
      %757 = vmatpush.msra.mxu0 %v548
      %758 = vmatmul.f32.gmra.mxu0 %v740
      %v759 = vpop.f32.mrf.mxu0
      %v760 = vadd.f32 0.0, %v759
      %761 = vdwg.mxu0
      %v763 = vsel %vm553, %v714, 0
      %765 = vmatpush.msra.mxu0 0.0
      %766 = vmatpush.msra.mxu0 0.0
      %767 = vmatpush.msra.mxu0 0.0
      %768 = vmatpush.msra.mxu0 0.0
      %769 = vmatpush.msra.mxu0 0.0
      %770 = vmatpush.msra.mxu0 0.0
      %771 = vmatpush.msra.mxu0 0.0
      %772 = vmatpush.msra.mxu0 0.0
      %773 = vmatpush.msra.mxu0 0.0
      %774 = vmatpush.msra.mxu0 0.0
      %775 = vmatpush.msra.mxu0 0.0
      %776 = vmatpush.msra.mxu0 0.0
      %777 = vmatpush.msra.mxu0 0.0
      %778 = vmatpush.msra.mxu0 0.0
      %779 = vmatpush.msra.mxu0 0.0
      %780 = vmatpush.msra.mxu0 %v550
      %781 = vmatmul.f32.gmra.mxu0 %v763
      %v782 = vpop.f32.mrf.mxu0
      %v783 = vadd.f32 0.0, %v782
      %784 = vdwg.mxu0
      %v786 = vsel %vm553, %v715, 0
      %788 = vmatpush.msra.mxu0 0.0
      %789 = vmatpush.msra.mxu0 0.0
      %790 = vmatpush.msra.mxu0 0.0
      %791 = vmatpush.msra.mxu0 0.0
      %792 = vmatpush.msra.mxu0 0.0
      %793 = vmatpush.msra.mxu0 0.0
      %794 = vmatpush.msra.mxu0 0.0
      %795 = vmatpush.msra.mxu0 0.0
      %796 = vmatpush.msra.mxu0 0.0
      %797 = vmatpush.msra.mxu0 0.0
      %798 = vmatpush.msra.mxu0 0.0
      %799 = vmatpush.msra.mxu0 0.0
      %800 = vmatpush.msra.mxu0 0.0
      %801 = vmatpush.msra.mxu0 0.0
      %802 = vmatpush.msra.mxu0 0.0
      %803 = vmatpush.msra.mxu0 %v552
      %804 = vmatmul.f32.gmra.mxu0 %v786
      %v805 = vpop.f32.mrf.mxu0
      %v806 = vadd.f32 0.0, %v805
      %807 = vdwg.mxu0
      %v808 = vrot.slane %v783, 4
      %v809 = vsel %vm201, %v808, %v737
      %v810 = vrot.slane %v737, 4
      %v811 = vsel %vm201, %v783, %v810
      %v813 = vunpack.c.l.s4 1983009808
      %v814 = vunpack.c.0.s8 %v813
      %v815 = vperm.slane %v809, %v814
      %v817 = vunpack.c.l.s4 1983009808
      %v818 = vunpack.c.0.s8 %v817
      %v819 = vperm.slane %v811, %v818
      %v820 = vrot.slane %v806, 4
      %v821 = vsel %vm201, %v820, %v760
      %v822 = vrot.slane %v760, 4
      %v823 = vsel %vm201, %v806, %v822
      %v825 = vunpack.c.l.s4 1983009808
      %v826 = vunpack.c.0.s8 %v825
      %v827 = vperm.slane %v821, %v826
      %v829 = vunpack.c.l.s4 1983009808
      %v830 = vunpack.c.0.s8 %v829
      %v831 = vperm.slane %v823, %v830
      %v832 = vrot.slane %v827, 4
      %v833 = vsel %vm201, %v832, %v815
      %v834 = vrot.slane %v815, 4
      %v835 = vsel %vm201, %v827, %v834
      %v837 = vunpack.c.l.s4 1934713408
      %v838 = vunpack.c.0.s8 %v837
      %v839 = vperm.slane %v833, %v838
      %v841 = vunpack.c.l.s4 1934713408
      %v842 = vunpack.c.0.s8 %v841
      %v843 = vperm.slane %v835, %v842
      %v844 = vrot.slane %v831, 4
      %v845 = vsel %vm201, %v844, %v819
      %v846 = vrot.slane %v819, 4
      %v847 = vsel %vm201, %v831, %v846
      %v849 = vunpack.c.l.s4 1934713408
      %v850 = vunpack.c.0.s8 %v849
      %v851 = vperm.slane %v845, %v850
      %v853 = vunpack.c.l.s4 1934713408
      %v854 = vunpack.c.0.s8 %v853
      %v855 = vperm.slane %v847, %v854
      %v856 = vrot.slane %v839, 4
      %v857 = vsel %vm201, 0.0, %v856
      %v858 = vrot.slane %v843, 4
      %v859 = vsel %vm201, 0.0, %v858
      %v860 = vrot.slane %v851, 4
      %v861 = vsel %vm201, 0.0, %v860
      %v862 = vrot.slane %v855, 4
      %v863 = vsel %vm201, 0.0, %v862
      %v864 = vsel %vm201, %v858, %v839
      %v866 = vunpack.c.l.s4 1983009808
      %v867 = vunpack.c.0.s8 %v866
      %v868 = vperm.slane %v864, %v867
      %v869 = vrot.slane %v859, 4
      %v870 = vsel %vm201, %v869, %v857
      %v872 = vunpack.c.l.s4 1983009808
      %v873 = vunpack.c.0.s8 %v872
      %v874 = vperm.slane %v870, %v873
      %v875 = vsel %vm201, %v862, %v851
      %v877 = vunpack.c.l.s4 1983009808
      %v878 = vunpack.c.0.s8 %v877
      %v879 = vperm.slane %v875, %v878
      %v880 = vrot.slane %v863, 4
      %v881 = vsel %vm201, %v880, %v861
      %v883 = vunpack.c.l.s4 1983009808
      %v884 = vunpack.c.0.s8 %v883
      %v885 = vperm.slane %v881, %v884
      %v886 = vrot.slane %v874, 4
      %v887 = vsel %vm201, %v886, %v868
      %v888 = vrot.slane %v868, 4
      %v889 = vsel %vm201, %v874, %v888
      %v891 = vunpack.c.l.s4 1934713408
      %v892 = vunpack.c.0.s8 %v891
      %v893 = vperm.slane %v887, %v892
      %v895 = vunpack.c.l.s4 1934713408
      %v896 = vunpack.c.0.s8 %v895
      %v897 = vperm.slane %v889, %v896
      %v898 = vrot.slane %v885, 4
      %v899 = vsel %vm201, %v898, %v879
      %v900 = vrot.slane %v879, 4
      %v901 = vsel %vm201, %v885, %v900
      %v903 = vunpack.c.l.s4 1934713408
      %v904 = vunpack.c.0.s8 %v903
      %v905 = vperm.slane %v899, %v904
      %v907 = vunpack.c.l.s4 1934713408
      %v908 = vunpack.c.0.s8 %v907
      %v909 = vperm.slane %v901, %v908
      %v910 = vrot.slane %v905, 4
      %v911 = vsel %vm201, %v910, %v893
      %v912 = vrot.slane %v893, 4
      %v913 = vsel %vm201, %v905, %v912
      %v914 = vrot.slane %v909, 4
      %v915 = vsel %vm201, %v914, %v897
      %v916 = vrot.slane %v897, 4
      %v917 = vsel %vm201, %v909, %v916
      %919 = vrot.lane.b32.xlu0 %v913, 8
      %v920 = vpop.permute.xlu0 %919
      %923 = vrot.lane.b32.xlu0 %v915, 16
      %v924 = vpop.permute.xlu0 %923
      %927 = vrot.lane.b32.xlu0 %v917, 24
      %v928 = vpop.permute.xlu0 %927
      %v930 = vsel %vm553, %v911, %v920
      %vm931 = vcmask 130048
      %v932 = vsel %vm931, %v930, %v924
      %vm933 = vcmask 195584
      %v934 = vsel %vm933, %v932, %v928
      %vm935 = vcmask 261120
      %936 = vst.msk [vmem:[%s186] sm:$0xff] %vm935, %v934
      %p937 = scmp.lt.s32.totalorder %s17, 1
      %s938 = scalar_select %p937, %s17, 1
      %p939 = scmp.lt.s32.totalorder %s18, 0
      %s940 = scalar_select %p939, %s18, 0
      %s941 = sadd.s32 %s940, %s938
      %s942 = smul.addr %s941, 8
      %s943 = scalar_lea.vmem %s2, %s942
      // Predicated region
      $region29: #{_lambda_.27} parent=27 // pred_check
        %p944 = pneg %p99
      $region30: #{_lambda_.27} parent=27 // pred_check_branch
        %946 = sbr.rel (%p944) target = $region32
      $region31: #{_lambda_.27} parent=27 // pred_region
        _
      $region32: #{_lambda_.27} parent=27 // pred_fallthru
        _
    $region28: #{_lambda_.27} parent=5 // pred_fallthru
      _
    %p947 = scmp.le.s32.totalorder 2, %s8
    // Predicated region
    $region33: #{_lambda_.27} parent=5 // pred_check
      %p948 = pneg %p947
    $region34: #{_lambda_.27} parent=5 // pred_check_branch
      %950 = sbr.rel (%p948) target = $region36
    $region35: #{_lambda_.27} parent=5 // pred_region
      %s951 = ssub.s32 %s8, 2
      // Predicated region
      $region37: #{_lambda_.27} parent=35 // pred_check
        %p952 = pneg %p105
      $region38: #{_lambda_.27} parent=35 // pred_check_branch
        %954 = sbr.rel (%p952) target = $region40
      $region39: #{_lambda_.27} parent=35 // pred_region
        %p955 = scmp.lt.s32.totalorder %s19, 1
        %s956 = scalar_select %p955, %s19, 1
        %p957 = scmp.lt.s32.totalorder %s20, 0
        %s958 = scalar_select %p957, %s20, 0
        %s959 = sadd.s32 %s958, %s956
        %s960 = smul.addr %s959, 8
        %s961 = scalar_lea.vmem %s2, %s960
      $region40: #{_lambda_.27} parent=35 // pred_fallthru
        _
    $region36: #{_lambda_.27} parent=5 // pred_fallthru
      _
  $region6: #{_lambda_.27} parent=0 // loop_footer
    %s12 = sadd.s32 1, %s8
  $region7: #{_lambda_.27} parent=0 // loop_footer_branch
    %7 = sbr.rel target = $region3
  $region8: #{_lambda_.27} parent=0 // loop_exit
    _

// kernel: _lambda_.30
$region0: #{_lambda_.30}
  #allocation0 [shape = 'u32[]', space=smem, size = 0x4, offset = 0x4, fixed_abs, tag = 'smem constant byte address 0x4 - core index']
  #allocation1 [shape = 'u32[72,128]{1,0:T(1,128)}', space=vmem, size = 0x9000, scoped, tag = 'internal scratch']
  #allocation2 [shape = 'f32[16,32]{1,0:T(8,128)}', space=vmem, size = 0x2000, scoped, tag = 'scratch operand']
  %s0 = inlined_call_operand.vmem [shape: f32[16,128], index: 0, kind: input, shape index: {}]
  %s1 = inlined_call_operand.vmem [shape: f32[128,32], index: 1, kind: input, shape index: {}]
  %s2 = inlined_call_operand.vmem [shape: f32[1,32], index: 2, kind: input, shape index: {}]
  %s3 = inlined_call_operand.vmem [shape: f32[16,32], index: 3, kind: input, shape index: {}]
  %s4 = inlined_call_operand.vmem [shape: f32[16,32], index: 4, kind: output, shape index: {}]
  %s5 = sld [smem:[#allocation0]]
  $region34: #{_lambda_.30} parent=0
    _
  %s7 = ssub.s32 1, %s5
  %s8 = scalar_select 0, %s7, %s5
  // Predicated region
  $region2: #{_lambda_.30} parent=0 // pred_check
    _
  $region3: #{_lambda_.30} parent=0 // pred_check_branch
    %10 = sbr.rel (0) target = $region5
  $region4: #{_lambda_.30} parent=0 // pred_region
    _
  $region5: #{_lambda_.30} parent=0 // pred_fallthru
    _
  // Predicated region
  $region6: #{_lambda_.30} parent=0 // pred_check
    _
  $region7: #{_lambda_.30} parent=0 // pred_check_branch
    %12 = sbr.rel (0) target = $region9
  $region8: #{_lambda_.30} parent=0 // pred_region
    _
  $region9: #{_lambda_.30} parent=0 // pred_fallthru
    _
  // Predicated region
  $region10: #{_lambda_.30} parent=0 // pred_check
    _
  $region11: #{_lambda_.30} parent=0 // pred_check_branch
    %14 = sbr.rel (0) target = $region13
  $region12: #{_lambda_.30} parent=0 // pred_region
    _
  $region13: #{_lambda_.30} parent=0 // pred_fallthru
    _
  // Predicated region
  $region14: #{_lambda_.30} parent=0 // pred_check
    _
  $region15: #{_lambda_.30} parent=0 // pred_check_branch
    %16 = sbr.rel (0) target = $region17
  $region16: #{_lambda_.30} parent=0 // pred_region
    _
  $region17: #{_lambda_.30} parent=0 // pred_fallthru
    _
  %p17 = scmp.eq.s32.totalorder 0, 0
  // Predicated region
  $region18: #{_lambda_.30} parent=0 // pred_check
    %p18 = pneg %p17
  $region19: #{_lambda_.30} parent=0 // pred_check_branch
    %20 = sbr.rel (%p18) target = $region21
  $region20: #{_lambda_.30} parent=0 // pred_region
    %vm21 = vcmask 261120
    %22 = vst.msk [vmem:[#allocation2] sm:$0xff] %vm21, 0.0
    %23 = vst.msk [vmem:[#allocation2 + $0x8] sm:$0xff] %vm21, 0.0
  $region21: #{_lambda_.30} parent=0 // pred_fallthru
    _
  %v24 = vld [vmem:[%s0] sm:$0xff]
  %v25 = vld [vmem:[%s0 + $0x8] sm:$0xff]
  %v26 = vld [vmem:[#allocation2] sm:$0xff]
  %v27 = vld [vmem:[#allocation2 + $0x8] sm:$0xff]
  %v28 = vld [vmem:[%s1] sm:$0xff]
  %v29 = vld [vmem:[%s1 + $0x8] sm:$0xff]
  %v30 = vld [vmem:[%s1 + $0x10] sm:$0xff]
  %v31 = vld [vmem:[%s1 + $0x18] sm:$0xff]
  %v32 = vld [vmem:[%s1 + $0x20] sm:$0xff]
  %v33 = vld [vmem:[%s1 + $0x28] sm:$0xff]
  %v34 = vld [vmem:[%s1 + $0x30] sm:$0xff]
  %v35 = vld [vmem:[%s1 + $0x38] sm:$0xff]
  %v36 = vld [vmem:[%s1 + $0x40] sm:$0xff]
  %v37 = vld [vmem:[%s1 + $0x48] sm:$0xff]
  %v38 = vld [vmem:[%s1 + $0x50] sm:$0xff]
  %v39 = vld [vmem:[%s1 + $0x58] sm:$0xff]
  %v40 = vld [vmem:[%s1 + $0x60] sm:$0xff]
  %v41 = vld [vmem:[%s1 + $0x68] sm:$0xff]
  %v42 = vld [vmem:[%s1 + $0x70] sm:$0xff]
  %v43 = vld [vmem:[%s1 + $0x78] sm:$0xff]
  %44 = vmatpush.msra.mxu0 %v43
  %45 = vmatpush.msra.mxu0 %v42
  %46 = vmatpush.msra.mxu0 %v41
  %47 = vmatpush.msra.mxu0 %v40
  %48 = vmatpush.msra.mxu0 %v39
  %49 = vmatpush.msra.mxu0 %v38
  %50 = vmatpush.msra.mxu0 %v37
  %51 = vmatpush.msra.mxu0 %v36
  %52 = vmatpush.msra.mxu0 %v35
  %53 = vmatpush.msra.mxu0 %v34
  %54 = vmatpush.msra.mxu0 %v33
  %55 = vmatpush.msra.mxu0 %v32
  %56 = vmatpush.msra.mxu0 %v31
  %57 = vmatpush.msra.mxu0 %v30
  %58 = vmatpush.msra.mxu0 %v29
  %59 = vmatpush.msra.mxu0 %v28
  %60 = vmatmul.f32.gmra.mxu0 %v24
  %v61 = vpop.f32.mrf.mxu0
  %v62 = vadd.f32 0.0, %v61
  %63 = vmatmul.f32.gmra.mxu0 %v25
  %v64 = vpop.f32.mrf.mxu0
  %v65 = vadd.f32 0.0, %v64
  %66 = vdwg.mxu0
  %v67 = vadd.f32 %v26, %v62
  %v68 = vadd.f32 %v27, %v65
  %vm69 = vcmask 261120
  %70 = vst.msk [vmem:[#allocation2] sm:$0xff] %vm69, %v67
  %71 = vst.msk [vmem:[#allocation2 + $0x8] sm:$0xff] %vm69, %v68
  // Predicated region
  $region22: #{_lambda_.30} parent=0 // pred_check
    %p72 = pneg %p17
  $region23: #{_lambda_.30} parent=0 // pred_check_branch
    %74 = sbr.rel (%p72) target = $region25
  $region24: #{_lambda_.30} parent=0 // pred_region
    %v75 = vld [vmem:[#allocation2] sm:$0xff]
    %v76 = vld [vmem:[#allocation2 + $0x8] sm:$0xff]
    %v77 = vld [vmem:[%s2] sm:$0x1]
    %v79 = vperm.slane %v77, 0
    %v81 = vadd.f32 %v75, %v79
    %v82 = vadd.f32 %v76, %v79
    %v83 = vld [vmem:[%s3] sm:$0xff]
    %v84 = vld [vmem:[%s3 + $0x8] sm:$0xff]
    %v85 = vadd.f32 %v81, %v83
    %v86 = vadd.f32 %v82, %v84
    %87 = vst.msk [vmem:[%s4] sm:$0xff] %vm69, %v85
    %88 = vst.msk [vmem:[%s4 + $0x8] sm:$0xff] %vm69, %v86
  $region25: #{_lambda_.30} parent=0 // pred_fallthru
    _
  // Predicated region
  $region26: #{_lambda_.30} parent=0 // pred_check
    _
  $region27: #{_lambda_.30} parent=0 // pred_check_branch
    %90 = sbr.rel (0) target = $region29
  $region28: #{_lambda_.30} parent=0 // pred_region
    _
  $region29: #{_lambda_.30} parent=0 // pred_fallthru
    _
  // Predicated region
  $region30: #{_lambda_.30} parent=0 // pred_check
    _
  $region31: #{_lambda_.30} parent=0 // pred_check_branch
    %92 = sbr.rel (0) target = $region33
  $region32: #{_lambda_.30} parent=0 // pred_region
    _
  $region33: #{_lambda_.30} parent=0 // pred_fallthru
    _

// kernel: _lambda_.29
$region0: #{_lambda_.29}
  #allocation0 [shape = 'u32[]', space=smem, size = 0x4, offset = 0x4, fixed_abs, tag = 'smem constant byte address 0x4 - core index']
  #allocation1 [shape = 'u32[72,128]{1,0:T(1,128)}', space=vmem, size = 0x9000, scoped, tag = 'internal scratch']
  #allocation2 [shape = 'f32[16,128]{1,0:T(8,128)}', space=vmem, size = 0x2000, scoped, tag = 'scratch operand']
  %s0 = inlined_call_operand.vmem [shape: f32[16,32], index: 0, kind: input, shape index: {}]
  %s1 = inlined_call_operand.vmem [shape: f32[1,32], index: 1, kind: input, shape index: {}]
  %s2 = inlined_call_operand.vmem [shape: f32[1,32], index: 2, kind: input, shape index: {}]
  %s3 = inlined_call_operand.hbm [shape: f32[32,128], index: 3, kind: input, shape index: {}]
  %s4 = inlined_call_operand.vmem [shape: f32[1,128], index: 4, kind: input, shape index: {}]
  %s5 = inlined_call_operand.vmem [shape: f32[16,128], index: 5, kind: output, shape index: {}]
  %s6 = sld [smem:[#allocation0]]
  $region42: #{_lambda_.29} parent=0
    _
  %s8 = ssub.s32 1, %s6
  %s9 = scalar_select 0, %s8, %s6
  $region1: #{_lambda_.29} parent=0
    #allocation3 [shape = 'u8[16384]{0}', space=vmem, size = 0x4000, scoped, tag = 'input window, operand 3, single buffered']
    #allocation4 [shape = 's32[1]{0}', space=sflag, size = 0x4, scoped, tag = 'scoped memory for _lambda_.29']
    %10 = vsyncpa [#allocation4], 0
    // Predicated region
    $region2: #{_lambda_.29} parent=1 // pred_check
      _
    $region3: #{_lambda_.29} parent=1 // pred_check_branch
      %12 = sbr.rel (0) target = $region5
    $region4: #{_lambda_.29} parent=1 // pred_region
      _
    $region5: #{_lambda_.29} parent=1 // pred_fallthru
      _
    // Predicated region
    $region6: #{_lambda_.29} parent=1 // pred_check
      _
    $region7: #{_lambda_.29} parent=1 // pred_check_branch
      %14 = sbr.rel (0) target = $region9
    $region8: #{_lambda_.29} parent=1 // pred_region
      _
    $region9: #{_lambda_.29} parent=1 // pred_fallthru
      _
    // Predicated region
    $region10: #{_lambda_.29} parent=1 // pred_check
      _
    $region11: #{_lambda_.29} parent=1 // pred_check_branch
      %16 = sbr.rel (0) target = $region13
    $region12: #{_lambda_.29} parent=1 // pred_region
      _
    $region13: #{_lambda_.29} parent=1 // pred_fallthru
      _
    // Predicated region
    $region14: #{_lambda_.29} parent=1 // pred_check
      _
    $region15: #{_lambda_.29} parent=1 // pred_check_branch
      %18 = sbr.rel (0) target = $region17
    $region16: #{_lambda_.29} parent=1 // pred_region
      %20 = vsyncadd [#allocation4], 0
      %s21 = sshll.u32 %s3, 4
      %s22 = int_to_ptr.hbm [resolvable:$true] %s21
      %s23 = sshll.u32 [#allocation3], 4
      %s24 = int_to_ptr.vmem [resolvable:$true] %s23
      %29 = dma.hbm_to_vmem [thread:$0]  %s22, 512, %s24, [#allocation4], 128, 128, 8
    $region17: #{_lambda_.29} parent=1 // pred_fallthru
      _
    // Predicated region
    $region18: #{_lambda_.29} parent=1 // pred_check
      _
    $region19: #{_lambda_.29} parent=1 // pred_check_branch
      %31 = sbr.rel (0) target = $region21
    $region20: #{_lambda_.29} parent=1 // pred_region
      _
    $region21: #{_lambda_.29} parent=1 // pred_fallthru
      _
    // Predicated region
    $region22: #{_lambda_.29} parent=1 // pred_check
      _
    $region23: #{_lambda_.29} parent=1 // pred_check_branch
      %33 = sbr.rel (0) target = $region25
    $region24: #{_lambda_.29} parent=1 // pred_region
      %35 = dma.done [#allocation4], 512
    $region25: #{_lambda_.29} parent=1 // pred_fallthru
      _
    %p36 = scmp.eq.s32.totalorder 0, 0
    // Predicated region
    $region26: #{_lambda_.29} parent=1 // pred_check
      %p37 = pneg %p36
    $region27: #{_lambda_.29} parent=1 // pred_check_branch
      %39 = sbr.rel (%p37) target = $region29
    $region28: #{_lambda_.29} parent=1 // pred_region
      %40 = vst [vmem:[#allocation2] sm:$0xff] 0.0
      %41 = vst [vmem:[#allocation2 + $0x8] sm:$0xff] 0.0
    $region29: #{_lambda_.29} parent=1 // pred_fallthru
      _
    %v42 = vld [vmem:[%s0] sm:$0xff]
    %v43 = vld [vmem:[%s0 + $0x8] sm:$0xff]
    %vm44 = vcmask 261120
    %v45 = vsel %vm44, %v42, 0.0
    %46 = vadd.xlane.f32.xlu0 %v45
    %v47 = vpop.xlane.xlu0 %46
    %v48 = vsel %vm44, %v43, 0.0
    %49 = vadd.xlane.f32.xlu0 %v48
    %v50 = vpop.xlane.xlu0 %49
    %v51 = vrcp.pop 32.0
    %v52 = vmul.f32 32.0, %v51
    %v53 = vsub.f32 1.0, %v52
    %v54 = vmul.f32 %v51, %v53
    %v55 = vadd.f32 %v51, %v54
    %vm56 = vweird.f32 %v51
    %v57 = vsel %vm56, %v51, %v55
    %v58 = vmul.f32 %v47, %v57
    %v59 = vmul.f32 %v50, %v57
    %v60 = vsub.f32 %v42, %v58
    %v61 = vsub.f32 %v43, %v59
    %v62 = vmul.f32 %v60, %v60
    %v63 = vmul.f32 %v61, %v61
    %v64 = vsel %vm44, %v62, 0.0
    %65 = vadd.xlane.f32.xlu0 %v64
    %v66 = vpop.xlane.xlu0 %65
    %v67 = vsel %vm44, %v63, 0.0
    %68 = vadd.xlane.f32.xlu0 %v67
    %v69 = vpop.xlane.xlu0 %68
    %v70 = vmul.f32 %v66, %v57
    %v71 = vmul.f32 %v69, %v57
    %v72 = vadd.f32 %v70, 1e-05
    %v73 = vadd.f32 %v71, 1e-05
    %v74 = vrsqrt.pop %v72
    %v75 = vmul.f32 %v74, %v72
    %v76 = vmul.f32 %v75, %v74
    %v77 = vmul.f32 0.5, %v76
    %v78 = vsub.f32 1.5, %v77
    %v79 = vmul.f32 %v74, %v78
    %vm80 = vweird.f32 %v72
    %vm81 = vweird.f32 %v74
    %vm82 = vmor %vm80, %vm81
    %v83 = vsel %vm82, %v74, %v79
    %v84 = vrsqrt.pop %v73
    %v85 = vmul.f32 %v84, %v73
    %v86 = vmul.f32 %v85, %v84
    %v87 = vmul.f32 0.5, %v86
    %v88 = vsub.f32 1.5, %v87
    %v89 = vmul.f32 %v84, %v88
    %vm90 = vweird.f32 %v73
    %vm91 = vweird.f32 %v84
    %vm92 = vmor %vm90, %vm91
    %v93 = vsel %vm92, %v84, %v89
    %v94 = vmul.f32 %v60, %v83
    %v95 = vmul.f32 %v61, %v93
    %v96 = vld [vmem:[%s1] sm:$0x1]
    %v98 = vperm.slane %v96, 0
    %v100 = vmul.f32 %v94, %v98
    %v101 = vmul.f32 %v95, %v98
    %v102 = vld [vmem:[%s2] sm:$0x1]
    %v104 = vperm.slane %v102, 0
    %v106 = vadd.f32 %v100, %v104
    %v107 = vadd.f32 %v101, %v104
    %v108 = vld [vmem:[#allocation2] sm:$0xff]
    %v109 = vld [vmem:[#allocation2 + $0x8] sm:$0xff]
    %v110 = vld [vmem:[#allocation3] sm:$0xff]
    %v111 = vld [vmem:[#allocation3 + $0x8] sm:$0xff]
    %v112 = vld [vmem:[#allocation3 + $0x10] sm:$0xff]
    %v113 = vld [vmem:[#allocation3 + $0x18] sm:$0xff]
    %v115 = vsel %vm44, %v106, 0
    %v118 = vsel %vm44, %v107, 0
    %120 = vmatpush.msra.mxu0 0.0
    %121 = vmatpush.msra.mxu0 0.0
    %122 = vmatpush.msra.mxu0 0.0
    %123 = vmatpush.msra.mxu0 0.0
    %124 = vmatpush.msra.mxu0 0.0
    %125 = vmatpush.msra.mxu0 0.0
    %126 = vmatpush.msra.mxu0 0.0
    %127 = vmatpush.msra.mxu0 0.0
    %128 = vmatpush.msra.mxu0 0.0
    %129 = vmatpush.msra.mxu0 0.0
    %130 = vmatpush.msra.mxu0 0.0
    %131 = vmatpush.msra.mxu0 0.0
    %132 = vmatpush.msra.mxu0 %v113
    %133 = vmatpush.msra.mxu0 %v112
    %134 = vmatpush.msra.mxu0 %v111
    %135 = vmatpush.msra.mxu0 %v110
    %136 = vmatmul.f32.gmra.mxu0 %v115
    %v137 = vpop.f32.mrf.mxu0
    %v138 = vadd.f32 0.0, %v137
    %139 = vmatmul.f32.gmra.mxu0 %v118
    %v140 = vpop.f32.mrf.mxu0
    %v141 = vadd.f32 0.0, %v140
    %142 = vdwg.mxu0
    %v143 = vadd.f32 %v108, %v138
    %v144 = vadd.f32 %v109, %v141
    %145 = vst [vmem:[#allocation2] sm:$0xff] %v143
    %146 = vst [vmem:[#allocation2 + $0x8] sm:$0xff] %v144
    // Predicated region
    $region30: #{_lambda_.29} parent=1 // pred_check
      %p147 = pneg %p36
    $region31: #{_lambda_.29} parent=1 // pred_check_branch
      %149 = sbr.rel (%p147) target = $region33
    $region32: #{_lambda_.29} parent=1 // pred_region
      %v150 = vld [vmem:[#allocation2] sm:$0xff]
      %v151 = vld [vmem:[#allocation2 + $0x8] sm:$0xff]
      %v152 = vld [vmem:[%s4] sm:$0x1]
      %v154 = vperm.slane %v152, 0
      %v156 = vadd.f32 %v150, %v154
      %v157 = vadd.f32 %v151, %v154
      %v158 = vmul.f32 %v156, 0.5
      %v159 = vmul.f32 %v157, 0.5
      %v160 = vmul.f32 %v156, 0.70710677
      %v161 = vmul.f32 %v157, 0.70710677
      %v162 = vand.u32 2147483647, %v160
      %v163 = vand.u32 2147483647, %v161
      %v164 = vmul.f32 %v162, 0.3275911
      %v165 = vmul.f32 %v163, 0.3275911
      %v166 = vadd.f32 %v164, 1.0
      %v167 = vadd.f32 %v165, 1.0
      %v168 = vrcp.pop %v166
      %v169 = vmul.f32 %v166, %v168
      %v170 = vsub.f32 1.0, %v169
      %v171 = vmul.f32 %v168, %v170
      %v172 = vadd.f32 %v168, %v171
      %vm173 = vweird.f32 %v166
      %vm174 = vweird.f32 %v168
      %vm175 = vmor %vm173, %vm174
      %v176 = vsel %vm175, %v168, %v172
      %v177 = vand.u32 2147483647, %v166
      %vm178 = vcmp.eq.f32.partialorder %v177, 8.507059e+37
      %v179 = vand.u32 %v166, 2147483648
      %v180 = vor.u32 1.1754944e-38, %v179
      %v181 = vsel %vm178, %v180, %v176
      %v182 = vmul.f32 1.0, %v181
      %v183 = vrcp.pop %v167
      %v184 = vmul.f32 %v167, %v183
      %v185 = vsub.f32 1.0, %v184
      %v186 = vmul.f32 %v183, %v185
      %v187 = vadd.f32 %v183, %v186
      %vm188 = vweird.f32 %v167
      %vm189 = vweird.f32 %v183
      %vm190 = vmor %vm188, %vm189
      %v191 = vsel %vm190, %v183, %v187
      %v192 = vand.u32 2147483647, %v167
      %vm193 = vcmp.eq.f32.partialorder %v192, 8.507059e+37
      %v194 = vand.u32 %v167, 2147483648
      %v195 = vor.u32 1.1754944e-38, %v194
      %v196 = vsel %vm193, %v195, %v191
      %v197 = vmul.f32 1.0, %v196
      %v198 = vmul.f32 %v182, 1.0614054
      %v199 = vmul.f32 %v197, 1.0614054
      %v200 = vsub.f32 %v198, 1.4531521
      %v201 = vsub.f32 %v199, 1.4531521
      %v202 = vmul.f32 %v200, %v182
      %v203 = vmul.f32 %v201, %v197
      %v204 = vadd.f32 %v202, 1.4214138
      %v205 = vadd.f32 %v203, 1.4214138
      %v206 = vmul.f32 %v204, %v182
      %v207 = vmul.f32 %v205, %v197
      %v208 = vsub.f32 %v206, 0.28449672
      %v209 = vsub.f32 %v207, 0.28449672
      %v210 = vmul.f32 %v208, %v182
      %v211 = vmul.f32 %v209, %v197
      %v212 = vadd.f32 %v210, 0.2548296
      %v213 = vadd.f32 %v211, 0.2548296
      %v214 = vmul.f32 %v212, %v182
      %v215 = vmul.f32 %v213, %v197
      %v216 = vsub.f32 0.0, %v162
      %v217 = vsub.f32 0.0, %v163
      %v218 = vmul.f32 %v216, %v162
      %v219 = vmul.f32 %v217, %v163
      %v220 = vmul.f32 %v218, 1.442695
      %v221 = vpow.pop %v220
      %v222 = vmul.f32 %v219, 1.442695
      %v223 = vpow.pop %v222
      %v224 = vmul.f32 %v214, %v221
      %v225 = vmul.f32 %v215, %v223
      %v226 = vsub.f32 1.0, %v224
      %v227 = vsub.f32 1.0, %v225
      %vm228 = vcmp.ge.f32.partialorder %v160, 0.0
      %vm229 = vcmp.ge.f32.partialorder %v161, 0.0
      %v230 = vsub.f32 0.0, %v226
      %v231 = vsub.f32 0.0, %v227
      %v232 = vsel %vm228, %v226, %v230
      %v233 = vsel %vm229, %v227, %v231
      %v234 = vadd.f32 %v232, 1.0
      %v235 = vadd.f32 %v233, 1.0
      %v236 = vmul.f32 %v158, %v234
      %v237 = vmul.f32 %v159, %v235
      %238 = vst [vmem:[%s5] sm:$0xff] %v236
      %239 = vst [vmem:[%s5 + $0x8] sm:$0xff] %v237
    $region33: #{_lambda_.29} parent=1 // pred_fallthru
      _
    // Predicated region
    $region34: #{_lambda_.29} parent=1 // pred_check
      _
    $region35: #{_lambda_.29} parent=1 // pred_check_branch
      %241 = sbr.rel (0) target = $region37
    $region36: #{_lambda_.29} parent=1 // pred_region
      _
    $region37: #{_lambda_.29} parent=1 // pred_fallthru
      _
    // Predicated region
    $region38: #{_lambda_.29} parent=1 // pred_check
      _
    $region39: #{_lambda_.29} parent=1 // pred_check_branch
      %243 = sbr.rel (0) target = $region41
    $region40: #{_lambda_.29} parent=1 // pred_region
      _
    $region41: #{_lambda_.29} parent=1 // pred_fallthru
      _
    %244 = vsyncpa [#allocation4], 1

// kernel: _lambda_.31
$region0: #{_lambda_.31}
  #allocation0 [shape = 'u32[]', space=smem, size = 0x4, offset = 0x4, fixed_abs, tag = 'smem constant byte address 0x4 - core index']
  #allocation1 [shape = 'u32[72,128]{1,0:T(1,128)}', space=vmem, size = 0x9000, scoped, tag = 'internal scratch']
  #allocation2 [shape = 'f32[16,32]{1,0:T(8,128)}', space=vmem, size = 0x2000, scoped, tag = 'scratch operand']
  %s0 = inlined_call_operand.vmem [shape: f32[16,32], index: 0, kind: input, shape index: {}]
  %s1 = inlined_call_operand.vmem [shape: f32[1,32], index: 1, kind: input, shape index: {}]
  %s2 = inlined_call_operand.vmem [shape: f32[1,32], index: 2, kind: input, shape index: {}]
  %s3 = inlined_call_operand.vmem [shape: f32[32,32], index: 3, kind: input, shape index: {}]
  %s4 = inlined_call_operand.vmem [shape: f32[1,32], index: 4, kind: input, shape index: {}]
  %s5 = inlined_call_operand.vmem [shape: f32[16,32], index: 5, kind: output, shape index: {}]
  %s6 = sld [smem:[#allocation0]]
  $region38: #{_lambda_.31} parent=0
    _
  %s8 = ssub.s32 1, %s6
  %s9 = scalar_select 0, %s8, %s6
  // Predicated region
  $region2: #{_lambda_.31} parent=0 // pred_check
    _
  $region3: #{_lambda_.31} parent=0 // pred_check_branch
    %11 = sbr.rel (0) target = $region5
  $region4: #{_lambda_.31} parent=0 // pred_region
    _
  $region5: #{_lambda_.31} parent=0 // pred_fallthru
    _
  // Predicated region
  $region6: #{_lambda_.31} parent=0 // pred_check
    _
  $region7: #{_lambda_.31} parent=0 // pred_check_branch
    %13 = sbr.rel (0) target = $region9
  $region8: #{_lambda_.31} parent=0 // pred_region
    _
  $region9: #{_lambda_.31} parent=0 // pred_fallthru
    _
  // Predicated region
  $region10: #{_lambda_.31} parent=0 // pred_check
    _
  $region11: #{_lambda_.31} parent=0 // pred_check_branch
    %15 = sbr.rel (0) target = $region13
  $region12: #{_lambda_.31} parent=0 // pred_region
    _
  $region13: #{_lambda_.31} parent=0 // pred_fallthru
    _
  // Predicated region
  $region14: #{_lambda_.31} parent=0 // pred_check
    _
  $region15: #{_lambda_.31} parent=0 // pred_check_branch
    %17 = sbr.rel (0) target = $region17
  $region16: #{_lambda_.31} parent=0 // pred_region
    _
  $region17: #{_lambda_.31} parent=0 // pred_fallthru
    _
  // Predicated region
  $region18: #{_lambda_.31} parent=0 // pred_check
    _
  $region19: #{_lambda_.31} parent=0 // pred_check_branch
    %19 = sbr.rel (0) target = $region21
  $region20: #{_lambda_.31} parent=0 // pred_region
    _
  $region21: #{_lambda_.31} parent=0 // pred_fallthru
    _
  %p20 = scmp.eq.s32.totalorder 0, 0
  // Predicated region
  $region22: #{_lambda_.31} parent=0 // pred_check
    %p21 = pneg %p20
  $region23: #{_lambda_.31} parent=0 // pred_check_branch
    %23 = sbr.rel (%p21) target = $region25
  $region24: #{_lambda_.31} parent=0 // pred_region
    %vm24 = vcmask 261120
    %25 = vst.msk [vmem:[#allocation2] sm:$0xff] %vm24, 0.0
    %26 = vst.msk [vmem:[#allocation2 + $0x8] sm:$0xff] %vm24, 0.0
  $region25: #{_lambda_.31} parent=0 // pred_fallthru
    _
  %v27 = vld [vmem:[%s0] sm:$0xff]
  %v28 = vld [vmem:[%s0 + $0x8] sm:$0xff]
  %vm29 = vcmask 261120
  %v30 = vsel %vm29, %v27, 0.0
  %31 = vadd.xlane.f32.xlu0 %v30
  %v32 = vpop.xlane.xlu0 %31
  %v33 = vsel %vm29, %v28, 0.0
  %34 = vadd.xlane.f32.xlu0 %v33
  %v35 = vpop.xlane.xlu0 %34
  %v36 = vrcp.pop 32.0
  %v37 = vmul.f32 32.0, %v36
  %v38 = vsub.f32 1.0, %v37
  %v39 = vmul.f32 %v36, %v38
  %v40 = vadd.f32 %v36, %v39
  %vm41 = vweird.f32 %v36
  %v42 = vsel %vm41, %v36, %v40
  %v43 = vmul.f32 %v32, %v42
  %v44 = vmul.f32 %v35, %v42
  %v45 = vsub.f32 %v27, %v43
  %v46 = vsub.f32 %v28, %v44
  %v47 = vmul.f32 %v45, %v45
  %v48 = vmul.f32 %v46, %v46
  %v49 = vsel %vm29, %v47, 0.0
  %50 = vadd.xlane.f32.xlu0 %v49
  %v51 = vpop.xlane.xlu0 %50
  %v52 = vsel %vm29, %v48, 0.0
  %53 = vadd.xlane.f32.xlu0 %v52
  %v54 = vpop.xlane.xlu0 %53
  %v55 = vmul.f32 %v51, %v42
  %v56 = vmul.f32 %v54, %v42
  %v57 = vadd.f32 %v55, 1e-05
  %v58 = vadd.f32 %v56, 1e-05
  %v59 = vrsqrt.pop %v57
  %v60 = vmul.f32 %v59, %v57
  %v61 = vmul.f32 %v60, %v59
  %v62 = vmul.f32 0.5, %v61
  %v63 = vsub.f32 1.5, %v62
  %v64 = vmul.f32 %v59, %v63
  %vm65 = vweird.f32 %v57
  %vm66 = vweird.f32 %v59
  %vm67 = vmor %vm65, %vm66
  %v68 = vsel %vm67, %v59, %v64
  %v69 = vrsqrt.pop %v58
  %v70 = vmul.f32 %v69, %v58
  %v71 = vmul.f32 %v70, %v69
  %v72 = vmul.f32 0.5, %v71
  %v73 = vsub.f32 1.5, %v72
  %v74 = vmul.f32 %v69, %v73
  %vm75 = vweird.f32 %v58
  %vm76 = vweird.f32 %v69
  %vm77 = vmor %vm75, %vm76
  %v78 = vsel %vm77, %v69, %v74
  %v79 = vmul.f32 %v45, %v68
  %v80 = vmul.f32 %v46, %v78
  %v81 = vld [vmem:[%s1] sm:$0x1]
  %v83 = vperm.slane %v81, 0
  %v85 = vmul.f32 %v79, %v83
  %v86 = vmul.f32 %v80, %v83
  %v87 = vld [vmem:[%s2] sm:$0x1]
  %v89 = vperm.slane %v87, 0
  %v91 = vadd.f32 %v85, %v89
  %v92 = vadd.f32 %v86, %v89
  %v93 = vld [vmem:[#allocation2] sm:$0xff]
  %v94 = vld [vmem:[#allocation2 + $0x8] sm:$0xff]
  %v95 = vld [vmem:[%s3] sm:$0xff]
  %v96 = vld [vmem:[%s3 + $0x8] sm:$0xff]
  %v97 = vld [vmem:[%s3 + $0x10] sm:$0xff]
  %v98 = vld [vmem:[%s3 + $0x18] sm:$0xff]
  %v100 = vsel %vm29, %v91, 0
  %v103 = vsel %vm29, %v92, 0
  %105 = vmatpush.msra.mxu0 0.0
  %106 = vmatpush.msra.mxu0 0.0
  %107 = vmatpush.msra.mxu0 0.0
  %108 = vmatpush.msra.mxu0 0.0
  %109 = vmatpush.msra.mxu0 0.0
  %110 = vmatpush.msra.mxu0 0.0
  %111 = vmatpush.msra.mxu0 0.0
  %112 = vmatpush.msra.mxu0 0.0
  %113 = vmatpush.msra.mxu0 0.0
  %114 = vmatpush.msra.mxu0 0.0
  %115 = vmatpush.msra.mxu0 0.0
  %116 = vmatpush.msra.mxu0 0.0
  %117 = vmatpush.msra.mxu0 %v98
  %118 = vmatpush.msra.mxu0 %v97
  %119 = vmatpush.msra.mxu0 %v96
  %120 = vmatpush.msra.mxu0 %v95
  %121 = vmatmul.f32.gmra.mxu0 %v100
  %v122 = vpop.f32.mrf.mxu0
  %v123 = vadd.f32 0.0, %v122
  %124 = vmatmul.f32.gmra.mxu0 %v103
  %v125 = vpop.f32.mrf.mxu0
  %v126 = vadd.f32 0.0, %v125
  %127 = vdwg.mxu0
  %v128 = vadd.f32 %v93, %v123
  %v129 = vadd.f32 %v94, %v126
  %130 = vst.msk [vmem:[#allocation2] sm:$0xff] %vm29, %v128
  %131 = vst.msk [vmem:[#allocation2 + $0x8] sm:$0xff] %vm29, %v129
  // Predicated region
  $region26: #{_lambda_.31} parent=0 // pred_check
    %p132 = pneg %p20
  $region27: #{_lambda_.31} parent=0 // pred_check_branch
    %134 = sbr.rel (%p132) target = $region29
  $region28: #{_lambda_.31} parent=0 // pred_region
    %v135 = vld [vmem:[#allocation2] sm:$0xff]
    %v136 = vld [vmem:[#allocation2 + $0x8] sm:$0xff]
    %v137 = vld [vmem:[%s4] sm:$0x1]
    %v139 = vperm.slane %v137, 0
    %v141 = vadd.f32 %v135, %v139
    %v142 = vadd.f32 %v136, %v139
    %143 = vst.msk [vmem:[%s5] sm:$0xff] %vm29, %v141
    %144 = vst.msk [vmem:[%s5 + $0x8] sm:$0xff] %vm29, %v142
  $region29: #{_lambda_.31} parent=0 // pred_fallthru
    _
  // Predicated region
  $region30: #{_lambda_.31} parent=0 // pred_check
    _
  $region31: #{_lambda_.31} parent=0 // pred_check_branch
    %146 = sbr.rel (0) target = $region33
  $region32: #{_lambda_.31} parent=0 // pred_region
    _
  $region33: #{_lambda_.31} parent=0 // pred_fallthru
    _
  // Predicated region
  $region34: #{_lambda_.31} parent=0 // pred_check
    _
  $region35: #{_lambda_.31} parent=0 // pred_check_branch
    %148 = sbr.rel (0) target = $region37
  $region36: #{_lambda_.31} parent=0 // pred_region
    _
  $region37: #{_lambda_.31} parent=0 // pred_fallthru
    _

// kernel: _lambda_.32
$region0: #{_lambda_.32}
  #allocation0 [shape = 'u32[]', space=smem, size = 0x4, offset = 0x4, fixed_abs, tag = 'smem constant byte address 0x4 - core index']
  #allocation1 [shape = 'u32[72,128]{1,0:T(1,128)}', space=vmem, size = 0x9000, scoped, tag = 'internal scratch']
  #allocation2 [shape = 'f32[32,64]{1,0:T(8,128)}', space=vmem, size = 0x4000, scoped, tag = 'scratch operand']
  %s0 = inlined_call_operand.hbm [shape: f32[32,32], index: 0, kind: input, shape index: {}]
  %s1 = inlined_call_operand.vmem [shape: f32[1,32], index: 1, kind: input, shape index: {}]
  %s2 = inlined_call_operand.vmem [shape: f32[1,32], index: 2, kind: input, shape index: {}]
  %s3 = inlined_call_operand.vmem [shape: f32[32,64], index: 3, kind: input, shape index: {}]
  %s4 = inlined_call_operand.hbm [shape: f32[1,64], index: 4, kind: input, shape index: {}]
  %s5 = inlined_call_operand.vmem [shape: f32[32,64], index: 5, kind: output, shape index: {}]
  %s6 = sld [smem:[#allocation0]]
  $region46: #{_lambda_.32} parent=0
    _
  %s8 = ssub.s32 1, %s6
  %s9 = scalar_select 0, %s8, %s6
  $region1: #{_lambda_.32} parent=0
    #allocation3 [shape = 'u8[16384]{0}', space=vmem, size = 0x4000, scoped, tag = 'input window, operand 0, single buffered']
    #allocation4 [shape = 's32[1]{0}', space=sflag, size = 0x4, scoped, tag = 'scoped memory for _lambda_.32']
    #allocation5 [shape = 'u8[512]{0}', space=vmem, size = 0x400, scoped, tag = 'input window, operand 4, single buffered']
    #allocation6 [shape = 's32[1]{0}', space=sflag, size = 0x4, scoped, tag = 'scoped memory for _lambda_.32']
    %10 = vsyncpa [#allocation4], 0
    %11 = vsyncpa [#allocation6], 0
    // Predicated region
    $region2: #{_lambda_.32} parent=1 // pred_check
      _
    $region3: #{_lambda_.32} parent=1 // pred_check_branch
      %13 = sbr.rel (0) target = $region5
    $region4: #{_lambda_.32} parent=1 // pred_region
      %15 = vsyncadd [#allocation4], 0
      %s16 = sshll.u32 %s0, 4
      %s17 = int_to_ptr.hbm [resolvable:$true] %s16
      %s18 = sshll.u32 [#allocation3], 4
      %s19 = int_to_ptr.vmem [resolvable:$true] %s18
      %24 = dma.hbm_to_vmem [thread:$0]  %s17, 512, %s19, [#allocation4], 128, 128, 8
    $region5: #{_lambda_.32} parent=1 // pred_fallthru
      _
    // Predicated region
    $region6: #{_lambda_.32} parent=1 // pred_check
      _
    $region7: #{_lambda_.32} parent=1 // pred_check_branch
      %26 = sbr.rel (0) target = $region9
    $region8: #{_lambda_.32} parent=1 // pred_region
      _
    $region9: #{_lambda_.32} parent=1 // pred_fallthru
      _
    // Predicated region
    $region10: #{_lambda_.32} parent=1 // pred_check
      _
    $region11: #{_lambda_.32} parent=1 // pred_check_branch
      %28 = sbr.rel (0) target = $region13
    $region12: #{_lambda_.32} parent=1 // pred_region
      _
    $region13: #{_lambda_.32} parent=1 // pred_fallthru
      _
    // Predicated region
    $region14: #{_lambda_.32} parent=1 // pred_check
      _
    $region15: #{_lambda_.32} parent=1 // pred_check_branch
      %30 = sbr.rel (0) target = $region17
    $region16: #{_lambda_.32} parent=1 // pred_region
      _
    $region17: #{_lambda_.32} parent=1 // pred_fallthru
      _
    // Predicated region
    $region18: #{_lambda_.32} parent=1 // pred_check
      _
    $region19: #{_lambda_.32} parent=1 // pred_check_branch
      %32 = sbr.rel (0) target = $region21
    $region20: #{_lambda_.32} parent=1 // pred_region
      %34 = vsyncadd [#allocation6], 0
      %s36 = sshll.u32 %s4, 4
      %s37 = int_to_ptr.hbm [resolvable:$true] %s36
      %s38 = sshll.u32 [#allocation5], 4
      %s39 = int_to_ptr.vmem [resolvable:$true] %s38
      %41 = dma.hbm_to_vmem [thread:$0]  %s37, 16, %s39, [#allocation6]
    $region21: #{_lambda_.32} parent=1 // pred_fallthru
      _
    // Predicated region
    $region22: #{_lambda_.32} parent=1 // pred_check
      _
    $region23: #{_lambda_.32} parent=1 // pred_check_branch
      %43 = sbr.rel (0) target = $region25
    $region24: #{_lambda_.32} parent=1 // pred_region
      %45 = dma.done [#allocation4], 512
    $region25: #{_lambda_.32} parent=1 // pred_fallthru
      _
    // Predicated region
    $region26: #{_lambda_.32} parent=1 // pred_check
      _
    $region27: #{_lambda_.32} parent=1 // pred_check_branch
      %47 = sbr.rel (0) target = $region29
    $region28: #{_lambda_.32} parent=1 // pred_region
      %49 = dma.done [#allocation6], 16
    $region29: #{_lambda_.32} parent=1 // pred_fallthru
      _
    %p50 = scmp.eq.s32.totalorder 0, 0
    // Predicated region
    $region30: #{_lambda_.32} parent=1 // pred_check
      %p51 = pneg %p50
    $region31: #{_lambda_.32} parent=1 // pred_check_branch
      %53 = sbr.rel (%p51) target = $region33
    $region32: #{_lambda_.32} parent=1 // pred_region
      %vm54 = vcmask 523264
      %55 = vst.msk [vmem:[#allocation2] sm:$0xff] %vm54, 0.0
      %56 = vst.msk [vmem:[#allocation2 + $0x8] sm:$0xff] %vm54, 0.0
      %57 = vst.msk [vmem:[#allocation2 + $0x10] sm:$0xff] %vm54, 0.0
      %58 = vst.msk [vmem:[#allocation2 + $0x18] sm:$0xff] %vm54, 0.0
    $region33: #{_lambda_.32} parent=1 // pred_fallthru
      _
    %v59 = vld [vmem:[#allocation3] sm:$0xff]
    %v60 = vld [vmem:[#allocation3 + $0x8] sm:$0xff]
    %v61 = vld [vmem:[#allocation3 + $0x10] sm:$0xff]
    %v62 = vld [vmem:[#allocation3 + $0x18] sm:$0xff]
    %vm63 = vcmask 261120
    %v64 = vsel %vm63, %v59, 0.0
    %65 = vadd.xlane.f32.xlu0 %v64
    %v66 = vpop.xlane.xlu0 %65
    %v67 = vsel %vm63, %v60, 0.0
    %68 = vadd.xlane.f32.xlu0 %v67
    %v69 = vpop.xlane.xlu0 %68
    %v70 = vsel %vm63, %v61, 0.0
    %71 = vadd.xlane.f32.xlu0 %v70
    %v72 = vpop.xlane.xlu0 %71
    %v73 = vsel %vm63, %v62, 0.0
    %74 = vadd.xlane.f32.xlu0 %v73
    %v75 = vpop.xlane.xlu0 %74
    %v76 = vrcp.pop 32.0
    %v77 = vmul.f32 32.0, %v76
    %v78 = vsub.f32 1.0, %v77
    %v79 = vmul.f32 %v76, %v78
    %v80 = vadd.f32 %v76, %v79
    %vm81 = vweird.f32 %v76
    %v82 = vsel %vm81, %v76, %v80
    %v83 = vmul.f32 %v66, %v82
    %v84 = vmul.f32 %v69, %v82
    %v85 = vmul.f32 %v72, %v82
    %v86 = vmul.f32 %v75, %v82
    %v87 = vsub.f32 %v59, %v83
    %v88 = vsub.f32 %v60, %v84
    %v89 = vsub.f32 %v61, %v85
    %v90 = vsub.f32 %v62, %v86
    %v91 = vmul.f32 %v87, %v87
    %v92 = vmul.f32 %v88, %v88
    %v93 = vmul.f32 %v89, %v89
    %v94 = vmul.f32 %v90, %v90
    %v95 = vsel %vm63, %v91, 0.0
    %96 = vadd.xlane.f32.xlu0 %v95
    %v97 = vpop.xlane.xlu0 %96
    %v98 = vsel %vm63, %v92, 0.0
    %99 = vadd.xlane.f32.xlu0 %v98
    %v100 = vpop.xlane.xlu0 %99
    %v101 = vsel %vm63, %v93, 0.0
    %102 = vadd.xlane.f32.xlu0 %v101
    %v103 = vpop.xlane.xlu0 %102
    %v104 = vsel %vm63, %v94, 0.0
    %105 = vadd.xlane.f32.xlu0 %v104
    %v106 = vpop.xlane.xlu0 %105
    %v107 = vmul.f32 %v97, %v82
    %v108 = vmul.f32 %v100, %v82
    %v109 = vmul.f32 %v103, %v82
    %v110 = vmul.f32 %v106, %v82
    %v111 = vadd.f32 %v107, 1e-05
    %v112 = vadd.f32 %v108, 1e-05
    %v113 = vadd.f32 %v109, 1e-05
    %v114 = vadd.f32 %v110, 1e-05
    %v115 = vrsqrt.pop %v111
    %v116 = vmul.f32 %v115, %v111
    %v117 = vmul.f32 %v116, %v115
    %v118 = vmul.f32 0.5, %v117
    %v119 = vsub.f32 1.5, %v118
    %v120 = vmul.f32 %v115, %v119
    %vm121 = vweird.f32 %v111
    %vm122 = vweird.f32 %v115
    %vm123 = vmor %vm121, %vm122
    %v124 = vsel %vm123, %v115, %v120
    %v125 = vrsqrt.pop %v112
    %v126 = vmul.f32 %v125, %v112
    %v127 = vmul.f32 %v126, %v125
    %v128 = vmul.f32 0.5, %v127
    %v129 = vsub.f32 1.5, %v128
    %v130 = vmul.f32 %v125, %v129
    %vm131 = vweird.f32 %v112
    %vm132 = vweird.f32 %v125
    %vm133 = vmor %vm131, %vm132
    %v134 = vsel %vm133, %v125, %v130
    %v135 = vrsqrt.pop %v113
    %v136 = vmul.f32 %v135, %v113
    %v137 = vmul.f32 %v136, %v135
    %v138 = vmul.f32 0.5, %v137
    %v139 = vsub.f32 1.5, %v138
    %v140 = vmul.f32 %v135, %v139
    %vm141 = vweird.f32 %v113
    %vm142 = vweird.f32 %v135
    %vm143 = vmor %vm141, %vm142
    %v144 = vsel %vm143, %v135, %v140
    %v145 = vrsqrt.pop %v114
    %v146 = vmul.f32 %v145, %v114
    %v147 = vmul.f32 %v146, %v145
    %v148 = vmul.f32 0.5, %v147
    %v149 = vsub.f32 1.5, %v148
    %v150 = vmul.f32 %v145, %v149
    %vm151 = vweird.f32 %v114
    %vm152 = vweird.f32 %v145
    %vm153 = vmor %vm151, %vm152
    %v154 = vsel %vm153, %v145, %v150
    %v155 = vmul.f32 %v87, %v124
    %v156 = vmul.f32 %v88, %v134
    %v157 = vmul.f32 %v89, %v144
    %v158 = vmul.f32 %v90, %v154
    %v159 = vld [vmem:[%s1] sm:$0x1]
    %v161 = vperm.slane %v159, 0
    %v163 = vmul.f32 %v155, %v161
    %v164 = vmul.f32 %v156, %v161
    %v165 = vmul.f32 %v157, %v161
    %v166 = vmul.f32 %v158, %v161
    %v167 = vld [vmem:[%s2] sm:$0x1]
    %v169 = vperm.slane %v167, 0
    %v171 = vadd.f32 %v163, %v169
    %v172 = vadd.f32 %v164, %v169
    %v173 = vadd.f32 %v165, %v169
    %v174 = vadd.f32 %v166, %v169
    %v175 = vld [vmem:[#allocation2] sm:$0xff]
    %v176 = vld [vmem:[#allocation2 + $0x8] sm:$0xff]
    %v177 = vld [vmem:[#allocation2 + $0x10] sm:$0xff]
    %v178 = vld [vmem:[#allocation2 + $0x18] sm:$0xff]
    %v179 = vld [vmem:[%s3] sm:$0xff]
    %v180 = vld [vmem:[%s3 + $0x8] sm:$0xff]
    %v181 = vld [vmem:[%s3 + $0x10] sm:$0xff]
    %v182 = vld [vmem:[%s3 + $0x18] sm:$0xff]
    %v184 = vsel %vm63, %v171, 0
    %v187 = vsel %vm63, %v172, 0
    %v190 = vsel %vm63, %v173, 0
    %v193 = vsel %vm63, %v174, 0
    %195 = vmatpush.msra.mxu0 0.0
    %196 = vmatpush.msra.mxu0 0.0
    %197 = vmatpush.msra.mxu0 0.0
    %198 = vmatpush.msra.mxu0 0.0
    %199 = vmatpush.msra.mxu0 0.0
    %200 = vmatpush.msra.mxu0 0.0
    %201 = vmatpush.msra.mxu0 0.0
    %202 = vmatpush.msra.mxu0 0.0
    %203 = vmatpush.msra.mxu0 0.0
    %204 = vmatpush.msra.mxu0 0.0
    %205 = vmatpush.msra.mxu0 0.0
    %206 = vmatpush.msra.mxu0 0.0
    %207 = vmatpush.msra.mxu0 %v182
    %208 = vmatpush.msra.mxu0 %v181
    %209 = vmatpush.msra.mxu0 %v180
    %210 = vmatpush.msra.mxu0 %v179
    %211 = vmatmul.f32.gmra.mxu0 %v184
    %v212 = vpop.f32.mrf.mxu0
    %v213 = vadd.f32 0.0, %v212
    %214 = vmatmul.f32.gmra.mxu0 %v187
    %v215 = vpop.f32.mrf.mxu0
    %v216 = vadd.f32 0.0, %v215
    %217 = vmatmul.f32.gmra.mxu0 %v190
    %v218 = vpop.f32.mrf.mxu0
    %v219 = vadd.f32 0.0, %v218
    %220 = vmatmul.f32.gmra.mxu0 %v193
    %v221 = vpop.f32.mrf.mxu0
    %v222 = vadd.f32 0.0, %v221
    %223 = vdwg.mxu0
    %v224 = vadd.f32 %v175, %v213
    %v225 = vadd.f32 %v176, %v216
    %v226 = vadd.f32 %v177, %v219
    %v227 = vadd.f32 %v178, %v222
    %vm228 = vcmask 523264
    %229 = vst.msk [vmem:[#allocation2] sm:$0xff] %vm228, %v224
    %230 = vst.msk [vmem:[#allocation2 + $0x8] sm:$0xff] %vm228, %v225
    %231 = vst.msk [vmem:[#allocation2 + $0x10] sm:$0xff] %vm228, %v226
    %232 = vst.msk [vmem:[#allocation2 + $0x18] sm:$0xff] %vm228, %v227
    // Predicated region
    $region34: #{_lambda_.32} parent=1 // pred_check
      %p233 = pneg %p50
    $region35: #{_lambda_.32} parent=1 // pred_check_branch
      %235 = sbr.rel (%p233) target = $region37
    $region36: #{_lambda_.32} parent=1 // pred_region
      %v236 = vld [vmem:[#allocation2] sm:$0xff]
      %v237 = vld [vmem:[#allocation2 + $0x8] sm:$0xff]
      %v238 = vld [vmem:[#allocation2 + $0x10] sm:$0xff]
      %v239 = vld [vmem:[#allocation2 + $0x18] sm:$0xff]
      %v240 = vld [vmem:[#allocation5] sm:$0x1]
      %v242 = vperm.slane %v240, 0
      %v244 = vadd.f32 %v236, %v242
      %v245 = vadd.f32 %v237, %v242
      %v246 = vadd.f32 %v238, %v242
      %v247 = vadd.f32 %v239, %v242
      %248 = vst.msk [vmem:[%s5] sm:$0xff] %vm228, %v244
      %249 = vst.msk [vmem:[%s5 + $0x8] sm:$0xff] %vm228, %v245
      %250 = vst.msk [vmem:[%s5 + $0x10] sm:$0xff] %vm228, %v246
      %251 = vst.msk [vmem:[%s5 + $0x18] sm:$0xff] %vm228, %v247
    $region37: #{_lambda_.32} parent=1 // pred_fallthru
      _
    // Predicated region
    $region38: #{_lambda_.32} parent=1 // pred_check
      _
    $region39: #{_lambda_.32} parent=1 // pred_check_branch
      %253 = sbr.rel (0) target = $region41
    $region40: #{_lambda_.32} parent=1 // pred_region
      _
    $region41: #{_lambda_.32} parent=1 // pred_fallthru
      _
    // Predicated region
    $region42: #{_lambda_.32} parent=1 // pred_check
      _
    $region43: #{_lambda_.32} parent=1 // pred_check_branch
      %255 = sbr.rel (0) target = $region45
    $region44: #{_lambda_.32} parent=1 // pred_region
      _
    $region45: #{_lambda_.32} parent=1 // pred_fallthru
      _
    %256 = vsyncpa [#allocation4], 1
    %257 = vsyncpa [#allocation6], 1

// kernel: _lambda_.34
$region0: #{_lambda_.34}
  #allocation0 [shape = 'u32[]', space=smem, size = 0x4, offset = 0x4, fixed_abs, tag = 'smem constant byte address 0x4 - core index']
  #allocation1 [shape = 'u32[72,128]{1,0:T(1,128)}', space=vmem, size = 0x9000, scoped, tag = 'internal scratch']
  #allocation2 [shape = 'f32[16,32]{1,0:T(8,128)}', space=vmem, size = 0x2000, scoped, tag = 'scratch operand']
  %s0 = inlined_call_operand.vmem [shape: f32[16,32], index: 0, kind: input, shape index: {}]
  %s1 = inlined_call_operand.vmem [shape: f32[32,32], index: 1, kind: input, shape index: {}]
  %s2 = inlined_call_operand.hbm [shape: f32[1,32], index: 2, kind: input, shape index: {}]
  %s3 = inlined_call_operand.vmem [shape: f32[16,32], index: 3, kind: input, shape index: {}]
  %s4 = inlined_call_operand.vmem [shape: f32[16,32], index: 4, kind: output, shape index: {}]
  %s5 = sld [smem:[#allocation0]]
  $region38: #{_lambda_.34} parent=0
    _
  %s7 = ssub.s32 1, %s5
  %s8 = scalar_select 0, %s7, %s5
  $region1: #{_lambda_.34} parent=0
    #allocation3 [shape = 'u8[512]{0}', space=vmem, size = 0x400, scoped, tag = 'input window, operand 2, single buffered']
    #allocation4 [shape = 's32[1]{0}', space=sflag, size = 0x4, scoped, tag = 'scoped memory for _lambda_.34']
    %9 = vsyncpa [#allocation4], 0
    // Predicated region
    $region2: #{_lambda_.34} parent=1 // pred_check
      _
    $region3: #{_lambda_.34} parent=1 // pred_check_branch
      %11 = sbr.rel (0) target = $region5
    $region4: #{_lambda_.34} parent=1 // pred_region
      _
    $region5: #{_lambda_.34} parent=1 // pred_fallthru
      _
    // Predicated region
    $region6: #{_lambda_.34} parent=1 // pred_check
      _
    $region7: #{_lambda_.34} parent=1 // pred_check_branch
      %13 = sbr.rel (0) target = $region9
    $region8: #{_lambda_.34} parent=1 // pred_region
      _
    $region9: #{_lambda_.34} parent=1 // pred_fallthru
      _
    // Predicated region
    $region10: #{_lambda_.34} parent=1 // pred_check
      _
    $region11: #{_lambda_.34} parent=1 // pred_check_branch
      %15 = sbr.rel (0) target = $region13
    $region12: #{_lambda_.34} parent=1 // pred_region
      %17 = vsyncadd [#allocation4], 0
      %s19 = sshll.u32 %s2, 4
      %s20 = int_to_ptr.hbm [resolvable:$true] %s19
      %s21 = sshll.u32 [#allocation3], 4
      %s22 = int_to_ptr.vmem [resolvable:$true] %s21
      %24 = dma.hbm_to_vmem [thread:$0]  %s20, 16, %s22, [#allocation4]
    $region13: #{_lambda_.34} parent=1 // pred_fallthru
      _
    // Predicated region
    $region14: #{_lambda_.34} parent=1 // pred_check
      _
    $region15: #{_lambda_.34} parent=1 // pred_check_branch
      %26 = sbr.rel (0) target = $region17
    $region16: #{_lambda_.34} parent=1 // pred_region
      _
    $region17: #{_lambda_.34} parent=1 // pred_fallthru
      _
    // Predicated region
    $region18: #{_lambda_.34} parent=1 // pred_check
      _
    $region19: #{_lambda_.34} parent=1 // pred_check_branch
      %28 = sbr.rel (0) target = $region21
    $region20: #{_lambda_.34} parent=1 // pred_region
      %30 = dma.done [#allocation4], 16
    $region21: #{_lambda_.34} parent=1 // pred_fallthru
      _
    %p31 = scmp.eq.s32.totalorder 0, 0
    // Predicated region
    $region22: #{_lambda_.34} parent=1 // pred_check
      %p32 = pneg %p31
    $region23: #{_lambda_.34} parent=1 // pred_check_branch
      %34 = sbr.rel (%p32) target = $region25
    $region24: #{_lambda_.34} parent=1 // pred_region
      %vm35 = vcmask 261120
      %36 = vst.msk [vmem:[#allocation2] sm:$0xff] %vm35, 0.0
      %37 = vst.msk [vmem:[#allocation2 + $0x8] sm:$0xff] %vm35, 0.0
    $region25: #{_lambda_.34} parent=1 // pred_fallthru
      _
    %v38 = vld [vmem:[%s0] sm:$0xff]
    %v39 = vld [vmem:[%s0 + $0x8] sm:$0xff]
    %v40 = vld [vmem:[#allocation2] sm:$0xff]
    %v41 = vld [vmem:[#allocation2 + $0x8] sm:$0xff]
    %v42 = vld [vmem:[%s1] sm:$0xff]
    %v43 = vld [vmem:[%s1 + $0x8] sm:$0xff]
    %v44 = vld [vmem:[%s1 + $0x10] sm:$0xff]
    %v45 = vld [vmem:[%s1 + $0x18] sm:$0xff]
    %vm46 = vcmask 261120
    %v48 = vsel %vm46, %v38, 0
    %v51 = vsel %vm46, %v39, 0
    %53 = vmatpush.msra.mxu0 0.0
    %54 = vmatpush.msra.mxu0 0.0
    %55 = vmatpush.msra.mxu0 0.0
    %56 = vmatpush.msra.mxu0 0.0
    %57 = vmatpush.msra.mxu0 0.0
    %58 = vmatpush.msra.mxu0 0.0
    %59 = vmatpush.msra.mxu0 0.0
    %60 = vmatpush.msra.mxu0 0.0
    %61 = vmatpush.msra.mxu0 0.0
    %62 = vmatpush.msra.mxu0 0.0
    %63 = vmatpush.msra.mxu0 0.0
    %64 = vmatpush.msra.mxu0 0.0
    %65 = vmatpush.msra.mxu0 %v45
    %66 = vmatpush.msra.mxu0 %v44
    %67 = vmatpush.msra.mxu0 %v43
    %68 = vmatpush.msra.mxu0 %v42
    %69 = vmatmul.f32.gmra.mxu0 %v48
    %v70 = vpop.f32.mrf.mxu0
    %v71 = vadd.f32 0.0, %v70
    %72 = vmatmul.f32.gmra.mxu0 %v51
    %v73 = vpop.f32.mrf.mxu0
    %v74 = vadd.f32 0.0, %v73
    %75 = vdwg.mxu0
    %v76 = vadd.f32 %v40, %v71
    %v77 = vadd.f32 %v41, %v74
    %78 = vst.msk [vmem:[#allocation2] sm:$0xff] %vm46, %v76
    %79 = vst.msk [vmem:[#allocation2 + $0x8] sm:$0xff] %vm46, %v77
    // Predicated region
    $region26: #{_lambda_.34} parent=1 // pred_check
      %p80 = pneg %p31
    $region27: #{_lambda_.34} parent=1 // pred_check_branch
      %82 = sbr.rel (%p80) target = $region29
    $region28: #{_lambda_.34} parent=1 // pred_region
      %v83 = vld [vmem:[#allocation2] sm:$0xff]
      %v84 = vld [vmem:[#allocation2 + $0x8] sm:$0xff]
      %v85 = vld [vmem:[#allocation3] sm:$0x1]
      %v87 = vperm.slane %v85, 0
      %v89 = vadd.f32 %v83, %v87
      %v90 = vadd.f32 %v84, %v87
      %v91 = vld [vmem:[%s3] sm:$0xff]
      %v92 = vld [vmem:[%s3 + $0x8] sm:$0xff]
      %v93 = vadd.f32 %v89, %v91
      %v94 = vadd.f32 %v90, %v92
      %95 = vst.msk [vmem:[%s4] sm:$0xff] %vm46, %v93
      %96 = vst.msk [vmem:[%s4 + $0x8] sm:$0xff] %vm46, %v94
    $region29: #{_lambda_.34} parent=1 // pred_fallthru
      _
    // Predicated region
    $region30: #{_lambda_.34} parent=1 // pred_check
      _
    $region31: #{_lambda_.34} parent=1 // pred_check_branch
      %98 = sbr.rel (0) target = $region33
    $region32: #{_lambda_.34} parent=1 // pred_region
      _
    $region33: #{_lambda_.34} parent=1 // pred_fallthru
      _
    // Predicated region
    $region34: #{_lambda_.34} parent=1 // pred_check
      _
    $region35: #{_lambda_.34} parent=1 // pred_check_branch
      %100 = sbr.rel (0) target = $region37
    $region36: #{_lambda_.34} parent=1 // pred_region
      _
    $region37: #{_lambda_.34} parent=1 // pred_fallthru
      _
    %101 = vsyncpa [#allocation4], 1

// kernel: _lambda_.35
$region0: #{_lambda_.35}
  #allocation0 [shape = 'u32[]', space=smem, size = 0x4, offset = 0x4, fixed_abs, tag = 'smem constant byte address 0x4 - core index']
  #allocation1 [shape = 'u32[72,128]{1,0:T(1,128)}', space=vmem, size = 0x9000, scoped, tag = 'internal scratch']
  #allocation2 [shape = 'f32[16,128]{1,0:T(8,128)}', space=vmem, size = 0x2000, scoped, tag = 'scratch operand']
  %s0 = inlined_call_operand.vmem [shape: f32[16,32], index: 0, kind: input, shape index: {}]
  %s1 = inlined_call_operand.hbm [shape: f32[1,32], index: 1, kind: input, shape index: {}]
  %s2 = inlined_call_operand.hbm [shape: f32[1,32], index: 2, kind: input, shape index: {}]
  %s3 = inlined_call_operand.vmem [shape: f32[32,128], index: 3, kind: input, shape index: {}]
  %s4 = inlined_call_operand.hbm [shape: f32[1,128], index: 4, kind: input, shape index: {}]
  %s5 = inlined_call_operand.vmem [shape: f32[16,128], index: 5, kind: output, shape index: {}]
  %s6 = sld [smem:[#allocation0]]
  $region50: #{_lambda_.35} parent=0
    _
  %s8 = ssub.s32 1, %s6
  %s9 = scalar_select 0, %s8, %s6
  $region1: #{_lambda_.35} parent=0
    #allocation3 [shape = 'u8[512]{0}', space=vmem, size = 0x400, scoped, tag = 'input window, operand 1, single buffered']
    #allocation4 [shape = 's32[1]{0}', space=sflag, size = 0x4, scoped, tag = 'scoped memory for _lambda_.35']
    #allocation5 [shape = 'u8[512]{0}', space=vmem, size = 0x400, scoped, tag = 'input window, operand 2, single buffered']
    #allocation6 [shape = 's32[1]{0}', space=sflag, size = 0x4, scoped, tag = 'scoped memory for _lambda_.35']
    #allocation7 [shape = 'u8[512]{0}', space=vmem, size = 0x400, scoped, tag = 'input window, operand 4, single buffered']
    %10 = vsyncpa [#allocation4], 0
    %11 = vsyncpa [#allocation6], 0
    // Predicated region
    $region2: #{_lambda_.35} parent=1 // pred_check
      _
    $region3: #{_lambda_.35} parent=1 // pred_check_branch
      %13 = sbr.rel (0) target = $region5
    $region4: #{_lambda_.35} parent=1 // pred_region
      _
    $region5: #{_lambda_.35} parent=1 // pred_fallthru
      _
    // Predicated region
    $region6: #{_lambda_.35} parent=1 // pred_check
      _
    $region7: #{_lambda_.35} parent=1 // pred_check_branch
      %15 = sbr.rel (0) target = $region9
    $region8: #{_lambda_.35} parent=1 // pred_region
      %17 = vsyncadd [#allocation4], 0
      %s19 = sshll.u32 %s1, 4
      %s20 = int_to_ptr.hbm [resolvable:$true] %s19
      %s21 = sshll.u32 [#allocation3], 4
      %s22 = int_to_ptr.vmem [resolvable:$true] %s21
      %24 = dma.hbm_to_vmem [thread:$0]  %s20, 16, %s22, [#allocation4]
    $region9: #{_lambda_.35} parent=1 // pred_fallthru
      _
    // Predicated region
    $region10: #{_lambda_.35} parent=1 // pred_check
      _
    $region11: #{_lambda_.35} parent=1 // pred_check_branch
      %26 = sbr.rel (0) target = $region13
    $region12: #{_lambda_.35} parent=1 // pred_region
      %28 = vsyncadd [#allocation6], 0
      %s30 = sshll.u32 %s2, 4
      %s31 = int_to_ptr.hbm [resolvable:$true] %s30
      %s32 = sshll.u32 [#allocation5], 4
      %s33 = int_to_ptr.vmem [resolvable:$true] %s32
      %35 = dma.hbm_to_vmem [thread:$0]  %s31, 16, %s33, [#allocation6]
    $region13: #{_lambda_.35} parent=1 // pred_fallthru
      _
    // Predicated region
    $region14: #{_lambda_.35} parent=1 // pred_check
      _
    $region15: #{_lambda_.35} parent=1 // pred_check_branch
      %37 = sbr.rel (0) target = $region17
    $region16: #{_lambda_.35} parent=1 // pred_region
      _
    $region17: #{_lambda_.35} parent=1 // pred_fallthru
      _
    // Predicated region
    $region18: #{_lambda_.35} parent=1 // pred_check
      _
    $region19: #{_lambda_.35} parent=1 // pred_check_branch
      %39 = sbr.rel (0) target = $region21
    $region20: #{_lambda_.35} parent=1 // pred_region
      %41 = vsyncadd [#allocation6], 0
      %s43 = sshll.u32 %s4, 4
      %s44 = int_to_ptr.hbm [resolvable:$true] %s43
      %s45 = sshll.u32 [#allocation7], 4
      %s46 = int_to_ptr.vmem [resolvable:$true] %s45
      %48 = dma.hbm_to_vmem [thread:$0]  %s44, 16, %s46, [#allocation6]
    $region21: #{_lambda_.35} parent=1 // pred_fallthru
      _
    // Predicated region
    $region22: #{_lambda_.35} parent=1 // pred_check
      _
    $region23: #{_lambda_.35} parent=1 // pred_check_branch
      %50 = sbr.rel (0) target = $region25
    $region24: #{_lambda_.35} parent=1 // pred_region
      %52 = dma.done [#allocation4], 16
    $region25: #{_lambda_.35} parent=1 // pred_fallthru
      _
    // Predicated region
    $region26: #{_lambda_.35} parent=1 // pred_check
      _
    $region27: #{_lambda_.35} parent=1 // pred_check_branch
      %54 = sbr.rel (0) target = $region29
    $region28: #{_lambda_.35} parent=1 // pred_region
      %56 = dma.done [#allocation6], 16
    $region29: #{_lambda_.35} parent=1 // pred_fallthru
      _
    // Predicated region
    $region30: #{_lambda_.35} parent=1 // pred_check
      _
    $region31: #{_lambda_.35} parent=1 // pred_check_branch
      %58 = sbr.rel (0) target = $region33
    $region32: #{_lambda_.35} parent=1 // pred_region
      %60 = dma.done [#allocation6], 16
    $region33: #{_lambda_.35} parent=1 // pred_fallthru
      _
    %p61 = scmp.eq.s32.totalorder 0, 0
    // Predicated region
    $region34: #{_lambda_.35} parent=1 // pred_check
      %p62 = pneg %p61
    $region35: #{_lambda_.35} parent=1 // pred_check_branch
      %64 = sbr.rel (%p62) target = $region37
    $region36: #{_lambda_.35} parent=1 // pred_region
      %65 = vst [vmem:[#allocation2] sm:$0xff] 0.0
      %66 = vst [vmem:[#allocation2 + $0x8] sm:$0xff] 0.0
    $region37: #{_lambda_.35} parent=1 // pred_fallthru
      _
    %v67 = vld [vmem:[%s0] sm:$0xff]
    %v68 = vld [vmem:[%s0 + $0x8] sm:$0xff]
    %vm69 = vcmask 261120
    %v70 = vsel %vm69, %v67, 0.0
    %71 = vadd.xlane.f32.xlu0 %v70
    %v72 = vpop.xlane.xlu0 %71
    %v73 = vsel %vm69, %v68, 0.0
    %74 = vadd.xlane.f32.xlu0 %v73
    %v75 = vpop.xlane.xlu0 %74
    %v76 = vrcp.pop 32.0
    %v77 = vmul.f32 32.0, %v76
    %v78 = vsub.f32 1.0, %v77
    %v79 = vmul.f32 %v76, %v78
    %v80 = vadd.f32 %v76, %v79
    %vm81 = vweird.f32 %v76
    %v82 = vsel %vm81, %v76, %v80
    %v83 = vmul.f32 %v72, %v82
    %v84 = vmul.f32 %v75, %v82
    %v85 = vsub.f32 %v67, %v83
    %v86 = vsub.f32 %v68, %v84
    %v87 = vmul.f32 %v85, %v85
    %v88 = vmul.f32 %v86, %v86
    %v89 = vsel %vm69, %v87, 0.0
    %90 = vadd.xlane.f32.xlu0 %v89
    %v91 = vpop.xlane.xlu0 %90
    %v92 = vsel %vm69, %v88, 0.0
    %93 = vadd.xlane.f32.xlu0 %v92
    %v94 = vpop.xlane.xlu0 %93
    %v95 = vmul.f32 %v91, %v82
    %v96 = vmul.f32 %v94, %v82
    %v97 = vadd.f32 %v95, 1e-05
    %v98 = vadd.f32 %v96, 1e-05
    %v99 = vrsqrt.pop %v97
    %v100 = vmul.f32 %v99, %v97
    %v101 = vmul.f32 %v100, %v99
    %v102 = vmul.f32 0.5, %v101
    %v103 = vsub.f32 1.5, %v102
    %v104 = vmul.f32 %v99, %v103
    %vm105 = vweird.f32 %v97
    %vm106 = vweird.f32 %v99
    %vm107 = vmor %vm105, %vm106
    %v108 = vsel %vm107, %v99, %v104
    %v109 = vrsqrt.pop %v98
    %v110 = vmul.f32 %v109, %v98
    %v111 = vmul.f32 %v110, %v109
    %v112 = vmul.f32 0.5, %v111
    %v113 = vsub.f32 1.5, %v112
    %v114 = vmul.f32 %v109, %v113
    %vm115 = vweird.f32 %v98
    %vm116 = vweird.f32 %v109
    %vm117 = vmor %vm115, %vm116
    %v118 = vsel %vm117, %v109, %v114
    %v119 = vmul.f32 %v85, %v108
    %v120 = vmul.f32 %v86, %v118
    %v121 = vld [vmem:[#allocation3] sm:$0x1]
    %v123 = vperm.slane %v121, 0
    %v125 = vmul.f32 %v119, %v123
    %v126 = vmul.f32 %v120, %v123
    %v127 = vld [vmem:[#allocation5] sm:$0x1]
    %v129 = vperm.slane %v127, 0
    %v131 = vadd.f32 %v125, %v129
    %v132 = vadd.f32 %v126, %v129
    %v133 = vld [vmem:[#allocation2] sm:$0xff]
    %v134 = vld [vmem:[#allocation2 + $0x8] sm:$0xff]
    %v135 = vld [vmem:[%s3] sm:$0xff]
    %v136 = vld [vmem:[%s3 + $0x8] sm:$0xff]
    %v137 = vld [vmem:[%s3 + $0x10] sm:$0xff]
    %v138 = vld [vmem:[%s3 + $0x18] sm:$0xff]
    %v140 = vsel %vm69, %v131, 0
    %v143 = vsel %vm69, %v132, 0
    %145 = vmatpush.msra.mxu0 0.0
    %146 = vmatpush.msra.mxu0 0.0
    %147 = vmatpush.msra.mxu0 0.0
    %148 = vmatpush.msra.mxu0 0.0
    %149 = vmatpush.msra.mxu0 0.0
    %150 = vmatpush.msra.mxu0 0.0
    %151 = vmatpush.msra.mxu0 0.0
    %152 = vmatpush.msra.mxu0 0.0
    %153 = vmatpush.msra.mxu0 0.0
    %154 = vmatpush.msra.mxu0 0.0
    %155 = vmatpush.msra.mxu0 0.0
    %156 = vmatpush.msra.mxu0 0.0
    %157 = vmatpush.msra.mxu0 %v138
    %158 = vmatpush.msra.mxu0 %v137
    %159 = vmatpush.msra.mxu0 %v136
    %160 = vmatpush.msra.mxu0 %v135
    %161 = vmatmul.f32.gmra.mxu0 %v140
    %v162 = vpop.f32.mrf.mxu0
    %v163 = vadd.f32 0.0, %v162
    %164 = vmatmul.f32.gmra.mxu0 %v143
    %v165 = vpop.f32.mrf.mxu0
    %v166 = vadd.f32 0.0, %v165
    %167 = vdwg.mxu0
    %v168 = vadd.f32 %v133, %v163
    %v169 = vadd.f32 %v134, %v166
    %170 = vst [vmem:[#allocation2] sm:$0xff] %v168
    %171 = vst [vmem:[#allocation2 + $0x8] sm:$0xff] %v169
    // Predicated region
    $region38: #{_lambda_.35} parent=1 // pred_check
      %p172 = pneg %p61
    $region39: #{_lambda_.35} parent=1 // pred_check_branch
      %174 = sbr.rel (%p172) target = $region41
    $region40: #{_lambda_.35} parent=1 // pred_region
      %v175 = vld [vmem:[#allocation2] sm:$0xff]
      %v176 = vld [vmem:[#allocation2 + $0x8] sm:$0xff]
      %v177 = vld [vmem:[#allocation7] sm:$0x1]
      %v179 = vperm.slane %v177, 0
      %v181 = vadd.f32 %v175, %v179
      %v182 = vadd.f32 %v176, %v179
      %v183 = vmul.f32 %v181, 0.5
      %v184 = vmul.f32 %v182, 0.5
      %v185 = vmul.f32 %v181, 0.70710677
      %v186 = vmul.f32 %v182, 0.70710677
      %v187 = vand.u32 2147483647, %v185
      %v188 = vand.u32 2147483647, %v186
      %v189 = vmul.f32 %v187, 0.3275911
      %v190 = vmul.f32 %v188, 0.3275911
      %v191 = vadd.f32 %v189, 1.0
      %v192 = vadd.f32 %v190, 1.0
      %v193 = vrcp.pop %v191
      %v194 = vmul.f32 %v191, %v193
      %v195 = vsub.f32 1.0, %v194
      %v196 = vmul.f32 %v193, %v195
      %v197 = vadd.f32 %v193, %v196
      %vm198 = vweird.f32 %v191
      %vm199 = vweird.f32 %v193
      %vm200 = vmor %vm198, %vm199
      %v201 = vsel %vm200, %v193, %v197
      %v202 = vand.u32 2147483647, %v191
      %vm203 = vcmp.eq.f32.partialorder %v202, 8.507059e+37
      %v204 = vand.u32 %v191, 2147483648
      %v205 = vor.u32 1.1754944e-38, %v204
      %v206 = vsel %vm203, %v205, %v201
      %v207 = vmul.f32 1.0, %v206
      %v208 = vrcp.pop %v192
      %v209 = vmul.f32 %v192, %v208
      %v210 = vsub.f32 1.0, %v209
      %v211 = vmul.f32 %v208, %v210
      %v212 = vadd.f32 %v208, %v211
      %vm213 = vweird.f32 %v192
      %vm214 = vweird.f32 %v208
      %vm215 = vmor %vm213, %vm214
      %v216 = vsel %vm215, %v208, %v212
      %v217 = vand.u32 2147483647, %v192
      %vm218 = vcmp.eq.f32.partialorder %v217, 8.507059e+37
      %v219 = vand.u32 %v192, 2147483648
      %v220 = vor.u32 1.1754944e-38, %v219
      %v221 = vsel %vm218, %v220, %v216
      %v222 = vmul.f32 1.0, %v221
      %v223 = vmul.f32 %v207, 1.0614054
      %v224 = vmul.f32 %v222, 1.0614054
      %v225 = vsub.f32 %v223, 1.4531521
      %v226 = vsub.f32 %v224, 1.4531521
      %v227 = vmul.f32 %v225, %v207
      %v228 = vmul.f32 %v226, %v222
      %v229 = vadd.f32 %v227, 1.4214138
      %v230 = vadd.f32 %v228, 1.4214138
      %v231 = vmul.f32 %v229, %v207
      %v232 = vmul.f32 %v230, %v222
      %v233 = vsub.f32 %v231, 0.28449672
      %v234 = vsub.f32 %v232, 0.28449672
      %v235 = vmul.f32 %v233, %v207
      %v236 = vmul.f32 %v234, %v222
      %v237 = vadd.f32 %v235, 0.2548296
      %v238 = vadd.f32 %v236, 0.2548296
      %v239 = vmul.f32 %v237, %v207
      %v240 = vmul.f32 %v238, %v222
      %v241 = vsub.f32 0.0, %v187
      %v242 = vsub.f32 0.0, %v188
      %v243 = vmul.f32 %v241, %v187
      %v244 = vmul.f32 %v242, %v188
      %v245 = vmul.f32 %v243, 1.442695
      %v246 = vpow.pop %v245
      %v247 = vmul.f32 %v244, 1.442695
      %v248 = vpow.pop %v247
      %v249 = vmul.f32 %v239, %v246
      %v250 = vmul.f32 %v240, %v248
      %v251 = vsub.f32 1.0, %v249
      %v252 = vsub.f32 1.0, %v250
      %vm253 = vcmp.ge.f32.partialorder %v185, 0.0
      %vm254 = vcmp.ge.f32.partialorder %v186, 0.0
      %v255 = vsub.f32 0.0, %v251
      %v256 = vsub.f32 0.0, %v252
      %v257 = vsel %vm253, %v251, %v255
      %v258 = vsel %vm254, %v252, %v256
      %v259 = vadd.f32 %v257, 1.0
      %v260 = vadd.f32 %v258, 1.0
      %v261 = vmul.f32 %v183, %v259
      %v262 = vmul.f32 %v184, %v260
      %263 = vst [vmem:[%s5] sm:$0xff] %v261
      %264 = vst [vmem:[%s5 + $0x8] sm:$0xff] %v262
    $region41: #{_lambda_.35} parent=1 // pred_fallthru
      _
    // Predicated region
    $region42: #{_lambda_.35} parent=1 // pred_check
      _
    $region43: #{_lambda_.35} parent=1 // pred_check_branch
      %266 = sbr.rel (0) target = $region45
    $region44: #{_lambda_.35} parent=1 // pred_region
      _
    $region45: #{_lambda_.35} parent=1 // pred_fallthru
      _
    // Predicated region
    $region46: #{_lambda_.35} parent=1 // pred_check
      _
    $region47: #{_lambda_.35} parent=1 // pred_check_branch
      %268 = sbr.rel (0) target = $region49
    $region48: #{_lambda_.35} parent=1 // pred_region
      _
    $region49: #{_lambda_.35} parent=1 // pred_fallthru
      _
    %269 = vsyncpa [#allocation4], 1
    %270 = vsyncpa [#allocation6], 1

// kernel: _lambda_.33
$region0: #{_lambda_.33}
  #allocation0 [shape = 'u32[]', space=smem, size = 0x4, offset = 0x4, fixed_abs, tag = 'smem constant byte address 0x4 - core index']
  #allocation1 [shape = 'u32[72,128]{1,0:T(1,128)}', space=vmem, size = 0x9000, scoped, tag = 'internal scratch']
  %s0 = inlined_call_operand.vmem [shape: f32[2,8,32], index: 0, kind: input, shape index: {}]
  %s1 = inlined_call_operand.vmem [shape: f32[2,16,64], index: 1, kind: input, shape index: {}]
  %s2 = inlined_call_operand.vmem [shape: f32[2,8,32], index: 2, kind: output, shape index: {}]
  %s3 = sld [smem:[#allocation0]]
  $region41: #{_lambda_.33} parent=0
    _
  %s5 = ssub.s32 1, %s3
  %s6 = scalar_select 0, %s5, %s3
  loop: start=0, step=1, limit=4
  $region2: #{_lambda_.33} parent=0 // loop_pre_header
    _
  $region3: #{_lambda_.33} parent=0 // loop_header
    %s8 = sphi 0, %s12
    %p9 = scmp.ge.s32.totalorder %s8, 4
    %s15 = sphi 0, %s27
    %s16 = sphi 0, %s23
    %s17 = sphi 0, %s15
    %s18 = sphi 0, %s16
    %s19 = sphi 0, %s17
    %s20 = sphi 0, %s18
    %s32 = sphi 0, %s34
    %s35 = sphi 0, %s32
    %s36 = sphi 0, %s35
    %s52 = sphi 0, %s36
    %s58 = sphi 0, %s60
    %s61 = sphi 0, %s58
    %s62 = sphi 0, %s61
    %s78 = sphi 0, %s62
    %s86 = sphi 0, %s88
    %s89 = sphi 0, %s86
    %s90 = sphi 0, %s89
    %s106 = sphi 0, %s90
  $region4: #{_lambda_.33} parent=0 // loop_header_branch
    %11 = sbr.rel (%p9) target = $region8
  $region5: #{_lambda_.33} parent=0 // loop_body
    %s13 = ssub.s32 %s8, 1
    %s14 = ssub.s32 %s8, 2
    %s21 = sadd.s32 1, %s16
    %p22 = scmp.ge.s32.totalorder %s21, 1
    %s23 = scalar_select %p22, 0, %s21
    %s24 = sadd.s32 1, %s15
    %s25 = scalar_select %p22, %s24, %s15
    %p26 = scmp.ge.s32.totalorder %s25, 2
    %s27 = scalar_select %p26, 0, %s25
    %s28 = ssub.s32 %s15, %s27
    %s29 = ssub.s32 %s16, %s23
    %s30 = sor.u32 %s28, %s29
    %p31 = scmp.eq.s32.totalorder %s30, 0
    %s33 = sadd.s32 %s32, 1
    %s34 = scalar_select %p31, %s32, %s33
    %p37 = pneg %p31
    %p38 = scmp.eq.s32.totalorder %s8, 1
    %p39 = por %p37, %p38
    %p40 = scmp.ne.s32.totalorder %s32, %s35
    %p41 = scmp.eq.s32.totalorder %s8, 0
    %p42 = por %p40, %p41
    %p43 = scmp.ne.s32.totalorder %s32, %s35
    %p44 = scmp.eq.s32.totalorder %s13, 1
    %p45 = por %p43, %p44
    %p46 = scmp.ne.s32.totalorder %s35, %s36
    %p47 = scmp.eq.s32.totalorder %s13, 0
    %p48 = por %p46, %p47
    %p49 = scmp.ne.s32.totalorder %s35, %s36
    %p50 = scmp.eq.s32.totalorder %s14, 1
    %p51 = por %p49, %p50
    %p53 = scmp.ne.s32.totalorder %s36, %s52
    %p54 = scmp.eq.s32.totalorder %s14, 0
    %p55 = por %p53, %p54
    %s56 = ssub.s32 %s15, %s27
    %p57 = scmp.eq.s32.totalorder %s56, 0
    %s59 = sadd.s32 %s58, 1
    %s60 = scalar_select %p57, %s58, %s59
    %p63 = pneg %p57
    %p64 = scmp.eq.s32.totalorder %s8, 1
    %p65 = por %p63, %p64
    %p66 = scmp.ne.s32.totalorder %s58, %s61
    %p67 = scmp.eq.s32.totalorder %s8, 0
    %p68 = por %p66, %p67
    %p69 = scmp.ne.s32.totalorder %s58, %s61
    %p70 = scmp.eq.s32.totalorder %s13, 1
    %p71 = por %p69, %p70
    %p72 = scmp.ne.s32.totalorder %s61, %s62
    %p73 = scmp.eq.s32.totalorder %s13, 0
    %p74 = por %p72, %p73
    %p75 = scmp.ne.s32.totalorder %s61, %s62
    %p76 = scmp.eq.s32.totalorder %s14, 1
    %p77 = por %p75, %p76
    %p79 = scmp.ne.s32.totalorder %s62, %s78
    %p80 = scmp.eq.s32.totalorder %s14, 0
    %p81 = por %p79, %p80
    %s82 = ssub.s32 %s15, %s27
    %s83 = ssub.s32 %s16, %s23
    %s84 = sor.u32 %s82, %s83
    %p85 = scmp.eq.s32.totalorder %s84, 0
    %s87 = sadd.s32 %s86, 1
    %s88 = scalar_select %p85, %s86, %s87
    %p91 = pneg %p85
    %p92 = scmp.eq.s32.totalorder %s8, 1
    %p93 = por %p91, %p92
    %p94 = scmp.ne.s32.totalorder %s86, %s89
    %p95 = scmp.eq.s32.totalorder %s8, 0
    %p96 = por %p94, %p95
    %p97 = scmp.ne.s32.totalorder %s86, %s89
    %p98 = scmp.eq.s32.totalorder %s13, 1
    %p99 = por %p97, %p98
    %p100 = scmp.ne.s32.totalorder %s89, %s90
    %p101 = scmp.eq.s32.totalorder %s13, 0
    %p102 = por %p100, %p101
    %p103 = scmp.ne.s32.totalorder %s89, %s90
    %p104 = scmp.eq.s32.totalorder %s14, 1
    %p105 = por %p103, %p104
    %p107 = scmp.ne.s32.totalorder %s90, %s106
    %p108 = scmp.eq.s32.totalorder %s14, 0
    %p109 = por %p107, %p108
    %p110 = scmp.le.s32.totalorder 1, %s8
    %p111 = scmp.lt.s32.totalorder %s8, 3
    %p112 = pnand %p110, %p111
    %p113 = pneg %p112
    // Predicated region
    $region9: #{_lambda_.33} parent=5 // pred_check
      _
    $region10: #{_lambda_.33} parent=5 // pred_check_branch
      %115 = sbr.rel (%p112) target = $region12
    $region11: #{_lambda_.33} parent=5 // pred_region
      %s116 = ssub.s32 %s8, 1
    $region12: #{_lambda_.33} parent=5 // pred_fallthru
      _
    %p117 = scmp.lt.s32.totalorder %s8, 2
    // Predicated region
    $region13: #{_lambda_.33} parent=5 // pred_check
      %p118 = pneg %p117
    $region14: #{_lambda_.33} parent=5 // pred_check_branch
      %120 = sbr.rel (%p118) target = $region16
    $region15: #{_lambda_.33} parent=5 // pred_region
      // Predicated region
      $region17: #{_lambda_.33} parent=15 // pred_check
        %p121 = pneg %p42
      $region18: #{_lambda_.33} parent=15 // pred_check_branch
        %123 = sbr.rel (%p121) target = $region20
      $region19: #{_lambda_.33} parent=15 // pred_region
        %p124 = scmp.lt.s32.totalorder %s15, 1
        %s125 = scalar_select %p124, %s15, 1
        %p126 = scmp.lt.s32.totalorder %s16, 0
        %s127 = scalar_select %p126, %s16, 0
        %s128 = sadd.s32 %s127, %s125
        %s129 = smul.addr %s128, 8
        %s130 = scalar_lea.vmem %s0, %s129
      $region20: #{_lambda_.33} parent=15 // pred_fallthru
        _
      // Predicated region
      $region21: #{_lambda_.33} parent=15 // pred_check
        %p131 = pneg %p68
      $region22: #{_lambda_.33} parent=15 // pred_check_branch
        %133 = sbr.rel (%p131) target = $region24
      $region23: #{_lambda_.33} parent=15 // pred_region
        %p134 = scmp.lt.s32.totalorder %s15, 1
        %s135 = scalar_select %p134, %s15, 1
        %s136 = smul.addr %s135, 2
        %s137 = smul.addr %s136, 8
        %s138 = scalar_lea.vmem %s1, %s137
      $region24: #{_lambda_.33} parent=15 // pred_fallthru
        _
    $region16: #{_lambda_.33} parent=5 // pred_fallthru
      _
    %p139 = scmp.le.s32.totalorder 1, %s8
    %p140 = scmp.lt.s32.totalorder %s8, 3
    %p141 = pnand %p139, %p140
    %p142 = pneg %p141
    // Predicated region
    $region25: #{_lambda_.33} parent=5 // pred_check
      _
    $region26: #{_lambda_.33} parent=5 // pred_check_branch
      %144 = sbr.rel (%p141) target = $region28
    $region27: #{_lambda_.33} parent=5 // pred_region
      %s145 = ssub.s32 %s8, 1
      %p146 = scmp.lt.s32.totalorder %s17, 1
      %s147 = scalar_select %p146, %s17, 1
      %p148 = scmp.lt.s32.totalorder %s18, 0
      %s149 = scalar_select %p148, %s18, 0
      %s150 = sadd.s32 %s149, %s147
      %s151 = smul.addr %s150, 8
      %s152 = scalar_lea.vmem %s0, %s151
      %p153 = pneg %p48
      %p154 = pneg %p45
      %p155 = scmp.lt.s32.totalorder %s17, 1
      %s156 = scalar_select %p155, %s17, 1
      %s157 = smul.addr %s156, 2
      %s158 = smul.addr %s157, 8
      %s159 = scalar_lea.vmem %s1, %s158
      %p160 = pneg %p74
      %p161 = pneg %p71
      %p162 = pneg %p102
      %p163 = pneg %p99
      %p164 = scmp.lt.s32.totalorder %s17, 1
      %s165 = scalar_select %p164, %s17, 1
      %p166 = scmp.lt.s32.totalorder %s18, 0
      %s167 = scalar_select %p166, %s18, 0
      %s168 = sadd.s32 %s167, %s165
      %s169 = smul.addr %s168, 8
      %s170 = scalar_lea.vmem %s2, %s169
      %p171 = scmp.lt.s32.totalorder %s17, 1
      %s172 = scalar_select %p171, %s17, 1
      %p173 = scmp.lt.s32.totalorder %s18, 0
      %s174 = scalar_select %p173, %s18, 0
      %s175 = sadd.s32 %s174, %s172
      %s176 = smul.addr %s175, 8
      %s177 = scalar_lea.vmem %s0, %s176
      %p178 = scmp.lt.s32.totalorder %s17, 1
      %s179 = scalar_select %p178, %s17, 1
      %s180 = smul.addr %s179, 2
      %s181 = smul.addr %s180, 8
      %s182 = scalar_lea.vmem %s1, %s181
      %p183 = scmp.lt.s32.totalorder %s17, 1
      %s184 = scalar_select %p183, %s17, 1
      %p185 = scmp.lt.s32.totalorder %s18, 0
      %s186 = scalar_select %p185, %s18, 0
      %s187 = sadd.s32 %s186, %s184
      %s188 = smul.addr %s187, 8
      %s189 = scalar_lea.vmem %s2, %s188
      %v190 = vld [vmem:[%s177] sm:$0xff]
      %v191 = vmul.f32 %v190, 0.35355338
      %v192 = vld [vmem:[%s182] sm:$0xff]
      %v193 = vld [vmem:[%s182 + $0x8] sm:$0xff]
      %195 = vrot.lane.b32.xlu0 %v191, 120
      %v196 = vpop.permute.xlu0 %195
      %198 = vrot.lane.b32.xlu0 %v191, 112
      %v199 = vpop.permute.xlu0 %198
      %201 = vrot.lane.b32.xlu0 %v191, 104
      %v202 = vpop.permute.xlu0 %201
      %v204 = vrot.slane %v199, 4
      %vm205 = vcmask 1047556
      %v206 = vsel %vm205, %v204, %v191
      %v207 = vrot.slane %v191, 4
      %v208 = vsel %vm205, %v199, %v207
      %v210 = vunpack.c.l.s4 1983009808
      %v211 = vunpack.c.0.s8 %v210
      %v212 = vperm.slane %v206, %v211
      %v214 = vunpack.c.l.s4 1983009808
      %v215 = vunpack.c.0.s8 %v214
      %v216 = vperm.slane %v208, %v215
      %v217 = vrot.slane %v202, 4
      %v218 = vsel %vm205, %v217, %v196
      %v219 = vrot.slane %v196, 4
      %v220 = vsel %vm205, %v202, %v219
      %v222 = vunpack.c.l.s4 1983009808
      %v223 = vunpack.c.0.s8 %v222
      %v224 = vperm.slane %v218, %v223
      %v226 = vunpack.c.l.s4 1983009808
      %v227 = vunpack.c.0.s8 %v226
      %v228 = vperm.slane %v220, %v227
      %v229 = vrot.slane %v224, 4
      %v230 = vsel %vm205, %v229, %v212
      %v231 = vrot.slane %v212, 4
      %v232 = vsel %vm205, %v224, %v231
      %v234 = vunpack.c.l.s4 1934713408
      %v235 = vunpack.c.0.s8 %v234
      %v236 = vperm.slane %v230, %v235
      %v238 = vunpack.c.l.s4 1934713408
      %v239 = vunpack.c.0.s8 %v238
      %v240 = vperm.slane %v232, %v239
      %v241 = vrot.slane %v228, 4
      %v242 = vsel %vm205, %v241, %v216
      %v243 = vrot.slane %v216, 4
      %v244 = vsel %vm205, %v228, %v243
      %v246 = vunpack.c.l.s4 1934713408
      %v247 = vunpack.c.0.s8 %v246
      %v248 = vperm.slane %v242, %v247
      %v250 = vunpack.c.l.s4 1934713408
      %v251 = vunpack.c.0.s8 %v250
      %v252 = vperm.slane %v244, %v251
      %v253 = vrot.slane %v236, 4
      %v254 = vsel %vm205, 0.0, %v253
      %v255 = vrot.slane %v240, 4
      %v256 = vsel %vm205, 0.0, %v255
      %v257 = vrot.slane %v248, 4
      %v258 = vsel %vm205, 0.0, %v257
      %v259 = vrot.slane %v252, 4
      %v260 = vsel %vm205, 0.0, %v259
      %v261 = vsel %vm205, %v255, %v236
      %v263 = vunpack.c.l.s4 1983009808
      %v264 = vunpack.c.0.s8 %v263
      %v265 = vperm.slane %v261, %v264
      %v266 = vrot.slane %v256, 4
      %v267 = vsel %vm205, %v266, %v254
      %v269 = vunpack.c.l.s4 1983009808
      %v270 = vunpack.c.0.s8 %v269
      %v271 = vperm.slane %v267, %v270
      %v272 = vsel %vm205, %v259, %v248
      %v274 = vunpack.c.l.s4 1983009808
      %v275 = vunpack.c.0.s8 %v274
      %v276 = vperm.slane %v272, %v275
      %v277 = vrot.slane %v260, 4
      %v278 = vsel %vm205, %v277, %v258
      %v280 = vunpack.c.l.s4 1983009808
      %v281 = vunpack.c.0.s8 %v280
      %v282 = vperm.slane %v278, %v281
      %v283 = vrot.slane %v271, 4
      %v284 = vsel %vm205, %v283, %v265
      %v285 = vrot.slane %v265, 4
      %v286 = vsel %vm205, %v271, %v285
      %v288 = vunpack.c.l.s4 1934713408
      %v289 = vunpack.c.0.s8 %v288
      %v290 = vperm.slane %v284, %v289
      %v292 = vunpack.c.l.s4 1934713408
      %v293 = vunpack.c.0.s8 %v292
      %v294 = vperm.slane %v286, %v293
      %v295 = vrot.slane %v282, 4
      %v296 = vsel %vm205, %v295, %v276
      %v297 = vrot.slane %v276, 4
      %v298 = vsel %vm205, %v282, %v297
      %v300 = vunpack.c.l.s4 1934713408
      %v301 = vunpack.c.0.s8 %v300
      %v302 = vperm.slane %v296, %v301
      %v304 = vunpack.c.l.s4 1934713408
      %v305 = vunpack.c.0.s8 %v304
      %v306 = vperm.slane %v298, %v305
      %v307 = vrot.slane %v302, 4
      %v308 = vsel %vm205, %v307, %v290
      %v309 = vrot.slane %v290, 4
      %v310 = vsel %vm205, %v302, %v309
      %v311 = vrot.slane %v306, 4
      %v312 = vsel %vm205, %v311, %v294
      %v313 = vrot.slane %v294, 4
      %v314 = vsel %vm205, %v306, %v313
      %317 = vrot.lane.b32.xlu0 %v192, 120
      %v318 = vpop.permute.xlu0 %317
      %319 = vrot.lane.b32.xlu0 %v193, 120
      %v320 = vpop.permute.xlu0 %319
      %323 = vrot.lane.b32.xlu0 %v192, 112
      %v324 = vpop.permute.xlu0 %323
      %325 = vrot.lane.b32.xlu0 %v193, 112
      %v326 = vpop.permute.xlu0 %325
      %329 = vrot.lane.b32.xlu0 %v192, 104
      %v330 = vpop.permute.xlu0 %329
      %331 = vrot.lane.b32.xlu0 %v193, 104
      %v332 = vpop.permute.xlu0 %331
      %v335 = vrot.slane %v324, 4
      %v336 = vsel %vm205, %v335, %v192
      %v337 = vrot.slane %v192, 4
      %v338 = vsel %vm205, %v324, %v337
      %v340 = vunpack.c.l.s4 1983009808
      %v341 = vunpack.c.0.s8 %v340
      %v342 = vperm.slane %v336, %v341
      %v344 = vunpack.c.l.s4 1983009808
      %v345 = vunpack.c.0.s8 %v344
      %v346 = vperm.slane %v338, %v345
      %v347 = vrot.slane %v330, 4
      %v348 = vsel %vm205, %v347, %v318
      %v349 = vrot.slane %v318, 4
      %v350 = vsel %vm205, %v330, %v349
      %v352 = vunpack.c.l.s4 1983009808
      %v353 = vunpack.c.0.s8 %v352
      %v354 = vperm.slane %v348, %v353
      %v356 = vunpack.c.l.s4 1983009808
      %v357 = vunpack.c.0.s8 %v356
      %v358 = vperm.slane %v350, %v357
      %v359 = vrot.slane %v354, 4
      %v360 = vsel %vm205, %v359, %v342
      %v361 = vrot.slane %v342, 4
      %v362 = vsel %vm205, %v354, %v361
      %v364 = vunpack.c.l.s4 1934713408
      %v365 = vunpack.c.0.s8 %v364
      %v366 = vperm.slane %v360, %v365
      %v368 = vunpack.c.l.s4 1934713408
      %v369 = vunpack.c.0.s8 %v368
      %v370 = vperm.slane %v362, %v369
      %v371 = vrot.slane %v358, 4
      %v372 = vsel %vm205, %v371, %v346
      %v373 = vrot.slane %v346, 4
      %v374 = vsel %vm205, %v358, %v373
      %v376 = vunpack.c.l.s4 1934713408
      %v377 = vunpack.c.0.s8 %v376
      %v378 = vperm.slane %v372, %v377
      %v380 = vunpack.c.l.s4 1934713408
      %v381 = vunpack.c.0.s8 %v380
      %v382 = vperm.slane %v374, %v381
      %v383 = vrot.slane %v366, 4
      %v384 = vsel %vm205, 0.0, %v383
      %v385 = vrot.slane %v370, 4
      %v386 = vsel %vm205, 0.0, %v385
      %v387 = vrot.slane %v378, 4
      %v388 = vsel %vm205, 0.0, %v387
      %v389 = vrot.slane %v382, 4
      %v390 = vsel %vm205, 0.0, %v389
      %v391 = vrot.slane %v326, 4
      %v392 = vsel %vm205, %v391, %v193
      %v393 = vrot.slane %v193, 4
      %v394 = vsel %vm205, %v326, %v393
      %v396 = vunpack.c.l.s4 1983009808
      %v397 = vunpack.c.0.s8 %v396
      %v398 = vperm.slane %v392, %v397
      %v400 = vunpack.c.l.s4 1983009808
      %v401 = vunpack.c.0.s8 %v400
      %v402 = vperm.slane %v394, %v401
      %v403 = vrot.slane %v332, 4
      %v404 = vsel %vm205, %v403, %v320
      %v405 = vrot.slane %v320, 4
      %v406 = vsel %vm205, %v332, %v405
      %v408 = vunpack.c.l.s4 1983009808
      %v409 = vunpack.c.0.s8 %v408
      %v410 = vperm.slane %v404, %v409
      %v412 = vunpack.c.l.s4 1983009808
      %v413 = vunpack.c.0.s8 %v412
      %v414 = vperm.slane %v406, %v413
      %v415 = vrot.slane %v410, 4
      %v416 = vsel %vm205, %v415, %v398
      %v417 = vrot.slane %v398, 4
      %v418 = vsel %vm205, %v410, %v417
      %v420 = vunpack.c.l.s4 1934713408
      %v421 = vunpack.c.0.s8 %v420
      %v422 = vperm.slane %v416, %v421
      %v424 = vunpack.c.l.s4 1934713408
      %v425 = vunpack.c.0.s8 %v424
      %v426 = vperm.slane %v418, %v425
      %v427 = vrot.slane %v414, 4
      %v428 = vsel %vm205, %v427, %v402
      %v429 = vrot.slane %v402, 4
      %v430 = vsel %vm205, %v414, %v429
      %v432 = vunpack.c.l.s4 1934713408
      %v433 = vunpack.c.0.s8 %v432
      %v434 = vperm.slane %v428, %v433
      %v436 = vunpack.c.l.s4 1934713408
      %v437 = vunpack.c.0.s8 %v436
      %v438 = vperm.slane %v430, %v437
      %v439 = vrot.slane %v422, 4
      %v440 = vsel %vm205, 0.0, %v439
      %v441 = vrot.slane %v426, 4
      %v442 = vsel %vm205, 0.0, %v441
      %v443 = vrot.slane %v434, 4
      %v444 = vsel %vm205, 0.0, %v443
      %v445 = vrot.slane %v438, 4
      %v446 = vsel %vm205, 0.0, %v445
      %v447 = vsel %vm205, %v385, %v366
      %v449 = vunpack.c.l.s4 1983009808
      %v450 = vunpack.c.0.s8 %v449
      %v451 = vperm.slane %v447, %v450
      %v452 = vrot.slane %v386, 4
      %v453 = vsel %vm205, %v452, %v384
      %v455 = vunpack.c.l.s4 1983009808
      %v456 = vunpack.c.0.s8 %v455
      %v457 = vperm.slane %v453, %v456
      %v458 = vsel %vm205, %v389, %v378
      %v460 = vunpack.c.l.s4 1983009808
      %v461 = vunpack.c.0.s8 %v460
      %v462 = vperm.slane %v458, %v461
      %v463 = vrot.slane %v390, 4
      %v464 = vsel %vm205, %v463, %v388
      %v466 = vunpack.c.l.s4 1983009808
      %v467 = vunpack.c.0.s8 %v466
      %v468 = vperm.slane %v464, %v467
      %v469 = vrot.slane %v457, 4
      %v470 = vsel %vm205, %v469, %v451
      %v471 = vrot.slane %v451, 4
      %v472 = vsel %vm205, %v457, %v471
      %v474 = vunpack.c.l.s4 1934713408
      %v475 = vunpack.c.0.s8 %v474
      %v476 = vperm.slane %v470, %v475
      %v478 = vunpack.c.l.s4 1934713408
      %v479 = vunpack.c.0.s8 %v478
      %v480 = vperm.slane %v472, %v479
      %v481 = vrot.slane %v468, 4
      %v482 = vsel %vm205, %v481, %v462
      %v483 = vrot.slane %v462, 4
      %v484 = vsel %vm205, %v468, %v483
      %v486 = vunpack.c.l.s4 1934713408
      %v487 = vunpack.c.0.s8 %v486
      %v488 = vperm.slane %v482, %v487
      %v490 = vunpack.c.l.s4 1934713408
      %v491 = vunpack.c.0.s8 %v490
      %v492 = vperm.slane %v484, %v491
      %v493 = vrot.slane %v488, 4
      %v494 = vsel %vm205, %v493, %v476
      %v495 = vrot.slane %v476, 4
      %v496 = vsel %vm205, %v488, %v495
      %v497 = vrot.slane %v492, 4
      %v498 = vsel %vm205, %v497, %v480
      %v499 = vrot.slane %v480, 4
      %v500 = vsel %vm205, %v492, %v499
      %v501 = vsel %vm205, %v441, %v422
      %v503 = vunpack.c.l.s4 1983009808
      %v504 = vunpack.c.0.s8 %v503
      %v505 = vperm.slane %v501, %v504
      %v506 = vrot.slane %v442, 4
      %v507 = vsel %vm205, %v506, %v440
      %v509 = vunpack.c.l.s4 1983009808
      %v510 = vunpack.c.0.s8 %v509
      %v511 = vperm.slane %v507, %v510
      %v512 = vsel %vm205, %v445, %v434
      %v514 = vunpack.c.l.s4 1983009808
      %v515 = vunpack.c.0.s8 %v514
      %v516 = vperm.slane %v512, %v515
      %v517 = vrot.slane %v446, 4
      %v518 = vsel %vm205, %v517, %v444
      %v520 = vunpack.c.l.s4 1983009808
      %v521 = vunpack.c.0.s8 %v520
      %v522 = vperm.slane %v518, %v521
      %v523 = vrot.slane %v511, 4
      %v524 = vsel %vm205, %v523, %v505
      %v525 = vrot.slane %v505, 4
      %v526 = vsel %vm205, %v511, %v525
      %v528 = vunpack.c.l.s4 1934713408
      %v529 = vunpack.c.0.s8 %v528
      %v530 = vperm.slane %v524, %v529
      %v532 = vunpack.c.l.s4 1934713408
      %v533 = vunpack.c.0.s8 %v532
      %v534 = vperm.slane %v526, %v533
      %v535 = vrot.slane %v522, 4
      %v536 = vsel %vm205, %v535, %v516
      %v537 = vrot.slane %v516, 4
      %v538 = vsel %vm205, %v522, %v537
      %v540 = vunpack.c.l.s4 1934713408
      %v541 = vunpack.c.0.s8 %v540
      %v542 = vperm.slane %v536, %v541
      %v544 = vunpack.c.l.s4 1934713408
      %v545 = vunpack.c.0.s8 %v544
      %v546 = vperm.slane %v538, %v545
      %v547 = vrot.slane %v542, 4
      %v548 = vsel %vm205, %v547, %v530
      %v549 = vrot.slane %v530, 4
      %v550 = vsel %vm205, %v542, %v549
      %v551 = vrot.slane %v546, 4
      %v552 = vsel %vm205, %v551, %v534
      %v553 = vrot.slane %v534, 4
      %v554 = vsel %vm205, %v546, %v553
      %555 = vrot.lane.b32.xlu0 %v192, 96
      %v556 = vpop.permute.xlu0 %555
      %557 = vrot.lane.b32.xlu0 %v193, 96
      %v558 = vpop.permute.xlu0 %557
      %559 = vrot.lane.b32.xlu0 %v318, 96
      %v560 = vpop.permute.xlu0 %559
      %561 = vrot.lane.b32.xlu0 %v320, 96
      %v562 = vpop.permute.xlu0 %561
      %563 = vrot.lane.b32.xlu0 %v324, 96
      %v564 = vpop.permute.xlu0 %563
      %565 = vrot.lane.b32.xlu0 %v326, 96
      %v566 = vpop.permute.xlu0 %565
      %567 = vrot.lane.b32.xlu0 %v330, 96
      %v568 = vpop.permute.xlu0 %567
      %569 = vrot.lane.b32.xlu0 %v332, 96
      %v570 = vpop.permute.xlu0 %569
      %v579 = vrot.slane %v564, 4
      %v580 = vsel %vm205, %v579, %v556
      %v581 = vrot.slane %v556, 4
      %v582 = vsel %vm205, %v564, %v581
      %v584 = vunpack.c.l.s4 1983009808
      %v585 = vunpack.c.0.s8 %v584
      %v586 = vperm.slane %v580, %v585
      %v588 = vunpack.c.l.s4 1983009808
      %v589 = vunpack.c.0.s8 %v588
      %v590 = vperm.slane %v582, %v589
      %v591 = vrot.slane %v568, 4
      %v592 = vsel %vm205, %v591, %v560
      %v593 = vrot.slane %v560, 4
      %v594 = vsel %vm205, %v568, %v593
      %v596 = vunpack.c.l.s4 1983009808
      %v597 = vunpack.c.0.s8 %v596
      %v598 = vperm.slane %v592, %v597
      %v600 = vunpack.c.l.s4 1983009808
      %v601 = vunpack.c.0.s8 %v600
      %v602 = vperm.slane %v594, %v601
      %v603 = vrot.slane %v598, 4
      %v604 = vsel %vm205, %v603, %v586
      %v605 = vrot.slane %v586, 4
      %v606 = vsel %vm205, %v598, %v605
      %v608 = vunpack.c.l.s4 1934713408
      %v609 = vunpack.c.0.s8 %v608
      %v610 = vperm.slane %v604, %v609
      %v612 = vunpack.c.l.s4 1934713408
      %v613 = vunpack.c.0.s8 %v612
      %v614 = vperm.slane %v606, %v613
      %v615 = vrot.slane %v602, 4
      %v616 = vsel %vm205, %v615, %v590
      %v617 = vrot.slane %v590, 4
      %v618 = vsel %vm205, %v602, %v617
      %v620 = vunpack.c.l.s4 1934713408
      %v621 = vunpack.c.0.s8 %v620
      %v622 = vperm.slane %v616, %v621
      %v624 = vunpack.c.l.s4 1934713408
      %v625 = vunpack.c.0.s8 %v624
      %v626 = vperm.slane %v618, %v625
      %v627 = vrot.slane %v610, 4
      %v628 = vsel %vm205, 0.0, %v627
      %v629 = vrot.slane %v614, 4
      %v630 = vsel %vm205, 0.0, %v629
      %v631 = vrot.slane %v622, 4
      %v632 = vsel %vm205, 0.0, %v631
      %v633 = vrot.slane %v626, 4
      %v634 = vsel %vm205, 0.0, %v633
      %v635 = vrot.slane %v566, 4
      %v636 = vsel %vm205, %v635, %v558
      %v637 = vrot.slane %v558, 4
      %v638 = vsel %vm205, %v566, %v637
      %v640 = vunpack.c.l.s4 1983009808
      %v641 = vunpack.c.0.s8 %v640
      %v642 = vperm.slane %v636, %v641
      %v644 = vunpack.c.l.s4 1983009808
      %v645 = vunpack.c.0.s8 %v644
      %v646 = vperm.slane %v638, %v645
      %v647 = vrot.slane %v570, 4
      %v648 = vsel %vm205, %v647, %v562
      %v649 = vrot.slane %v562, 4
      %v650 = vsel %vm205, %v570, %v649
      %v652 = vunpack.c.l.s4 1983009808
      %v653 = vunpack.c.0.s8 %v652
      %v654 = vperm.slane %v648, %v653
      %v656 = vunpack.c.l.s4 1983009808
      %v657 = vunpack.c.0.s8 %v656
      %v658 = vperm.slane %v650, %v657
      %v659 = vrot.slane %v654, 4
      %v660 = vsel %vm205, %v659, %v642
      %v661 = vrot.slane %v642, 4
      %v662 = vsel %vm205, %v654, %v661
      %v664 = vunpack.c.l.s4 1934713408
      %v665 = vunpack.c.0.s8 %v664
      %v666 = vperm.slane %v660, %v665
      %v668 = vunpack.c.l.s4 1934713408
      %v669 = vunpack.c.0.s8 %v668
      %v670 = vperm.slane %v662, %v669
      %v671 = vrot.slane %v658, 4
      %v672 = vsel %vm205, %v671, %v646
      %v673 = vrot.slane %v646, 4
      %v674 = vsel %vm205, %v658, %v673
      %v676 = vunpack.c.l.s4 1934713408
      %v677 = vunpack.c.0.s8 %v676
      %v678 = vperm.slane %v672, %v677
      %v680 = vunpack.c.l.s4 1934713408
      %v681 = vunpack.c.0.s8 %v680
      %v682 = vperm.slane %v674, %v681
      %v683 = vrot.slane %v666, 4
      %v684 = vsel %vm205, 0.0, %v683
      %v685 = vrot.slane %v670, 4
      %v686 = vsel %vm205, 0.0, %v685
      %v687 = vrot.slane %v678, 4
      %v688 = vsel %vm205, 0.0, %v687
      %v689 = vrot.slane %v682, 4
      %v690 = vsel %vm205, 0.0, %v689
      %v691 = vsel %vm205, %v629, %v610
      %v693 = vunpack.c.l.s4 1983009808
      %v694 = vunpack.c.0.s8 %v693
      %v695 = vperm.slane %v691, %v694
      %v696 = vrot.slane %v630, 4
      %v697 = vsel %vm205, %v696, %v628
      %v699 = vunpack.c.l.s4 1983009808
      %v700 = vunpack.c.0.s8 %v699
      %v701 = vperm.slane %v697, %v700
      %v702 = vsel %vm205, %v633, %v622
      %v704 = vunpack.c.l.s4 1983009808
      %v705 = vunpack.c.0.s8 %v704
      %v706 = vperm.slane %v702, %v705
      %v707 = vrot.slane %v634, 4
      %v708 = vsel %vm205, %v707, %v632
      %v710 = vunpack.c.l.s4 1983009808
      %v711 = vunpack.c.0.s8 %v710
      %v712 = vperm.slane %v708, %v711
      %v713 = vrot.slane %v701, 4
      %v714 = vsel %vm205, %v713, %v695
      %v715 = vrot.slane %v695, 4
      %v716 = vsel %vm205, %v701, %v715
      %v718 = vunpack.c.l.s4 1934713408
      %v719 = vunpack.c.0.s8 %v718
      %v720 = vperm.slane %v714, %v719
      %v722 = vunpack.c.l.s4 1934713408
      %v723 = vunpack.c.0.s8 %v722
      %v724 = vperm.slane %v716, %v723
      %v725 = vrot.slane %v712, 4
      %v726 = vsel %vm205, %v725, %v706
      %v727 = vrot.slane %v706, 4
      %v728 = vsel %vm205, %v712, %v727
      %v730 = vunpack.c.l.s4 1934713408
      %v731 = vunpack.c.0.s8 %v730
      %v732 = vperm.slane %v726, %v731
      %v734 = vunpack.c.l.s4 1934713408
      %v735 = vunpack.c.0.s8 %v734
      %v736 = vperm.slane %v728, %v735
      %v737 = vrot.slane %v732, 4
      %v738 = vsel %vm205, %v737, %v720
      %v739 = vrot.slane %v720, 4
      %v740 = vsel %vm205, %v732, %v739
      %v741 = vrot.slane %v736, 4
      %v742 = vsel %vm205, %v741, %v724
      %v743 = vrot.slane %v724, 4
      %v744 = vsel %vm205, %v736, %v743
      %v745 = vsel %vm205, %v685, %v666
      %v747 = vunpack.c.l.s4 1983009808
      %v748 = vunpack.c.0.s8 %v747
      %v749 = vperm.slane %v745, %v748
      %v750 = vrot.slane %v686, 4
      %v751 = vsel %vm205, %v750, %v684
      %v753 = vunpack.c.l.s4 1983009808
      %v754 = vunpack.c.0.s8 %v753
      %v755 = vperm.slane %v751, %v754
      %v756 = vsel %vm205, %v689, %v678
      %v758 = vunpack.c.l.s4 1983009808
      %v759 = vunpack.c.0.s8 %v758
      %v760 = vperm.slane %v756, %v759
      %v761 = vrot.slane %v690, 4
      %v762 = vsel %vm205, %v761, %v688
      %v764 = vunpack.c.l.s4 1983009808
      %v765 = vunpack.c.0.s8 %v764
      %v766 = vperm.slane %v762, %v765
      %v767 = vrot.slane %v755, 4
      %v768 = vsel %vm205, %v767, %v749
      %v769 = vrot.slane %v749, 4
      %v770 = vsel %vm205, %v755, %v769
      %v772 = vunpack.c.l.s4 1934713408
      %v773 = vunpack.c.0.s8 %v772
      %v774 = vperm.slane %v768, %v773
      %v776 = vunpack.c.l.s4 1934713408
      %v777 = vunpack.c.0.s8 %v776
      %v778 = vperm.slane %v770, %v777
      %v779 = vrot.slane %v766, 4
      %v780 = vsel %vm205, %v779, %v760
      %v781 = vrot.slane %v760, 4
      %v782 = vsel %vm205, %v766, %v781
      %v784 = vunpack.c.l.s4 1934713408
      %v785 = vunpack.c.0.s8 %v784
      %v786 = vperm.slane %v780, %v785
      %v788 = vunpack.c.l.s4 1934713408
      %v789 = vunpack.c.0.s8 %v788
      %v790 = vperm.slane %v782, %v789
      %v791 = vrot.slane %v786, 4
      %v792 = vsel %vm205, %v791, %v774
      %v793 = vrot.slane %v774, 4
      %v794 = vsel %vm205, %v786, %v793
      %v795 = vrot.slane %v790, 4
      %v796 = vsel %vm205, %v795, %v778
      %v797 = vrot.slane %v778, 4
      %v798 = vsel %vm205, %v790, %v797
      %vm799 = vcmask 64512
      %v801 = vsel %vm799, %v308, 0
      %v804 = vsel %vm799, %v494, 0
      %v807 = vsel %vm799, %v548, 0
      %809 = vmatpush.xpose.msra.mxu0 0.0
      %810 = vmatpush.xpose.msra.mxu0 0.0
      %811 = vmatpush.xpose.msra.mxu0 0.0
      %812 = vmatpush.xpose.msra.mxu0 0.0
      %813 = vmatpush.xpose.msra.mxu0 0.0
      %814 = vmatpush.xpose.msra.mxu0 0.0
      %815 = vmatpush.xpose.msra.mxu0 0.0
      %816 = vmatpush.xpose.msra.mxu0 0.0
      %817 = vmatpush.xpose.msra.mxu0 0.0
      %818 = vmatpush.xpose.msra.mxu0 0.0
      %819 = vmatpush.xpose.msra.mxu0 0.0
      %820 = vmatpush.xpose.msra.mxu0 0.0
      %821 = vmatpush.xpose.msra.mxu0 0.0
      %822 = vmatpush.xpose.msra.mxu0 0.0
      %823 = vmatpush.xpose.msra.mxu0 %v807
      %824 = vmatpush.xpose.msra.mxu0 %v804
      %825 = vmatmul.f32.gmra.mxu0 %v801
      %v826 = vpop.f32.mrf.mxu0
      %v827 = vadd.f32 0.0, %v826
      %828 = vdwg.mxu0
      %v830 = vsel %vm799, %v310, 0
      %v833 = vsel %vm799, %v496, 0
      %v836 = vsel %vm799, %v550, 0
      %838 = vmatpush.xpose.msra.mxu0 0.0
      %839 = vmatpush.xpose.msra.mxu0 0.0
      %840 = vmatpush.xpose.msra.mxu0 0.0
      %841 = vmatpush.xpose.msra.mxu0 0.0
      %842 = vmatpush.xpose.msra.mxu0 0.0
      %843 = vmatpush.xpose.msra.mxu0 0.0
      %844 = vmatpush.xpose.msra.mxu0 0.0
      %845 = vmatpush.xpose.msra.mxu0 0.0
      %846 = vmatpush.xpose.msra.mxu0 0.0
      %847 = vmatpush.xpose.msra.mxu0 0.0
      %848 = vmatpush.xpose.msra.mxu0 0.0
      %849 = vmatpush.xpose.msra.mxu0 0.0
      %850 = vmatpush.xpose.msra.mxu0 0.0
      %851 = vmatpush.xpose.msra.mxu0 0.0
      %852 = vmatpush.xpose.msra.mxu0 %v836
      %853 = vmatpush.xpose.msra.mxu0 %v833
      %854 = vmatmul.f32.gmra.mxu0 %v830
      %v855 = vpop.f32.mrf.mxu0
      %v856 = vadd.f32 0.0, %v855
      %857 = vdwg.mxu0
      %v859 = vsel %vm799, %v312, 0
      %v862 = vsel %vm799, %v498, 0
      %v865 = vsel %vm799, %v552, 0
      %867 = vmatpush.xpose.msra.mxu0 0.0
      %868 = vmatpush.xpose.msra.mxu0 0.0
      %869 = vmatpush.xpose.msra.mxu0 0.0
      %870 = vmatpush.xpose.msra.mxu0 0.0
      %871 = vmatpush.xpose.msra.mxu0 0.0
      %872 = vmatpush.xpose.msra.mxu0 0.0
      %873 = vmatpush.xpose.msra.mxu0 0.0
      %874 = vmatpush.xpose.msra.mxu0 0.0
      %875 = vmatpush.xpose.msra.mxu0 0.0
      %876 = vmatpush.xpose.msra.mxu0 0.0
      %877 = vmatpush.xpose.msra.mxu0 0.0
      %878 = vmatpush.xpose.msra.mxu0 0.0
      %879 = vmatpush.xpose.msra.mxu0 0.0
      %880 = vmatpush.xpose.msra.mxu0 0.0
      %881 = vmatpush.xpose.msra.mxu0 %v865
      %882 = vmatpush.xpose.msra.mxu0 %v862
      %883 = vmatmul.f32.gmra.mxu0 %v859
      %v884 = vpop.f32.mrf.mxu0
      %v885 = vadd.f32 0.0, %v884
      %886 = vdwg.mxu0
      %v888 = vsel %vm799, %v314, 0
      %v891 = vsel %vm799, %v500, 0
      %v894 = vsel %vm799, %v554, 0
      %896 = vmatpush.xpose.msra.mxu0 0.0
      %897 = vmatpush.xpose.msra.mxu0 0.0
      %898 = vmatpush.xpose.msra.mxu0 0.0
      %899 = vmatpush.xpose.msra.mxu0 0.0
      %900 = vmatpush.xpose.msra.mxu0 0.0
      %901 = vmatpush.xpose.msra.mxu0 0.0
      %902 = vmatpush.xpose.msra.mxu0 0.0
      %903 = vmatpush.xpose.msra.mxu0 0.0
      %904 = vmatpush.xpose.msra.mxu0 0.0
      %905 = vmatpush.xpose.msra.mxu0 0.0
      %906 = vmatpush.xpose.msra.mxu0 0.0
      %907 = vmatpush.xpose.msra.mxu0 0.0
      %908 = vmatpush.xpose.msra.mxu0 0.0
      %909 = vmatpush.xpose.msra.mxu0 0.0
      %910 = vmatpush.xpose.msra.mxu0 %v894
      %911 = vmatpush.xpose.msra.mxu0 %v891
      %912 = vmatmul.f32.gmra.mxu0 %v888
      %v913 = vpop.f32.mrf.mxu0
      %v914 = vadd.f32 0.0, %v913
      %915 = vdwg.mxu0
      %vm916 = vcmask 130048
      %v917 = vsel %vm916, %v827, -inf
      %918 = vmax.xlane.f32.xlu0 %v917
      %v919 = vpop.xlane.xlu0 %918
      %v920 = vsel %vm916, %v856, -inf
      %921 = vmax.xlane.f32.xlu0 %v920
      %v922 = vpop.xlane.xlu0 %921
      %v923 = vsel %vm916, %v885, -inf
      %924 = vmax.xlane.f32.xlu0 %v923
      %v925 = vpop.xlane.xlu0 %924
      %v926 = vsel %vm916, %v914, -inf
      %927 = vmax.xlane.f32.xlu0 %v926
      %v928 = vpop.xlane.xlu0 %927
      %v929 = vsub.f32 %v827, %v919
      %v930 = vsub.f32 %v856, %v922
      %v931 = vsub.f32 %v885, %v925
      %v932 = vsub.f32 %v914, %v928
      %v933 = vmul.f32 %v929, 1.442695
      %v934 = vpow.pop %v933
      %v935 = vmul.f32 %v930, 1.442695
      %v936 = vpow.pop %v935
      %v937 = vmul.f32 %v931, 1.442695
      %v938 = vpow.pop %v937
      %v939 = vmul.f32 %v932, 1.442695
      %v940 = vpow.pop %v939
      %v941 = vsel %vm916, %v934, 0.0
      %942 = vadd.xlane.f32.xlu0 %v941
      %v943 = vpop.xlane.xlu0 %942
      %v944 = vsel %vm916, %v936, 0.0
      %945 = vadd.xlane.f32.xlu0 %v944
      %v946 = vpop.xlane.xlu0 %945
      %v947 = vsel %vm916, %v938, 0.0
      %948 = vadd.xlane.f32.xlu0 %v947
      %v949 = vpop.xlane.xlu0 %948
      %v950 = vsel %vm916, %v940, 0.0
      %951 = vadd.xlane.f32.xlu0 %v950
      %v952 = vpop.xlane.xlu0 %951
      %v953 = vrcp.pop %v943
      %v954 = vrcp.pop %v946
      %v955 = vrcp.pop %v949
      %v956 = vrcp.pop %v952
      %v957 = vmul.f32 %v934, %v953
      %v958 = vmul.f32 %v936, %v954
      %v959 = vmul.f32 %v938, %v955
      %v960 = vmul.f32 %v940, %v956
      %v962 = vsel %vm916, %v957, 0
      %964 = vmatpush.msra.mxu0 0.0
      %965 = vmatpush.msra.mxu0 0.0
      %966 = vmatpush.msra.mxu0 0.0
      %967 = vmatpush.msra.mxu0 0.0
      %968 = vmatpush.msra.mxu0 0.0
      %969 = vmatpush.msra.mxu0 0.0
      %970 = vmatpush.msra.mxu0 0.0
      %971 = vmatpush.msra.mxu0 0.0
      %972 = vmatpush.msra.mxu0 0.0
      %973 = vmatpush.msra.mxu0 0.0
      %974 = vmatpush.msra.mxu0 0.0
      %975 = vmatpush.msra.mxu0 0.0
      %976 = vmatpush.msra.mxu0 0.0
      %977 = vmatpush.msra.mxu0 0.0
      %978 = vmatpush.msra.mxu0 %v792
      %979 = vmatpush.msra.mxu0 %v738
      %980 = vmatmul.f32.gmra.mxu0 %v962
      %v981 = vpop.f32.mrf.mxu0
      %v982 = vadd.f32 0.0, %v981
      %983 = vdwg.mxu0
      %v985 = vsel %vm916, %v958, 0
      %987 = vmatpush.msra.mxu0 0.0
      %988 = vmatpush.msra.mxu0 0.0
      %989 = vmatpush.msra.mxu0 0.0
      %990 = vmatpush.msra.mxu0 0.0
      %991 = vmatpush.msra.mxu0 0.0
      %992 = vmatpush.msra.mxu0 0.0
      %993 = vmatpush.msra.mxu0 0.0
      %994 = vmatpush.msra.mxu0 0.0
      %995 = vmatpush.msra.mxu0 0.0
      %996 = vmatpush.msra.mxu0 0.0
      %997 = vmatpush.msra.mxu0 0.0
      %998 = vmatpush.msra.mxu0 0.0
      %999 = vmatpush.msra.mxu0 0.0
      %1000 = vmatpush.msra.mxu0 0.0
      %1001 = vmatpush.msra.mxu0 %v794
      %1002 = vmatpush.msra.mxu0 %v740
      %1003 = vmatmul.f32.gmra.mxu0 %v985
      %v1004 = vpop.f32.mrf.mxu0
      %v1005 = vadd.f32 0.0, %v1004
      %1006 = vdwg.mxu0
      %v1008 = vsel %vm916, %v959, 0
      %1010 = vmatpush.msra.mxu0 0.0
      %1011 = vmatpush.msra.mxu0 0.0
      %1012 = vmatpush.msra.mxu0 0.0
      %1013 = vmatpush.msra.mxu0 0.0
      %1014 = vmatpush.msra.mxu0 0.0
      %1015 = vmatpush.msra.mxu0 0.0
      %1016 = vmatpush.msra.mxu0 0.0
      %1017 = vmatpush.msra.mxu0 0.0
      %1018 = vmatpush.msra.mxu0 0.0
      %1019 = vmatpush.msra.mxu0 0.0
      %1020 = vmatpush.msra.mxu0 0.0
      %1021 = vmatpush.msra.mxu0 0.0
      %1022 = vmatpush.msra.mxu0 0.0
      %1023 = vmatpush.msra.mxu0 0.0
      %1024 = vmatpush.msra.mxu0 %v796
      %1025 = vmatpush.msra.mxu0 %v742
      %1026 = vmatmul.f32.gmra.mxu0 %v1008
      %v1027 = vpop.f32.mrf.mxu0
      %v1028 = vadd.f32 0.0, %v1027
      %1029 = vdwg.mxu0
      %v1031 = vsel %vm916, %v960, 0
      %1033 = vmatpush.msra.mxu0 0.0
      %1034 = vmatpush.msra.mxu0 0.0
      %1035 = vmatpush.msra.mxu0 0.0
      %1036 = vmatpush.msra.mxu0 0.0
      %1037 = vmatpush.msra.mxu0 0.0
      %1038 = vmatpush.msra.mxu0 0.0
      %1039 = vmatpush.msra.mxu0 0.0
      %1040 = vmatpush.msra.mxu0 0.0
      %1041 = vmatpush.msra.mxu0 0.0
      %1042 = vmatpush.msra.mxu0 0.0
      %1043 = vmatpush.msra.mxu0 0.0
      %1044 = vmatpush.msra.mxu0 0.0
      %1045 = vmatpush.msra.mxu0 0.0
      %1046 = vmatpush.msra.mxu0 0.0
      %1047 = vmatpush.msra.mxu0 %v798
      %1048 = vmatpush.msra.mxu0 %v744
      %1049 = vmatmul.f32.gmra.mxu0 %v1031
      %v1050 = vpop.f32.mrf.mxu0
      %v1051 = vadd.f32 0.0, %v1050
      %1052 = vdwg.mxu0
      %v1053 = vrot.slane %v1028, 4
      %v1054 = vsel %vm205, %v1053, %v982
      %v1055 = vrot.slane %v982, 4
      %v1056 = vsel %vm205, %v1028, %v1055
      %v1058 = vunpack.c.l.s4 1983009808
      %v1059 = vunpack.c.0.s8 %v1058
      %v1060 = vperm.slane %v1054, %v1059
      %v1062 = vunpack.c.l.s4 1983009808
      %v1063 = vunpack.c.0.s8 %v1062
      %v1064 = vperm.slane %v1056, %v1063
      %v1065 = vrot.slane %v1051, 4
      %v1066 = vsel %vm205, %v1065, %v1005
      %v1067 = vrot.slane %v1005, 4
      %v1068 = vsel %vm205, %v1051, %v1067
      %v1070 = vunpack.c.l.s4 1983009808
      %v1071 = vunpack.c.0.s8 %v1070
      %v1072 = vperm.slane %v1066, %v1071
      %v1074 = vunpack.c.l.s4 1983009808
      %v1075 = vunpack.c.0.s8 %v1074
      %v1076 = vperm.slane %v1068, %v1075
      %v1077 = vrot.slane %v1072, 4
      %v1078 = vsel %vm205, %v1077, %v1060
      %v1079 = vrot.slane %v1060, 4
      %v1080 = vsel %vm205, %v1072, %v1079
      %v1082 = vunpack.c.l.s4 1934713408
      %v1083 = vunpack.c.0.s8 %v1082
      %v1084 = vperm.slane %v1078, %v1083
      %v1086 = vunpack.c.l.s4 1934713408
      %v1087 = vunpack.c.0.s8 %v1086
      %v1088 = vperm.slane %v1080, %v1087
      %v1089 = vrot.slane %v1076, 4
      %v1090 = vsel %vm205, %v1089, %v1064
      %v1091 = vrot.slane %v1064, 4
      %v1092 = vsel %vm205, %v1076, %v1091
      %v1094 = vunpack.c.l.s4 1934713408
      %v1095 = vunpack.c.0.s8 %v1094
      %v1096 = vperm.slane %v1090, %v1095
      %v1098 = vunpack.c.l.s4 1934713408
      %v1099 = vunpack.c.0.s8 %v1098
      %v1100 = vperm.slane %v1092, %v1099
      %v1101 = vrot.slane %v1084, 4
      %v1102 = vsel %vm205, 0.0, %v1101
      %v1103 = vrot.slane %v1088, 4
      %v1104 = vsel %vm205, 0.0, %v1103
      %v1105 = vrot.slane %v1096, 4
      %v1106 = vsel %vm205, 0.0, %v1105
      %v1107 = vrot.slane %v1100, 4
      %v1108 = vsel %vm205, 0.0, %v1107
      %v1109 = vsel %vm205, %v1103, %v1084
      %v1111 = vunpack.c.l.s4 1983009808
      %v1112 = vunpack.c.0.s8 %v1111
      %v1113 = vperm.slane %v1109, %v1112
      %v1114 = vrot.slane %v1104, 4
      %v1115 = vsel %vm205, %v1114, %v1102
      %v1117 = vunpack.c.l.s4 1983009808
      %v1118 = vunpack.c.0.s8 %v1117
      %v1119 = vperm.slane %v1115, %v1118
      %v1120 = vsel %vm205, %v1107, %v1096
      %v1122 = vunpack.c.l.s4 1983009808
      %v1123 = vunpack.c.0.s8 %v1122
      %v1124 = vperm.slane %v1120, %v1123
      %v1125 = vrot.slane %v1108, 4
      %v1126 = vsel %vm205, %v1125, %v1106
      %v1128 = vunpack.c.l.s4 1983009808
      %v1129 = vunpack.c.0.s8 %v1128
      %v1130 = vperm.slane %v1126, %v1129
      %v1131 = vrot.slane %v1119, 4
      %v1132 = vsel %vm205, %v1131, %v1113
      %v1133 = vrot.slane %v1113, 4
      %v1134 = vsel %vm205, %v1119, %v1133
      %v1136 = vunpack.c.l.s4 1934713408
      %v1137 = vunpack.c.0.s8 %v1136
      %v1138 = vperm.slane %v1132, %v1137
      %v1140 = vunpack.c.l.s4 1934713408
      %v1141 = vunpack.c.0.s8 %v1140
      %v1142 = vperm.slane %v1134, %v1141
      %v1143 = vrot.slane %v1130, 4
      %v1144 = vsel %vm205, %v1143, %v1124
      %v1145 = vrot.slane %v1124, 4
      %v1146 = vsel %vm205, %v1130, %v1145
      %v1148 = vunpack.c.l.s4 1934713408
      %v1149 = vunpack.c.0.s8 %v1148
      %v1150 = vperm.slane %v1144, %v1149
      %v1152 = vunpack.c.l.s4 1934713408
      %v1153 = vunpack.c.0.s8 %v1152
      %v1154 = vperm.slane %v1146, %v1153
      %v1155 = vrot.slane %v1150, 4
      %v1156 = vsel %vm205, %v1155, %v1138
      %v1157 = vrot.slane %v1138, 4
      %v1158 = vsel %vm205, %v1150, %v1157
      %v1159 = vrot.slane %v1154, 4
      %v1160 = vsel %vm205, %v1159, %v1142
      %v1161 = vrot.slane %v1142, 4
      %v1162 = vsel %vm205, %v1154, %v1161
      %1164 = vrot.lane.b32.xlu0 %v1158, 8
      %v1165 = vpop.permute.xlu0 %1164
      %1168 = vrot.lane.b32.xlu0 %v1160, 16
      %v1169 = vpop.permute.xlu0 %1168
      %1172 = vrot.lane.b32.xlu0 %v1162, 24
      %v1173 = vpop.permute.xlu0 %1172
      %v1175 = vsel %vm799, %v1156, %v1165
      %v1176 = vsel %vm916, %v1175, %v1169
      %vm1177 = vcmask 195584
      %v1178 = vsel %vm1177, %v1176, %v1173
      %vm1179 = vcmask 261120
      %1180 = vst.msk [vmem:[%s189] sm:$0xff] %vm1179, %v1178
      %p1181 = scmp.lt.s32.totalorder %s17, 1
      %s1182 = scalar_select %p1181, %s17, 1
      %p1183 = scmp.lt.s32.totalorder %s18, 0
      %s1184 = scalar_select %p1183, %s18, 0
      %s1185 = sadd.s32 %s1184, %s1182
      %s1186 = smul.addr %s1185, 8
      %s1187 = scalar_lea.vmem %s2, %s1186
      // Predicated region
      $region29: #{_lambda_.33} parent=27 // pred_check
        %p1188 = pneg %p99
      $region30: #{_lambda_.33} parent=27 // pred_check_branch
        %1190 = sbr.rel (%p1188) target = $region32
      $region31: #{_lambda_.33} parent=27 // pred_region
        _
      $region32: #{_lambda_.33} parent=27 // pred_fallthru
        _
    $region28: #{_lambda_.33} parent=5 // pred_fallthru
      _
    %p1191 = scmp.le.s32.totalorder 2, %s8
    // Predicated region
    $region33: #{_lambda_.33} parent=5 // pred_check
      %p1192 = pneg %p1191
    $region34: #{_lambda_.33} parent=5 // pred_check_branch
      %1194 = sbr.rel (%p1192) target = $region36
    $region35: #{_lambda_.33} parent=5 // pred_region
      %s1195 = ssub.s32 %s8, 2
      // Predicated region
      $region37: #{_lambda_.33} parent=35 // pred_check
        %p1196 = pneg %p105
      $region38: #{_lambda_.33} parent=35 // pred_check_branch
        %1198 = sbr.rel (%p1196) target = $region40
      $region39: #{_lambda_.33} parent=35 // pred_region
        %p1199 = scmp.lt.s32.totalorder %s19, 1
        %s1200 = scalar_select %p1199, %s19, 1
        %p1201 = scmp.lt.s32.totalorder %s20, 0
        %s1202 = scalar_select %p1201, %s20, 0
        %s1203 = sadd.s32 %s1202, %s1200
        %s1204 = smul.addr %s1203, 8
        %s1205 = scalar_lea.vmem %s2, %s1204
      $region40: #{_lambda_.33} parent=35 // pred_fallthru
        _
    $region36: #{_lambda_.33} parent=5 // pred_fallthru
      _
  $region6: #{_lambda_.33} parent=0 // loop_footer
    %s12 = sadd.s32 1, %s8
  $region7: #{_lambda_.33} parent=0 // loop_footer_branch
    %7 = sbr.rel target = $region3
  $region8: #{_lambda_.33} parent=0 // loop_exit
    _

// kernel: _lambda_.36
$region0: #{_lambda_.36}
  #allocation0 [shape = 'u32[]', space=smem, size = 0x4, offset = 0x4, fixed_abs, tag = 'smem constant byte address 0x4 - core index']
  #allocation1 [shape = 'u32[72,128]{1,0:T(1,128)}', space=vmem, size = 0x9000, scoped, tag = 'internal scratch']
  #allocation2 [shape = 'f32[16,32]{1,0:T(8,128)}', space=vmem, size = 0x2000, scoped, tag = 'scratch operand']
  %s0 = inlined_call_operand.vmem [shape: f32[16,128], index: 0, kind: input, shape index: {}]
  %s1 = inlined_call_operand.vmem [shape: f32[128,32], index: 1, kind: input, shape index: {}]
  %s2 = inlined_call_operand.hbm [shape: f32[1,32], index: 2, kind: input, shape index: {}]
  %s3 = inlined_call_operand.vmem [shape: f32[16,32], index: 3, kind: input, shape index: {}]
  %s4 = inlined_call_operand.vmem [shape: f32[16,32], index: 4, kind: output, shape index: {}]
  %s5 = sld [smem:[#allocation0]]
  $region38: #{_lambda_.36} parent=0
    _
  %s7 = ssub.s32 1, %s5
  %s8 = scalar_select 0, %s7, %s5
  $region1: #{_lambda_.36} parent=0
    #allocation3 [shape = 'u8[512]{0}', space=vmem, size = 0x400, scoped, tag = 'input window, operand 2, single buffered']
    #allocation4 [shape = 's32[1]{0}', space=sflag, size = 0x4, scoped, tag = 'scoped memory for _lambda_.36']
    %9 = vsyncpa [#allocation4], 0
    // Predicated region
    $region2: #{_lambda_.36} parent=1 // pred_check
      _
    $region3: #{_lambda_.36} parent=1 // pred_check_branch
      %11 = sbr.rel (0) target = $region5
    $region4: #{_lambda_.36} parent=1 // pred_region
      _
    $region5: #{_lambda_.36} parent=1 // pred_fallthru
      _
    // Predicated region
    $region6: #{_lambda_.36} parent=1 // pred_check
      _
    $region7: #{_lambda_.36} parent=1 // pred_check_branch
      %13 = sbr.rel (0) target = $region9
    $region8: #{_lambda_.36} parent=1 // pred_region
      _
    $region9: #{_lambda_.36} parent=1 // pred_fallthru
      _
    // Predicated region
    $region10: #{_lambda_.36} parent=1 // pred_check
      _
    $region11: #{_lambda_.36} parent=1 // pred_check_branch
      %15 = sbr.rel (0) target = $region13
    $region12: #{_lambda_.36} parent=1 // pred_region
      %17 = vsyncadd [#allocation4], 0
      %s19 = sshll.u32 %s2, 4
      %s20 = int_to_ptr.hbm [resolvable:$true] %s19
      %s21 = sshll.u32 [#allocation3], 4
      %s22 = int_to_ptr.vmem [resolvable:$true] %s21
      %24 = dma.hbm_to_vmem [thread:$0]  %s20, 16, %s22, [#allocation4]
    $region13: #{_lambda_.36} parent=1 // pred_fallthru
      _
    // Predicated region
    $region14: #{_lambda_.36} parent=1 // pred_check
      _
    $region15: #{_lambda_.36} parent=1 // pred_check_branch
      %26 = sbr.rel (0) target = $region17
    $region16: #{_lambda_.36} parent=1 // pred_region
      _
    $region17: #{_lambda_.36} parent=1 // pred_fallthru
      _
    // Predicated region
    $region18: #{_lambda_.36} parent=1 // pred_check
      _
    $region19: #{_lambda_.36} parent=1 // pred_check_branch
      %28 = sbr.rel (0) target = $region21
    $region20: #{_lambda_.36} parent=1 // pred_region
      %30 = dma.done [#allocation4], 16
    $region21: #{_lambda_.36} parent=1 // pred_fallthru
      _
    %p31 = scmp.eq.s32.totalorder 0, 0
    // Predicated region
    $region22: #{_lambda_.36} parent=1 // pred_check
      %p32 = pneg %p31
    $region23: #{_lambda_.36} parent=1 // pred_check_branch
      %34 = sbr.rel (%p32) target = $region25
    $region24: #{_lambda_.36} parent=1 // pred_region
      %vm35 = vcmask 261120
      %36 = vst.msk [vmem:[#allocation2] sm:$0xff] %vm35, 0.0
      %37 = vst.msk [vmem:[#allocation2 + $0x8] sm:$0xff] %vm35, 0.0
    $region25: #{_lambda_.36} parent=1 // pred_fallthru
      _
    %v38 = vld [vmem:[%s0] sm:$0xff]
    %v39 = vld [vmem:[%s0 + $0x8] sm:$0xff]
    %v40 = vld [vmem:[#allocation2] sm:$0xff]
    %v41 = vld [vmem:[#allocation2 + $0x8] sm:$0xff]
    %v42 = vld [vmem:[%s1] sm:$0xff]
    %v43 = vld [vmem:[%s1 + $0x8] sm:$0xff]
    %v44 = vld [vmem:[%s1 + $0x10] sm:$0xff]
    %v45 = vld [vmem:[%s1 + $0x18] sm:$0xff]
    %v46 = vld [vmem:[%s1 + $0x20] sm:$0xff]
    %v47 = vld [vmem:[%s1 + $0x28] sm:$0xff]
    %v48 = vld [vmem:[%s1 + $0x30] sm:$0xff]
    %v49 = vld [vmem:[%s1 + $0x38] sm:$0xff]
    %v50 = vld [vmem:[%s1 + $0x40] sm:$0xff]
    %v51 = vld [vmem:[%s1 + $0x48] sm:$0xff]
    %v52 = vld [vmem:[%s1 + $0x50] sm:$0xff]
    %v53 = vld [vmem:[%s1 + $0x58] sm:$0xff]
    %v54 = vld [vmem:[%s1 + $0x60] sm:$0xff]
    %v55 = vld [vmem:[%s1 + $0x68] sm:$0xff]
    %v56 = vld [vmem:[%s1 + $0x70] sm:$0xff]
    %v57 = vld [vmem:[%s1 + $0x78] sm:$0xff]
    %58 = vmatpush.msra.mxu0 %v57
    %59 = vmatpush.msra.mxu0 %v56
    %60 = vmatpush.msra.mxu0 %v55
    %61 = vmatpush.msra.mxu0 %v54
    %62 = vmatpush.msra.mxu0 %v53
    %63 = vmatpush.msra.mxu0 %v52
    %64 = vmatpush.msra.mxu0 %v51
    %65 = vmatpush.msra.mxu0 %v50
    %66 = vmatpush.msra.mxu0 %v49
    %67 = vmatpush.msra.mxu0 %v48
    %68 = vmatpush.msra.mxu0 %v47
    %69 = vmatpush.msra.mxu0 %v46
    %70 = vmatpush.msra.mxu0 %v45
    %71 = vmatpush.msra.mxu0 %v44
    %72 = vmatpush.msra.mxu0 %v43
    %73 = vmatpush.msra.mxu0 %v42
    %74 = vmatmul.f32.gmra.mxu0 %v38
    %v75 = vpop.f32.mrf.mxu0
    %v76 = vadd.f32 0.0, %v75
    %77 = vmatmul.f32.gmra.mxu0 %v39
    %v78 = vpop.f32.mrf.mxu0
    %v79 = vadd.f32 0.0, %v78
    %80 = vdwg.mxu0
    %v81 = vadd.f32 %v40, %v76
    %v82 = vadd.f32 %v41, %v79
    %vm83 = vcmask 261120
    %84 = vst.msk [vmem:[#allocation2] sm:$0xff] %vm83, %v81
    %85 = vst.msk [vmem:[#allocation2 + $0x8] sm:$0xff] %vm83, %v82
    // Predicated region
    $region26: #{_lambda_.36} parent=1 // pred_check
      %p86 = pneg %p31
    $region27: #{_lambda_.36} parent=1 // pred_check_branch
      %88 = sbr.rel (%p86) target = $region29
    $region28: #{_lambda_.36} parent=1 // pred_region
      %v89 = vld [vmem:[#allocation2] sm:$0xff]
      %v90 = vld [vmem:[#allocation2 + $0x8] sm:$0xff]
      %v91 = vld [vmem:[#allocation3] sm:$0x1]
      %v93 = vperm.slane %v91, 0
      %v95 = vadd.f32 %v89, %v93
      %v96 = vadd.f32 %v90, %v93
      %v97 = vld [vmem:[%s3] sm:$0xff]
      %v98 = vld [vmem:[%s3 + $0x8] sm:$0xff]
      %v99 = vadd.f32 %v95, %v97
      %v100 = vadd.f32 %v96, %v98
      %101 = vst.msk [vmem:[%s4] sm:$0xff] %vm83, %v99
      %102 = vst.msk [vmem:[%s4 + $0x8] sm:$0xff] %vm83, %v100
    $region29: #{_lambda_.36} parent=1 // pred_fallthru
      _
    // Predicated region
    $region30: #{_lambda_.36} parent=1 // pred_check
      _
    $region31: #{_lambda_.36} parent=1 // pred_check_branch
      %104 = sbr.rel (0) target = $region33
    $region32: #{_lambda_.36} parent=1 // pred_region
      _
    $region33: #{_lambda_.36} parent=1 // pred_fallthru
      _
    // Predicated region
    $region34: #{_lambda_.36} parent=1 // pred_check
      _
    $region35: #{_lambda_.36} parent=1 // pred_check_branch
      %106 = sbr.rel (0) target = $region37
    $region36: #{_lambda_.36} parent=1 // pred_region
      _
    $region37: #{_lambda_.36} parent=1 // pred_fallthru
      _
    %107 = vsyncpa [#allocation4], 1

// kernel: _lambda_.37
$region0: #{_lambda_.37}
  #allocation0 [shape = 'u32[]', space=smem, size = 0x4, offset = 0x4, fixed_abs, tag = 'smem constant byte address 0x4 - core index']
  #allocation1 [shape = 'u32[72,128]{1,0:T(1,128)}', space=vmem, size = 0x9000, scoped, tag = 'internal scratch']
  #allocation2 [shape = 'f32[16,32]{1,0:T(8,128)}', space=vmem, size = 0x2000, scoped, tag = 'scratch operand']
  %s0 = inlined_call_operand.vmem [shape: f32[16,32], index: 0, kind: input, shape index: {}]
  %s1 = inlined_call_operand.hbm [shape: f32[1,32], index: 1, kind: input, shape index: {}]
  %s2 = inlined_call_operand.hbm [shape: f32[1,32], index: 2, kind: input, shape index: {}]
  %s3 = inlined_call_operand.vmem [shape: f32[32,32], index: 3, kind: input, shape index: {}]
  %s4 = inlined_call_operand.hbm [shape: f32[1,32], index: 4, kind: input, shape index: {}]
  %s5 = inlined_call_operand.vmem [shape: f32[16,32], index: 5, kind: output, shape index: {}]
  %s6 = sld [smem:[#allocation0]]
  $region50: #{_lambda_.37} parent=0
    _
  %s8 = ssub.s32 1, %s6
  %s9 = scalar_select 0, %s8, %s6
  $region1: #{_lambda_.37} parent=0
    #allocation3 [shape = 'u8[512]{0}', space=vmem, size = 0x400, scoped, tag = 'input window, operand 1, single buffered']
    #allocation4 [shape = 's32[1]{0}', space=sflag, size = 0x4, scoped, tag = 'scoped memory for _lambda_.37']
    #allocation5 [shape = 'u8[512]{0}', space=vmem, size = 0x400, scoped, tag = 'input window, operand 2, single buffered']
    #allocation6 [shape = 's32[1]{0}', space=sflag, size = 0x4, scoped, tag = 'scoped memory for _lambda_.37']
    #allocation7 [shape = 'u8[512]{0}', space=vmem, size = 0x400, scoped, tag = 'input window, operand 4, single buffered']
    %10 = vsyncpa [#allocation4], 0
    %11 = vsyncpa [#allocation6], 0
    // Predicated region
    $region2: #{_lambda_.37} parent=1 // pred_check
      _
    $region3: #{_lambda_.37} parent=1 // pred_check_branch
      %13 = sbr.rel (0) target = $region5
    $region4: #{_lambda_.37} parent=1 // pred_region
      _
    $region5: #{_lambda_.37} parent=1 // pred_fallthru
      _
    // Predicated region
    $region6: #{_lambda_.37} parent=1 // pred_check
      _
    $region7: #{_lambda_.37} parent=1 // pred_check_branch
      %15 = sbr.rel (0) target = $region9
    $region8: #{_lambda_.37} parent=1 // pred_region
      %17 = vsyncadd [#allocation4], 0
      %s19 = sshll.u32 %s1, 4
      %s20 = int_to_ptr.hbm [resolvable:$true] %s19
      %s21 = sshll.u32 [#allocation3], 4
      %s22 = int_to_ptr.vmem [resolvable:$true] %s21
      %24 = dma.hbm_to_vmem [thread:$0]  %s20, 16, %s22, [#allocation4]
    $region9: #{_lambda_.37} parent=1 // pred_fallthru
      _
    // Predicated region
    $region10: #{_lambda_.37} parent=1 // pred_check
      _
    $region11: #{_lambda_.37} parent=1 // pred_check_branch
      %26 = sbr.rel (0) target = $region13
    $region12: #{_lambda_.37} parent=1 // pred_region
      %28 = vsyncadd [#allocation6], 0
      %s30 = sshll.u32 %s2, 4
      %s31 = int_to_ptr.hbm [resolvable:$true] %s30
      %s32 = sshll.u32 [#allocation5], 4
      %s33 = int_to_ptr.vmem [resolvable:$true] %s32
      %35 = dma.hbm_to_vmem [thread:$0]  %s31, 16, %s33, [#allocation6]
    $region13: #{_lambda_.37} parent=1 // pred_fallthru
      _
    // Predicated region
    $region14: #{_lambda_.37} parent=1 // pred_check
      _
    $region15: #{_lambda_.37} parent=1 // pred_check_branch
      %37 = sbr.rel (0) target = $region17
    $region16: #{_lambda_.37} parent=1 // pred_region
      _
    $region17: #{_lambda_.37} parent=1 // pred_fallthru
      _
    // Predicated region
    $region18: #{_lambda_.37} parent=1 // pred_check
      _
    $region19: #{_lambda_.37} parent=1 // pred_check_branch
      %39 = sbr.rel (0) target = $region21
    $region20: #{_lambda_.37} parent=1 // pred_region
      %41 = vsyncadd [#allocation6], 0
      %s43 = sshll.u32 %s4, 4
      %s44 = int_to_ptr.hbm [resolvable:$true] %s43
      %s45 = sshll.u32 [#allocation7], 4
      %s46 = int_to_ptr.vmem [resolvable:$true] %s45
      %48 = dma.hbm_to_vmem [thread:$0]  %s44, 16, %s46, [#allocation6]
    $region21: #{_lambda_.37} parent=1 // pred_fallthru
      _
    // Predicated region
    $region22: #{_lambda_.37} parent=1 // pred_check
      _
    $region23: #{_lambda_.37} parent=1 // pred_check_branch
      %50 = sbr.rel (0) target = $region25
    $region24: #{_lambda_.37} parent=1 // pred_region
      %52 = dma.done [#allocation4], 16
    $region25: #{_lambda_.37} parent=1 // pred_fallthru
      _
    // Predicated region
    $region26: #{_lambda_.37} parent=1 // pred_check
      _
    $region27: #{_lambda_.37} parent=1 // pred_check_branch
      %54 = sbr.rel (0) target = $region29
    $region28: #{_lambda_.37} parent=1 // pred_region
      %56 = dma.done [#allocation6], 16
    $region29: #{_lambda_.37} parent=1 // pred_fallthru
      _
    // Predicated region
    $region30: #{_lambda_.37} parent=1 // pred_check
      _
    $region31: #{_lambda_.37} parent=1 // pred_check_branch
      %58 = sbr.rel (0) target = $region33
    $region32: #{_lambda_.37} parent=1 // pred_region
      %60 = dma.done [#allocation6], 16
    $region33: #{_lambda_.37} parent=1 // pred_fallthru
      _
    %p61 = scmp.eq.s32.totalorder 0, 0
    // Predicated region
    $region34: #{_lambda_.37} parent=1 // pred_check
      %p62 = pneg %p61
    $region35: #{_lambda_.37} parent=1 // pred_check_branch
      %64 = sbr.rel (%p62) target = $region37
    $region36: #{_lambda_.37} parent=1 // pred_region
      %vm65 = vcmask 261120
      %66 = vst.msk [vmem:[#allocation2] sm:$0xff] %vm65, 0.0
      %67 = vst.msk [vmem:[#allocation2 + $0x8] sm:$0xff] %vm65, 0.0
    $region37: #{_lambda_.37} parent=1 // pred_fallthru
      _
    %v68 = vld [vmem:[%s0] sm:$0xff]
    %v69 = vld [vmem:[%s0 + $0x8] sm:$0xff]
    %vm70 = vcmask 261120
    %v71 = vsel %vm70, %v68, 0.0
    %72 = vadd.xlane.f32.xlu0 %v71
    %v73 = vpop.xlane.xlu0 %72
    %v74 = vsel %vm70, %v69, 0.0
    %75 = vadd.xlane.f32.xlu0 %v74
    %v76 = vpop.xlane.xlu0 %75
    %v77 = vrcp.pop 32.0
    %v78 = vmul.f32 32.0, %v77
    %v79 = vsub.f32 1.0, %v78
    %v80 = vmul.f32 %v77, %v79
    %v81 = vadd.f32 %v77, %v80
    %vm82 = vweird.f32 %v77
    %v83 = vsel %vm82, %v77, %v81
    %v84 = vmul.f32 %v73, %v83
    %v85 = vmul.f32 %v76, %v83
    %v86 = vsub.f32 %v68, %v84
    %v87 = vsub.f32 %v69, %v85
    %v88 = vmul.f32 %v86, %v86
    %v89 = vmul.f32 %v87, %v87
    %v90 = vsel %vm70, %v88, 0.0
    %91 = vadd.xlane.f32.xlu0 %v90
    %v92 = vpop.xlane.xlu0 %91
    %v93 = vsel %vm70, %v89, 0.0
    %94 = vadd.xlane.f32.xlu0 %v93
    %v95 = vpop.xlane.xlu0 %94
    %v96 = vmul.f32 %v92, %v83
    %v97 = vmul.f32 %v95, %v83
    %v98 = vadd.f32 %v96, 1e-05
    %v99 = vadd.f32 %v97, 1e-05
    %v100 = vrsqrt.pop %v98
    %v101 = vmul.f32 %v100, %v98
    %v102 = vmul.f32 %v101, %v100
    %v103 = vmul.f32 0.5, %v102
    %v104 = vsub.f32 1.5, %v103
    %v105 = vmul.f32 %v100, %v104
    %vm106 = vweird.f32 %v98
    %vm107 = vweird.f32 %v100
    %vm108 = vmor %vm106, %vm107
    %v109 = vsel %vm108, %v100, %v105
    %v110 = vrsqrt.pop %v99
    %v111 = vmul.f32 %v110, %v99
    %v112 = vmul.f32 %v111, %v110
    %v113 = vmul.f32 0.5, %v112
    %v114 = vsub.f32 1.5, %v113
    %v115 = vmul.f32 %v110, %v114
    %vm116 = vweird.f32 %v99
    %vm117 = vweird.f32 %v110
    %vm118 = vmor %vm116, %vm117
    %v119 = vsel %vm118, %v110, %v115
    %v120 = vmul.f32 %v86, %v109
    %v121 = vmul.f32 %v87, %v119
    %v122 = vld [vmem:[#allocation3] sm:$0x1]
    %v124 = vperm.slane %v122, 0
    %v126 = vmul.f32 %v120, %v124
    %v127 = vmul.f32 %v121, %v124
    %v128 = vld [vmem:[#allocation5] sm:$0x1]
    %v130 = vperm.slane %v128, 0
    %v132 = vadd.f32 %v126, %v130
    %v133 = vadd.f32 %v127, %v130
    %v134 = vld [vmem:[#allocation2] sm:$0xff]
    %v135 = vld [vmem:[#allocation2 + $0x8] sm:$0xff]
    %v136 = vld [vmem:[%s3] sm:$0xff]
    %v137 = vld [vmem:[%s3 + $0x8] sm:$0xff]
    %v138 = vld [vmem:[%s3 + $0x10] sm:$0xff]
    %v139 = vld [vmem:[%s3 + $0x18] sm:$0xff]
    %v141 = vsel %vm70, %v132, 0
    %v144 = vsel %vm70, %v133, 0
    %146 = vmatpush.msra.mxu0 0.0
    %147 = vmatpush.msra.mxu0 0.0
    %148 = vmatpush.msra.mxu0 0.0
    %149 = vmatpush.msra.mxu0 0.0
    %150 = vmatpush.msra.mxu0 0.0
    %151 = vmatpush.msra.mxu0 0.0
    %152 = vmatpush.msra.mxu0 0.0
    %153 = vmatpush.msra.mxu0 0.0
    %154 = vmatpush.msra.mxu0 0.0
    %155 = vmatpush.msra.mxu0 0.0
    %156 = vmatpush.msra.mxu0 0.0
    %157 = vmatpush.msra.mxu0 0.0
    %158 = vmatpush.msra.mxu0 %v139
    %159 = vmatpush.msra.mxu0 %v138
    %160 = vmatpush.msra.mxu0 %v137
    %161 = vmatpush.msra.mxu0 %v136
    %162 = vmatmul.f32.gmra.mxu0 %v141
    %v163 = vpop.f32.mrf.mxu0
    %v164 = vadd.f32 0.0, %v163
    %165 = vmatmul.f32.gmra.mxu0 %v144
    %v166 = vpop.f32.mrf.mxu0
    %v167 = vadd.f32 0.0, %v166
    %168 = vdwg.mxu0
    %v169 = vadd.f32 %v134, %v164
    %v170 = vadd.f32 %v135, %v167
    %171 = vst.msk [vmem:[#allocation2] sm:$0xff] %vm70, %v169
    %172 = vst.msk [vmem:[#allocation2 + $0x8] sm:$0xff] %vm70, %v170
    // Predicated region
    $region38: #{_lambda_.37} parent=1 // pred_check
      %p173 = pneg %p61
    $region39: #{_lambda_.37} parent=1 // pred_check_branch
      %175 = sbr.rel (%p173) target = $region41
    $region40: #{_lambda_.37} parent=1 // pred_region
      %v176 = vld [vmem:[#allocation2] sm:$0xff]
      %v177 = vld [vmem:[#allocation2 + $0x8] sm:$0xff]
      %v178 = vld [vmem:[#allocation7] sm:$0x1]
      %v180 = vperm.slane %v178, 0
      %v182 = vadd.f32 %v176, %v180
      %v183 = vadd.f32 %v177, %v180
      %184 = vst.msk [vmem:[%s5] sm:$0xff] %vm70, %v182
      %185 = vst.msk [vmem:[%s5 + $0x8] sm:$0xff] %vm70, %v183
    $region41: #{_lambda_.37} parent=1 // pred_fallthru
      _
    // Predicated region
    $region42: #{_lambda_.37} parent=1 // pred_check
      _
    $region43: #{_lambda_.37} parent=1 // pred_check_branch
      %187 = sbr.rel (0) target = $region45
    $region44: #{_lambda_.37} parent=1 // pred_region
      _
    $region45: #{_lambda_.37} parent=1 // pred_fallthru
      _
    // Predicated region
    $region46: #{_lambda_.37} parent=1 // pred_check
      _
    $region47: #{_lambda_.37} parent=1 // pred_check_branch
      %189 = sbr.rel (0) target = $region49
    $region48: #{_lambda_.37} parent=1 // pred_region
      _
    $region49: #{_lambda_.37} parent=1 // pred_fallthru
      _
    %190 = vsyncpa [#allocation4], 1
    %191 = vsyncpa [#allocation6], 1

// kernel: _lambda_.38
$region0: #{_lambda_.38}
  #allocation0 [shape = 'u32[]', space=smem, size = 0x4, offset = 0x4, fixed_abs, tag = 'smem constant byte address 0x4 - core index']
  #allocation1 [shape = 'u32[72,128]{1,0:T(1,128)}', space=vmem, size = 0x9000, scoped, tag = 'internal scratch']
  #allocation2 [shape = 'f32[16,64]{1,0:T(8,128)}', space=vmem, size = 0x2000, scoped, tag = 'scratch operand']
  %s0 = inlined_call_operand.vmem [shape: f32[16,32], index: 0, kind: input, shape index: {}]
  %s1 = inlined_call_operand.hbm [shape: f32[1,32], index: 1, kind: input, shape index: {}]
  %s2 = inlined_call_operand.hbm [shape: f32[1,32], index: 2, kind: input, shape index: {}]
  %s3 = inlined_call_operand.vmem [shape: f32[32,64], index: 3, kind: input, shape index: {}]
  %s4 = inlined_call_operand.hbm [shape: f32[1,64], index: 4, kind: input, shape index: {}]
  %s5 = inlined_call_operand.vmem [shape: f32[16,64], index: 5, kind: output, shape index: {}]
  %s6 = sld [smem:[#allocation0]]
  $region50: #{_lambda_.38} parent=0
    _
  %s8 = ssub.s32 1, %s6
  %s9 = scalar_select 0, %s8, %s6
  $region1: #{_lambda_.38} parent=0
    #allocation3 [shape = 'u8[512]{0}', space=vmem, size = 0x400, scoped, tag = 'input window, operand 1, single buffered']
    #allocation4 [shape = 's32[1]{0}', space=sflag, size = 0x4, scoped, tag = 'scoped memory for _lambda_.38']
    #allocation5 [shape = 'u8[512]{0}', space=vmem, size = 0x400, scoped, tag = 'input window, operand 2, single buffered']
    #allocation6 [shape = 's32[1]{0}', space=sflag, size = 0x4, scoped, tag = 'scoped memory for _lambda_.38']
    #allocation7 [shape = 'u8[512]{0}', space=vmem, size = 0x400, scoped, tag = 'input window, operand 4, single buffered']
    %10 = vsyncpa [#allocation4], 0
    %11 = vsyncpa [#allocation6], 0
    // Predicated region
    $region2: #{_lambda_.38} parent=1 // pred_check
      _
    $region3: #{_lambda_.38} parent=1 // pred_check_branch
      %13 = sbr.rel (0) target = $region5
    $region4: #{_lambda_.38} parent=1 // pred_region
      _
    $region5: #{_lambda_.38} parent=1 // pred_fallthru
      _
    // Predicated region
    $region6: #{_lambda_.38} parent=1 // pred_check
      _
    $region7: #{_lambda_.38} parent=1 // pred_check_branch
      %15 = sbr.rel (0) target = $region9
    $region8: #{_lambda_.38} parent=1 // pred_region
      %17 = vsyncadd [#allocation4], 0
      %s19 = sshll.u32 %s1, 4
      %s20 = int_to_ptr.hbm [resolvable:$true] %s19
      %s21 = sshll.u32 [#allocation3], 4
      %s22 = int_to_ptr.vmem [resolvable:$true] %s21
      %24 = dma.hbm_to_vmem [thread:$0]  %s20, 16, %s22, [#allocation4]
    $region9: #{_lambda_.38} parent=1 // pred_fallthru
      _
    // Predicated region
    $region10: #{_lambda_.38} parent=1 // pred_check
      _
    $region11: #{_lambda_.38} parent=1 // pred_check_branch
      %26 = sbr.rel (0) target = $region13
    $region12: #{_lambda_.38} parent=1 // pred_region
      %28 = vsyncadd [#allocation6], 0
      %s30 = sshll.u32 %s2, 4
      %s31 = int_to_ptr.hbm [resolvable:$true] %s30
      %s32 = sshll.u32 [#allocation5], 4
      %s33 = int_to_ptr.vmem [resolvable:$true] %s32
      %35 = dma.hbm_to_vmem [thread:$0]  %s31, 16, %s33, [#allocation6]
    $region13: #{_lambda_.38} parent=1 // pred_fallthru
      _
    // Predicated region
    $region14: #{_lambda_.38} parent=1 // pred_check
      _
    $region15: #{_lambda_.38} parent=1 // pred_check_branch
      %37 = sbr.rel (0) target = $region17
    $region16: #{_lambda_.38} parent=1 // pred_region
      _
    $region17: #{_lambda_.38} parent=1 // pred_fallthru
      _
    // Predicated region
    $region18: #{_lambda_.38} parent=1 // pred_check
      _
    $region19: #{_lambda_.38} parent=1 // pred_check_branch
      %39 = sbr.rel (0) target = $region21
    $region20: #{_lambda_.38} parent=1 // pred_region
      %41 = vsyncadd [#allocation6], 0
      %s43 = sshll.u32 %s4, 4
      %s44 = int_to_ptr.hbm [resolvable:$true] %s43
      %s45 = sshll.u32 [#allocation7], 4
      %s46 = int_to_ptr.vmem [resolvable:$true] %s45
      %48 = dma.hbm_to_vmem [thread:$0]  %s44, 16, %s46, [#allocation6]
    $region21: #{_lambda_.38} parent=1 // pred_fallthru
      _
    // Predicated region
    $region22: #{_lambda_.38} parent=1 // pred_check
      _
    $region23: #{_lambda_.38} parent=1 // pred_check_branch
      %50 = sbr.rel (0) target = $region25
    $region24: #{_lambda_.38} parent=1 // pred_region
      %52 = dma.done [#allocation4], 16
    $region25: #{_lambda_.38} parent=1 // pred_fallthru
      _
    // Predicated region
    $region26: #{_lambda_.38} parent=1 // pred_check
      _
    $region27: #{_lambda_.38} parent=1 // pred_check_branch
      %54 = sbr.rel (0) target = $region29
    $region28: #{_lambda_.38} parent=1 // pred_region
      %56 = dma.done [#allocation6], 16
    $region29: #{_lambda_.38} parent=1 // pred_fallthru
      _
    // Predicated region
    $region30: #{_lambda_.38} parent=1 // pred_check
      _
    $region31: #{_lambda_.38} parent=1 // pred_check_branch
      %58 = sbr.rel (0) target = $region33
    $region32: #{_lambda_.38} parent=1 // pred_region
      %60 = dma.done [#allocation6], 16
    $region33: #{_lambda_.38} parent=1 // pred_fallthru
      _
    %p61 = scmp.eq.s32.totalorder 0, 0
    // Predicated region
    $region34: #{_lambda_.38} parent=1 // pred_check
      %p62 = pneg %p61
    $region35: #{_lambda_.38} parent=1 // pred_check_branch
      %64 = sbr.rel (%p62) target = $region37
    $region36: #{_lambda_.38} parent=1 // pred_region
      %vm65 = vcmask 523264
      %66 = vst.msk [vmem:[#allocation2] sm:$0xff] %vm65, 0.0
      %67 = vst.msk [vmem:[#allocation2 + $0x8] sm:$0xff] %vm65, 0.0
    $region37: #{_lambda_.38} parent=1 // pred_fallthru
      _
    %v68 = vld [vmem:[%s0] sm:$0xff]
    %v69 = vld [vmem:[%s0 + $0x8] sm:$0xff]
    %vm70 = vcmask 261120
    %v71 = vsel %vm70, %v68, 0.0
    %72 = vadd.xlane.f32.xlu0 %v71
    %v73 = vpop.xlane.xlu0 %72
    %v74 = vsel %vm70, %v69, 0.0
    %75 = vadd.xlane.f32.xlu0 %v74
    %v76 = vpop.xlane.xlu0 %75
    %v77 = vrcp.pop 32.0
    %v78 = vmul.f32 32.0, %v77
    %v79 = vsub.f32 1.0, %v78
    %v80 = vmul.f32 %v77, %v79
    %v81 = vadd.f32 %v77, %v80
    %vm82 = vweird.f32 %v77
    %v83 = vsel %vm82, %v77, %v81
    %v84 = vmul.f32 %v73, %v83
    %v85 = vmul.f32 %v76, %v83
    %v86 = vsub.f32 %v68, %v84
    %v87 = vsub.f32 %v69, %v85
    %v88 = vmul.f32 %v86, %v86
    %v89 = vmul.f32 %v87, %v87
    %v90 = vsel %vm70, %v88, 0.0
    %91 = vadd.xlane.f32.xlu0 %v90
    %v92 = vpop.xlane.xlu0 %91
    %v93 = vsel %vm70, %v89, 0.0
    %94 = vadd.xlane.f32.xlu0 %v93
    %v95 = vpop.xlane.xlu0 %94
    %v96 = vmul.f32 %v92, %v83
    %v97 = vmul.f32 %v95, %v83
    %v98 = vadd.f32 %v96, 1e-05
    %v99 = vadd.f32 %v97, 1e-05
    %v100 = vrsqrt.pop %v98
    %v101 = vmul.f32 %v100, %v98
    %v102 = vmul.f32 %v101, %v100
    %v103 = vmul.f32 0.5, %v102
    %v104 = vsub.f32 1.5, %v103
    %v105 = vmul.f32 %v100, %v104
    %vm106 = vweird.f32 %v98
    %vm107 = vweird.f32 %v100
    %vm108 = vmor %vm106, %vm107
    %v109 = vsel %vm108, %v100, %v105
    %v110 = vrsqrt.pop %v99
    %v111 = vmul.f32 %v110, %v99
    %v112 = vmul.f32 %v111, %v110
    %v113 = vmul.f32 0.5, %v112
    %v114 = vsub.f32 1.5, %v113
    %v115 = vmul.f32 %v110, %v114
    %vm116 = vweird.f32 %v99
    %vm117 = vweird.f32 %v110
    %vm118 = vmor %vm116, %vm117
    %v119 = vsel %vm118, %v110, %v115
    %v120 = vmul.f32 %v86, %v109
    %v121 = vmul.f32 %v87, %v119
    %v122 = vld [vmem:[#allocation3] sm:$0x1]
    %v124 = vperm.slane %v122, 0
    %v126 = vmul.f32 %v120, %v124
    %v127 = vmul.f32 %v121, %v124
    %v128 = vld [vmem:[#allocation5] sm:$0x1]
    %v130 = vperm.slane %v128, 0
    %v132 = vadd.f32 %v126, %v130
    %v133 = vadd.f32 %v127, %v130
    %v134 = vld [vmem:[#allocation2] sm:$0xff]
    %v135 = vld [vmem:[#allocation2 + $0x8] sm:$0xff]
    %v136 = vld [vmem:[%s3] sm:$0xff]
    %v137 = vld [vmem:[%s3 + $0x8] sm:$0xff]
    %v138 = vld [vmem:[%s3 + $0x10] sm:$0xff]
    %v139 = vld [vmem:[%s3 + $0x18] sm:$0xff]
    %v141 = vsel %vm70, %v132, 0
    %v144 = vsel %vm70, %v133, 0
    %146 = vmatpush.msra.mxu0 0.0
    %147 = vmatpush.msra.mxu0 0.0
    %148 = vmatpush.msra.mxu0 0.0
    %149 = vmatpush.msra.mxu0 0.0
    %150 = vmatpush.msra.mxu0 0.0
    %151 = vmatpush.msra.mxu0 0.0
    %152 = vmatpush.msra.mxu0 0.0
    %153 = vmatpush.msra.mxu0 0.0
    %154 = vmatpush.msra.mxu0 0.0
    %155 = vmatpush.msra.mxu0 0.0
    %156 = vmatpush.msra.mxu0 0.0
    %157 = vmatpush.msra.mxu0 0.0
    %158 = vmatpush.msra.mxu0 %v139
    %159 = vmatpush.msra.mxu0 %v138
    %160 = vmatpush.msra.mxu0 %v137
    %161 = vmatpush.msra.mxu0 %v136
    %162 = vmatmul.f32.gmra.mxu0 %v141
    %v163 = vpop.f32.mrf.mxu0
    %v164 = vadd.f32 0.0, %v163
    %165 = vmatmul.f32.gmra.mxu0 %v144
    %v166 = vpop.f32.mrf.mxu0
    %v167 = vadd.f32 0.0, %v166
    %168 = vdwg.mxu0
    %v169 = vadd.f32 %v134, %v164
    %v170 = vadd.f32 %v135, %v167
    %vm171 = vcmask 523264
    %172 = vst.msk [vmem:[#allocation2] sm:$0xff] %vm171, %v169
    %173 = vst.msk [vmem:[#allocation2 + $0x8] sm:$0xff] %vm171, %v170
    // Predicated region
    $region38: #{_lambda_.38} parent=1 // pred_check
      %p174 = pneg %p61
    $region39: #{_lambda_.38} parent=1 // pred_check_branch
      %176 = sbr.rel (%p174) target = $region41
    $region40: #{_lambda_.38} parent=1 // pred_region
      %v177 = vld [vmem:[#allocation2] sm:$0xff]
      %v178 = vld [vmem:[#allocation2 + $0x8] sm:$0xff]
      %v179 = vld [vmem:[#allocation7] sm:$0x1]
      %v181 = vperm.slane %v179, 0
      %v183 = vadd.f32 %v177, %v181
      %v184 = vadd.f32 %v178, %v181
      %185 = vst.msk [vmem:[%s5] sm:$0xff] %vm171, %v183
      %186 = vst.msk [vmem:[%s5 + $0x8] sm:$0xff] %vm171, %v184
    $region41: #{_lambda_.38} parent=1 // pred_fallthru
      _
    // Predicated region
    $region42: #{_lambda_.38} parent=1 // pred_check
      _
    $region43: #{_lambda_.38} parent=1 // pred_check_branch
      %188 = sbr.rel (0) target = $region45
    $region44: #{_lambda_.38} parent=1 // pred_region
      _
    $region45: #{_lambda_.38} parent=1 // pred_fallthru
      _
    // Predicated region
    $region46: #{_lambda_.38} parent=1 // pred_check
      _
    $region47: #{_lambda_.38} parent=1 // pred_check_branch
      %190 = sbr.rel (0) target = $region49
    $region48: #{_lambda_.38} parent=1 // pred_region
      _
    $region49: #{_lambda_.38} parent=1 // pred_fallthru
      _
    %191 = vsyncpa [#allocation4], 1
    %192 = vsyncpa [#allocation6], 1

// kernel: _lambda_.46
$region0: #{_lambda_.46}
  #allocation0 [shape = 'u32[]', space=smem, size = 0x4, offset = 0x4, fixed_abs, tag = 'smem constant byte address 0x4 - core index']
  #allocation1 [shape = 'u32[72,128]{1,0:T(1,128)}', space=vmem, size = 0x9000, scoped, tag = 'internal scratch']
  #allocation2 [shape = 'f32[16,32]{1,0:T(8,128)}', space=vmem, size = 0x2000, scoped, tag = 'scratch operand']
  %s0 = inlined_call_operand.vmem [shape: f32[16,32], index: 0, kind: input, shape index: {}]
  %s1 = inlined_call_operand.vmem [shape: f32[32,32], index: 1, kind: input, shape index: {}]
  %s2 = inlined_call_operand.vmem [shape: f32[1,32], index: 2, kind: input, shape index: {}]
  %s3 = inlined_call_operand.vmem [shape: f32[16,32], index: 3, kind: input, shape index: {}]
  %s4 = inlined_call_operand.vmem [shape: f32[16,32], index: 4, kind: output, shape index: {}]
  %s5 = sld [smem:[#allocation0]]
  $region34: #{_lambda_.46} parent=0
    _
  %s7 = ssub.s32 1, %s5
  %s8 = scalar_select 0, %s7, %s5
  // Predicated region
  $region2: #{_lambda_.46} parent=0 // pred_check
    _
  $region3: #{_lambda_.46} parent=0 // pred_check_branch
    %10 = sbr.rel (0) target = $region5
  $region4: #{_lambda_.46} parent=0 // pred_region
    _
  $region5: #{_lambda_.46} parent=0 // pred_fallthru
    _
  // Predicated region
  $region6: #{_lambda_.46} parent=0 // pred_check
    _
  $region7: #{_lambda_.46} parent=0 // pred_check_branch
    %12 = sbr.rel (0) target = $region9
  $region8: #{_lambda_.46} parent=0 // pred_region
    _
  $region9: #{_lambda_.46} parent=0 // pred_fallthru
    _
  // Predicated region
  $region10: #{_lambda_.46} parent=0 // pred_check
    _
  $region11: #{_lambda_.46} parent=0 // pred_check_branch
    %14 = sbr.rel (0) target = $region13
  $region12: #{_lambda_.46} parent=0 // pred_region
    _
  $region13: #{_lambda_.46} parent=0 // pred_fallthru
    _
  // Predicated region
  $region14: #{_lambda_.46} parent=0 // pred_check
    _
  $region15: #{_lambda_.46} parent=0 // pred_check_branch
    %16 = sbr.rel (0) target = $region17
  $region16: #{_lambda_.46} parent=0 // pred_region
    _
  $region17: #{_lambda_.46} parent=0 // pred_fallthru
    _
  %p17 = scmp.eq.s32.totalorder 0, 0
  // Predicated region
  $region18: #{_lambda_.46} parent=0 // pred_check
    %p18 = pneg %p17
  $region19: #{_lambda_.46} parent=0 // pred_check_branch
    %20 = sbr.rel (%p18) target = $region21
  $region20: #{_lambda_.46} parent=0 // pred_region
    %vm21 = vcmask 261120
    %22 = vst.msk [vmem:[#allocation2] sm:$0xff] %vm21, 0.0
    %23 = vst.msk [vmem:[#allocation2 + $0x8] sm:$0xff] %vm21, 0.0
  $region21: #{_lambda_.46} parent=0 // pred_fallthru
    _
  %v24 = vld [vmem:[%s0] sm:$0xff]
  %v25 = vld [vmem:[%s0 + $0x8] sm:$0xff]
  %v26 = vld [vmem:[#allocation2] sm:$0xff]
  %v27 = vld [vmem:[#allocation2 + $0x8] sm:$0xff]
  %v28 = vld [vmem:[%s1] sm:$0xff]
  %v29 = vld [vmem:[%s1 + $0x8] sm:$0xff]
  %v30 = vld [vmem:[%s1 + $0x10] sm:$0xff]
  %v31 = vld [vmem:[%s1 + $0x18] sm:$0xff]
  %vm32 = vcmask 261120
  %v34 = vsel %vm32, %v24, 0
  %v37 = vsel %vm32, %v25, 0
  %39 = vmatpush.msra.mxu0 0.0
  %40 = vmatpush.msra.mxu0 0.0
  %41 = vmatpush.msra.mxu0 0.0
  %42 = vmatpush.msra.mxu0 0.0
  %43 = vmatpush.msra.mxu0 0.0
  %44 = vmatpush.msra.mxu0 0.0
  %45 = vmatpush.msra.mxu0 0.0
  %46 = vmatpush.msra.mxu0 0.0
  %47 = vmatpush.msra.mxu0 0.0
  %48 = vmatpush.msra.mxu0 0.0
  %49 = vmatpush.msra.mxu0 0.0
  %50 = vmatpush.msra.mxu0 0.0
  %51 = vmatpush.msra.mxu0 %v31
  %52 = vmatpush.msra.mxu0 %v30
  %53 = vmatpush.msra.mxu0 %v29
  %54 = vmatpush.msra.mxu0 %v28
  %55 = vmatmul.f32.gmra.mxu0 %v34
  %v56 = vpop.f32.mrf.mxu0
  %v57 = vadd.f32 0.0, %v56
  %58 = vmatmul.f32.gmra.mxu0 %v37
  %v59 = vpop.f32.mrf.mxu0
  %v60 = vadd.f32 0.0, %v59
  %61 = vdwg.mxu0
  %v62 = vadd.f32 %v26, %v57
  %v63 = vadd.f32 %v27, %v60
  %64 = vst.msk [vmem:[#allocation2] sm:$0xff] %vm32, %v62
  %65 = vst.msk [vmem:[#allocation2 + $0x8] sm:$0xff] %vm32, %v63
  // Predicated region
  $region22: #{_lambda_.46} parent=0 // pred_check
    %p66 = pneg %p17
  $region23: #{_lambda_.46} parent=0 // pred_check_branch
    %68 = sbr.rel (%p66) target = $region25
  $region24: #{_lambda_.46} parent=0 // pred_region
    %v69 = vld [vmem:[#allocation2] sm:$0xff]
    %v70 = vld [vmem:[#allocation2 + $0x8] sm:$0xff]
    %v71 = vld [vmem:[%s2] sm:$0x1]
    %v73 = vperm.slane %v71, 0
    %v75 = vadd.f32 %v69, %v73
    %v76 = vadd.f32 %v70, %v73
    %v77 = vld [vmem:[%s3] sm:$0xff]
    %v78 = vld [vmem:[%s3 + $0x8] sm:$0xff]
    %v79 = vadd.f32 %v75, %v77
    %v80 = vadd.f32 %v76, %v78
    %81 = vst.msk [vmem:[%s4] sm:$0xff] %vm32, %v79
    %82 = vst.msk [vmem:[%s4 + $0x8] sm:$0xff] %vm32, %v80
  $region25: #{_lambda_.46} parent=0 // pred_fallthru
    _
  // Predicated region
  $region26: #{_lambda_.46} parent=0 // pred_check
    _
  $region27: #{_lambda_.46} parent=0 // pred_check_branch
    %84 = sbr.rel (0) target = $region29
  $region28: #{_lambda_.46} parent=0 // pred_region
    _
  $region29: #{_lambda_.46} parent=0 // pred_fallthru
    _
  // Predicated region
  $region30: #{_lambda_.46} parent=0 // pred_check
    _
  $region31: #{_lambda_.46} parent=0 // pred_check_branch
    %86 = sbr.rel (0) target = $region33
  $region32: #{_lambda_.46} parent=0 // pred_region
    _
  $region33: #{_lambda_.46} parent=0 // pred_fallthru
    _

// kernel: _lambda_.44
$region0: #{_lambda_.44}
  #allocation0 [shape = 'u32[]', space=smem, size = 0x4, offset = 0x4, fixed_abs, tag = 'smem constant byte address 0x4 - core index']
  #allocation1 [shape = 'u32[72,128]{1,0:T(1,128)}', space=vmem, size = 0x9000, scoped, tag = 'internal scratch']
  #allocation2 [shape = 'f32[32,64]{1,0:T(8,128)}', space=vmem, size = 0x4000, scoped, tag = 'scratch operand']
  %s0 = inlined_call_operand.vmem [shape: f32[32,32], index: 0, kind: input, shape index: {}]
  %s1 = inlined_call_operand.vmem [shape: f32[1,32], index: 1, kind: input, shape index: {}]
  %s2 = inlined_call_operand.vmem [shape: f32[1,32], index: 2, kind: input, shape index: {}]
  %s3 = inlined_call_operand.vmem [shape: f32[32,64], index: 3, kind: input, shape index: {}]
  %s4 = inlined_call_operand.vmem [shape: f32[1,64], index: 4, kind: input, shape index: {}]
  %s5 = inlined_call_operand.vmem [shape: f32[32,64], index: 5, kind: output, shape index: {}]
  %s6 = sld [smem:[#allocation0]]
  $region38: #{_lambda_.44} parent=0
    _
  %s8 = ssub.s32 1, %s6
  %s9 = scalar_select 0, %s8, %s6
  // Predicated region
  $region2: #{_lambda_.44} parent=0 // pred_check
    _
  $region3: #{_lambda_.44} parent=0 // pred_check_branch
    %11 = sbr.rel (0) target = $region5
  $region4: #{_lambda_.44} parent=0 // pred_region
    _
  $region5: #{_lambda_.44} parent=0 // pred_fallthru
    _
  // Predicated region
  $region6: #{_lambda_.44} parent=0 // pred_check
    _
  $region7: #{_lambda_.44} parent=0 // pred_check_branch
    %13 = sbr.rel (0) target = $region9
  $region8: #{_lambda_.44} parent=0 // pred_region
    _
  $region9: #{_lambda_.44} parent=0 // pred_fallthru
    _
  // Predicated region
  $region10: #{_lambda_.44} parent=0 // pred_check
    _
  $region11: #{_lambda_.44} parent=0 // pred_check_branch
    %15 = sbr.rel (0) target = $region13
  $region12: #{_lambda_.44} parent=0 // pred_region
    _
  $region13: #{_lambda_.44} parent=0 // pred_fallthru
    _
  // Predicated region
  $region14: #{_lambda_.44} parent=0 // pred_check
    _
  $region15: #{_lambda_.44} parent=0 // pred_check_branch
    %17 = sbr.rel (0) target = $region17
  $region16: #{_lambda_.44} parent=0 // pred_region
    _
  $region17: #{_lambda_.44} parent=0 // pred_fallthru
    _
  // Predicated region
  $region18: #{_lambda_.44} parent=0 // pred_check
    _
  $region19: #{_lambda_.44} parent=0 // pred_check_branch
    %19 = sbr.rel (0) target = $region21
  $region20: #{_lambda_.44} parent=0 // pred_region
    _
  $region21: #{_lambda_.44} parent=0 // pred_fallthru
    _
  %p20 = scmp.eq.s32.totalorder 0, 0
  // Predicated region
  $region22: #{_lambda_.44} parent=0 // pred_check
    %p21 = pneg %p20
  $region23: #{_lambda_.44} parent=0 // pred_check_branch
    %23 = sbr.rel (%p21) target = $region25
  $region24: #{_lambda_.44} parent=0 // pred_region
    %vm24 = vcmask 523264
    %25 = vst.msk [vmem:[#allocation2] sm:$0xff] %vm24, 0.0
    %26 = vst.msk [vmem:[#allocation2 + $0x8] sm:$0xff] %vm24, 0.0
    %27 = vst.msk [vmem:[#allocation2 + $0x10] sm:$0xff] %vm24, 0.0
    %28 = vst.msk [vmem:[#allocation2 + $0x18] sm:$0xff] %vm24, 0.0
  $region25: #{_lambda_.44} parent=0 // pred_fallthru
    _
  %v29 = vld [vmem:[%s0] sm:$0xff]
  %v30 = vld [vmem:[%s0 + $0x8] sm:$0xff]
  %v31 = vld [vmem:[%s0 + $0x10] sm:$0xff]
  %v32 = vld [vmem:[%s0 + $0x18] sm:$0xff]
  %vm33 = vcmask 261120
  %v34 = vsel %vm33, %v29, 0.0
  %35 = vadd.xlane.f32.xlu0 %v34
  %v36 = vpop.xlane.xlu0 %35
  %v37 = vsel %vm33, %v30, 0.0
  %38 = vadd.xlane.f32.xlu0 %v37
  %v39 = vpop.xlane.xlu0 %38
  %v40 = vsel %vm33, %v31, 0.0
  %41 = vadd.xlane.f32.xlu0 %v40
  %v42 = vpop.xlane.xlu0 %41
  %v43 = vsel %vm33, %v32, 0.0
  %44 = vadd.xlane.f32.xlu0 %v43
  %v45 = vpop.xlane.xlu0 %44
  %v46 = vrcp.pop 32.0
  %v47 = vmul.f32 32.0, %v46
  %v48 = vsub.f32 1.0, %v47
  %v49 = vmul.f32 %v46, %v48
  %v50 = vadd.f32 %v46, %v49
  %vm51 = vweird.f32 %v46
  %v52 = vsel %vm51, %v46, %v50
  %v53 = vmul.f32 %v36, %v52
  %v54 = vmul.f32 %v39, %v52
  %v55 = vmul.f32 %v42, %v52
  %v56 = vmul.f32 %v45, %v52
  %v57 = vsub.f32 %v29, %v53
  %v58 = vsub.f32 %v30, %v54
  %v59 = vsub.f32 %v31, %v55
  %v60 = vsub.f32 %v32, %v56
  %v61 = vmul.f32 %v57, %v57
  %v62 = vmul.f32 %v58, %v58
  %v63 = vmul.f32 %v59, %v59
  %v64 = vmul.f32 %v60, %v60
  %v65 = vsel %vm33, %v61, 0.0
  %66 = vadd.xlane.f32.xlu0 %v65
  %v67 = vpop.xlane.xlu0 %66
  %v68 = vsel %vm33, %v62, 0.0
  %69 = vadd.xlane.f32.xlu0 %v68
  %v70 = vpop.xlane.xlu0 %69
  %v71 = vsel %vm33, %v63, 0.0
  %72 = vadd.xlane.f32.xlu0 %v71
  %v73 = vpop.xlane.xlu0 %72
  %v74 = vsel %vm33, %v64, 0.0
  %75 = vadd.xlane.f32.xlu0 %v74
  %v76 = vpop.xlane.xlu0 %75
  %v77 = vmul.f32 %v67, %v52
  %v78 = vmul.f32 %v70, %v52
  %v79 = vmul.f32 %v73, %v52
  %v80 = vmul.f32 %v76, %v52
  %v81 = vadd.f32 %v77, 1e-05
  %v82 = vadd.f32 %v78, 1e-05
  %v83 = vadd.f32 %v79, 1e-05
  %v84 = vadd.f32 %v80, 1e-05
  %v85 = vrsqrt.pop %v81
  %v86 = vmul.f32 %v85, %v81
  %v87 = vmul.f32 %v86, %v85
  %v88 = vmul.f32 0.5, %v87
  %v89 = vsub.f32 1.5, %v88
  %v90 = vmul.f32 %v85, %v89
  %vm91 = vweird.f32 %v81
  %vm92 = vweird.f32 %v85
  %vm93 = vmor %vm91, %vm92
  %v94 = vsel %vm93, %v85, %v90
  %v95 = vrsqrt.pop %v82
  %v96 = vmul.f32 %v95, %v82
  %v97 = vmul.f32 %v96, %v95
  %v98 = vmul.f32 0.5, %v97
  %v99 = vsub.f32 1.5, %v98
  %v100 = vmul.f32 %v95, %v99
  %vm101 = vweird.f32 %v82
  %vm102 = vweird.f32 %v95
  %vm103 = vmor %vm101, %vm102
  %v104 = vsel %vm103, %v95, %v100
  %v105 = vrsqrt.pop %v83
  %v106 = vmul.f32 %v105, %v83
  %v107 = vmul.f32 %v106, %v105
  %v108 = vmul.f32 0.5, %v107
  %v109 = vsub.f32 1.5, %v108
  %v110 = vmul.f32 %v105, %v109
  %vm111 = vweird.f32 %v83
  %vm112 = vweird.f32 %v105
  %vm113 = vmor %vm111, %vm112
  %v114 = vsel %vm113, %v105, %v110
  %v115 = vrsqrt.pop %v84
  %v116 = vmul.f32 %v115, %v84
  %v117 = vmul.f32 %v116, %v115
  %v118 = vmul.f32 0.5, %v117
  %v119 = vsub.f32 1.5, %v118
  %v120 = vmul.f32 %v115, %v119
  %vm121 = vweird.f32 %v84
  %vm122 = vweird.f32 %v115
  %vm123 = vmor %vm121, %vm122
  %v124 = vsel %vm123, %v115, %v120
  %v125 = vmul.f32 %v57, %v94
  %v126 = vmul.f32 %v58, %v104
  %v127 = vmul.f32 %v59, %v114
  %v128 = vmul.f32 %v60, %v124
  %v129 = vld [vmem:[%s1] sm:$0x1]
  %v131 = vperm.slane %v129, 0
  %v133 = vmul.f32 %v125, %v131
  %v134 = vmul.f32 %v126, %v131
  %v135 = vmul.f32 %v127, %v131
  %v136 = vmul.f32 %v128, %v131
  %v137 = vld [vmem:[%s2] sm:$0x1]
  %v139 = vperm.slane %v137, 0
  %v141 = vadd.f32 %v133, %v139
  %v142 = vadd.f32 %v134, %v139
  %v143 = vadd.f32 %v135, %v139
  %v144 = vadd.f32 %v136, %v139
  %v145 = vld [vmem:[#allocation2] sm:$0xff]
  %v146 = vld [vmem:[#allocation2 + $0x8] sm:$0xff]
  %v147 = vld [vmem:[#allocation2 + $0x10] sm:$0xff]
  %v148 = vld [vmem:[#allocation2 + $0x18] sm:$0xff]
  %v149 = vld [vmem:[%s3] sm:$0xff]
  %v150 = vld [vmem:[%s3 + $0x8] sm:$0xff]
  %v151 = vld [vmem:[%s3 + $0x10] sm:$0xff]
  %v152 = vld [vmem:[%s3 + $0x18] sm:$0xff]
  %v154 = vsel %vm33, %v141, 0
  %v157 = vsel %vm33, %v142, 0
  %v160 = vsel %vm33, %v143, 0
  %v163 = vsel %vm33, %v144, 0
  %165 = vmatpush.msra.mxu0 0.0
  %166 = vmatpush.msra.mxu0 0.0
  %167 = vmatpush.msra.mxu0 0.0
  %168 = vmatpush.msra.mxu0 0.0
  %169 = vmatpush.msra.mxu0 0.0
  %170 = vmatpush.msra.mxu0 0.0
  %171 = vmatpush.msra.mxu0 0.0
  %172 = vmatpush.msra.mxu0 0.0
  %173 = vmatpush.msra.mxu0 0.0
  %174 = vmatpush.msra.mxu0 0.0
  %175 = vmatpush.msra.mxu0 0.0
  %176 = vmatpush.msra.mxu0 0.0
  %177 = vmatpush.msra.mxu0 %v152
  %178 = vmatpush.msra.mxu0 %v151
  %179 = vmatpush.msra.mxu0 %v150
  %180 = vmatpush.msra.mxu0 %v149
  %181 = vmatmul.f32.gmra.mxu0 %v154
  %v182 = vpop.f32.mrf.mxu0
  %v183 = vadd.f32 0.0, %v182
  %184 = vmatmul.f32.gmra.mxu0 %v157
  %v185 = vpop.f32.mrf.mxu0
  %v186 = vadd.f32 0.0, %v185
  %187 = vmatmul.f32.gmra.mxu0 %v160
  %v188 = vpop.f32.mrf.mxu0
  %v189 = vadd.f32 0.0, %v188
  %190 = vmatmul.f32.gmra.mxu0 %v163
  %v191 = vpop.f32.mrf.mxu0
  %v192 = vadd.f32 0.0, %v191
  %193 = vdwg.mxu0
  %v194 = vadd.f32 %v145, %v183
  %v195 = vadd.f32 %v146, %v186
  %v196 = vadd.f32 %v147, %v189
  %v197 = vadd.f32 %v148, %v192
  %vm198 = vcmask 523264
  %199 = vst.msk [vmem:[#allocation2] sm:$0xff] %vm198, %v194
  %200 = vst.msk [vmem:[#allocation2 + $0x8] sm:$0xff] %vm198, %v195
  %201 = vst.msk [vmem:[#allocation2 + $0x10] sm:$0xff] %vm198, %v196
  %202 = vst.msk [vmem:[#allocation2 + $0x18] sm:$0xff] %vm198, %v197
  // Predicated region
  $region26: #{_lambda_.44} parent=0 // pred_check
    %p203 = pneg %p20
  $region27: #{_lambda_.44} parent=0 // pred_check_branch
    %205 = sbr.rel (%p203) target = $region29
  $region28: #{_lambda_.44} parent=0 // pred_region
    %v206 = vld [vmem:[#allocation2] sm:$0xff]
    %v207 = vld [vmem:[#allocation2 + $0x8] sm:$0xff]
    %v208 = vld [vmem:[#allocation2 + $0x10] sm:$0xff]
    %v209 = vld [vmem:[#allocation2 + $0x18] sm:$0xff]
    %v210 = vld [vmem:[%s4] sm:$0x1]
    %v212 = vperm.slane %v210, 0
    %v214 = vadd.f32 %v206, %v212
    %v215 = vadd.f32 %v207, %v212
    %v216 = vadd.f32 %v208, %v212
    %v217 = vadd.f32 %v209, %v212
    %218 = vst.msk [vmem:[%s5] sm:$0xff] %vm198, %v214
    %219 = vst.msk [vmem:[%s5 + $0x8] sm:$0xff] %vm198, %v215
    %220 = vst.msk [vmem:[%s5 + $0x10] sm:$0xff] %vm198, %v216
    %221 = vst.msk [vmem:[%s5 + $0x18] sm:$0xff] %vm198, %v217
  $region29: #{_lambda_.44} parent=0 // pred_fallthru
    _
  // Predicated region
  $region30: #{_lambda_.44} parent=0 // pred_check
    _
  $region31: #{_lambda_.44} parent=0 // pred_check_branch
    %223 = sbr.rel (0) target = $region33
  $region32: #{_lambda_.44} parent=0 // pred_region
    _
  $region33: #{_lambda_.44} parent=0 // pred_fallthru
    _
  // Predicated region
  $region34: #{_lambda_.44} parent=0 // pred_check
    _
  $region35: #{_lambda_.44} parent=0 // pred_check_branch
    %225 = sbr.rel (0) target = $region37
  $region36: #{_lambda_.44} parent=0 // pred_region
    _
  $region37: #{_lambda_.44} parent=0 // pred_fallthru
    _

// kernel: _lambda_.47
$region0: #{_lambda_.47}
  #allocation0 [shape = 'u32[]', space=smem, size = 0x4, offset = 0x4, fixed_abs, tag = 'smem constant byte address 0x4 - core index']
  #allocation1 [shape = 'u32[72,128]{1,0:T(1,128)}', space=vmem, size = 0x9000, scoped, tag = 'internal scratch']
  #allocation2 [shape = 'f32[16,128]{1,0:T(8,128)}', space=vmem, size = 0x2000, scoped, tag = 'scratch operand']
  %s0 = inlined_call_operand.vmem [shape: f32[16,32], index: 0, kind: input, shape index: {}]
  %s1 = inlined_call_operand.vmem [shape: f32[1,32], index: 1, kind: input, shape index: {}]
  %s2 = inlined_call_operand.vmem [shape: f32[1,32], index: 2, kind: input, shape index: {}]
  %s3 = inlined_call_operand.vmem [shape: f32[32,128], index: 3, kind: input, shape index: {}]
  %s4 = inlined_call_operand.vmem [shape: f32[1,128], index: 4, kind: input, shape index: {}]
  %s5 = inlined_call_operand.vmem [shape: f32[16,128], index: 5, kind: output, shape index: {}]
  %s6 = sld [smem:[#allocation0]]
  $region38: #{_lambda_.47} parent=0
    _
  %s8 = ssub.s32 1, %s6
  %s9 = scalar_select 0, %s8, %s6
  // Predicated region
  $region2: #{_lambda_.47} parent=0 // pred_check
    _
  $region3: #{_lambda_.47} parent=0 // pred_check_branch
    %11 = sbr.rel (0) target = $region5
  $region4: #{_lambda_.47} parent=0 // pred_region
    _
  $region5: #{_lambda_.47} parent=0 // pred_fallthru
    _
  // Predicated region
  $region6: #{_lambda_.47} parent=0 // pred_check
    _
  $region7: #{_lambda_.47} parent=0 // pred_check_branch
    %13 = sbr.rel (0) target = $region9
  $region8: #{_lambda_.47} parent=0 // pred_region
    _
  $region9: #{_lambda_.47} parent=0 // pred_fallthru
    _
  // Predicated region
  $region10: #{_lambda_.47} parent=0 // pred_check
    _
  $region11: #{_lambda_.47} parent=0 // pred_check_branch
    %15 = sbr.rel (0) target = $region13
  $region12: #{_lambda_.47} parent=0 // pred_region
    _
  $region13: #{_lambda_.47} parent=0 // pred_fallthru
    _
  // Predicated region
  $region14: #{_lambda_.47} parent=0 // pred_check
    _
  $region15: #{_lambda_.47} parent=0 // pred_check_branch
    %17 = sbr.rel (0) target = $region17
  $region16: #{_lambda_.47} parent=0 // pred_region
    _
  $region17: #{_lambda_.47} parent=0 // pred_fallthru
    _
  // Predicated region
  $region18: #{_lambda_.47} parent=0 // pred_check
    _
  $region19: #{_lambda_.47} parent=0 // pred_check_branch
    %19 = sbr.rel (0) target = $region21
  $region20: #{_lambda_.47} parent=0 // pred_region
    _
  $region21: #{_lambda_.47} parent=0 // pred_fallthru
    _
  %p20 = scmp.eq.s32.totalorder 0, 0
  // Predicated region
  $region22: #{_lambda_.47} parent=0 // pred_check
    %p21 = pneg %p20
  $region23: #{_lambda_.47} parent=0 // pred_check_branch
    %23 = sbr.rel (%p21) target = $region25
  $region24: #{_lambda_.47} parent=0 // pred_region
    %24 = vst [vmem:[#allocation2] sm:$0xff] 0.0
    %25 = vst [vmem:[#allocation2 + $0x8] sm:$0xff] 0.0
  $region25: #{_lambda_.47} parent=0 // pred_fallthru
    _
  %v26 = vld [vmem:[%s0] sm:$0xff]
  %v27 = vld [vmem:[%s0 + $0x8] sm:$0xff]
  %vm28 = vcmask 261120
  %v29 = vsel %vm28, %v26, 0.0
  %30 = vadd.xlane.f32.xlu0 %v29
  %v31 = vpop.xlane.xlu0 %30
  %v32 = vsel %vm28, %v27, 0.0
  %33 = vadd.xlane.f32.xlu0 %v32
  %v34 = vpop.xlane.xlu0 %33
  %v35 = vrcp.pop 32.0
  %v36 = vmul.f32 32.0, %v35
  %v37 = vsub.f32 1.0, %v36
  %v38 = vmul.f32 %v35, %v37
  %v39 = vadd.f32 %v35, %v38
  %vm40 = vweird.f32 %v35
  %v41 = vsel %vm40, %v35, %v39
  %v42 = vmul.f32 %v31, %v41
  %v43 = vmul.f32 %v34, %v41
  %v44 = vsub.f32 %v26, %v42
  %v45 = vsub.f32 %v27, %v43
  %v46 = vmul.f32 %v44, %v44
  %v47 = vmul.f32 %v45, %v45
  %v48 = vsel %vm28, %v46, 0.0
  %49 = vadd.xlane.f32.xlu0 %v48
  %v50 = vpop.xlane.xlu0 %49
  %v51 = vsel %vm28, %v47, 0.0
  %52 = vadd.xlane.f32.xlu0 %v51
  %v53 = vpop.xlane.xlu0 %52
  %v54 = vmul.f32 %v50, %v41
  %v55 = vmul.f32 %v53, %v41
  %v56 = vadd.f32 %v54, 1e-05
  %v57 = vadd.f32 %v55, 1e-05
  %v58 = vrsqrt.pop %v56
  %v59 = vmul.f32 %v58, %v56
  %v60 = vmul.f32 %v59, %v58
  %v61 = vmul.f32 0.5, %v60
  %v62 = vsub.f32 1.5, %v61
  %v63 = vmul.f32 %v58, %v62
  %vm64 = vweird.f32 %v56
  %vm65 = vweird.f32 %v58
  %vm66 = vmor %vm64, %vm65
  %v67 = vsel %vm66, %v58, %v63
  %v68 = vrsqrt.pop %v57
  %v69 = vmul.f32 %v68, %v57
  %v70 = vmul.f32 %v69, %v68
  %v71 = vmul.f32 0.5, %v70
  %v72 = vsub.f32 1.5, %v71
  %v73 = vmul.f32 %v68, %v72
  %vm74 = vweird.f32 %v57
  %vm75 = vweird.f32 %v68
  %vm76 = vmor %vm74, %vm75
  %v77 = vsel %vm76, %v68, %v73
  %v78 = vmul.f32 %v44, %v67
  %v79 = vmul.f32 %v45, %v77
  %v80 = vld [vmem:[%s1] sm:$0x1]
  %v82 = vperm.slane %v80, 0
  %v84 = vmul.f32 %v78, %v82
  %v85 = vmul.f32 %v79, %v82
  %v86 = vld [vmem:[%s2] sm:$0x1]
  %v88 = vperm.slane %v86, 0
  %v90 = vadd.f32 %v84, %v88
  %v91 = vadd.f32 %v85, %v88
  %v92 = vld [vmem:[#allocation2] sm:$0xff]
  %v93 = vld [vmem:[#allocation2 + $0x8] sm:$0xff]
  %v94 = vld [vmem:[%s3] sm:$0xff]
  %v95 = vld [vmem:[%s3 + $0x8] sm:$0xff]
  %v96 = vld [vmem:[%s3 + $0x10] sm:$0xff]
  %v97 = vld [vmem:[%s3 + $0x18] sm:$0xff]
  %v99 = vsel %vm28, %v90, 0
  %v102 = vsel %vm28, %v91, 0
  %104 = vmatpush.msra.mxu0 0.0
  %105 = vmatpush.msra.mxu0 0.0
  %106 = vmatpush.msra.mxu0 0.0
  %107 = vmatpush.msra.mxu0 0.0
  %108 = vmatpush.msra.mxu0 0.0
  %109 = vmatpush.msra.mxu0 0.0
  %110 = vmatpush.msra.mxu0 0.0
  %111 = vmatpush.msra.mxu0 0.0
  %112 = vmatpush.msra.mxu0 0.0
  %113 = vmatpush.msra.mxu0 0.0
  %114 = vmatpush.msra.mxu0 0.0
  %115 = vmatpush.msra.mxu0 0.0
  %116 = vmatpush.msra.mxu0 %v97
  %117 = vmatpush.msra.mxu0 %v96
  %118 = vmatpush.msra.mxu0 %v95
  %119 = vmatpush.msra.mxu0 %v94
  %120 = vmatmul.f32.gmra.mxu0 %v99
  %v121 = vpop.f32.mrf.mxu0
  %v122 = vadd.f32 0.0, %v121
  %123 = vmatmul.f32.gmra.mxu0 %v102
  %v124 = vpop.f32.mrf.mxu0
  %v125 = vadd.f32 0.0, %v124
  %126 = vdwg.mxu0
  %v127 = vadd.f32 %v92, %v122
  %v128 = vadd.f32 %v93, %v125
  %129 = vst [vmem:[#allocation2] sm:$0xff] %v127
  %130 = vst [vmem:[#allocation2 + $0x8] sm:$0xff] %v128
  // Predicated region
  $region26: #{_lambda_.47} parent=0 // pred_check
    %p131 = pneg %p20
  $region27: #{_lambda_.47} parent=0 // pred_check_branch
    %133 = sbr.rel (%p131) target = $region29
  $region28: #{_lambda_.47} parent=0 // pred_region
    %v134 = vld [vmem:[#allocation2] sm:$0xff]
    %v135 = vld [vmem:[#allocation2 + $0x8] sm:$0xff]
    %v136 = vld [vmem:[%s4] sm:$0x1]
    %v138 = vperm.slane %v136, 0
    %v140 = vadd.f32 %v134, %v138
    %v141 = vadd.f32 %v135, %v138
    %v142 = vmul.f32 %v140, 0.5
    %v143 = vmul.f32 %v141, 0.5
    %v144 = vmul.f32 %v140, 0.70710677
    %v145 = vmul.f32 %v141, 0.70710677
    %v146 = vand.u32 2147483647, %v144
    %v147 = vand.u32 2147483647, %v145
    %v148 = vmul.f32 %v146, 0.3275911
    %v149 = vmul.f32 %v147, 0.3275911
    %v150 = vadd.f32 %v148, 1.0
    %v151 = vadd.f32 %v149, 1.0
    %v152 = vrcp.pop %v150
    %v153 = vmul.f32 %v150, %v152
    %v154 = vsub.f32 1.0, %v153
    %v155 = vmul.f32 %v152, %v154
    %v156 = vadd.f32 %v152, %v155
    %vm157 = vweird.f32 %v150
    %vm158 = vweird.f32 %v152
    %vm159 = vmor %vm157, %vm158
    %v160 = vsel %vm159, %v152, %v156
    %v161 = vand.u32 2147483647, %v150
    %vm162 = vcmp.eq.f32.partialorder %v161, 8.507059e+37
    %v163 = vand.u32 %v150, 2147483648
    %v164 = vor.u32 1.1754944e-38, %v163
    %v165 = vsel %vm162, %v164, %v160
    %v166 = vmul.f32 1.0, %v165
    %v167 = vrcp.pop %v151
    %v168 = vmul.f32 %v151, %v167
    %v169 = vsub.f32 1.0, %v168
    %v170 = vmul.f32 %v167, %v169
    %v171 = vadd.f32 %v167, %v170
    %vm172 = vweird.f32 %v151
    %vm173 = vweird.f32 %v167
    %vm174 = vmor %vm172, %vm173
    %v175 = vsel %vm174, %v167, %v171
    %v176 = vand.u32 2147483647, %v151
    %vm177 = vcmp.eq.f32.partialorder %v176, 8.507059e+37
    %v178 = vand.u32 %v151, 2147483648
    %v179 = vor.u32 1.1754944e-38, %v178
    %v180 = vsel %vm177, %v179, %v175
    %v181 = vmul.f32 1.0, %v180
    %v182 = vmul.f32 %v166, 1.0614054
    %v183 = vmul.f32 %v181, 1.0614054
    %v184 = vsub.f32 %v182, 1.4531521
    %v185 = vsub.f32 %v183, 1.4531521
    %v186 = vmul.f32 %v184, %v166
    %v187 = vmul.f32 %v185, %v181
    %v188 = vadd.f32 %v186, 1.4214138
    %v189 = vadd.f32 %v187, 1.4214138
    %v190 = vmul.f32 %v188, %v166
    %v191 = vmul.f32 %v189, %v181
    %v192 = vsub.f32 %v190, 0.28449672
    %v193 = vsub.f32 %v191, 0.28449672
    %v194 = vmul.f32 %v192, %v166
    %v195 = vmul.f32 %v193, %v181
    %v196 = vadd.f32 %v194, 0.2548296
    %v197 = vadd.f32 %v195, 0.2548296
    %v198 = vmul.f32 %v196, %v166
    %v199 = vmul.f32 %v197, %v181
    %v200 = vsub.f32 0.0, %v146
    %v201 = vsub.f32 0.0, %v147
    %v202 = vmul.f32 %v200, %v146
    %v203 = vmul.f32 %v201, %v147
    %v204 = vmul.f32 %v202, 1.442695
    %v205 = vpow.pop %v204
    %v206 = vmul.f32 %v203, 1.442695
    %v207 = vpow.pop %v206
    %v208 = vmul.f32 %v198, %v205
    %v209 = vmul.f32 %v199, %v207
    %v210 = vsub.f32 1.0, %v208
    %v211 = vsub.f32 1.0, %v209
    %vm212 = vcmp.ge.f32.partialorder %v144, 0.0
    %vm213 = vcmp.ge.f32.partialorder %v145, 0.0
    %v214 = vsub.f32 0.0, %v210
    %v215 = vsub.f32 0.0, %v211
    %v216 = vsel %vm212, %v210, %v214
    %v217 = vsel %vm213, %v211, %v215
    %v218 = vadd.f32 %v216, 1.0
    %v219 = vadd.f32 %v217, 1.0
    %v220 = vmul.f32 %v142, %v218
    %v221 = vmul.f32 %v143, %v219
    %222 = vst [vmem:[%s5] sm:$0xff] %v220
    %223 = vst [vmem:[%s5 + $0x8] sm:$0xff] %v221
  $region29: #{_lambda_.47} parent=0 // pred_fallthru
    _
  // Predicated region
  $region30: #{_lambda_.47} parent=0 // pred_check
    _
  $region31: #{_lambda_.47} parent=0 // pred_check_branch
    %225 = sbr.rel (0) target = $region33
  $region32: #{_lambda_.47} parent=0 // pred_region
    _
  $region33: #{_lambda_.47} parent=0 // pred_fallthru
    _
  // Predicated region
  $region34: #{_lambda_.47} parent=0 // pred_check
    _
  $region35: #{_lambda_.47} parent=0 // pred_check_branch
    %227 = sbr.rel (0) target = $region37
  $region36: #{_lambda_.47} parent=0 // pred_region
    _
  $region37: #{_lambda_.47} parent=0 // pred_fallthru
    _

// kernel: _lambda_.49
$region0: #{_lambda_.49}
  #allocation0 [shape = 'u32[]', space=smem, size = 0x4, offset = 0x4, fixed_abs, tag = 'smem constant byte address 0x4 - core index']
  #allocation1 [shape = 'u32[72,128]{1,0:T(1,128)}', space=vmem, size = 0x9000, scoped, tag = 'internal scratch']
  #allocation2 [shape = 'f32[16,16]{1,0:T(8,128)}', space=vmem, size = 0x2000, scoped, tag = 'scratch operand']
  %s0 = inlined_call_operand.vmem [shape: f32[16,32], index: 0, kind: input, shape index: {}]
  %s1 = inlined_call_operand.vmem [shape: f32[1,32], index: 1, kind: input, shape index: {}]
  %s2 = inlined_call_operand.vmem [shape: f32[1,32], index: 2, kind: input, shape index: {}]
  %s3 = inlined_call_operand.vmem [shape: f32[32,16], index: 3, kind: input, shape index: {}]
  %s4 = inlined_call_operand.hbm [shape: f32[16,16], index: 4, kind: output, shape index: {}]
  %s5 = sld [smem:[#allocation0]]
  $region34: #{_lambda_.49} parent=0
    _
  %s7 = ssub.s32 1, %s5
  %s8 = scalar_select 0, %s7, %s5
  $region1: #{_lambda_.49} parent=0
    #allocation3 [shape = 'u8[8192]{0}', space=vmem, size = 0x2000, scoped, tag = 'output window, operand 0, single buffered']
    #allocation4 [shape = 's32[1]{0}', space=sflag, size = 0x4, scoped, tag = 'scoped memory for _lambda_.49']
    %9 = vsyncpa [#allocation4], 0
    // Predicated region
    $region2: #{_lambda_.49} parent=1 // pred_check
      _
    $region3: #{_lambda_.49} parent=1 // pred_check_branch
      %11 = sbr.rel (0) target = $region5
    $region4: #{_lambda_.49} parent=1 // pred_region
      _
    $region5: #{_lambda_.49} parent=1 // pred_fallthru
      _
    // Predicated region
    $region6: #{_lambda_.49} parent=1 // pred_check
      _
    $region7: #{_lambda_.49} parent=1 // pred_check_branch
      %13 = sbr.rel (0) target = $region9
    $region8: #{_lambda_.49} parent=1 // pred_region
      _
    $region9: #{_lambda_.49} parent=1 // pred_fallthru
      _
    // Predicated region
    $region10: #{_lambda_.49} parent=1 // pred_check
      _
    $region11: #{_lambda_.49} parent=1 // pred_check_branch
      %15 = sbr.rel (0) target = $region13
    $region12: #{_lambda_.49} parent=1 // pred_region
      _
    $region13: #{_lambda_.49} parent=1 // pred_fallthru
      _
    // Predicated region
    $region14: #{_lambda_.49} parent=1 // pred_check
      _
    $region15: #{_lambda_.49} parent=1 // pred_check_branch
      %17 = sbr.rel (0) target = $region17
    $region16: #{_lambda_.49} parent=1 // pred_region
      _
    $region17: #{_lambda_.49} parent=1 // pred_fallthru
      _
    %p18 = scmp.eq.s32.totalorder 0, 0
    // Predicated region
    $region18: #{_lambda_.49} parent=1 // pred_check
      %p19 = pneg %p18
    $region19: #{_lambda_.49} parent=1 // pred_check_branch
      %21 = sbr.rel (%p19) target = $region21
    $region20: #{_lambda_.49} parent=1 // pred_region
      %vm22 = vcmask 130048
      %23 = vst.msk [vmem:[#allocation2] sm:$0xff] %vm22, 0.0
      %24 = vst.msk [vmem:[#allocation2 + $0x8] sm:$0xff] %vm22, 0.0
    $region21: #{_lambda_.49} parent=1 // pred_fallthru
      _
    %v25 = vld [vmem:[%s0] sm:$0xff]
    %v26 = vld [vmem:[%s0 + $0x8] sm:$0xff]
    %vm27 = vcmask 261120
    %v28 = vsel %vm27, %v25, 0.0
    %29 = vadd.xlane.f32.xlu0 %v28
    %v30 = vpop.xlane.xlu0 %29
    %v31 = vsel %vm27, %v26, 0.0
    %32 = vadd.xlane.f32.xlu0 %v31
    %v33 = vpop.xlane.xlu0 %32
    %v34 = vrcp.pop 32.0
    %v35 = vmul.f32 32.0, %v34
    %v36 = vsub.f32 1.0, %v35
    %v37 = vmul.f32 %v34, %v36
    %v38 = vadd.f32 %v34, %v37
    %vm39 = vweird.f32 %v34
    %v40 = vsel %vm39, %v34, %v38
    %v41 = vmul.f32 %v30, %v40
    %v42 = vmul.f32 %v33, %v40
    %v43 = vsub.f32 %v25, %v41
    %v44 = vsub.f32 %v26, %v42
    %v45 = vmul.f32 %v43, %v43
    %v46 = vmul.f32 %v44, %v44
    %v47 = vsel %vm27, %v45, 0.0
    %48 = vadd.xlane.f32.xlu0 %v47
    %v49 = vpop.xlane.xlu0 %48
    %v50 = vsel %vm27, %v46, 0.0
    %51 = vadd.xlane.f32.xlu0 %v50
    %v52 = vpop.xlane.xlu0 %51
    %v53 = vmul.f32 %v49, %v40
    %v54 = vmul.f32 %v52, %v40
    %v55 = vadd.f32 %v53, 1e-05
    %v56 = vadd.f32 %v54, 1e-05
    %v57 = vrsqrt.pop %v55
    %v58 = vmul.f32 %v57, %v55
    %v59 = vmul.f32 %v58, %v57
    %v60 = vmul.f32 0.5, %v59
    %v61 = vsub.f32 1.5, %v60
    %v62 = vmul.f32 %v57, %v61
    %vm63 = vweird.f32 %v55
    %vm64 = vweird.f32 %v57
    %vm65 = vmor %vm63, %vm64
    %v66 = vsel %vm65, %v57, %v62
    %v67 = vrsqrt.pop %v56
    %v68 = vmul.f32 %v67, %v56
    %v69 = vmul.f32 %v68, %v67
    %v70 = vmul.f32 0.5, %v69
    %v71 = vsub.f32 1.5, %v70
    %v72 = vmul.f32 %v67, %v71
    %vm73 = vweird.f32 %v56
    %vm74 = vweird.f32 %v67
    %vm75 = vmor %vm73, %vm74
    %v76 = vsel %vm75, %v67, %v72
    %v77 = vmul.f32 %v43, %v66
    %v78 = vmul.f32 %v44, %v76
    %v79 = vld [vmem:[%s1] sm:$0x1]
    %v81 = vperm.slane %v79, 0
    %v83 = vmul.f32 %v77, %v81
    %v84 = vmul.f32 %v78, %v81
    %v85 = vld [vmem:[%s2] sm:$0x1]
    %v87 = vperm.slane %v85, 0
    %v89 = vadd.f32 %v83, %v87
    %v90 = vadd.f32 %v84, %v87
    %v91 = vld [vmem:[#allocation2] sm:$0xff]
    %v92 = vld [vmem:[#allocation2 + $0x8] sm:$0xff]
    %v93 = vld [vmem:[%s3] sm:$0xff]
    %v94 = vld [vmem:[%s3 + $0x8] sm:$0xff]
    %v95 = vld [vmem:[%s3 + $0x10] sm:$0xff]
    %v96 = vld [vmem:[%s3 + $0x18] sm:$0xff]
    %v98 = vsel %vm27, %v89, 0
    %v101 = vsel %vm27, %v90, 0
    %103 = vmatpush.msra.mxu0 0.0
    %104 = vmatpush.msra.mxu0 0.0
    %105 = vmatpush.msra.mxu0 0.0
    %106 = vmatpush.msra.mxu0 0.0
    %107 = vmatpush.msra.mxu0 0.0
    %108 = vmatpush.msra.mxu0 0.0
    %109 = vmatpush.msra.mxu0 0.0
    %110 = vmatpush.msra.mxu0 0.0
    %111 = vmatpush.msra.mxu0 0.0
    %112 = vmatpush.msra.mxu0 0.0
    %113 = vmatpush.msra.mxu0 0.0
    %114 = vmatpush.msra.mxu0 0.0
    %115 = vmatpush.msra.mxu0 %v96
    %116 = vmatpush.msra.mxu0 %v95
    %117 = vmatpush.msra.mxu0 %v94
    %118 = vmatpush.msra.mxu0 %v93
    %119 = vmatmul.f32.gmra.mxu0 %v98
    %v120 = vpop.f32.mrf.mxu0
    %v121 = vadd.f32 0.0, %v120
    %122 = vmatmul.f32.gmra.mxu0 %v101
    %v123 = vpop.f32.mrf.mxu0
    %v124 = vadd.f32 0.0, %v123
    %125 = vdwg.mxu0
    %v126 = vadd.f32 %v91, %v121
    %v127 = vadd.f32 %v92, %v124
    %vm128 = vcmask 130048
    %129 = vst.msk [vmem:[#allocation2] sm:$0xff] %vm128, %v126
    %130 = vst.msk [vmem:[#allocation2 + $0x8] sm:$0xff] %vm128, %v127
    // Predicated region
    $region22: #{_lambda_.49} parent=1 // pred_check
      %p131 = pneg %p18
    $region23: #{_lambda_.49} parent=1 // pred_check_branch
      %133 = sbr.rel (%p131) target = $region25
    $region24: #{_lambda_.49} parent=1 // pred_region
      %v134 = vld [vmem:[#allocation2] sm:$0xff]
      %v135 = vld [vmem:[#allocation2 + $0x8] sm:$0xff]
      %136 = vst.msk [vmem:[#allocation3] sm:$0xff] %vm128, %v134
      %137 = vst.msk [vmem:[#allocation3 + $0x8] sm:$0xff] %vm128, %v135
    $region25: #{_lambda_.49} parent=1 // pred_fallthru
      _
    // Predicated region
    $region26: #{_lambda_.49} parent=1 // pred_check
      _
    $region27: #{_lambda_.49} parent=1 // pred_check_branch
      %139 = sbr.rel (0) target = $region29
    $region28: #{_lambda_.49} parent=1 // pred_region
      %141 = vsyncadd [#allocation4], 0
      %s142 = sshll.u32 [#allocation3], 4
      %s143 = int_to_ptr.vmem [resolvable:$true] %s142
      %s144 = sshll.u32 %s4, 4
      %s145 = int_to_ptr.hbm [resolvable:$true] %s144
      %150 = dma.vmem_to_hbm [thread:$0]  %s143, 256, %s145, [#allocation4], 128, 128, 8
    $region29: #{_lambda_.49} parent=1 // pred_fallthru
      _
    // Predicated region
    $region30: #{_lambda_.49} parent=1 // pred_check
      _
    $region31: #{_lambda_.49} parent=1 // pred_check_branch
      %152 = sbr.rel (0) target = $region33
    $region32: #{_lambda_.49} parent=1 // pred_region
      %154 = dma.done [#allocation4], 256
    $region33: #{_lambda_.49} parent=1 // pred_fallthru
      _
    %155 = vsyncpa [#allocation4], 1

</llo_original>
